<compile_context>
chip_gen: v7x
topology: tpu7x:2x2x1
jax: 0.10.0
libtpu: 0.0.40
codegen_flags: <defaults>
</compile_context>

<pallas_src>
import functools

import jax
import jax.numpy as jnp
from jax import lax
from jax.experimental import pallas as pl
from jax.experimental.pallas import tpu as pltpu

BN_EPS = 1e-5


# ----------------------------- fused kernel -------------------------------- #

def _barlow_fused_kernel(x_ref, wbb_ref, w1_ref, w2_ref, w3_ref, sp_ref,
                         out_ref, f_ref, *, num_views, batch_per_view, spatial):
    """Single invocation == both views' full batch.

    x_ref    : (N*P, C)  f32  NHWC-flattened pixels (N = V*B images, P = H*W).
    wbb_ref  : (C, F)    f32  synthetic-backbone 1x1-conv weight.
    w1/w2/w3 :           bf16 projection-head weights (no b1/b2: cancel in BN).
    sp_ref   : (8, D)    f32  packed small params:
                              row 0 = conv bias, 1-2 = g1,be1, 3-4 = g2,be2,
                              row 5 = b3, rows 6-7 = padding.
    """
    V, B, P = num_views, batch_per_view, spatial
    N = V * B
    F = wbb_ref.shape[1]
    H1 = w1_ref.shape[1]
    OUT = w3_ref.shape[1]

    sp = sp_ref[...]
    bb = sp[0:1, :F]
    g1, be1 = sp[1:2, :H1], sp[2:3, :H1]
    g2, be2 = sp[3:4, :H1], sp[4:5, :H1]
    b3 = sp[5:6, :OUT]

    # --- synthetic backbone: 1x1 conv -> +bias -> ReLU -> global avg pool ---
    # One (N*P, C) x (C, F) matmul (no per-image batched einsum / broadcast).
    z = jnp.dot(x_ref[...], wbb_ref[...], preferred_element_type=jnp.float32)
    z = jnp.maximum(z + bb, 0.0)                                  # (N*P, F)

    # GAP as a matmul with a constant (N, N*P) averaging matrix (MXU, not XLU).
    img = lax.broadcasted_iota(jnp.int32, (N, N * P), 0)
    col = lax.broadcasted_iota(jnp.int32, (N, N * P), 1)
    lo = img * P
    pool = jnp.where((col >= lo) & (col < lo + P), 1.0 / P, 0.0)
    pool = pool.astype(jnp.float32)
    f = jnp.dot(pool, z, preferred_element_type=jnp.float32)      # (N, F)
    f_ref[...] = f

    # --- projection MLP: [Linear -> BatchNorm1d(train) -> ReLU] x2 -> Linear
    def bn_relu(h, g, be):
        parts = []
        for v in range(V):                    # V is static: per-view BN stats
            hv = h[v * B:(v + 1) * B, :]
            mu = jnp.mean(hv, axis=0, keepdims=True)
            d = hv - mu
            var = jnp.mean(d * d, axis=0, keepdims=True)   # safe two-pass var
            parts.append(d * lax.rsqrt(var + BN_EPS))
        hn = parts[0] if V == 1 else jnp.concatenate(parts, axis=0)
        return jnp.maximum(hn * g + be, 0.0)

    # Linear biases before train-mode BN cancel exactly -> omitted.
    h = jnp.dot(f.astype(jnp.bfloat16), w1_ref[...],
                preferred_element_type=jnp.float32)
    h = bn_relu(h, g1, be1)
    h = jnp.dot(h.astype(jnp.bfloat16), w2_ref[...],
                preferred_element_type=jnp.float32)
    h = bn_relu(h, g2, be2)
    out_ref[...] = jnp.dot(h.astype(jnp.bfloat16), w3_ref[...],
                           preferred_element_type=jnp.float32) + b3


# ----------------------------- wrappers ------------------------------------ #

def _fused_forward(x2d, wbb, w1, w2, w3, small, num_views, batch_per_view,
                   spatial):
    N = num_views * batch_per_view
    F, H1 = w1.shape
    OUT = w3.shape[1]

    kernel = functools.partial(_barlow_fused_kernel, num_views=num_views,
                               batch_per_view=batch_per_view, spatial=spatial)
    vmem = pl.BlockSpec(memory_space=pltpu.MemorySpace.VMEM)
    # Single invocation (no grid): no per-step overhead, weights DMA'd once,
    # no dead double-buffers.  Everything fits in the default scoped VMEM at
    # these toy widths.
    out, f = pl.pallas_call(
        kernel,
        out_shape=(jax.ShapeDtypeStruct((N, OUT), jnp.float32),
                   jax.ShapeDtypeStruct((N, F), jnp.float32)),
        in_specs=[vmem, vmem, vmem, vmem, vmem, vmem],
        out_specs=(vmem, vmem),
    )(x2d, wbb, w1, w2, w3, small)
    return out, f


@functools.partial(jax.jit, static_argnames=("num_views",))
def _forward_impl(x, params, num_views):
    # x: (V*B, C, H, W) -> NHWC-flattened (V*B*H*W, C).  One cheap XLA
    # transpose; no ones-channel / zero-pad concatenation per forward.
    N, C, H, W = x.shape
    P = H * W
    B = N // num_views
    x2d = jnp.transpose(x, (0, 2, 3, 1)).reshape(N * P, C).astype(jnp.float32)
    return _fused_forward(x2d, params["wbb"], params["w1"], params["w2"],
                          params["w3"], params["small"], num_views, B, P)


# ----------------------------- params --------------------------------------- #

def init_params(key, in_channels, num_ftrs, proj_hidden_dim, out_dim):
    """PyTorch-style init (uniform +-1/sqrt(fan_in); BN gamma=1, beta=0)."""
    ks = jax.random.split(key, 8)

    def lin(kw, kb, fan_in, fan_out):
        bound = 1.0 / (fan_in ** 0.5)
        w = jax.random.uniform(kw, (fan_in, fan_out), jnp.float32, -bound, bound)
        b = jax.random.uniform(kb, (fan_out,), jnp.float32, -bound, bound)
        return w, b

    # synthetic backbone 1x1 conv (weight stored as (C, F), bias separately)
    wbb, bb = lin(ks[0], ks[1], in_channels, num_ftrs)
    # projection head; b1/b2 are mathematically redundant before train-mode BN
    w1, _b1 = lin(ks[2], ks[3], num_ftrs, proj_hidden_dim)
    w2, _b2 = lin(ks[4], ks[5], proj_hidden_dim, proj_hidden_dim)
    w3, b3 = lin(ks[6], ks[7], proj_hidden_dim, out_dim)
    g1 = jnp.ones((proj_hidden_dim,), jnp.float32)
    be1 = jnp.zeros((proj_hidden_dim,), jnp.float32)
    g2 = jnp.ones((proj_hidden_dim,), jnp.float32)
    be2 = jnp.zeros((proj_hidden_dim,), jnp.float32)

    # pack the small per-feature vectors into one lane-dense (8, D) array
    rows = [bb, g1, be1, g2, be2, b3]
    D = max(r.shape[0] for r in rows)
    D = ((D + 127) // 128) * 128
    padded = [jnp.pad(r, (0, D - r.shape[0])) for r in rows]
    padded += [jnp.zeros((D,), jnp.float32)] * (8 - len(padded))
    small = jnp.stack(padded)

    return {
        "wbb": wbb,                          # f32 (tiny K; input stays f32)
        "w1": w1.astype(jnp.bfloat16),       # bf16 matmul, f32 accumulation
        "w2": w2.astype(jnp.bfloat16),
        "w3": w3.astype(jnp.bfloat16),
        "small": small,
    }


# ----------------------------- reference ------------------------------------ #

def _reference_forward(x, params, num_views):
    """Pure-JAX reference (same math, same bf16 weight rounding)."""
    wbb = params["wbb"]
    w1 = params["w1"].astype(jnp.float32)
    w2 = params["w2"].astype(jnp.float32)
    w3 = params["w3"].astype(jnp.float32)
    small = params["small"]
    F, H1, OUT = wbb.shape[1], w1.shape[1], w3.shape[1]
    bb, g1, be1 = small[0, :F], small[1, :H1], small[2, :H1]
    g2, be2, b3 = small[3, :H1], small[4, :H1], small[5, :OUT]

    N, C, H, W = x.shape
    B = N // num_views
    xf = jnp.transpose(x, (0, 2, 3, 1)).astype(jnp.float32)       # (N,H,W,C)
    z = jnp.einsum("nhwc,cf->nhwf", xf, wbb,
                   precision=lax.Precision.HIGHEST) + bb
    f = jnp.mean(jnp.maximum(z, 0.0), axis=(1, 2))                # (N, F)

    def bn_relu(h, g, be):
        h3 = h.reshape(num_views, B, -1)
        mu = jnp.mean(h3, axis=1, keepdims=True)
        var = jnp.mean((h3 - mu) ** 2, axis=1, keepdims=True)
        hn = ((h3 - mu) / jnp.sqrt(var + BN_EPS)).reshape(N, -1)
        return jnp.maximum(hn * g + be, 0.0)

    def bmm(a, w):  # mirror the in-kernel bf16 activation cast
        return jnp.dot(a.astype(jnp.bfloat16).astype(jnp.float32), w,
                       precision=lax.Precision.HIGHEST)

    h = bn_relu(bmm(f, w1), g1, be1)
    h = bn_relu(bmm(h, w2), g2, be2)
    out = bmm(h, w3) + b3
    return out, f


# ----------------------------- model ----------------------------------------- #

class BarlowTwins:
    """Pallas-TPU BarlowTwins: synthetic backbone + 3-layer projection head."""

    def __init__(self, params, num_ftrs=128, proj_hidden_dim=256, out_dim=256):
        self.params = params
        self.num_ftrs = num_ftrs
        self.proj_hidden_dim = proj_hidden_dim
        self.out_dim = out_dim

    def forward(self, x0, x1=None, return_features=False):
        if x1 is None:
            out, f = _forward_impl(x0, self.params, num_views=1)
            return (out, f) if return_features else out
        B = x0.shape[0]
        x = jnp.concatenate([x0, x1], axis=0)     # both views -> one fused call
        out, f = _forward_impl(x, self.params, num_views=2)
        out0, out1, f0, f1 = out[:B], out[B:], f[:B], f[B:]
        if return_features:
            return (out0, f0), (out1, f1)
        return out0, out1

    __call__ = forward


# ----------------------------- main ------------------------------------------ #

if __name__ == "__main__":
    B, C, H, W = 8, 4, 16, 16
    NUM_FTRS, PROJ_HIDDEN, OUT_DIM = 128, 256, 256

    key = jax.random.PRNGKey(0)
    k_x0, k_x1, k_p = jax.random.split(key, 3)
    x0 = jax.random.normal(k_x0, (B, C, H, W), jnp.float32)
    x1 = jax.random.normal(k_x1, (B, C, H, W), jnp.float32)

    params = init_params(k_p, C, NUM_FTRS, PROJ_HIDDEN, OUT_DIM)
    model = BarlowTwins(params, NUM_FTRS, PROJ_HIDDEN, OUT_DIM)

    (out0, f0), (out1, f1) = model.forward(x0, x1, return_features=True)
    out_single = model.forward(x0)                     # x1 is None path
    jax.block_until_ready((out0, f0, out1, f1, out_single))

    assert out0.shape == (B, OUT_DIM) and out1.shape == (B, OUT_DIM)
    assert f0.shape == (B, NUM_FTRS) and f1.shape == (B, NUM_FTRS)
    assert out_single.shape == (B, OUT_DIM)
    assert bool(jnp.all(jnp.isfinite(out0))) and bool(jnp.all(jnp.isfinite(out1)))

    # correctness vs. pure-JAX reference (bf16 weight path -> loose tolerance)
    ref_out, ref_f = _reference_forward(jnp.concatenate([x0, x1], 0), params, 2)
    max_out = float(jnp.max(jnp.abs(jnp.concatenate([out0, out1], 0) - ref_out)))
    max_f = float(jnp.max(jnp.abs(jnp.concatenate([f0, f1], 0) - ref_f)))
    assert max_out < 5e-2 and max_f < 5e-2, (max_out, max_f)

    print("KERNEL_OK")
</pallas_src>

<mosaic_0001>
module attributes {stable_mosaic.version = 11 : i64} {
  func.func @_barlow_fused_kernel(%arg0: memref<4096x4xf32, #tpu.memory_space<vmem>>, %arg1: memref<4x128xf32, #tpu.memory_space<vmem>>, %arg2: memref<128x256xbf16, #tpu.memory_space<vmem>>, %arg3: memref<256x256xbf16, #tpu.memory_space<vmem>>, %arg4: memref<256x256xbf16, #tpu.memory_space<vmem>>, %arg5: memref<8x256xf32, #tpu.memory_space<vmem>>, %arg6: memref<16x256xf32, #tpu.memory_space<vmem>>, %arg7: memref<16x128xf32, #tpu.memory_space<vmem>>) attributes {dimension_semantics = [], scalar_prefetch = 0 : i64, scratch_operands = 0 : i64, tpu.core_type = #tpu.core_type<tc>} {
    %c0 = arith.constant 0 : index
    %c0_0 = arith.constant 0 : index
    %0 = vector.load %arg5[%c0, %c0_0] : memref<8x256xf32, #tpu.memory_space<vmem>>, vector<8x256xf32>
    %1 = vector.extract_strided_slice %0 {offsets = [0, 0], sizes = [1, 128], strides = [1, 1]} : vector<8x256xf32> to vector<1x128xf32>
    %2 = vector.extract_strided_slice %0 {offsets = [1, 0], sizes = [1, 256], strides = [1, 1]} : vector<8x256xf32> to vector<1x256xf32>
    %3 = vector.extract_strided_slice %0 {offsets = [2, 0], sizes = [1, 256], strides = [1, 1]} : vector<8x256xf32> to vector<1x256xf32>
    %4 = vector.extract_strided_slice %0 {offsets = [3, 0], sizes = [1, 256], strides = [1, 1]} : vector<8x256xf32> to vector<1x256xf32>
    %5 = vector.extract_strided_slice %0 {offsets = [4, 0], sizes = [1, 256], strides = [1, 1]} : vector<8x256xf32> to vector<1x256xf32>
    %6 = vector.extract_strided_slice %0 {offsets = [5, 0], sizes = [1, 256], strides = [1, 1]} : vector<8x256xf32> to vector<1x256xf32>
    %c0_1 = arith.constant 0 : index
    %c0_2 = arith.constant 0 : index
    %7 = vector.load %arg0[%c0_1, %c0_2] : memref<4096x4xf32, #tpu.memory_space<vmem>>, vector<4096x4xf32>
    %c0_3 = arith.constant 0 : index
    %c0_4 = arith.constant 0 : index
    %8 = vector.load %arg1[%c0_3, %c0_4] : memref<4x128xf32, #tpu.memory_space<vmem>>, vector<4x128xf32>
    %cst = arith.constant dense<0.000000e+00> : vector<4096x128xf32>
    %9 = tpu.matmul %7, %8, %cst {dimension_numbers = #tpu.dot_dimension_numbers<[1], [0], [0], [1], [0, 0, 1, 1], [], []>} : vector<4096x4xf32>, vector<4x128xf32>, vector<4096x128xf32> -> vector<4096x128xf32>
    %10 = vector.broadcast %1 : vector<1x128xf32> to vector<4096x128xf32>
    %11 = arith.addf %9, %10 : vector<4096x128xf32>
    %cst_5 = arith.constant 0.000000e+00 : f32
    %12 = vector.broadcast %cst_5 : f32 to vector<4096x128xf32>
    %13 = arith.maximumf %11, %12 : vector<4096x128xf32>
    %14 = tpu.iota {dimensions = array<i32: 0>} : vector<16x4096xi32>
    %15 = tpu.iota {dimensions = array<i32: 1>} : vector<16x4096xi32>
    %c256_i32 = arith.constant 256 : i32
    %16 = vector.broadcast %c256_i32 : i32 to vector<16x4096xi32>
    %17 = arith.muli %14, %16 : vector<16x4096xi32>
    %18 = arith.cmpi sge, %15, %17 : vector<16x4096xi32>
    %c256_i32_6 = arith.constant 256 : i32
    %19 = vector.broadcast %c256_i32_6 : i32 to vector<16x4096xi32>
    %20 = arith.addi %17, %19 : vector<16x4096xi32>
    %21 = arith.cmpi slt, %15, %20 : vector<16x4096xi32>
    %22 = arith.andi %18, %21 : vector<16x4096xi1>
    %cst_7 = arith.constant 3.906250e-03 : f32
    %cst_8 = arith.constant 0.000000e+00 : f32
    %23 = vector.broadcast %cst_7 : f32 to vector<16x4096xf32>
    %24 = vector.broadcast %cst_8 : f32 to vector<16x4096xf32>
    %25 = arith.select %22, %23, %24 : vector<16x4096xi1>, vector<16x4096xf32>
    %cst_9 = arith.constant dense<0.000000e+00> : vector<16x128xf32>
    %26 = tpu.matmul %25, %13, %cst_9 {dimension_numbers = #tpu.dot_dimension_numbers<[1], [0], [0], [1], [0, 0, 1, 1], [], []>} : vector<16x4096xf32>, vector<4096x128xf32>, vector<16x128xf32> -> vector<16x128xf32>
    %c0_10 = arith.constant 0 : index
    %c0_11 = arith.constant 0 : index
    %27 = vector.load %arg7[%c0_10, %c0_11] : memref<16x128xf32, #tpu.memory_space<vmem>>, vector<16x128xf32>
    tpu.vector_store %arg7[%c0_10, %c0_11], %26 {strides = array<i32>} : memref<16x128xf32, #tpu.memory_space<vmem>>, vector<16x128xf32>,
    %28 = arith.truncf %26 : vector<16x128xf32> to vector<16x128xbf16>
    %c0_12 = arith.constant 0 : index
    %c0_13 = arith.constant 0 : index
    %29 = vector.load %arg2[%c0_12, %c0_13] : memref<128x256xbf16, #tpu.memory_space<vmem>>, vector<128x256xbf16>
    %cst_14 = arith.constant dense<0.000000e+00> : vector<16x256xf32>
    %30 = tpu.matmul %28, %29, %cst_14 {dimension_numbers = #tpu.dot_dimension_numbers<[1], [0], [0], [1], [0, 0, 1, 1], [], []>} : vector<16x128xbf16>, vector<128x256xbf16>, vector<16x256xf32> -> vector<16x256xf32>
    %31 = vector.extract_strided_slice %30 {offsets = [0, 0], sizes = [8, 256], strides = [1, 1]} : vector<16x256xf32> to vector<8x256xf32>
    %cst_15 = arith.constant dense<0.000000e+00> : vector<256xf32>
    %32 = vector.multi_reduction <add>, %31, %cst_15 [0] : vector<8x256xf32> to vector<256xf32>
    %33 = vector.shape_cast %32 : vector<256xf32> to vector<1x256xf32>
    %cst_16 = arith.constant 8.000000e+00 : f32
    %34 = vector.broadcast %cst_16 : f32 to vector<1x256xf32>
    %35 = arith.divf %33, %34 : vector<1x256xf32>
    %36 = vector.broadcast %35 : vector<1x256xf32> to vector<8x256xf32>
    %37 = arith.subf %31, %36 : vector<8x256xf32>
    %38 = arith.mulf %37, %37 : vector<8x256xf32>
    %cst_17 = arith.constant dense<0.000000e+00> : vector<256xf32>
    %39 = vector.multi_reduction <add>, %38, %cst_17 [0] : vector<8x256xf32> to vector<256xf32>
    %40 = vector.shape_cast %39 : vector<256xf32> to vector<1x256xf32>
    %cst_18 = arith.constant 8.000000e+00 : f32
    %41 = vector.broadcast %cst_18 : f32 to vector<1x256xf32>
    %42 = arith.divf %40, %41 : vector<1x256xf32>
    %cst_19 = arith.constant 9.99999974E-6 : f32
    %43 = vector.broadcast %cst_19 : f32 to vector<1x256xf32>
    %44 = arith.addf %42, %43 : vector<1x256xf32>
    %45 = math.rsqrt %44 : vector<1x256xf32>
    %46 = vector.broadcast %45 : vector<1x256xf32> to vector<8x256xf32>
    %47 = arith.mulf %37, %46 : vector<8x256xf32>
    %48 = vector.extract_strided_slice %30 {offsets = [8, 0], sizes = [8, 256], strides = [1, 1]} : vector<16x256xf32> to vector<8x256xf32>
    %cst_20 = arith.constant dense<0.000000e+00> : vector<256xf32>
    %49 = vector.multi_reduction <add>, %48, %cst_20 [0] : vector<8x256xf32> to vector<256xf32>
    %50 = vector.shape_cast %49 : vector<256xf32> to vector<1x256xf32>
    %cst_21 = arith.constant 8.000000e+00 : f32
    %51 = vector.broadcast %cst_21 : f32 to vector<1x256xf32>
    %52 = arith.divf %50, %51 : vector<1x256xf32>
    %53 = vector.broadcast %52 : vector<1x256xf32> to vector<8x256xf32>
    %54 = arith.subf %48, %53 : vector<8x256xf32>
    %55 = arith.mulf %54, %54 : vector<8x256xf32>
    %cst_22 = arith.constant dense<0.000000e+00> : vector<256xf32>
    %56 = vector.multi_reduction <add>, %55, %cst_22 [0] : vector<8x256xf32> to vector<256xf32>
    %57 = vector.shape_cast %56 : vector<256xf32> to vector<1x256xf32>
    %cst_23 = arith.constant 8.000000e+00 : f32
    %58 = vector.broadcast %cst_23 : f32 to vector<1x256xf32>
    %59 = arith.divf %57, %58 : vector<1x256xf32>
    %cst_24 = arith.constant 9.99999974E-6 : f32
    %60 = vector.broadcast %cst_24 : f32 to vector<1x256xf32>
    %61 = arith.addf %59, %60 : vector<1x256xf32>
    %62 = math.rsqrt %61 : vector<1x256xf32>
    %63 = vector.broadcast %62 : vector<1x256xf32> to vector<8x256xf32>
    %64 = arith.mulf %54, %63 : vector<8x256xf32>
    %65 = tpu.concatenate %47, %64 in 0 : vector<8x256xf32>, vector<8x256xf32> -> vector<16x256xf32>
    %66 = vector.broadcast %2 : vector<1x256xf32> to vector<16x256xf32>
    %67 = arith.mulf %65, %66 : vector<16x256xf32>
    %68 = vector.broadcast %3 : vector<1x256xf32> to vector<16x256xf32>
    %69 = arith.addf %67, %68 : vector<16x256xf32>
    %cst_25 = arith.constant 0.000000e+00 : f32
    %70 = vector.broadcast %cst_25 : f32 to vector<16x256xf32>
    %71 = arith.maximumf %69, %70 : vector<16x256xf32>
    %72 = arith.truncf %71 : vector<16x256xf32> to vector<16x256xbf16>
    %c0_26 = arith.constant 0 : index
    %c0_27 = arith.constant 0 : index
    %73 = vector.load %arg3[%c0_26, %c0_27] : memref<256x256xbf16, #tpu.memory_space<vmem>>, vector<256x256xbf16>
    %cst_28 = arith.constant dense<0.000000e+00> : vector<16x256xf32>
    %74 = tpu.matmul %72, %73, %cst_28 {dimension_numbers = #tpu.dot_dimension_numbers<[1], [0], [0], [1], [0, 0, 1, 1], [], []>} : vector<16x256xbf16>, vector<256x256xbf16>, vector<16x256xf32> -> vector<16x256xf32>
    %75 = vector.extract_strided_slice %74 {offsets = [0, 0], sizes = [8, 256], strides = [1, 1]} : vector<16x256xf32> to vector<8x256xf32>
    %cst_29 = arith.constant dense<0.000000e+00> : vector<256xf32>
    %76 = vector.multi_reduction <add>, %75, %cst_29 [0] : vector<8x256xf32> to vector<256xf32>
    %77 = vector.shape_cast %76 : vector<256xf32> to vector<1x256xf32>
    %cst_30 = arith.constant 8.000000e+00 : f32
    %78 = vector.broadcast %cst_30 : f32 to vector<1x256xf32>
    %79 = arith.divf %77, %78 : vector<1x256xf32>
    %80 = vector.broadcast %79 : vector<1x256xf32> to vector<8x256xf32>
    %81 = arith.subf %75, %80 : vector<8x256xf32>
    %82 = arith.mulf %81, %81 : vector<8x256xf32>
    %cst_31 = arith.constant dense<0.000000e+00> : vector<256xf32>
    %83 = vector.multi_reduction <add>, %82, %cst_31 [0] : vector<8x256xf32> to vector<256xf32>
    %84 = vector.shape_cast %83 : vector<256xf32> to vector<1x256xf32>
    %cst_32 = arith.constant 8.000000e+00 : f32
    %85 = vector.broadcast %cst_32 : f32 to vector<1x256xf32>
    %86 = arith.divf %84, %85 : vector<1x256xf32>
    %cst_33 = arith.constant 9.99999974E-6 : f32
    %87 = vector.broadcast %cst_33 : f32 to vector<1x256xf32>
    %88 = arith.addf %86, %87 : vector<1x256xf32>
    %89 = math.rsqrt %88 : vector<1x256xf32>
    %90 = vector.broadcast %89 : vector<1x256xf32> to vector<8x256xf32>
    %91 = arith.mulf %81, %90 : vector<8x256xf32>
    %92 = vector.extract_strided_slice %74 {offsets = [8, 0], sizes = [8, 256], strides = [1, 1]} : vector<16x256xf32> to vector<8x256xf32>
    %cst_34 = arith.constant dense<0.000000e+00> : vector<256xf32>
    %93 = vector.multi_reduction <add>, %92, %cst_34 [0] : vector<8x256xf32> to vector<256xf32>
    %94 = vector.shape_cast %93 : vector<256xf32> to vector<1x256xf32>
    %cst_35 = arith.constant 8.000000e+00 : f32
    %95 = vector.broadcast %cst_35 : f32 to vector<1x256xf32>
    %96 = arith.divf %94, %95 : vector<1x256xf32>
    %97 = vector.broadcast %96 : vector<1x256xf32> to vector<8x256xf32>
    %98 = arith.subf %92, %97 : vector<8x256xf32>
    %99 = arith.mulf %98, %98 : vector<8x256xf32>
    %cst_36 = arith.constant dense<0.000000e+00> : vector<256xf32>
    %100 = vector.multi_reduction <add>, %99, %cst_36 [0] : vector<8x256xf32> to vector<256xf32>
    %101 = vector.shape_cast %100 : vector<256xf32> to vector<1x256xf32>
    %cst_37 = arith.constant 8.000000e+00 : f32
    %102 = vector.broadcast %cst_37 : f32 to vector<1x256xf32>
    %103 = arith.divf %101, %102 : vector<1x256xf32>
    %cst_38 = arith.constant 9.99999974E-6 : f32
    %104 = vector.broadcast %cst_38 : f32 to vector<1x256xf32>
    %105 = arith.addf %103, %104 : vector<1x256xf32>
    %106 = math.rsqrt %105 : vector<1x256xf32>
    %107 = vector.broadcast %106 : vector<1x256xf32> to vector<8x256xf32>
    %108 = arith.mulf %98, %107 : vector<8x256xf32>
    %109 = tpu.concatenate %91, %108 in 0 : vector<8x256xf32>, vector<8x256xf32> -> vector<16x256xf32>
    %110 = vector.broadcast %4 : vector<1x256xf32> to vector<16x256xf32>
    %111 = arith.mulf %109, %110 : vector<16x256xf32>
    %112 = vector.broadcast %5 : vector<1x256xf32> to vector<16x256xf32>
    %113 = arith.addf %111, %112 : vector<16x256xf32>
    %cst_39 = arith.constant 0.000000e+00 : f32
    %114 = vector.broadcast %cst_39 : f32 to vector<16x256xf32>
    %115 = arith.maximumf %113, %114 : vector<16x256xf32>
    %116 = arith.truncf %115 : vector<16x256xf32> to vector<16x256xbf16>
    %c0_40 = arith.constant 0 : index
    %c0_41 = arith.constant 0 : index
    %117 = vector.load %arg4[%c0_40, %c0_41] : memref<256x256xbf16, #tpu.memory_space<vmem>>, vector<256x256xbf16>
    %cst_42 = arith.constant dense<0.000000e+00> : vector<16x256xf32>
    %118 = tpu.matmul %116, %117, %cst_42 {dimension_numbers = #tpu.dot_dimension_numbers<[1], [0], [0], [1], [0, 0, 1, 1], [], []>} : vector<16x256xbf16>, vector<256x256xbf16>, vector<16x256xf32> -> vector<16x256xf32>
    %119 = vector.broadcast %6 : vector<1x256xf32> to vector<16x256xf32>
    %120 = arith.addf %118, %119 : vector<16x256xf32>
    %c0_43 = arith.constant 0 : index
    %c0_44 = arith.constant 0 : index
    %121 = vector.load %arg6[%c0_43, %c0_44] : memref<16x256xf32, #tpu.memory_space<vmem>>, vector<16x256xf32>
    tpu.vector_store %arg6[%c0_43, %c0_44], %120 {strides = array<i32>} : memref<16x256xf32, #tpu.memory_space<vmem>>, vector<16x256xf32>,
    return
  }
}

</mosaic_0001>

<llo_original>
// kernel: _forward_impl.1
$region0: #{_forward_impl.1}
  #allocation0 [shape = 'u32[]', space=smem, size = 0x4, offset = 0x4, fixed_abs, tag = 'smem constant byte address 0x4 - core index']
  #allocation1 [shape = 'u32[144,128]{1,0:T(1,128)}', space=vmem, size = 0x12000, scoped, tag = 'internal scratch']
  %s0 = inlined_call_operand.vmem [shape: f32[4096,4], index: 0, kind: input, shape index: {}]
  %s1 = inlined_call_operand.vmem [shape: f32[4,128], index: 1, kind: input, shape index: {}]
  %s2 = inlined_call_operand.vmem [shape: bf16[128,256], index: 2, kind: input, shape index: {}]
  %s3 = inlined_call_operand.vmem [shape: bf16[256,256], index: 3, kind: input, shape index: {}]
  %s4 = inlined_call_operand.vmem [shape: bf16[256,256], index: 4, kind: input, shape index: {}]
  %s5 = inlined_call_operand.vmem [shape: f32[8,256], index: 5, kind: input, shape index: {}]
  %s6 = inlined_call_operand.hbm [shape: f32[16,256], index: 6, kind: output, shape index: {0}]
  %s7 = inlined_call_operand.hbm [shape: f32[16,128], index: 7, kind: output, shape index: {1}]
  %8 = xla_tuple %s6, %s7
  %s9 = sld [smem:[#allocation0]]
  $region42: #{_forward_impl.1} parent=0
    _
  %s11 = ssub.s32 1, %s9
  %s12 = scalar_select 0, %s11, %s9
  $region1: #{_forward_impl.1} parent=0
    #allocation2 [shape = 'u8[16384]{0}', space=vmem, size = 0x4000, scoped, tag = 'output window, operand 0, single buffered']
    #allocation3 [shape = 's32[1]{0}', space=sflag, size = 0x4, scoped, tag = 'scoped memory for _forward_impl.1']
    #allocation4 [shape = 'u8[8192]{0}', space=vmem, size = 0x2000, scoped, tag = 'output window, operand 1, single buffered']
    #allocation5 [shape = 's32[1]{0}', space=sflag, size = 0x4, scoped, tag = 'scoped memory for _forward_impl.1']
    %13 = vsyncpa [#allocation3], 0
    %14 = vsyncpa [#allocation5], 0
    // Predicated region
    $region2: #{_forward_impl.1} parent=1 // pred_check
      _
    $region3: #{_forward_impl.1} parent=1 // pred_check_branch
      %16 = sbr.rel (0) target = $region5
    $region4: #{_forward_impl.1} parent=1 // pred_region
      _
    $region5: #{_forward_impl.1} parent=1 // pred_fallthru
      _
    // Predicated region
    $region6: #{_forward_impl.1} parent=1 // pred_check
      _
    $region7: #{_forward_impl.1} parent=1 // pred_check_branch
      %18 = sbr.rel (0) target = $region9
    $region8: #{_forward_impl.1} parent=1 // pred_region
      _
    $region9: #{_forward_impl.1} parent=1 // pred_fallthru
      _
    // Predicated region
    $region10: #{_forward_impl.1} parent=1 // pred_check
      _
    $region11: #{_forward_impl.1} parent=1 // pred_check_branch
      %20 = sbr.rel (0) target = $region13
    $region12: #{_forward_impl.1} parent=1 // pred_region
      _
    $region13: #{_forward_impl.1} parent=1 // pred_fallthru
      _
    // Predicated region
    $region14: #{_forward_impl.1} parent=1 // pred_check
      _
    $region15: #{_forward_impl.1} parent=1 // pred_check_branch
      %22 = sbr.rel (0) target = $region17
    $region16: #{_forward_impl.1} parent=1 // pred_region
      _
    $region17: #{_forward_impl.1} parent=1 // pred_fallthru
      _
    // Predicated region
    $region18: #{_forward_impl.1} parent=1 // pred_check
      _
    $region19: #{_forward_impl.1} parent=1 // pred_check_branch
      %24 = sbr.rel (0) target = $region21
    $region20: #{_forward_impl.1} parent=1 // pred_region
      _
    $region21: #{_forward_impl.1} parent=1 // pred_fallthru
      _
    // Predicated region
    $region22: #{_forward_impl.1} parent=1 // pred_check
      _
    $region23: #{_forward_impl.1} parent=1 // pred_check_branch
      %26 = sbr.rel (0) target = $region25
    $region24: #{_forward_impl.1} parent=1 // pred_region
      _
    $region25: #{_forward_impl.1} parent=1 // pred_fallthru
      _
    %v28 = vld [vmem:[%s5] sm:$0xff]
    %v29 = vld [vmem:[%s5 + $0x8] sm:$0xff]
    %v30 = vld [vmem:[%s0] sm:$0xff]
    %v31 = vld [vmem:[%s0 + $0x8] sm:$0xff]
    %v32 = vld [vmem:[%s0 + $0x10] sm:$0xff]
    %v33 = vld [vmem:[%s0 + $0x18] sm:$0xff]
    %v34 = vld [vmem:[%s0 + $0x20] sm:$0xff]
    %v35 = vld [vmem:[%s0 + $0x28] sm:$0xff]
    %v36 = vld [vmem:[%s0 + $0x30] sm:$0xff]
    %v37 = vld [vmem:[%s0 + $0x38] sm:$0xff]
    %v38 = vld [vmem:[%s0 + $0x40] sm:$0xff]
    %v39 = vld [vmem:[%s0 + $0x48] sm:$0xff]
    %v40 = vld [vmem:[%s0 + $0x50] sm:$0xff]
    %v41 = vld [vmem:[%s0 + $0x58] sm:$0xff]
    %v42 = vld [vmem:[%s0 + $0x60] sm:$0xff]
    %v43 = vld [vmem:[%s0 + $0x68] sm:$0xff]
    %v44 = vld [vmem:[%s0 + $0x70] sm:$0xff]
    %v45 = vld [vmem:[%s0 + $0x78] sm:$0xff]
    %v46 = vld [vmem:[%s0 + $0x80] sm:$0xff]
    %v47 = vld [vmem:[%s0 + $0x88] sm:$0xff]
    %v48 = vld [vmem:[%s0 + $0x90] sm:$0xff]
    %v49 = vld [vmem:[%s0 + $0x98] sm:$0xff]
    %v50 = vld [vmem:[%s0 + $0xa0] sm:$0xff]
    %v51 = vld [vmem:[%s0 + $0xa8] sm:$0xff]
    %v52 = vld [vmem:[%s0 + $0xb0] sm:$0xff]
    %v53 = vld [vmem:[%s0 + $0xb8] sm:$0xff]
    %v54 = vld [vmem:[%s0 + $0xc0] sm:$0xff]
    %v55 = vld [vmem:[%s0 + $0xc8] sm:$0xff]
    %v56 = vld [vmem:[%s0 + $0xd0] sm:$0xff]
    %v57 = vld [vmem:[%s0 + $0xd8] sm:$0xff]
    %v58 = vld [vmem:[%s0 + $0xe0] sm:$0xff]
    %v59 = vld [vmem:[%s0 + $0xe8] sm:$0xff]
    %v60 = vld [vmem:[%s0 + $0xf0] sm:$0xff]
    %v61 = vld [vmem:[%s0 + $0xf8] sm:$0xff]
    %v62 = vld [vmem:[%s0 + $0x100] sm:$0xff]
    %v63 = vld [vmem:[%s0 + $0x108] sm:$0xff]
    %v64 = vld [vmem:[%s0 + $0x110] sm:$0xff]
    %v65 = vld [vmem:[%s0 + $0x118] sm:$0xff]
    %v66 = vld [vmem:[%s0 + $0x120] sm:$0xff]
    %v67 = vld [vmem:[%s0 + $0x128] sm:$0xff]
    %v68 = vld [vmem:[%s0 + $0x130] sm:$0xff]
    %v69 = vld [vmem:[%s0 + $0x138] sm:$0xff]
    %v70 = vld [vmem:[%s0 + $0x140] sm:$0xff]
    %v71 = vld [vmem:[%s0 + $0x148] sm:$0xff]
    %v72 = vld [vmem:[%s0 + $0x150] sm:$0xff]
    %v73 = vld [vmem:[%s0 + $0x158] sm:$0xff]
    %v74 = vld [vmem:[%s0 + $0x160] sm:$0xff]
    %v75 = vld [vmem:[%s0 + $0x168] sm:$0xff]
    %v76 = vld [vmem:[%s0 + $0x170] sm:$0xff]
    %v77 = vld [vmem:[%s0 + $0x178] sm:$0xff]
    %v78 = vld [vmem:[%s0 + $0x180] sm:$0xff]
    %v79 = vld [vmem:[%s0 + $0x188] sm:$0xff]
    %v80 = vld [vmem:[%s0 + $0x190] sm:$0xff]
    %v81 = vld [vmem:[%s0 + $0x198] sm:$0xff]
    %v82 = vld [vmem:[%s0 + $0x1a0] sm:$0xff]
    %v83 = vld [vmem:[%s0 + $0x1a8] sm:$0xff]
    %v84 = vld [vmem:[%s0 + $0x1b0] sm:$0xff]
    %v85 = vld [vmem:[%s0 + $0x1b8] sm:$0xff]
    %v86 = vld [vmem:[%s0 + $0x1c0] sm:$0xff]
    %v87 = vld [vmem:[%s0 + $0x1c8] sm:$0xff]
    %v88 = vld [vmem:[%s0 + $0x1d0] sm:$0xff]
    %v89 = vld [vmem:[%s0 + $0x1d8] sm:$0xff]
    %v90 = vld [vmem:[%s0 + $0x1e0] sm:$0xff]
    %v91 = vld [vmem:[%s0 + $0x1e8] sm:$0xff]
    %v92 = vld [vmem:[%s0 + $0x1f0] sm:$0xff]
    %v93 = vld [vmem:[%s0 + $0x1f8] sm:$0xff]
    %v94 = vld [vmem:[%s0 + $0x200] sm:$0xff]
    %v95 = vld [vmem:[%s0 + $0x208] sm:$0xff]
    %v96 = vld [vmem:[%s0 + $0x210] sm:$0xff]
    %v97 = vld [vmem:[%s0 + $0x218] sm:$0xff]
    %v98 = vld [vmem:[%s0 + $0x220] sm:$0xff]
    %v99 = vld [vmem:[%s0 + $0x228] sm:$0xff]
    %v100 = vld [vmem:[%s0 + $0x230] sm:$0xff]
    %v101 = vld [vmem:[%s0 + $0x238] sm:$0xff]
    %v102 = vld [vmem:[%s0 + $0x240] sm:$0xff]
    %v103 = vld [vmem:[%s0 + $0x248] sm:$0xff]
    %v104 = vld [vmem:[%s0 + $0x250] sm:$0xff]
    %v105 = vld [vmem:[%s0 + $0x258] sm:$0xff]
    %v106 = vld [vmem:[%s0 + $0x260] sm:$0xff]
    %v107 = vld [vmem:[%s0 + $0x268] sm:$0xff]
    %v108 = vld [vmem:[%s0 + $0x270] sm:$0xff]
    %v109 = vld [vmem:[%s0 + $0x278] sm:$0xff]
    %v110 = vld [vmem:[%s0 + $0x280] sm:$0xff]
    %v111 = vld [vmem:[%s0 + $0x288] sm:$0xff]
    %v112 = vld [vmem:[%s0 + $0x290] sm:$0xff]
    %v113 = vld [vmem:[%s0 + $0x298] sm:$0xff]
    %v114 = vld [vmem:[%s0 + $0x2a0] sm:$0xff]
    %v115 = vld [vmem:[%s0 + $0x2a8] sm:$0xff]
    %v116 = vld [vmem:[%s0 + $0x2b0] sm:$0xff]
    %v117 = vld [vmem:[%s0 + $0x2b8] sm:$0xff]
    %v118 = vld [vmem:[%s0 + $0x2c0] sm:$0xff]
    %v119 = vld [vmem:[%s0 + $0x2c8] sm:$0xff]
    %v120 = vld [vmem:[%s0 + $0x2d0] sm:$0xff]
    %v121 = vld [vmem:[%s0 + $0x2d8] sm:$0xff]
    %v122 = vld [vmem:[%s0 + $0x2e0] sm:$0xff]
    %v123 = vld [vmem:[%s0 + $0x2e8] sm:$0xff]
    %v124 = vld [vmem:[%s0 + $0x2f0] sm:$0xff]
    %v125 = vld [vmem:[%s0 + $0x2f8] sm:$0xff]
    %v126 = vld [vmem:[%s0 + $0x300] sm:$0xff]
    %v127 = vld [vmem:[%s0 + $0x308] sm:$0xff]
    %v128 = vld [vmem:[%s0 + $0x310] sm:$0xff]
    %v129 = vld [vmem:[%s0 + $0x318] sm:$0xff]
    %v130 = vld [vmem:[%s0 + $0x320] sm:$0xff]
    %v131 = vld [vmem:[%s0 + $0x328] sm:$0xff]
    %v132 = vld [vmem:[%s0 + $0x330] sm:$0xff]
    %v133 = vld [vmem:[%s0 + $0x338] sm:$0xff]
    %v134 = vld [vmem:[%s0 + $0x340] sm:$0xff]
    %v135 = vld [vmem:[%s0 + $0x348] sm:$0xff]
    %v136 = vld [vmem:[%s0 + $0x350] sm:$0xff]
    %v137 = vld [vmem:[%s0 + $0x358] sm:$0xff]
    %v138 = vld [vmem:[%s0 + $0x360] sm:$0xff]
    %v139 = vld [vmem:[%s0 + $0x368] sm:$0xff]
    %v140 = vld [vmem:[%s0 + $0x370] sm:$0xff]
    %v141 = vld [vmem:[%s0 + $0x378] sm:$0xff]
    %v142 = vld [vmem:[%s0 + $0x380] sm:$0xff]
    %v143 = vld [vmem:[%s0 + $0x388] sm:$0xff]
    %v144 = vld [vmem:[%s0 + $0x390] sm:$0xff]
    %v145 = vld [vmem:[%s0 + $0x398] sm:$0xff]
    %v146 = vld [vmem:[%s0 + $0x3a0] sm:$0xff]
    %v147 = vld [vmem:[%s0 + $0x3a8] sm:$0xff]
    %v148 = vld [vmem:[%s0 + $0x3b0] sm:$0xff]
    %v149 = vld [vmem:[%s0 + $0x3b8] sm:$0xff]
    %v150 = vld [vmem:[%s0 + $0x3c0] sm:$0xff]
    %v151 = vld [vmem:[%s0 + $0x3c8] sm:$0xff]
    %v152 = vld [vmem:[%s0 + $0x3d0] sm:$0xff]
    %v153 = vld [vmem:[%s0 + $0x3d8] sm:$0xff]
    %v154 = vld [vmem:[%s0 + $0x3e0] sm:$0xff]
    %v155 = vld [vmem:[%s0 + $0x3e8] sm:$0xff]
    %v156 = vld [vmem:[%s0 + $0x3f0] sm:$0xff]
    %v157 = vld [vmem:[%s0 + $0x3f8] sm:$0xff]
    %v158 = vld [vmem:[%s0 + $0x400] sm:$0xff]
    %v159 = vld [vmem:[%s0 + $0x408] sm:$0xff]
    %v160 = vld [vmem:[%s0 + $0x410] sm:$0xff]
    %v161 = vld [vmem:[%s0 + $0x418] sm:$0xff]
    %v162 = vld [vmem:[%s0 + $0x420] sm:$0xff]
    %v163 = vld [vmem:[%s0 + $0x428] sm:$0xff]
    %v164 = vld [vmem:[%s0 + $0x430] sm:$0xff]
    %v165 = vld [vmem:[%s0 + $0x438] sm:$0xff]
    %v166 = vld [vmem:[%s0 + $0x440] sm:$0xff]
    %v167 = vld [vmem:[%s0 + $0x448] sm:$0xff]
    %v168 = vld [vmem:[%s0 + $0x450] sm:$0xff]
    %v169 = vld [vmem:[%s0 + $0x458] sm:$0xff]
    %v170 = vld [vmem:[%s0 + $0x460] sm:$0xff]
    %v171 = vld [vmem:[%s0 + $0x468] sm:$0xff]
    %v172 = vld [vmem:[%s0 + $0x470] sm:$0xff]
    %v173 = vld [vmem:[%s0 + $0x478] sm:$0xff]
    %v174 = vld [vmem:[%s0 + $0x480] sm:$0xff]
    %v175 = vld [vmem:[%s0 + $0x488] sm:$0xff]
    %v176 = vld [vmem:[%s0 + $0x490] sm:$0xff]
    %v177 = vld [vmem:[%s0 + $0x498] sm:$0xff]
    %v178 = vld [vmem:[%s0 + $0x4a0] sm:$0xff]
    %v179 = vld [vmem:[%s0 + $0x4a8] sm:$0xff]
    %v180 = vld [vmem:[%s0 + $0x4b0] sm:$0xff]
    %v181 = vld [vmem:[%s0 + $0x4b8] sm:$0xff]
    %v182 = vld [vmem:[%s0 + $0x4c0] sm:$0xff]
    %v183 = vld [vmem:[%s0 + $0x4c8] sm:$0xff]
    %v184 = vld [vmem:[%s0 + $0x4d0] sm:$0xff]
    %v185 = vld [vmem:[%s0 + $0x4d8] sm:$0xff]
    %v186 = vld [vmem:[%s0 + $0x4e0] sm:$0xff]
    %v187 = vld [vmem:[%s0 + $0x4e8] sm:$0xff]
    %v188 = vld [vmem:[%s0 + $0x4f0] sm:$0xff]
    %v189 = vld [vmem:[%s0 + $0x4f8] sm:$0xff]
    %v190 = vld [vmem:[%s0 + $0x500] sm:$0xff]
    %v191 = vld [vmem:[%s0 + $0x508] sm:$0xff]
    %v192 = vld [vmem:[%s0 + $0x510] sm:$0xff]
    %v193 = vld [vmem:[%s0 + $0x518] sm:$0xff]
    %v194 = vld [vmem:[%s0 + $0x520] sm:$0xff]
    %v195 = vld [vmem:[%s0 + $0x528] sm:$0xff]
    %v196 = vld [vmem:[%s0 + $0x530] sm:$0xff]
    %v197 = vld [vmem:[%s0 + $0x538] sm:$0xff]
    %v198 = vld [vmem:[%s0 + $0x540] sm:$0xff]
    %v199 = vld [vmem:[%s0 + $0x548] sm:$0xff]
    %v200 = vld [vmem:[%s0 + $0x550] sm:$0xff]
    %v201 = vld [vmem:[%s0 + $0x558] sm:$0xff]
    %v202 = vld [vmem:[%s0 + $0x560] sm:$0xff]
    %v203 = vld [vmem:[%s0 + $0x568] sm:$0xff]
    %v204 = vld [vmem:[%s0 + $0x570] sm:$0xff]
    %v205 = vld [vmem:[%s0 + $0x578] sm:$0xff]
    %v206 = vld [vmem:[%s0 + $0x580] sm:$0xff]
    %v207 = vld [vmem:[%s0 + $0x588] sm:$0xff]
    %v208 = vld [vmem:[%s0 + $0x590] sm:$0xff]
    %v209 = vld [vmem:[%s0 + $0x598] sm:$0xff]
    %v210 = vld [vmem:[%s0 + $0x5a0] sm:$0xff]
    %v211 = vld [vmem:[%s0 + $0x5a8] sm:$0xff]
    %v212 = vld [vmem:[%s0 + $0x5b0] sm:$0xff]
    %v213 = vld [vmem:[%s0 + $0x5b8] sm:$0xff]
    %v214 = vld [vmem:[%s0 + $0x5c0] sm:$0xff]
    %v215 = vld [vmem:[%s0 + $0x5c8] sm:$0xff]
    %v216 = vld [vmem:[%s0 + $0x5d0] sm:$0xff]
    %v217 = vld [vmem:[%s0 + $0x5d8] sm:$0xff]
    %v218 = vld [vmem:[%s0 + $0x5e0] sm:$0xff]
    %v219 = vld [vmem:[%s0 + $0x5e8] sm:$0xff]
    %v220 = vld [vmem:[%s0 + $0x5f0] sm:$0xff]
    %v221 = vld [vmem:[%s0 + $0x5f8] sm:$0xff]
    %v222 = vld [vmem:[%s0 + $0x600] sm:$0xff]
    %v223 = vld [vmem:[%s0 + $0x608] sm:$0xff]
    %v224 = vld [vmem:[%s0 + $0x610] sm:$0xff]
    %v225 = vld [vmem:[%s0 + $0x618] sm:$0xff]
    %v226 = vld [vmem:[%s0 + $0x620] sm:$0xff]
    %v227 = vld [vmem:[%s0 + $0x628] sm:$0xff]
    %v228 = vld [vmem:[%s0 + $0x630] sm:$0xff]
    %v229 = vld [vmem:[%s0 + $0x638] sm:$0xff]
    %v230 = vld [vmem:[%s0 + $0x640] sm:$0xff]
    %v231 = vld [vmem:[%s0 + $0x648] sm:$0xff]
    %v232 = vld [vmem:[%s0 + $0x650] sm:$0xff]
    %v233 = vld [vmem:[%s0 + $0x658] sm:$0xff]
    %v234 = vld [vmem:[%s0 + $0x660] sm:$0xff]
    %v235 = vld [vmem:[%s0 + $0x668] sm:$0xff]
    %v236 = vld [vmem:[%s0 + $0x670] sm:$0xff]
    %v237 = vld [vmem:[%s0 + $0x678] sm:$0xff]
    %v238 = vld [vmem:[%s0 + $0x680] sm:$0xff]
    %v239 = vld [vmem:[%s0 + $0x688] sm:$0xff]
    %v240 = vld [vmem:[%s0 + $0x690] sm:$0xff]
    %v241 = vld [vmem:[%s0 + $0x698] sm:$0xff]
    %v242 = vld [vmem:[%s0 + $0x6a0] sm:$0xff]
    %v243 = vld [vmem:[%s0 + $0x6a8] sm:$0xff]
    %v244 = vld [vmem:[%s0 + $0x6b0] sm:$0xff]
    %v245 = vld [vmem:[%s0 + $0x6b8] sm:$0xff]
    %v246 = vld [vmem:[%s0 + $0x6c0] sm:$0xff]
    %v247 = vld [vmem:[%s0 + $0x6c8] sm:$0xff]
    %v248 = vld [vmem:[%s0 + $0x6d0] sm:$0xff]
    %v249 = vld [vmem:[%s0 + $0x6d8] sm:$0xff]
    %v250 = vld [vmem:[%s0 + $0x6e0] sm:$0xff]
    %v251 = vld [vmem:[%s0 + $0x6e8] sm:$0xff]
    %v252 = vld [vmem:[%s0 + $0x6f0] sm:$0xff]
    %v253 = vld [vmem:[%s0 + $0x6f8] sm:$0xff]
    %v254 = vld [vmem:[%s0 + $0x700] sm:$0xff]
    %v255 = vld [vmem:[%s0 + $0x708] sm:$0xff]
    %v256 = vld [vmem:[%s0 + $0x710] sm:$0xff]
    %v257 = vld [vmem:[%s0 + $0x718] sm:$0xff]
    %v258 = vld [vmem:[%s0 + $0x720] sm:$0xff]
    %v259 = vld [vmem:[%s0 + $0x728] sm:$0xff]
    %v260 = vld [vmem:[%s0 + $0x730] sm:$0xff]
    %v261 = vld [vmem:[%s0 + $0x738] sm:$0xff]
    %v262 = vld [vmem:[%s0 + $0x740] sm:$0xff]
    %v263 = vld [vmem:[%s0 + $0x748] sm:$0xff]
    %v264 = vld [vmem:[%s0 + $0x750] sm:$0xff]
    %v265 = vld [vmem:[%s0 + $0x758] sm:$0xff]
    %v266 = vld [vmem:[%s0 + $0x760] sm:$0xff]
    %v267 = vld [vmem:[%s0 + $0x768] sm:$0xff]
    %v268 = vld [vmem:[%s0 + $0x770] sm:$0xff]
    %v269 = vld [vmem:[%s0 + $0x778] sm:$0xff]
    %v270 = vld [vmem:[%s0 + $0x780] sm:$0xff]
    %v271 = vld [vmem:[%s0 + $0x788] sm:$0xff]
    %v272 = vld [vmem:[%s0 + $0x790] sm:$0xff]
    %v273 = vld [vmem:[%s0 + $0x798] sm:$0xff]
    %v274 = vld [vmem:[%s0 + $0x7a0] sm:$0xff]
    %v275 = vld [vmem:[%s0 + $0x7a8] sm:$0xff]
    %v276 = vld [vmem:[%s0 + $0x7b0] sm:$0xff]
    %v277 = vld [vmem:[%s0 + $0x7b8] sm:$0xff]
    %v278 = vld [vmem:[%s0 + $0x7c0] sm:$0xff]
    %v279 = vld [vmem:[%s0 + $0x7c8] sm:$0xff]
    %v280 = vld [vmem:[%s0 + $0x7d0] sm:$0xff]
    %v281 = vld [vmem:[%s0 + $0x7d8] sm:$0xff]
    %v282 = vld [vmem:[%s0 + $0x7e0] sm:$0xff]
    %v283 = vld [vmem:[%s0 + $0x7e8] sm:$0xff]
    %v284 = vld [vmem:[%s0 + $0x7f0] sm:$0xff]
    %v285 = vld [vmem:[%s0 + $0x7f8] sm:$0xff]
    %v286 = vld [vmem:[%s0 + $0x800] sm:$0xff]
    %v287 = vld [vmem:[%s0 + $0x808] sm:$0xff]
    %v288 = vld [vmem:[%s0 + $0x810] sm:$0xff]
    %v289 = vld [vmem:[%s0 + $0x818] sm:$0xff]
    %v290 = vld [vmem:[%s0 + $0x820] sm:$0xff]
    %v291 = vld [vmem:[%s0 + $0x828] sm:$0xff]
    %v292 = vld [vmem:[%s0 + $0x830] sm:$0xff]
    %v293 = vld [vmem:[%s0 + $0x838] sm:$0xff]
    %v294 = vld [vmem:[%s0 + $0x840] sm:$0xff]
    %v295 = vld [vmem:[%s0 + $0x848] sm:$0xff]
    %v296 = vld [vmem:[%s0 + $0x850] sm:$0xff]
    %v297 = vld [vmem:[%s0 + $0x858] sm:$0xff]
    %v298 = vld [vmem:[%s0 + $0x860] sm:$0xff]
    %v299 = vld [vmem:[%s0 + $0x868] sm:$0xff]
    %v300 = vld [vmem:[%s0 + $0x870] sm:$0xff]
    %v301 = vld [vmem:[%s0 + $0x878] sm:$0xff]
    %v302 = vld [vmem:[%s0 + $0x880] sm:$0xff]
    %v303 = vld [vmem:[%s0 + $0x888] sm:$0xff]
    %v304 = vld [vmem:[%s0 + $0x890] sm:$0xff]
    %v305 = vld [vmem:[%s0 + $0x898] sm:$0xff]
    %v306 = vld [vmem:[%s0 + $0x8a0] sm:$0xff]
    %v307 = vld [vmem:[%s0 + $0x8a8] sm:$0xff]
    %v308 = vld [vmem:[%s0 + $0x8b0] sm:$0xff]
    %v309 = vld [vmem:[%s0 + $0x8b8] sm:$0xff]
    %v310 = vld [vmem:[%s0 + $0x8c0] sm:$0xff]
    %v311 = vld [vmem:[%s0 + $0x8c8] sm:$0xff]
    %v312 = vld [vmem:[%s0 + $0x8d0] sm:$0xff]
    %v313 = vld [vmem:[%s0 + $0x8d8] sm:$0xff]
    %v314 = vld [vmem:[%s0 + $0x8e0] sm:$0xff]
    %v315 = vld [vmem:[%s0 + $0x8e8] sm:$0xff]
    %v316 = vld [vmem:[%s0 + $0x8f0] sm:$0xff]
    %v317 = vld [vmem:[%s0 + $0x8f8] sm:$0xff]
    %v318 = vld [vmem:[%s0 + $0x900] sm:$0xff]
    %v319 = vld [vmem:[%s0 + $0x908] sm:$0xff]
    %v320 = vld [vmem:[%s0 + $0x910] sm:$0xff]
    %v321 = vld [vmem:[%s0 + $0x918] sm:$0xff]
    %v322 = vld [vmem:[%s0 + $0x920] sm:$0xff]
    %v323 = vld [vmem:[%s0 + $0x928] sm:$0xff]
    %v324 = vld [vmem:[%s0 + $0x930] sm:$0xff]
    %v325 = vld [vmem:[%s0 + $0x938] sm:$0xff]
    %v326 = vld [vmem:[%s0 + $0x940] sm:$0xff]
    %v327 = vld [vmem:[%s0 + $0x948] sm:$0xff]
    %v328 = vld [vmem:[%s0 + $0x950] sm:$0xff]
    %v329 = vld [vmem:[%s0 + $0x958] sm:$0xff]
    %v330 = vld [vmem:[%s0 + $0x960] sm:$0xff]
    %v331 = vld [vmem:[%s0 + $0x968] sm:$0xff]
    %v332 = vld [vmem:[%s0 + $0x970] sm:$0xff]
    %v333 = vld [vmem:[%s0 + $0x978] sm:$0xff]
    %v334 = vld [vmem:[%s0 + $0x980] sm:$0xff]
    %v335 = vld [vmem:[%s0 + $0x988] sm:$0xff]
    %v336 = vld [vmem:[%s0 + $0x990] sm:$0xff]
    %v337 = vld [vmem:[%s0 + $0x998] sm:$0xff]
    %v338 = vld [vmem:[%s0 + $0x9a0] sm:$0xff]
    %v339 = vld [vmem:[%s0 + $0x9a8] sm:$0xff]
    %v340 = vld [vmem:[%s0 + $0x9b0] sm:$0xff]
    %v341 = vld [vmem:[%s0 + $0x9b8] sm:$0xff]
    %v342 = vld [vmem:[%s0 + $0x9c0] sm:$0xff]
    %v343 = vld [vmem:[%s0 + $0x9c8] sm:$0xff]
    %v344 = vld [vmem:[%s0 + $0x9d0] sm:$0xff]
    %v345 = vld [vmem:[%s0 + $0x9d8] sm:$0xff]
    %v346 = vld [vmem:[%s0 + $0x9e0] sm:$0xff]
    %v347 = vld [vmem:[%s0 + $0x9e8] sm:$0xff]
    %v348 = vld [vmem:[%s0 + $0x9f0] sm:$0xff]
    %v349 = vld [vmem:[%s0 + $0x9f8] sm:$0xff]
    %v350 = vld [vmem:[%s0 + $0xa00] sm:$0xff]
    %v351 = vld [vmem:[%s0 + $0xa08] sm:$0xff]
    %v352 = vld [vmem:[%s0 + $0xa10] sm:$0xff]
    %v353 = vld [vmem:[%s0 + $0xa18] sm:$0xff]
    %v354 = vld [vmem:[%s0 + $0xa20] sm:$0xff]
    %v355 = vld [vmem:[%s0 + $0xa28] sm:$0xff]
    %v356 = vld [vmem:[%s0 + $0xa30] sm:$0xff]
    %v357 = vld [vmem:[%s0 + $0xa38] sm:$0xff]
    %v358 = vld [vmem:[%s0 + $0xa40] sm:$0xff]
    %v359 = vld [vmem:[%s0 + $0xa48] sm:$0xff]
    %v360 = vld [vmem:[%s0 + $0xa50] sm:$0xff]
    %v361 = vld [vmem:[%s0 + $0xa58] sm:$0xff]
    %v362 = vld [vmem:[%s0 + $0xa60] sm:$0xff]
    %v363 = vld [vmem:[%s0 + $0xa68] sm:$0xff]
    %v364 = vld [vmem:[%s0 + $0xa70] sm:$0xff]
    %v365 = vld [vmem:[%s0 + $0xa78] sm:$0xff]
    %v366 = vld [vmem:[%s0 + $0xa80] sm:$0xff]
    %v367 = vld [vmem:[%s0 + $0xa88] sm:$0xff]
    %v368 = vld [vmem:[%s0 + $0xa90] sm:$0xff]
    %v369 = vld [vmem:[%s0 + $0xa98] sm:$0xff]
    %v370 = vld [vmem:[%s0 + $0xaa0] sm:$0xff]
    %v371 = vld [vmem:[%s0 + $0xaa8] sm:$0xff]
    %v372 = vld [vmem:[%s0 + $0xab0] sm:$0xff]
    %v373 = vld [vmem:[%s0 + $0xab8] sm:$0xff]
    %v374 = vld [vmem:[%s0 + $0xac0] sm:$0xff]
    %v375 = vld [vmem:[%s0 + $0xac8] sm:$0xff]
    %v376 = vld [vmem:[%s0 + $0xad0] sm:$0xff]
    %v377 = vld [vmem:[%s0 + $0xad8] sm:$0xff]
    %v378 = vld [vmem:[%s0 + $0xae0] sm:$0xff]
    %v379 = vld [vmem:[%s0 + $0xae8] sm:$0xff]
    %v380 = vld [vmem:[%s0 + $0xaf0] sm:$0xff]
    %v381 = vld [vmem:[%s0 + $0xaf8] sm:$0xff]
    %v382 = vld [vmem:[%s0 + $0xb00] sm:$0xff]
    %v383 = vld [vmem:[%s0 + $0xb08] sm:$0xff]
    %v384 = vld [vmem:[%s0 + $0xb10] sm:$0xff]
    %v385 = vld [vmem:[%s0 + $0xb18] sm:$0xff]
    %v386 = vld [vmem:[%s0 + $0xb20] sm:$0xff]
    %v387 = vld [vmem:[%s0 + $0xb28] sm:$0xff]
    %v388 = vld [vmem:[%s0 + $0xb30] sm:$0xff]
    %v389 = vld [vmem:[%s0 + $0xb38] sm:$0xff]
    %v390 = vld [vmem:[%s0 + $0xb40] sm:$0xff]
    %v391 = vld [vmem:[%s0 + $0xb48] sm:$0xff]
    %v392 = vld [vmem:[%s0 + $0xb50] sm:$0xff]
    %v393 = vld [vmem:[%s0 + $0xb58] sm:$0xff]
    %v394 = vld [vmem:[%s0 + $0xb60] sm:$0xff]
    %v395 = vld [vmem:[%s0 + $0xb68] sm:$0xff]
    %v396 = vld [vmem:[%s0 + $0xb70] sm:$0xff]
    %v397 = vld [vmem:[%s0 + $0xb78] sm:$0xff]
    %v398 = vld [vmem:[%s0 + $0xb80] sm:$0xff]
    %v399 = vld [vmem:[%s0 + $0xb88] sm:$0xff]
    %v400 = vld [vmem:[%s0 + $0xb90] sm:$0xff]
    %v401 = vld [vmem:[%s0 + $0xb98] sm:$0xff]
    %v402 = vld [vmem:[%s0 + $0xba0] sm:$0xff]
    %v403 = vld [vmem:[%s0 + $0xba8] sm:$0xff]
    %v404 = vld [vmem:[%s0 + $0xbb0] sm:$0xff]
    %v405 = vld [vmem:[%s0 + $0xbb8] sm:$0xff]
    %v406 = vld [vmem:[%s0 + $0xbc0] sm:$0xff]
    %v407 = vld [vmem:[%s0 + $0xbc8] sm:$0xff]
    %v408 = vld [vmem:[%s0 + $0xbd0] sm:$0xff]
    %v409 = vld [vmem:[%s0 + $0xbd8] sm:$0xff]
    %v410 = vld [vmem:[%s0 + $0xbe0] sm:$0xff]
    %v411 = vld [vmem:[%s0 + $0xbe8] sm:$0xff]
    %v412 = vld [vmem:[%s0 + $0xbf0] sm:$0xff]
    %v413 = vld [vmem:[%s0 + $0xbf8] sm:$0xff]
    %v414 = vld [vmem:[%s0 + $0xc00] sm:$0xff]
    %v415 = vld [vmem:[%s0 + $0xc08] sm:$0xff]
    %v416 = vld [vmem:[%s0 + $0xc10] sm:$0xff]
    %v417 = vld [vmem:[%s0 + $0xc18] sm:$0xff]
    %v418 = vld [vmem:[%s0 + $0xc20] sm:$0xff]
    %v419 = vld [vmem:[%s0 + $0xc28] sm:$0xff]
    %v420 = vld [vmem:[%s0 + $0xc30] sm:$0xff]
    %v421 = vld [vmem:[%s0 + $0xc38] sm:$0xff]
    %v422 = vld [vmem:[%s0 + $0xc40] sm:$0xff]
    %v423 = vld [vmem:[%s0 + $0xc48] sm:$0xff]
    %v424 = vld [vmem:[%s0 + $0xc50] sm:$0xff]
    %v425 = vld [vmem:[%s0 + $0xc58] sm:$0xff]
    %v426 = vld [vmem:[%s0 + $0xc60] sm:$0xff]
    %v427 = vld [vmem:[%s0 + $0xc68] sm:$0xff]
    %v428 = vld [vmem:[%s0 + $0xc70] sm:$0xff]
    %v429 = vld [vmem:[%s0 + $0xc78] sm:$0xff]
    %v430 = vld [vmem:[%s0 + $0xc80] sm:$0xff]
    %v431 = vld [vmem:[%s0 + $0xc88] sm:$0xff]
    %v432 = vld [vmem:[%s0 + $0xc90] sm:$0xff]
    %v433 = vld [vmem:[%s0 + $0xc98] sm:$0xff]
    %v434 = vld [vmem:[%s0 + $0xca0] sm:$0xff]
    %v435 = vld [vmem:[%s0 + $0xca8] sm:$0xff]
    %v436 = vld [vmem:[%s0 + $0xcb0] sm:$0xff]
    %v437 = vld [vmem:[%s0 + $0xcb8] sm:$0xff]
    %v438 = vld [vmem:[%s0 + $0xcc0] sm:$0xff]
    %v439 = vld [vmem:[%s0 + $0xcc8] sm:$0xff]
    %v440 = vld [vmem:[%s0 + $0xcd0] sm:$0xff]
    %v441 = vld [vmem:[%s0 + $0xcd8] sm:$0xff]
    %v442 = vld [vmem:[%s0 + $0xce0] sm:$0xff]
    %v443 = vld [vmem:[%s0 + $0xce8] sm:$0xff]
    %v444 = vld [vmem:[%s0 + $0xcf0] sm:$0xff]
    %v445 = vld [vmem:[%s0 + $0xcf8] sm:$0xff]
    %v446 = vld [vmem:[%s0 + $0xd00] sm:$0xff]
    %v447 = vld [vmem:[%s0 + $0xd08] sm:$0xff]
    %v448 = vld [vmem:[%s0 + $0xd10] sm:$0xff]
    %v449 = vld [vmem:[%s0 + $0xd18] sm:$0xff]
    %v450 = vld [vmem:[%s0 + $0xd20] sm:$0xff]
    %v451 = vld [vmem:[%s0 + $0xd28] sm:$0xff]
    %v452 = vld [vmem:[%s0 + $0xd30] sm:$0xff]
    %v453 = vld [vmem:[%s0 + $0xd38] sm:$0xff]
    %v454 = vld [vmem:[%s0 + $0xd40] sm:$0xff]
    %v455 = vld [vmem:[%s0 + $0xd48] sm:$0xff]
    %v456 = vld [vmem:[%s0 + $0xd50] sm:$0xff]
    %v457 = vld [vmem:[%s0 + $0xd58] sm:$0xff]
    %v458 = vld [vmem:[%s0 + $0xd60] sm:$0xff]
    %v459 = vld [vmem:[%s0 + $0xd68] sm:$0xff]
    %v460 = vld [vmem:[%s0 + $0xd70] sm:$0xff]
    %v461 = vld [vmem:[%s0 + $0xd78] sm:$0xff]
    %v462 = vld [vmem:[%s0 + $0xd80] sm:$0xff]
    %v463 = vld [vmem:[%s0 + $0xd88] sm:$0xff]
    %v464 = vld [vmem:[%s0 + $0xd90] sm:$0xff]
    %v465 = vld [vmem:[%s0 + $0xd98] sm:$0xff]
    %v466 = vld [vmem:[%s0 + $0xda0] sm:$0xff]
    %v467 = vld [vmem:[%s0 + $0xda8] sm:$0xff]
    %v468 = vld [vmem:[%s0 + $0xdb0] sm:$0xff]
    %v469 = vld [vmem:[%s0 + $0xdb8] sm:$0xff]
    %v470 = vld [vmem:[%s0 + $0xdc0] sm:$0xff]
    %v471 = vld [vmem:[%s0 + $0xdc8] sm:$0xff]
    %v472 = vld [vmem:[%s0 + $0xdd0] sm:$0xff]
    %v473 = vld [vmem:[%s0 + $0xdd8] sm:$0xff]
    %v474 = vld [vmem:[%s0 + $0xde0] sm:$0xff]
    %v475 = vld [vmem:[%s0 + $0xde8] sm:$0xff]
    %v476 = vld [vmem:[%s0 + $0xdf0] sm:$0xff]
    %v477 = vld [vmem:[%s0 + $0xdf8] sm:$0xff]
    %v478 = vld [vmem:[%s0 + $0xe00] sm:$0xff]
    %v479 = vld [vmem:[%s0 + $0xe08] sm:$0xff]
    %v480 = vld [vmem:[%s0 + $0xe10] sm:$0xff]
    %v481 = vld [vmem:[%s0 + $0xe18] sm:$0xff]
    %v482 = vld [vmem:[%s0 + $0xe20] sm:$0xff]
    %v483 = vld [vmem:[%s0 + $0xe28] sm:$0xff]
    %v484 = vld [vmem:[%s0 + $0xe30] sm:$0xff]
    %v485 = vld [vmem:[%s0 + $0xe38] sm:$0xff]
    %v486 = vld [vmem:[%s0 + $0xe40] sm:$0xff]
    %v487 = vld [vmem:[%s0 + $0xe48] sm:$0xff]
    %v488 = vld [vmem:[%s0 + $0xe50] sm:$0xff]
    %v489 = vld [vmem:[%s0 + $0xe58] sm:$0xff]
    %v490 = vld [vmem:[%s0 + $0xe60] sm:$0xff]
    %v491 = vld [vmem:[%s0 + $0xe68] sm:$0xff]
    %v492 = vld [vmem:[%s0 + $0xe70] sm:$0xff]
    %v493 = vld [vmem:[%s0 + $0xe78] sm:$0xff]
    %v494 = vld [vmem:[%s0 + $0xe80] sm:$0xff]
    %v495 = vld [vmem:[%s0 + $0xe88] sm:$0xff]
    %v496 = vld [vmem:[%s0 + $0xe90] sm:$0xff]
    %v497 = vld [vmem:[%s0 + $0xe98] sm:$0xff]
    %v498 = vld [vmem:[%s0 + $0xea0] sm:$0xff]
    %v499 = vld [vmem:[%s0 + $0xea8] sm:$0xff]
    %v500 = vld [vmem:[%s0 + $0xeb0] sm:$0xff]
    %v501 = vld [vmem:[%s0 + $0xeb8] sm:$0xff]
    %v502 = vld [vmem:[%s0 + $0xec0] sm:$0xff]
    %v503 = vld [vmem:[%s0 + $0xec8] sm:$0xff]
    %v504 = vld [vmem:[%s0 + $0xed0] sm:$0xff]
    %v505 = vld [vmem:[%s0 + $0xed8] sm:$0xff]
    %v506 = vld [vmem:[%s0 + $0xee0] sm:$0xff]
    %v507 = vld [vmem:[%s0 + $0xee8] sm:$0xff]
    %v508 = vld [vmem:[%s0 + $0xef0] sm:$0xff]
    %v509 = vld [vmem:[%s0 + $0xef8] sm:$0xff]
    %v510 = vld [vmem:[%s0 + $0xf00] sm:$0xff]
    %v511 = vld [vmem:[%s0 + $0xf08] sm:$0xff]
    %v512 = vld [vmem:[%s0 + $0xf10] sm:$0xff]
    %v513 = vld [vmem:[%s0 + $0xf18] sm:$0xff]
    %v514 = vld [vmem:[%s0 + $0xf20] sm:$0xff]
    %v515 = vld [vmem:[%s0 + $0xf28] sm:$0xff]
    %v516 = vld [vmem:[%s0 + $0xf30] sm:$0xff]
    %v517 = vld [vmem:[%s0 + $0xf38] sm:$0xff]
    %v518 = vld [vmem:[%s0 + $0xf40] sm:$0xff]
    %v519 = vld [vmem:[%s0 + $0xf48] sm:$0xff]
    %v520 = vld [vmem:[%s0 + $0xf50] sm:$0xff]
    %v521 = vld [vmem:[%s0 + $0xf58] sm:$0xff]
    %v522 = vld [vmem:[%s0 + $0xf60] sm:$0xff]
    %v523 = vld [vmem:[%s0 + $0xf68] sm:$0xff]
    %v524 = vld [vmem:[%s0 + $0xf70] sm:$0xff]
    %v525 = vld [vmem:[%s0 + $0xf78] sm:$0xff]
    %v526 = vld [vmem:[%s0 + $0xf80] sm:$0xff]
    %v527 = vld [vmem:[%s0 + $0xf88] sm:$0xff]
    %v528 = vld [vmem:[%s0 + $0xf90] sm:$0xff]
    %v529 = vld [vmem:[%s0 + $0xf98] sm:$0xff]
    %v530 = vld [vmem:[%s0 + $0xfa0] sm:$0xff]
    %v531 = vld [vmem:[%s0 + $0xfa8] sm:$0xff]
    %v532 = vld [vmem:[%s0 + $0xfb0] sm:$0xff]
    %v533 = vld [vmem:[%s0 + $0xfb8] sm:$0xff]
    %v534 = vld [vmem:[%s0 + $0xfc0] sm:$0xff]
    %v535 = vld [vmem:[%s0 + $0xfc8] sm:$0xff]
    %v536 = vld [vmem:[%s0 + $0xfd0] sm:$0xff]
    %v537 = vld [vmem:[%s0 + $0xfd8] sm:$0xff]
    %v538 = vld [vmem:[%s0 + $0xfe0] sm:$0xff]
    %v539 = vld [vmem:[%s0 + $0xfe8] sm:$0xff]
    %v540 = vld [vmem:[%s0 + $0xff0] sm:$0xff]
    %v541 = vld [vmem:[%s0 + $0xff8] sm:$0xff]
    %v542 = vld [vmem:[%s1] sm:$0xf]
    %v543 = vlaneseq
    %v544 = vshrl.u32 %v543, 7
    %v545 = vsub.s32 0, %v544
    %v546 = vrot.slane %v28, %v545
    %vm547 = vcmask 31744
    %v549 = vsel %vm547, %v30, 0
    %v552 = vsel %vm547, %v31, 0
    %v555 = vsel %vm547, %v32, 0
    %v558 = vsel %vm547, %v33, 0
    %v561 = vsel %vm547, %v34, 0
    %v564 = vsel %vm547, %v35, 0
    %v567 = vsel %vm547, %v36, 0
    %v570 = vsel %vm547, %v37, 0
    %v573 = vsel %vm547, %v38, 0
    %v576 = vsel %vm547, %v39, 0
    %v579 = vsel %vm547, %v40, 0
    %v582 = vsel %vm547, %v41, 0
    %v585 = vsel %vm547, %v42, 0
    %v588 = vsel %vm547, %v43, 0
    %v591 = vsel %vm547, %v44, 0
    %v594 = vsel %vm547, %v45, 0
    %v597 = vsel %vm547, %v46, 0
    %v600 = vsel %vm547, %v47, 0
    %v603 = vsel %vm547, %v48, 0
    %v606 = vsel %vm547, %v49, 0
    %v609 = vsel %vm547, %v50, 0
    %v612 = vsel %vm547, %v51, 0
    %v615 = vsel %vm547, %v52, 0
    %v618 = vsel %vm547, %v53, 0
    %v621 = vsel %vm547, %v54, 0
    %v624 = vsel %vm547, %v55, 0
    %v627 = vsel %vm547, %v56, 0
    %v630 = vsel %vm547, %v57, 0
    %v633 = vsel %vm547, %v58, 0
    %v636 = vsel %vm547, %v59, 0
    %v639 = vsel %vm547, %v60, 0
    %v642 = vsel %vm547, %v61, 0
    %v645 = vsel %vm547, %v62, 0
    %v648 = vsel %vm547, %v63, 0
    %v651 = vsel %vm547, %v64, 0
    %v654 = vsel %vm547, %v65, 0
    %v657 = vsel %vm547, %v66, 0
    %v660 = vsel %vm547, %v67, 0
    %v663 = vsel %vm547, %v68, 0
    %v666 = vsel %vm547, %v69, 0
    %v669 = vsel %vm547, %v70, 0
    %v672 = vsel %vm547, %v71, 0
    %v675 = vsel %vm547, %v72, 0
    %v678 = vsel %vm547, %v73, 0
    %v681 = vsel %vm547, %v74, 0
    %v684 = vsel %vm547, %v75, 0
    %v687 = vsel %vm547, %v76, 0
    %v690 = vsel %vm547, %v77, 0
    %v693 = vsel %vm547, %v78, 0
    %v696 = vsel %vm547, %v79, 0
    %v699 = vsel %vm547, %v80, 0
    %v702 = vsel %vm547, %v81, 0
    %v705 = vsel %vm547, %v82, 0
    %v708 = vsel %vm547, %v83, 0
    %v711 = vsel %vm547, %v84, 0
    %v714 = vsel %vm547, %v85, 0
    %v717 = vsel %vm547, %v86, 0
    %v720 = vsel %vm547, %v87, 0
    %v723 = vsel %vm547, %v88, 0
    %v726 = vsel %vm547, %v89, 0
    %v729 = vsel %vm547, %v90, 0
    %v732 = vsel %vm547, %v91, 0
    %v735 = vsel %vm547, %v92, 0
    %v738 = vsel %vm547, %v93, 0
    %v741 = vsel %vm547, %v94, 0
    %v744 = vsel %vm547, %v95, 0
    %v747 = vsel %vm547, %v96, 0
    %v750 = vsel %vm547, %v97, 0
    %v753 = vsel %vm547, %v98, 0
    %v756 = vsel %vm547, %v99, 0
    %v759 = vsel %vm547, %v100, 0
    %v762 = vsel %vm547, %v101, 0
    %v765 = vsel %vm547, %v102, 0
    %v768 = vsel %vm547, %v103, 0
    %v771 = vsel %vm547, %v104, 0
    %v774 = vsel %vm547, %v105, 0
    %v777 = vsel %vm547, %v106, 0
    %v780 = vsel %vm547, %v107, 0
    %v783 = vsel %vm547, %v108, 0
    %v786 = vsel %vm547, %v109, 0
    %v789 = vsel %vm547, %v110, 0
    %v792 = vsel %vm547, %v111, 0
    %v795 = vsel %vm547, %v112, 0
    %v798 = vsel %vm547, %v113, 0
    %v801 = vsel %vm547, %v114, 0
    %v804 = vsel %vm547, %v115, 0
    %v807 = vsel %vm547, %v116, 0
    %v810 = vsel %vm547, %v117, 0
    %v813 = vsel %vm547, %v118, 0
    %v816 = vsel %vm547, %v119, 0
    %v819 = vsel %vm547, %v120, 0
    %v822 = vsel %vm547, %v121, 0
    %v825 = vsel %vm547, %v122, 0
    %v828 = vsel %vm547, %v123, 0
    %v831 = vsel %vm547, %v124, 0
    %v834 = vsel %vm547, %v125, 0
    %v837 = vsel %vm547, %v126, 0
    %v840 = vsel %vm547, %v127, 0
    %v843 = vsel %vm547, %v128, 0
    %v846 = vsel %vm547, %v129, 0
    %v849 = vsel %vm547, %v130, 0
    %v852 = vsel %vm547, %v131, 0
    %v855 = vsel %vm547, %v132, 0
    %v858 = vsel %vm547, %v133, 0
    %v861 = vsel %vm547, %v134, 0
    %v864 = vsel %vm547, %v135, 0
    %v867 = vsel %vm547, %v136, 0
    %v870 = vsel %vm547, %v137, 0
    %v873 = vsel %vm547, %v138, 0
    %v876 = vsel %vm547, %v139, 0
    %v879 = vsel %vm547, %v140, 0
    %v882 = vsel %vm547, %v141, 0
    %v885 = vsel %vm547, %v142, 0
    %v888 = vsel %vm547, %v143, 0
    %v891 = vsel %vm547, %v144, 0
    %v894 = vsel %vm547, %v145, 0
    %v897 = vsel %vm547, %v146, 0
    %v900 = vsel %vm547, %v147, 0
    %v903 = vsel %vm547, %v148, 0
    %v906 = vsel %vm547, %v149, 0
    %v909 = vsel %vm547, %v150, 0
    %v912 = vsel %vm547, %v151, 0
    %v915 = vsel %vm547, %v152, 0
    %v918 = vsel %vm547, %v153, 0
    %v921 = vsel %vm547, %v154, 0
    %v924 = vsel %vm547, %v155, 0
    %v927 = vsel %vm547, %v156, 0
    %v930 = vsel %vm547, %v157, 0
    %v933 = vsel %vm547, %v158, 0
    %v936 = vsel %vm547, %v159, 0
    %v939 = vsel %vm547, %v160, 0
    %v942 = vsel %vm547, %v161, 0
    %v945 = vsel %vm547, %v162, 0
    %v948 = vsel %vm547, %v163, 0
    %v951 = vsel %vm547, %v164, 0
    %v954 = vsel %vm547, %v165, 0
    %v957 = vsel %vm547, %v166, 0
    %v960 = vsel %vm547, %v167, 0
    %v963 = vsel %vm547, %v168, 0
    %v966 = vsel %vm547, %v169, 0
    %v969 = vsel %vm547, %v170, 0
    %v972 = vsel %vm547, %v171, 0
    %v975 = vsel %vm547, %v172, 0
    %v978 = vsel %vm547, %v173, 0
    %v981 = vsel %vm547, %v174, 0
    %v984 = vsel %vm547, %v175, 0
    %v987 = vsel %vm547, %v176, 0
    %v990 = vsel %vm547, %v177, 0
    %v993 = vsel %vm547, %v178, 0
    %v996 = vsel %vm547, %v179, 0
    %v999 = vsel %vm547, %v180, 0
    %v1002 = vsel %vm547, %v181, 0
    %v1005 = vsel %vm547, %v182, 0
    %v1008 = vsel %vm547, %v183, 0
    %v1011 = vsel %vm547, %v184, 0
    %v1014 = vsel %vm547, %v185, 0
    %v1017 = vsel %vm547, %v186, 0
    %v1020 = vsel %vm547, %v187, 0
    %v1023 = vsel %vm547, %v188, 0
    %v1026 = vsel %vm547, %v189, 0
    %v1029 = vsel %vm547, %v190, 0
    %v1032 = vsel %vm547, %v191, 0
    %v1035 = vsel %vm547, %v192, 0
    %v1038 = vsel %vm547, %v193, 0
    %v1041 = vsel %vm547, %v194, 0
    %v1044 = vsel %vm547, %v195, 0
    %v1047 = vsel %vm547, %v196, 0
    %v1050 = vsel %vm547, %v197, 0
    %v1053 = vsel %vm547, %v198, 0
    %v1056 = vsel %vm547, %v199, 0
    %v1059 = vsel %vm547, %v200, 0
    %v1062 = vsel %vm547, %v201, 0
    %v1065 = vsel %vm547, %v202, 0
    %v1068 = vsel %vm547, %v203, 0
    %v1071 = vsel %vm547, %v204, 0
    %v1074 = vsel %vm547, %v205, 0
    %v1077 = vsel %vm547, %v206, 0
    %v1080 = vsel %vm547, %v207, 0
    %v1083 = vsel %vm547, %v208, 0
    %v1086 = vsel %vm547, %v209, 0
    %v1089 = vsel %vm547, %v210, 0
    %v1092 = vsel %vm547, %v211, 0
    %v1095 = vsel %vm547, %v212, 0
    %v1098 = vsel %vm547, %v213, 0
    %v1101 = vsel %vm547, %v214, 0
    %v1104 = vsel %vm547, %v215, 0
    %v1107 = vsel %vm547, %v216, 0
    %v1110 = vsel %vm547, %v217, 0
    %v1113 = vsel %vm547, %v218, 0
    %v1116 = vsel %vm547, %v219, 0
    %v1119 = vsel %vm547, %v220, 0
    %v1122 = vsel %vm547, %v221, 0
    %v1125 = vsel %vm547, %v222, 0
    %v1128 = vsel %vm547, %v223, 0
    %v1131 = vsel %vm547, %v224, 0
    %v1134 = vsel %vm547, %v225, 0
    %v1137 = vsel %vm547, %v226, 0
    %v1140 = vsel %vm547, %v227, 0
    %v1143 = vsel %vm547, %v228, 0
    %v1146 = vsel %vm547, %v229, 0
    %v1149 = vsel %vm547, %v230, 0
    %v1152 = vsel %vm547, %v231, 0
    %v1155 = vsel %vm547, %v232, 0
    %v1158 = vsel %vm547, %v233, 0
    %v1161 = vsel %vm547, %v234, 0
    %v1164 = vsel %vm547, %v235, 0
    %v1167 = vsel %vm547, %v236, 0
    %v1170 = vsel %vm547, %v237, 0
    %v1173 = vsel %vm547, %v238, 0
    %v1176 = vsel %vm547, %v239, 0
    %v1179 = vsel %vm547, %v240, 0
    %v1182 = vsel %vm547, %v241, 0
    %v1185 = vsel %vm547, %v242, 0
    %v1188 = vsel %vm547, %v243, 0
    %v1191 = vsel %vm547, %v244, 0
    %v1194 = vsel %vm547, %v245, 0
    %v1197 = vsel %vm547, %v246, 0
    %v1200 = vsel %vm547, %v247, 0
    %v1203 = vsel %vm547, %v248, 0
    %v1206 = vsel %vm547, %v249, 0
    %v1209 = vsel %vm547, %v250, 0
    %v1212 = vsel %vm547, %v251, 0
    %v1215 = vsel %vm547, %v252, 0
    %v1218 = vsel %vm547, %v253, 0
    %v1221 = vsel %vm547, %v254, 0
    %v1224 = vsel %vm547, %v255, 0
    %v1227 = vsel %vm547, %v256, 0
    %v1230 = vsel %vm547, %v257, 0
    %v1233 = vsel %vm547, %v258, 0
    %v1236 = vsel %vm547, %v259, 0
    %v1239 = vsel %vm547, %v260, 0
    %v1242 = vsel %vm547, %v261, 0
    %v1245 = vsel %vm547, %v262, 0
    %v1248 = vsel %vm547, %v263, 0
    %v1251 = vsel %vm547, %v264, 0
    %v1254 = vsel %vm547, %v265, 0
    %v1257 = vsel %vm547, %v266, 0
    %v1260 = vsel %vm547, %v267, 0
    %v1263 = vsel %vm547, %v268, 0
    %v1266 = vsel %vm547, %v269, 0
    %v1269 = vsel %vm547, %v270, 0
    %v1272 = vsel %vm547, %v271, 0
    %v1275 = vsel %vm547, %v272, 0
    %v1278 = vsel %vm547, %v273, 0
    %v1281 = vsel %vm547, %v274, 0
    %v1284 = vsel %vm547, %v275, 0
    %v1287 = vsel %vm547, %v276, 0
    %v1290 = vsel %vm547, %v277, 0
    %v1293 = vsel %vm547, %v278, 0
    %v1296 = vsel %vm547, %v279, 0
    %v1299 = vsel %vm547, %v280, 0
    %v1302 = vsel %vm547, %v281, 0
    %v1305 = vsel %vm547, %v282, 0
    %v1308 = vsel %vm547, %v283, 0
    %v1311 = vsel %vm547, %v284, 0
    %v1314 = vsel %vm547, %v285, 0
    %v1317 = vsel %vm547, %v286, 0
    %v1320 = vsel %vm547, %v287, 0
    %v1323 = vsel %vm547, %v288, 0
    %v1326 = vsel %vm547, %v289, 0
    %v1329 = vsel %vm547, %v290, 0
    %v1332 = vsel %vm547, %v291, 0
    %v1335 = vsel %vm547, %v292, 0
    %v1338 = vsel %vm547, %v293, 0
    %v1341 = vsel %vm547, %v294, 0
    %v1344 = vsel %vm547, %v295, 0
    %v1347 = vsel %vm547, %v296, 0
    %v1350 = vsel %vm547, %v297, 0
    %v1353 = vsel %vm547, %v298, 0
    %v1356 = vsel %vm547, %v299, 0
    %v1359 = vsel %vm547, %v300, 0
    %v1362 = vsel %vm547, %v301, 0
    %v1365 = vsel %vm547, %v302, 0
    %v1368 = vsel %vm547, %v303, 0
    %v1371 = vsel %vm547, %v304, 0
    %v1374 = vsel %vm547, %v305, 0
    %v1377 = vsel %vm547, %v306, 0
    %v1380 = vsel %vm547, %v307, 0
    %v1383 = vsel %vm547, %v308, 0
    %v1386 = vsel %vm547, %v309, 0
    %v1389 = vsel %vm547, %v310, 0
    %v1392 = vsel %vm547, %v311, 0
    %v1395 = vsel %vm547, %v312, 0
    %v1398 = vsel %vm547, %v313, 0
    %v1401 = vsel %vm547, %v314, 0
    %v1404 = vsel %vm547, %v315, 0
    %v1407 = vsel %vm547, %v316, 0
    %v1410 = vsel %vm547, %v317, 0
    %v1413 = vsel %vm547, %v318, 0
    %v1416 = vsel %vm547, %v319, 0
    %v1419 = vsel %vm547, %v320, 0
    %v1422 = vsel %vm547, %v321, 0
    %v1425 = vsel %vm547, %v322, 0
    %v1428 = vsel %vm547, %v323, 0
    %v1431 = vsel %vm547, %v324, 0
    %v1434 = vsel %vm547, %v325, 0
    %v1437 = vsel %vm547, %v326, 0
    %v1440 = vsel %vm547, %v327, 0
    %v1443 = vsel %vm547, %v328, 0
    %v1446 = vsel %vm547, %v329, 0
    %v1449 = vsel %vm547, %v330, 0
    %v1452 = vsel %vm547, %v331, 0
    %v1455 = vsel %vm547, %v332, 0
    %v1458 = vsel %vm547, %v333, 0
    %v1461 = vsel %vm547, %v334, 0
    %v1464 = vsel %vm547, %v335, 0
    %v1467 = vsel %vm547, %v336, 0
    %v1470 = vsel %vm547, %v337, 0
    %v1473 = vsel %vm547, %v338, 0
    %v1476 = vsel %vm547, %v339, 0
    %v1479 = vsel %vm547, %v340, 0
    %v1482 = vsel %vm547, %v341, 0
    %v1485 = vsel %vm547, %v342, 0
    %v1488 = vsel %vm547, %v343, 0
    %v1491 = vsel %vm547, %v344, 0
    %v1494 = vsel %vm547, %v345, 0
    %v1497 = vsel %vm547, %v346, 0
    %v1500 = vsel %vm547, %v347, 0
    %v1503 = vsel %vm547, %v348, 0
    %v1506 = vsel %vm547, %v349, 0
    %v1509 = vsel %vm547, %v350, 0
    %v1512 = vsel %vm547, %v351, 0
    %v1515 = vsel %vm547, %v352, 0
    %v1518 = vsel %vm547, %v353, 0
    %v1521 = vsel %vm547, %v354, 0
    %v1524 = vsel %vm547, %v355, 0
    %v1527 = vsel %vm547, %v356, 0
    %v1530 = vsel %vm547, %v357, 0
    %v1533 = vsel %vm547, %v358, 0
    %v1536 = vsel %vm547, %v359, 0
    %v1539 = vsel %vm547, %v360, 0
    %v1542 = vsel %vm547, %v361, 0
    %v1545 = vsel %vm547, %v362, 0
    %v1548 = vsel %vm547, %v363, 0
    %v1551 = vsel %vm547, %v364, 0
    %v1554 = vsel %vm547, %v365, 0
    %v1557 = vsel %vm547, %v366, 0
    %v1560 = vsel %vm547, %v367, 0
    %v1563 = vsel %vm547, %v368, 0
    %v1566 = vsel %vm547, %v369, 0
    %v1569 = vsel %vm547, %v370, 0
    %v1572 = vsel %vm547, %v371, 0
    %v1575 = vsel %vm547, %v372, 0
    %v1578 = vsel %vm547, %v373, 0
    %v1581 = vsel %vm547, %v374, 0
    %v1584 = vsel %vm547, %v375, 0
    %v1587 = vsel %vm547, %v376, 0
    %v1590 = vsel %vm547, %v377, 0
    %v1593 = vsel %vm547, %v378, 0
    %v1596 = vsel %vm547, %v379, 0
    %v1599 = vsel %vm547, %v380, 0
    %v1602 = vsel %vm547, %v381, 0
    %v1605 = vsel %vm547, %v382, 0
    %v1608 = vsel %vm547, %v383, 0
    %v1611 = vsel %vm547, %v384, 0
    %v1614 = vsel %vm547, %v385, 0
    %v1617 = vsel %vm547, %v386, 0
    %v1620 = vsel %vm547, %v387, 0
    %v1623 = vsel %vm547, %v388, 0
    %v1626 = vsel %vm547, %v389, 0
    %v1629 = vsel %vm547, %v390, 0
    %v1632 = vsel %vm547, %v391, 0
    %v1635 = vsel %vm547, %v392, 0
    %v1638 = vsel %vm547, %v393, 0
    %v1641 = vsel %vm547, %v394, 0
    %v1644 = vsel %vm547, %v395, 0
    %v1647 = vsel %vm547, %v396, 0
    %v1650 = vsel %vm547, %v397, 0
    %v1653 = vsel %vm547, %v398, 0
    %v1656 = vsel %vm547, %v399, 0
    %v1659 = vsel %vm547, %v400, 0
    %v1662 = vsel %vm547, %v401, 0
    %v1665 = vsel %vm547, %v402, 0
    %v1668 = vsel %vm547, %v403, 0
    %v1671 = vsel %vm547, %v404, 0
    %v1674 = vsel %vm547, %v405, 0
    %v1677 = vsel %vm547, %v406, 0
    %v1680 = vsel %vm547, %v407, 0
    %v1683 = vsel %vm547, %v408, 0
    %v1686 = vsel %vm547, %v409, 0
    %v1689 = vsel %vm547, %v410, 0
    %v1692 = vsel %vm547, %v411, 0
    %v1695 = vsel %vm547, %v412, 0
    %v1698 = vsel %vm547, %v413, 0
    %v1701 = vsel %vm547, %v414, 0
    %v1704 = vsel %vm547, %v415, 0
    %v1707 = vsel %vm547, %v416, 0
    %v1710 = vsel %vm547, %v417, 0
    %v1713 = vsel %vm547, %v418, 0
    %v1716 = vsel %vm547, %v419, 0
    %v1719 = vsel %vm547, %v420, 0
    %v1722 = vsel %vm547, %v421, 0
    %v1725 = vsel %vm547, %v422, 0
    %v1728 = vsel %vm547, %v423, 0
    %v1731 = vsel %vm547, %v424, 0
    %v1734 = vsel %vm547, %v425, 0
    %v1737 = vsel %vm547, %v426, 0
    %v1740 = vsel %vm547, %v427, 0
    %v1743 = vsel %vm547, %v428, 0
    %v1746 = vsel %vm547, %v429, 0
    %v1749 = vsel %vm547, %v430, 0
    %v1752 = vsel %vm547, %v431, 0
    %v1755 = vsel %vm547, %v432, 0
    %v1758 = vsel %vm547, %v433, 0
    %v1761 = vsel %vm547, %v434, 0
    %v1764 = vsel %vm547, %v435, 0
    %v1767 = vsel %vm547, %v436, 0
    %v1770 = vsel %vm547, %v437, 0
    %v1773 = vsel %vm547, %v438, 0
    %v1776 = vsel %vm547, %v439, 0
    %v1779 = vsel %vm547, %v440, 0
    %v1782 = vsel %vm547, %v441, 0
    %v1785 = vsel %vm547, %v442, 0
    %v1788 = vsel %vm547, %v443, 0
    %v1791 = vsel %vm547, %v444, 0
    %v1794 = vsel %vm547, %v445, 0
    %v1797 = vsel %vm547, %v446, 0
    %v1800 = vsel %vm547, %v447, 0
    %v1803 = vsel %vm547, %v448, 0
    %v1806 = vsel %vm547, %v449, 0
    %v1809 = vsel %vm547, %v450, 0
    %v1812 = vsel %vm547, %v451, 0
    %v1815 = vsel %vm547, %v452, 0
    %v1818 = vsel %vm547, %v453, 0
    %v1821 = vsel %vm547, %v454, 0
    %v1824 = vsel %vm547, %v455, 0
    %v1827 = vsel %vm547, %v456, 0
    %v1830 = vsel %vm547, %v457, 0
    %v1833 = vsel %vm547, %v458, 0
    %v1836 = vsel %vm547, %v459, 0
    %v1839 = vsel %vm547, %v460, 0
    %v1842 = vsel %vm547, %v461, 0
    %v1845 = vsel %vm547, %v462, 0
    %v1848 = vsel %vm547, %v463, 0
    %v1851 = vsel %vm547, %v464, 0
    %v1854 = vsel %vm547, %v465, 0
    %v1857 = vsel %vm547, %v466, 0
    %v1860 = vsel %vm547, %v467, 0
    %v1863 = vsel %vm547, %v468, 0
    %v1866 = vsel %vm547, %v469, 0
    %v1869 = vsel %vm547, %v470, 0
    %v1872 = vsel %vm547, %v471, 0
    %v1875 = vsel %vm547, %v472, 0
    %v1878 = vsel %vm547, %v473, 0
    %v1881 = vsel %vm547, %v474, 0
    %v1884 = vsel %vm547, %v475, 0
    %v1887 = vsel %vm547, %v476, 0
    %v1890 = vsel %vm547, %v477, 0
    %v1893 = vsel %vm547, %v478, 0
    %v1896 = vsel %vm547, %v479, 0
    %v1899 = vsel %vm547, %v480, 0
    %v1902 = vsel %vm547, %v481, 0
    %v1905 = vsel %vm547, %v482, 0
    %v1908 = vsel %vm547, %v483, 0
    %v1911 = vsel %vm547, %v484, 0
    %v1914 = vsel %vm547, %v485, 0
    %v1917 = vsel %vm547, %v486, 0
    %v1920 = vsel %vm547, %v487, 0
    %v1923 = vsel %vm547, %v488, 0
    %v1926 = vsel %vm547, %v489, 0
    %v1929 = vsel %vm547, %v490, 0
    %v1932 = vsel %vm547, %v491, 0
    %v1935 = vsel %vm547, %v492, 0
    %v1938 = vsel %vm547, %v493, 0
    %v1941 = vsel %vm547, %v494, 0
    %v1944 = vsel %vm547, %v495, 0
    %v1947 = vsel %vm547, %v496, 0
    %v1950 = vsel %vm547, %v497, 0
    %v1953 = vsel %vm547, %v498, 0
    %v1956 = vsel %vm547, %v499, 0
    %v1959 = vsel %vm547, %v500, 0
    %v1962 = vsel %vm547, %v501, 0
    %v1965 = vsel %vm547, %v502, 0
    %v1968 = vsel %vm547, %v503, 0
    %v1971 = vsel %vm547, %v504, 0
    %v1974 = vsel %vm547, %v505, 0
    %v1977 = vsel %vm547, %v506, 0
    %v1980 = vsel %vm547, %v507, 0
    %v1983 = vsel %vm547, %v508, 0
    %v1986 = vsel %vm547, %v509, 0
    %v1989 = vsel %vm547, %v510, 0
    %v1992 = vsel %vm547, %v511, 0
    %v1995 = vsel %vm547, %v512, 0
    %v1998 = vsel %vm547, %v513, 0
    %v2001 = vsel %vm547, %v514, 0
    %v2004 = vsel %vm547, %v515, 0
    %v2007 = vsel %vm547, %v516, 0
    %v2010 = vsel %vm547, %v517, 0
    %v2013 = vsel %vm547, %v518, 0
    %v2016 = vsel %vm547, %v519, 0
    %v2019 = vsel %vm547, %v520, 0
    %v2022 = vsel %vm547, %v521, 0
    %v2025 = vsel %vm547, %v522, 0
    %v2028 = vsel %vm547, %v523, 0
    %v2031 = vsel %vm547, %v524, 0
    %v2034 = vsel %vm547, %v525, 0
    %v2037 = vsel %vm547, %v526, 0
    %v2040 = vsel %vm547, %v527, 0
    %v2043 = vsel %vm547, %v528, 0
    %v2046 = vsel %vm547, %v529, 0
    %v2049 = vsel %vm547, %v530, 0
    %v2052 = vsel %vm547, %v531, 0
    %v2055 = vsel %vm547, %v532, 0
    %v2058 = vsel %vm547, %v533, 0
    %v2061 = vsel %vm547, %v534, 0
    %v2064 = vsel %vm547, %v535, 0
    %v2067 = vsel %vm547, %v536, 0
    %v2070 = vsel %vm547, %v537, 0
    %v2073 = vsel %vm547, %v538, 0
    %v2076 = vsel %vm547, %v539, 0
    %v2079 = vsel %vm547, %v540, 0
    %v2082 = vsel %vm547, %v541, 0
    %vm2084 = vcmask 1043456
    %v2086 = vsel %vm2084, %v542, 0
    %2088 = vmatprep.subr.mxu0 0.0
    %2089 = vmatpush1.msra.mxu0 %v2086
    %2090 = vmatprep.subr.mxu0 0.0
    %2091 = vmatpush1.msra.mxu0 0.0
    %2092 = vmatprep.subr.mxu0 0.0
    %2093 = vmatpush1.msra.mxu0 0.0
    %2094 = vmatprep.subr.mxu0 0.0
    %2095 = vmatpush1.msra.mxu0 0.0
    %2096 = vmatprep.subr.mxu0 0.0
    %2097 = vmatpush1.msra.mxu0 0.0
    %2098 = vmatprep.subr.mxu0 0.0
    %2099 = vmatpush1.msra.mxu0 0.0
    %2100 = vmatprep.subr.mxu0 0.0
    %2101 = vmatpush1.msra.mxu0 0.0
    %2102 = vmatprep.subr.mxu0 0.0
    %2103 = vmatpush1.msra.mxu0 0.0
    %2104 = vmatprep.subr.mxu0 0.0
    %2105 = vmatpush1.msra.mxu0 0.0
    %2106 = vmatprep.subr.mxu0 0.0
    %2107 = vmatpush1.msra.mxu0 0.0
    %2108 = vmatprep.subr.mxu0 0.0
    %2109 = vmatpush1.msra.mxu0 0.0
    %2110 = vmatprep.subr.mxu0 0.0
    %2111 = vmatpush1.msra.mxu0 0.0
    %2112 = vmatprep.subr.mxu0 0.0
    %2113 = vmatpush1.msra.mxu0 0.0
    %2114 = vmatprep.subr.mxu0 0.0
    %2115 = vmatpush1.msra.mxu0 0.0
    %2116 = vmatprep.subr.mxu0 0.0
    %2117 = vmatpush1.msra.mxu0 0.0
    %2118 = vmatprep.subr.mxu0 0.0
    %2119 = vmatpush1.msra.mxu0 0.0
    %2120 = vmatprep.subr.mxu0 0.0
    %2121 = vmatpush1.msra.mxu0 0.0
    %2122 = vmatprep.subr.mxu0 0.0
    %2123 = vmatpush1.msra.mxu0 0.0
    %2124 = vmatprep.subr.mxu0 0.0
    %2125 = vmatpush1.msra.mxu0 0.0
    %2126 = vmatprep.subr.mxu0 0.0
    %2127 = vmatpush1.msra.mxu0 0.0
    %2128 = vmatprep.subr.mxu0 0.0
    %2129 = vmatpush1.msra.mxu0 0.0
    %2130 = vmatprep.subr.mxu0 0.0
    %2131 = vmatpush1.msra.mxu0 0.0
    %2132 = vmatprep.subr.mxu0 0.0
    %2133 = vmatpush1.msra.mxu0 0.0
    %2134 = vmatprep.subr.mxu0 0.0
    %2135 = vmatpush1.msra.mxu0 0.0
    %2136 = vmatprep.subr.mxu0 0.0
    %2137 = vmatpush1.msra.mxu0 0.0
    %2138 = vmatprep.subr.mxu0 0.0
    %2139 = vmatpush1.msra.mxu0 0.0
    %2140 = vmatprep.subr.mxu0 0.0
    %2141 = vmatpush1.msra.mxu0 0.0
    %2142 = vmatprep.subr.mxu0 0.0
    %2143 = vmatpush1.msra.mxu0 0.0
    %2144 = vmatprep.subr.mxu0 0.0
    %2145 = vmatpush1.msra.mxu0 0.0
    %2146 = vmatprep.subr.mxu0 0.0
    %2147 = vmatpush1.msra.mxu0 0.0
    %2148 = vmatprep.subr.mxu0 0.0
    %2149 = vmatpush1.msra.mxu0 0.0
    %2150 = vmatprep.subr.mxu0 0.0
    %2151 = vmatpush1.msra.mxu0 0.0
    %2152 = vmatprep.mubr.f32.mxu0 0.0
    %2153 = vmatmul.mubr.f32.gmra.mrb[0].mxu0 %v549
    %v2154 = vpop.f32.mrb[0].mxu0
    %v2155 = vadd.f32 %v546, %v2154
    %v2156 = vpop.f32.mrb[0].mxu0
    %2157 = vmatprep.mubr.f32.mxu0 0.0
    %2158 = vmatmul.mubr.f32.gmra.mrb[0].mxu0 %v552
    %v2159 = vpop.f32.mrb[0].mxu0
    %v2160 = vadd.f32 %v546, %v2159
    %v2161 = vpop.f32.mrb[0].mxu0
    %2162 = vmatprep.mubr.f32.mxu0 0.0
    %2163 = vmatmul.mubr.f32.gmra.mrb[0].mxu0 %v555
    %v2164 = vpop.f32.mrb[0].mxu0
    %v2165 = vadd.f32 %v546, %v2164
    %v2166 = vpop.f32.mrb[0].mxu0
    %2167 = vmatprep.mubr.f32.mxu0 0.0
    %2168 = vmatmul.mubr.f32.gmra.mrb[0].mxu0 %v558
    %v2169 = vpop.f32.mrb[0].mxu0
    %v2170 = vadd.f32 %v546, %v2169
    %v2171 = vpop.f32.mrb[0].mxu0
    %2172 = vmatprep.mubr.f32.mxu0 0.0
    %2173 = vmatmul.mubr.f32.gmra.mrb[0].mxu0 %v561
    %v2174 = vpop.f32.mrb[0].mxu0
    %v2175 = vadd.f32 %v546, %v2174
    %v2176 = vpop.f32.mrb[0].mxu0
    %2177 = vmatprep.mubr.f32.mxu0 0.0
    %2178 = vmatmul.mubr.f32.gmra.mrb[0].mxu0 %v564
    %v2179 = vpop.f32.mrb[0].mxu0
    %v2180 = vadd.f32 %v546, %v2179
    %v2181 = vpop.f32.mrb[0].mxu0
    %2182 = vmatprep.mubr.f32.mxu0 0.0
    %2183 = vmatmul.mubr.f32.gmra.mrb[0].mxu0 %v567
    %v2184 = vpop.f32.mrb[0].mxu0
    %v2185 = vadd.f32 %v546, %v2184
    %v2186 = vpop.f32.mrb[0].mxu0
    %2187 = vmatprep.mubr.f32.mxu0 0.0
    %2188 = vmatmul.mubr.f32.gmra.mrb[0].mxu0 %v570
    %v2189 = vpop.f32.mrb[0].mxu0
    %v2190 = vadd.f32 %v546, %v2189
    %v2191 = vpop.f32.mrb[0].mxu0
    %2192 = vmatprep.mubr.f32.mxu0 0.0
    %2193 = vmatmul.mubr.f32.gmra.mrb[0].mxu0 %v573
    %v2194 = vpop.f32.mrb[0].mxu0
    %v2195 = vadd.f32 %v546, %v2194
    %v2196 = vpop.f32.mrb[0].mxu0
    %2197 = vmatprep.mubr.f32.mxu0 0.0
    %2198 = vmatmul.mubr.f32.gmra.mrb[0].mxu0 %v576
    %v2199 = vpop.f32.mrb[0].mxu0
    %v2200 = vadd.f32 %v546, %v2199
    %v2201 = vpop.f32.mrb[0].mxu0
    %2202 = vmatprep.mubr.f32.mxu0 0.0
    %2203 = vmatmul.mubr.f32.gmra.mrb[0].mxu0 %v579
    %v2204 = vpop.f32.mrb[0].mxu0
    %v2205 = vadd.f32 %v546, %v2204
    %v2206 = vpop.f32.mrb[0].mxu0
    %2207 = vmatprep.mubr.f32.mxu0 0.0
    %2208 = vmatmul.mubr.f32.gmra.mrb[0].mxu0 %v582
    %v2209 = vpop.f32.mrb[0].mxu0
    %v2210 = vadd.f32 %v546, %v2209
    %v2211 = vpop.f32.mrb[0].mxu0
    %2212 = vmatprep.mubr.f32.mxu0 0.0
    %2213 = vmatmul.mubr.f32.gmra.mrb[0].mxu0 %v585
    %v2214 = vpop.f32.mrb[0].mxu0
    %v2215 = vadd.f32 %v546, %v2214
    %v2216 = vpop.f32.mrb[0].mxu0
    %2217 = vmatprep.mubr.f32.mxu0 0.0
    %2218 = vmatmul.mubr.f32.gmra.mrb[0].mxu0 %v588
    %v2219 = vpop.f32.mrb[0].mxu0
    %v2220 = vadd.f32 %v546, %v2219
    %v2221 = vpop.f32.mrb[0].mxu0
    %2222 = vmatprep.mubr.f32.mxu0 0.0
    %2223 = vmatmul.mubr.f32.gmra.mrb[0].mxu0 %v591
    %v2224 = vpop.f32.mrb[0].mxu0
    %v2225 = vadd.f32 %v546, %v2224
    %v2226 = vpop.f32.mrb[0].mxu0
    %2227 = vmatprep.mubr.f32.mxu0 0.0
    %2228 = vmatmul.mubr.f32.gmra.mrb[0].mxu0 %v594
    %v2229 = vpop.f32.mrb[0].mxu0
    %v2230 = vadd.f32 %v546, %v2229
    %v2231 = vpop.f32.mrb[0].mxu0
    %2232 = vmatprep.mubr.f32.mxu0 0.0
    %2233 = vmatmul.mubr.f32.gmra.mrb[0].mxu0 %v597
    %v2234 = vpop.f32.mrb[0].mxu0
    %v2235 = vadd.f32 %v546, %v2234
    %v2236 = vpop.f32.mrb[0].mxu0
    %2237 = vmatprep.mubr.f32.mxu0 0.0
    %2238 = vmatmul.mubr.f32.gmra.mrb[0].mxu0 %v600
    %v2239 = vpop.f32.mrb[0].mxu0
    %v2240 = vadd.f32 %v546, %v2239
    %v2241 = vpop.f32.mrb[0].mxu0
    %2242 = vmatprep.mubr.f32.mxu0 0.0
    %2243 = vmatmul.mubr.f32.gmra.mrb[0].mxu0 %v603
    %v2244 = vpop.f32.mrb[0].mxu0
    %v2245 = vadd.f32 %v546, %v2244
    %v2246 = vpop.f32.mrb[0].mxu0
    %2247 = vmatprep.mubr.f32.mxu0 0.0
    %2248 = vmatmul.mubr.f32.gmra.mrb[0].mxu0 %v606
    %v2249 = vpop.f32.mrb[0].mxu0
    %v2250 = vadd.f32 %v546, %v2249
    %v2251 = vpop.f32.mrb[0].mxu0
    %2252 = vmatprep.mubr.f32.mxu0 0.0
    %2253 = vmatmul.mubr.f32.gmra.mrb[0].mxu0 %v609
    %v2254 = vpop.f32.mrb[0].mxu0
    %v2255 = vadd.f32 %v546, %v2254
    %v2256 = vpop.f32.mrb[0].mxu0
    %2257 = vmatprep.mubr.f32.mxu0 0.0
    %2258 = vmatmul.mubr.f32.gmra.mrb[0].mxu0 %v612
    %v2259 = vpop.f32.mrb[0].mxu0
    %v2260 = vadd.f32 %v546, %v2259
    %v2261 = vpop.f32.mrb[0].mxu0
    %2262 = vmatprep.mubr.f32.mxu0 0.0
    %2263 = vmatmul.mubr.f32.gmra.mrb[0].mxu0 %v615
    %v2264 = vpop.f32.mrb[0].mxu0
    %v2265 = vadd.f32 %v546, %v2264
    %v2266 = vpop.f32.mrb[0].mxu0
    %2267 = vmatprep.mubr.f32.mxu0 0.0
    %2268 = vmatmul.mubr.f32.gmra.mrb[0].mxu0 %v618
    %v2269 = vpop.f32.mrb[0].mxu0
    %v2270 = vadd.f32 %v546, %v2269
    %v2271 = vpop.f32.mrb[0].mxu0
    %2272 = vmatprep.mubr.f32.mxu0 0.0
    %2273 = vmatmul.mubr.f32.gmra.mrb[0].mxu0 %v621
    %v2274 = vpop.f32.mrb[0].mxu0
    %v2275 = vadd.f32 %v546, %v2274
    %v2276 = vpop.f32.mrb[0].mxu0
    %2277 = vmatprep.mubr.f32.mxu0 0.0
    %2278 = vmatmul.mubr.f32.gmra.mrb[0].mxu0 %v624
    %v2279 = vpop.f32.mrb[0].mxu0
    %v2280 = vadd.f32 %v546, %v2279
    %v2281 = vpop.f32.mrb[0].mxu0
    %2282 = vmatprep.mubr.f32.mxu0 0.0
    %2283 = vmatmul.mubr.f32.gmra.mrb[0].mxu0 %v627
    %v2284 = vpop.f32.mrb[0].mxu0
    %v2285 = vadd.f32 %v546, %v2284
    %v2286 = vpop.f32.mrb[0].mxu0
    %2287 = vmatprep.mubr.f32.mxu0 0.0
    %2288 = vmatmul.mubr.f32.gmra.mrb[0].mxu0 %v630
    %v2289 = vpop.f32.mrb[0].mxu0
    %v2290 = vadd.f32 %v546, %v2289
    %v2291 = vpop.f32.mrb[0].mxu0
    %2292 = vmatprep.mubr.f32.mxu0 0.0
    %2293 = vmatmul.mubr.f32.gmra.mrb[0].mxu0 %v633
    %v2294 = vpop.f32.mrb[0].mxu0
    %v2295 = vadd.f32 %v546, %v2294
    %v2296 = vpop.f32.mrb[0].mxu0
    %2297 = vmatprep.mubr.f32.mxu0 0.0
    %2298 = vmatmul.mubr.f32.gmra.mrb[0].mxu0 %v636
    %v2299 = vpop.f32.mrb[0].mxu0
    %v2300 = vadd.f32 %v546, %v2299
    %v2301 = vpop.f32.mrb[0].mxu0
    %2302 = vmatprep.mubr.f32.mxu0 0.0
    %2303 = vmatmul.mubr.f32.gmra.mrb[0].mxu0 %v639
    %v2304 = vpop.f32.mrb[0].mxu0
    %v2305 = vadd.f32 %v546, %v2304
    %v2306 = vpop.f32.mrb[0].mxu0
    %2307 = vmatprep.mubr.f32.mxu0 0.0
    %2308 = vmatmul.mubr.f32.gmra.mrb[0].mxu0 %v642
    %v2309 = vpop.f32.mrb[0].mxu0
    %v2310 = vadd.f32 %v546, %v2309
    %v2311 = vpop.f32.mrb[0].mxu0
    %2312 = vmatprep.mubr.f32.mxu0 0.0
    %2313 = vmatmul.mubr.f32.gmra.mrb[0].mxu0 %v645
    %v2314 = vpop.f32.mrb[0].mxu0
    %v2315 = vadd.f32 %v546, %v2314
    %v2316 = vpop.f32.mrb[0].mxu0
    %2317 = vmatprep.mubr.f32.mxu0 0.0
    %2318 = vmatmul.mubr.f32.gmra.mrb[0].mxu0 %v648
    %v2319 = vpop.f32.mrb[0].mxu0
    %v2320 = vadd.f32 %v546, %v2319
    %v2321 = vpop.f32.mrb[0].mxu0
    %2322 = vmatprep.mubr.f32.mxu0 0.0
    %2323 = vmatmul.mubr.f32.gmra.mrb[0].mxu0 %v651
    %v2324 = vpop.f32.mrb[0].mxu0
    %v2325 = vadd.f32 %v546, %v2324
    %v2326 = vpop.f32.mrb[0].mxu0
    %2327 = vmatprep.mubr.f32.mxu0 0.0
    %2328 = vmatmul.mubr.f32.gmra.mrb[0].mxu0 %v654
    %v2329 = vpop.f32.mrb[0].mxu0
    %v2330 = vadd.f32 %v546, %v2329
    %v2331 = vpop.f32.mrb[0].mxu0
    %2332 = vmatprep.mubr.f32.mxu0 0.0
    %2333 = vmatmul.mubr.f32.gmra.mrb[0].mxu0 %v657
    %v2334 = vpop.f32.mrb[0].mxu0
    %v2335 = vadd.f32 %v546, %v2334
    %v2336 = vpop.f32.mrb[0].mxu0
    %2337 = vmatprep.mubr.f32.mxu0 0.0
    %2338 = vmatmul.mubr.f32.gmra.mrb[0].mxu0 %v660
    %v2339 = vpop.f32.mrb[0].mxu0
    %v2340 = vadd.f32 %v546, %v2339
    %v2341 = vpop.f32.mrb[0].mxu0
    %2342 = vmatprep.mubr.f32.mxu0 0.0
    %2343 = vmatmul.mubr.f32.gmra.mrb[0].mxu0 %v663
    %v2344 = vpop.f32.mrb[0].mxu0
    %v2345 = vadd.f32 %v546, %v2344
    %v2346 = vpop.f32.mrb[0].mxu0
    %2347 = vmatprep.mubr.f32.mxu0 0.0
    %2348 = vmatmul.mubr.f32.gmra.mrb[0].mxu0 %v666
    %v2349 = vpop.f32.mrb[0].mxu0
    %v2350 = vadd.f32 %v546, %v2349
    %v2351 = vpop.f32.mrb[0].mxu0
    %2352 = vmatprep.mubr.f32.mxu0 0.0
    %2353 = vmatmul.mubr.f32.gmra.mrb[0].mxu0 %v669
    %v2354 = vpop.f32.mrb[0].mxu0
    %v2355 = vadd.f32 %v546, %v2354
    %v2356 = vpop.f32.mrb[0].mxu0
    %2357 = vmatprep.mubr.f32.mxu0 0.0
    %2358 = vmatmul.mubr.f32.gmra.mrb[0].mxu0 %v672
    %v2359 = vpop.f32.mrb[0].mxu0
    %v2360 = vadd.f32 %v546, %v2359
    %v2361 = vpop.f32.mrb[0].mxu0
    %2362 = vmatprep.mubr.f32.mxu0 0.0
    %2363 = vmatmul.mubr.f32.gmra.mrb[0].mxu0 %v675
    %v2364 = vpop.f32.mrb[0].mxu0
    %v2365 = vadd.f32 %v546, %v2364
    %v2366 = vpop.f32.mrb[0].mxu0
    %2367 = vmatprep.mubr.f32.mxu0 0.0
    %2368 = vmatmul.mubr.f32.gmra.mrb[0].mxu0 %v678
    %v2369 = vpop.f32.mrb[0].mxu0
    %v2370 = vadd.f32 %v546, %v2369
    %v2371 = vpop.f32.mrb[0].mxu0
    %2372 = vmatprep.mubr.f32.mxu0 0.0
    %2373 = vmatmul.mubr.f32.gmra.mrb[0].mxu0 %v681
    %v2374 = vpop.f32.mrb[0].mxu0
    %v2375 = vadd.f32 %v546, %v2374
    %v2376 = vpop.f32.mrb[0].mxu0
    %2377 = vmatprep.mubr.f32.mxu0 0.0
    %2378 = vmatmul.mubr.f32.gmra.mrb[0].mxu0 %v684
    %v2379 = vpop.f32.mrb[0].mxu0
    %v2380 = vadd.f32 %v546, %v2379
    %v2381 = vpop.f32.mrb[0].mxu0
    %2382 = vmatprep.mubr.f32.mxu0 0.0
    %2383 = vmatmul.mubr.f32.gmra.mrb[0].mxu0 %v687
    %v2384 = vpop.f32.mrb[0].mxu0
    %v2385 = vadd.f32 %v546, %v2384
    %v2386 = vpop.f32.mrb[0].mxu0
    %2387 = vmatprep.mubr.f32.mxu0 0.0
    %2388 = vmatmul.mubr.f32.gmra.mrb[0].mxu0 %v690
    %v2389 = vpop.f32.mrb[0].mxu0
    %v2390 = vadd.f32 %v546, %v2389
    %v2391 = vpop.f32.mrb[0].mxu0
    %2392 = vmatprep.mubr.f32.mxu0 0.0
    %2393 = vmatmul.mubr.f32.gmra.mrb[0].mxu0 %v693
    %v2394 = vpop.f32.mrb[0].mxu0
    %v2395 = vadd.f32 %v546, %v2394
    %v2396 = vpop.f32.mrb[0].mxu0
    %2397 = vmatprep.mubr.f32.mxu0 0.0
    %2398 = vmatmul.mubr.f32.gmra.mrb[0].mxu0 %v696
    %v2399 = vpop.f32.mrb[0].mxu0
    %v2400 = vadd.f32 %v546, %v2399
    %v2401 = vpop.f32.mrb[0].mxu0
    %2402 = vmatprep.mubr.f32.mxu0 0.0
    %2403 = vmatmul.mubr.f32.gmra.mrb[0].mxu0 %v699
    %v2404 = vpop.f32.mrb[0].mxu0
    %v2405 = vadd.f32 %v546, %v2404
    %v2406 = vpop.f32.mrb[0].mxu0
    %2407 = vmatprep.mubr.f32.mxu0 0.0
    %2408 = vmatmul.mubr.f32.gmra.mrb[0].mxu0 %v702
    %v2409 = vpop.f32.mrb[0].mxu0
    %v2410 = vadd.f32 %v546, %v2409
    %v2411 = vpop.f32.mrb[0].mxu0
    %2412 = vmatprep.mubr.f32.mxu0 0.0
    %2413 = vmatmul.mubr.f32.gmra.mrb[0].mxu0 %v705
    %v2414 = vpop.f32.mrb[0].mxu0
    %v2415 = vadd.f32 %v546, %v2414
    %v2416 = vpop.f32.mrb[0].mxu0
    %2417 = vmatprep.mubr.f32.mxu0 0.0
    %2418 = vmatmul.mubr.f32.gmra.mrb[0].mxu0 %v708
    %v2419 = vpop.f32.mrb[0].mxu0
    %v2420 = vadd.f32 %v546, %v2419
    %v2421 = vpop.f32.mrb[0].mxu0
    %2422 = vmatprep.mubr.f32.mxu0 0.0
    %2423 = vmatmul.mubr.f32.gmra.mrb[0].mxu0 %v711
    %v2424 = vpop.f32.mrb[0].mxu0
    %v2425 = vadd.f32 %v546, %v2424
    %v2426 = vpop.f32.mrb[0].mxu0
    %2427 = vmatprep.mubr.f32.mxu0 0.0
    %2428 = vmatmul.mubr.f32.gmra.mrb[0].mxu0 %v714
    %v2429 = vpop.f32.mrb[0].mxu0
    %v2430 = vadd.f32 %v546, %v2429
    %v2431 = vpop.f32.mrb[0].mxu0
    %2432 = vmatprep.mubr.f32.mxu0 0.0
    %2433 = vmatmul.mubr.f32.gmra.mrb[0].mxu0 %v717
    %v2434 = vpop.f32.mrb[0].mxu0
    %v2435 = vadd.f32 %v546, %v2434
    %v2436 = vpop.f32.mrb[0].mxu0
    %2437 = vmatprep.mubr.f32.mxu0 0.0
    %2438 = vmatmul.mubr.f32.gmra.mrb[0].mxu0 %v720
    %v2439 = vpop.f32.mrb[0].mxu0
    %v2440 = vadd.f32 %v546, %v2439
    %v2441 = vpop.f32.mrb[0].mxu0
    %2442 = vmatprep.mubr.f32.mxu0 0.0
    %2443 = vmatmul.mubr.f32.gmra.mrb[0].mxu0 %v723
    %v2444 = vpop.f32.mrb[0].mxu0
    %v2445 = vadd.f32 %v546, %v2444
    %v2446 = vpop.f32.mrb[0].mxu0
    %2447 = vmatprep.mubr.f32.mxu0 0.0
    %2448 = vmatmul.mubr.f32.gmra.mrb[0].mxu0 %v726
    %v2449 = vpop.f32.mrb[0].mxu0
    %v2450 = vadd.f32 %v546, %v2449
    %v2451 = vpop.f32.mrb[0].mxu0
    %2452 = vmatprep.mubr.f32.mxu0 0.0
    %2453 = vmatmul.mubr.f32.gmra.mrb[0].mxu0 %v729
    %v2454 = vpop.f32.mrb[0].mxu0
    %v2455 = vadd.f32 %v546, %v2454
    %v2456 = vpop.f32.mrb[0].mxu0
    %2457 = vmatprep.mubr.f32.mxu0 0.0
    %2458 = vmatmul.mubr.f32.gmra.mrb[0].mxu0 %v732
    %v2459 = vpop.f32.mrb[0].mxu0
    %v2460 = vadd.f32 %v546, %v2459
    %v2461 = vpop.f32.mrb[0].mxu0
    %2462 = vmatprep.mubr.f32.mxu0 0.0
    %2463 = vmatmul.mubr.f32.gmra.mrb[0].mxu0 %v735
    %v2464 = vpop.f32.mrb[0].mxu0
    %v2465 = vadd.f32 %v546, %v2464
    %v2466 = vpop.f32.mrb[0].mxu0
    %2467 = vmatprep.mubr.f32.mxu0 0.0
    %2468 = vmatmul.mubr.f32.gmra.mrb[0].mxu0 %v738
    %v2469 = vpop.f32.mrb[0].mxu0
    %v2470 = vadd.f32 %v546, %v2469
    %v2471 = vpop.f32.mrb[0].mxu0
    %2472 = vmatprep.mubr.f32.mxu0 0.0
    %2473 = vmatmul.mubr.f32.gmra.mrb[0].mxu0 %v741
    %v2474 = vpop.f32.mrb[0].mxu0
    %v2475 = vadd.f32 %v546, %v2474
    %v2476 = vpop.f32.mrb[0].mxu0
    %2477 = vmatprep.mubr.f32.mxu0 0.0
    %2478 = vmatmul.mubr.f32.gmra.mrb[0].mxu0 %v744
    %v2479 = vpop.f32.mrb[0].mxu0
    %v2480 = vadd.f32 %v546, %v2479
    %v2481 = vpop.f32.mrb[0].mxu0
    %2482 = vmatprep.mubr.f32.mxu0 0.0
    %2483 = vmatmul.mubr.f32.gmra.mrb[0].mxu0 %v747
    %v2484 = vpop.f32.mrb[0].mxu0
    %v2485 = vadd.f32 %v546, %v2484
    %v2486 = vpop.f32.mrb[0].mxu0
    %2487 = vmatprep.mubr.f32.mxu0 0.0
    %2488 = vmatmul.mubr.f32.gmra.mrb[0].mxu0 %v750
    %v2489 = vpop.f32.mrb[0].mxu0
    %v2490 = vadd.f32 %v546, %v2489
    %v2491 = vpop.f32.mrb[0].mxu0
    %2492 = vmatprep.mubr.f32.mxu0 0.0
    %2493 = vmatmul.mubr.f32.gmra.mrb[0].mxu0 %v753
    %v2494 = vpop.f32.mrb[0].mxu0
    %v2495 = vadd.f32 %v546, %v2494
    %v2496 = vpop.f32.mrb[0].mxu0
    %2497 = vmatprep.mubr.f32.mxu0 0.0
    %2498 = vmatmul.mubr.f32.gmra.mrb[0].mxu0 %v756
    %v2499 = vpop.f32.mrb[0].mxu0
    %v2500 = vadd.f32 %v546, %v2499
    %v2501 = vpop.f32.mrb[0].mxu0
    %2502 = vmatprep.mubr.f32.mxu0 0.0
    %2503 = vmatmul.mubr.f32.gmra.mrb[0].mxu0 %v759
    %v2504 = vpop.f32.mrb[0].mxu0
    %v2505 = vadd.f32 %v546, %v2504
    %v2506 = vpop.f32.mrb[0].mxu0
    %2507 = vmatprep.mubr.f32.mxu0 0.0
    %2508 = vmatmul.mubr.f32.gmra.mrb[0].mxu0 %v762
    %v2509 = vpop.f32.mrb[0].mxu0
    %v2510 = vadd.f32 %v546, %v2509
    %v2511 = vpop.f32.mrb[0].mxu0
    %2512 = vmatprep.mubr.f32.mxu0 0.0
    %2513 = vmatmul.mubr.f32.gmra.mrb[0].mxu0 %v765
    %v2514 = vpop.f32.mrb[0].mxu0
    %v2515 = vadd.f32 %v546, %v2514
    %v2516 = vpop.f32.mrb[0].mxu0
    %2517 = vmatprep.mubr.f32.mxu0 0.0
    %2518 = vmatmul.mubr.f32.gmra.mrb[0].mxu0 %v768
    %v2519 = vpop.f32.mrb[0].mxu0
    %v2520 = vadd.f32 %v546, %v2519
    %v2521 = vpop.f32.mrb[0].mxu0
    %2522 = vmatprep.mubr.f32.mxu0 0.0
    %2523 = vmatmul.mubr.f32.gmra.mrb[0].mxu0 %v771
    %v2524 = vpop.f32.mrb[0].mxu0
    %v2525 = vadd.f32 %v546, %v2524
    %v2526 = vpop.f32.mrb[0].mxu0
    %2527 = vmatprep.mubr.f32.mxu0 0.0
    %2528 = vmatmul.mubr.f32.gmra.mrb[0].mxu0 %v774
    %v2529 = vpop.f32.mrb[0].mxu0
    %v2530 = vadd.f32 %v546, %v2529
    %v2531 = vpop.f32.mrb[0].mxu0
    %2532 = vmatprep.mubr.f32.mxu0 0.0
    %2533 = vmatmul.mubr.f32.gmra.mrb[0].mxu0 %v777
    %v2534 = vpop.f32.mrb[0].mxu0
    %v2535 = vadd.f32 %v546, %v2534
    %v2536 = vpop.f32.mrb[0].mxu0
    %2537 = vmatprep.mubr.f32.mxu0 0.0
    %2538 = vmatmul.mubr.f32.gmra.mrb[0].mxu0 %v780
    %v2539 = vpop.f32.mrb[0].mxu0
    %v2540 = vadd.f32 %v546, %v2539
    %v2541 = vpop.f32.mrb[0].mxu0
    %2542 = vmatprep.mubr.f32.mxu0 0.0
    %2543 = vmatmul.mubr.f32.gmra.mrb[0].mxu0 %v783
    %v2544 = vpop.f32.mrb[0].mxu0
    %v2545 = vadd.f32 %v546, %v2544
    %v2546 = vpop.f32.mrb[0].mxu0
    %2547 = vmatprep.mubr.f32.mxu0 0.0
    %2548 = vmatmul.mubr.f32.gmra.mrb[0].mxu0 %v786
    %v2549 = vpop.f32.mrb[0].mxu0
    %v2550 = vadd.f32 %v546, %v2549
    %v2551 = vpop.f32.mrb[0].mxu0
    %2552 = vmatprep.mubr.f32.mxu0 0.0
    %2553 = vmatmul.mubr.f32.gmra.mrb[0].mxu0 %v789
    %v2554 = vpop.f32.mrb[0].mxu0
    %v2555 = vadd.f32 %v546, %v2554
    %v2556 = vpop.f32.mrb[0].mxu0
    %2557 = vmatprep.mubr.f32.mxu0 0.0
    %2558 = vmatmul.mubr.f32.gmra.mrb[0].mxu0 %v792
    %v2559 = vpop.f32.mrb[0].mxu0
    %v2560 = vadd.f32 %v546, %v2559
    %v2561 = vpop.f32.mrb[0].mxu0
    %2562 = vmatprep.mubr.f32.mxu0 0.0
    %2563 = vmatmul.mubr.f32.gmra.mrb[0].mxu0 %v795
    %v2564 = vpop.f32.mrb[0].mxu0
    %v2565 = vadd.f32 %v546, %v2564
    %v2566 = vpop.f32.mrb[0].mxu0
    %2567 = vmatprep.mubr.f32.mxu0 0.0
    %2568 = vmatmul.mubr.f32.gmra.mrb[0].mxu0 %v798
    %v2569 = vpop.f32.mrb[0].mxu0
    %v2570 = vadd.f32 %v546, %v2569
    %v2571 = vpop.f32.mrb[0].mxu0
    %2572 = vmatprep.mubr.f32.mxu0 0.0
    %2573 = vmatmul.mubr.f32.gmra.mrb[0].mxu0 %v801
    %v2574 = vpop.f32.mrb[0].mxu0
    %v2575 = vadd.f32 %v546, %v2574
    %v2576 = vpop.f32.mrb[0].mxu0
    %2577 = vmatprep.mubr.f32.mxu0 0.0
    %2578 = vmatmul.mubr.f32.gmra.mrb[0].mxu0 %v804
    %v2579 = vpop.f32.mrb[0].mxu0
    %v2580 = vadd.f32 %v546, %v2579
    %v2581 = vpop.f32.mrb[0].mxu0
    %2582 = vmatprep.mubr.f32.mxu0 0.0
    %2583 = vmatmul.mubr.f32.gmra.mrb[0].mxu0 %v807
    %v2584 = vpop.f32.mrb[0].mxu0
    %v2585 = vadd.f32 %v546, %v2584
    %v2586 = vpop.f32.mrb[0].mxu0
    %2587 = vmatprep.mubr.f32.mxu0 0.0
    %2588 = vmatmul.mubr.f32.gmra.mrb[0].mxu0 %v810
    %v2589 = vpop.f32.mrb[0].mxu0
    %v2590 = vadd.f32 %v546, %v2589
    %v2591 = vpop.f32.mrb[0].mxu0
    %2592 = vmatprep.mubr.f32.mxu0 0.0
    %2593 = vmatmul.mubr.f32.gmra.mrb[0].mxu0 %v813
    %v2594 = vpop.f32.mrb[0].mxu0
    %v2595 = vadd.f32 %v546, %v2594
    %v2596 = vpop.f32.mrb[0].mxu0
    %2597 = vmatprep.mubr.f32.mxu0 0.0
    %2598 = vmatmul.mubr.f32.gmra.mrb[0].mxu0 %v816
    %v2599 = vpop.f32.mrb[0].mxu0
    %v2600 = vadd.f32 %v546, %v2599
    %v2601 = vpop.f32.mrb[0].mxu0
    %2602 = vmatprep.mubr.f32.mxu0 0.0
    %2603 = vmatmul.mubr.f32.gmra.mrb[0].mxu0 %v819
    %v2604 = vpop.f32.mrb[0].mxu0
    %v2605 = vadd.f32 %v546, %v2604
    %v2606 = vpop.f32.mrb[0].mxu0
    %2607 = vmatprep.mubr.f32.mxu0 0.0
    %2608 = vmatmul.mubr.f32.gmra.mrb[0].mxu0 %v822
    %v2609 = vpop.f32.mrb[0].mxu0
    %v2610 = vadd.f32 %v546, %v2609
    %v2611 = vpop.f32.mrb[0].mxu0
    %2612 = vmatprep.mubr.f32.mxu0 0.0
    %2613 = vmatmul.mubr.f32.gmra.mrb[0].mxu0 %v825
    %v2614 = vpop.f32.mrb[0].mxu0
    %v2615 = vadd.f32 %v546, %v2614
    %v2616 = vpop.f32.mrb[0].mxu0
    %2617 = vmatprep.mubr.f32.mxu0 0.0
    %2618 = vmatmul.mubr.f32.gmra.mrb[0].mxu0 %v828
    %v2619 = vpop.f32.mrb[0].mxu0
    %v2620 = vadd.f32 %v546, %v2619
    %v2621 = vpop.f32.mrb[0].mxu0
    %2622 = vmatprep.mubr.f32.mxu0 0.0
    %2623 = vmatmul.mubr.f32.gmra.mrb[0].mxu0 %v831
    %v2624 = vpop.f32.mrb[0].mxu0
    %v2625 = vadd.f32 %v546, %v2624
    %v2626 = vpop.f32.mrb[0].mxu0
    %2627 = vmatprep.mubr.f32.mxu0 0.0
    %2628 = vmatmul.mubr.f32.gmra.mrb[0].mxu0 %v834
    %v2629 = vpop.f32.mrb[0].mxu0
    %v2630 = vadd.f32 %v546, %v2629
    %v2631 = vpop.f32.mrb[0].mxu0
    %2632 = vmatprep.mubr.f32.mxu0 0.0
    %2633 = vmatmul.mubr.f32.gmra.mrb[0].mxu0 %v837
    %v2634 = vpop.f32.mrb[0].mxu0
    %v2635 = vadd.f32 %v546, %v2634
    %v2636 = vpop.f32.mrb[0].mxu0
    %2637 = vmatprep.mubr.f32.mxu0 0.0
    %2638 = vmatmul.mubr.f32.gmra.mrb[0].mxu0 %v840
    %v2639 = vpop.f32.mrb[0].mxu0
    %v2640 = vadd.f32 %v546, %v2639
    %v2641 = vpop.f32.mrb[0].mxu0
    %2642 = vmatprep.mubr.f32.mxu0 0.0
    %2643 = vmatmul.mubr.f32.gmra.mrb[0].mxu0 %v843
    %v2644 = vpop.f32.mrb[0].mxu0
    %v2645 = vadd.f32 %v546, %v2644
    %v2646 = vpop.f32.mrb[0].mxu0
    %2647 = vmatprep.mubr.f32.mxu0 0.0
    %2648 = vmatmul.mubr.f32.gmra.mrb[0].mxu0 %v846
    %v2649 = vpop.f32.mrb[0].mxu0
    %v2650 = vadd.f32 %v546, %v2649
    %v2651 = vpop.f32.mrb[0].mxu0
    %2652 = vmatprep.mubr.f32.mxu0 0.0
    %2653 = vmatmul.mubr.f32.gmra.mrb[0].mxu0 %v849
    %v2654 = vpop.f32.mrb[0].mxu0
    %v2655 = vadd.f32 %v546, %v2654
    %v2656 = vpop.f32.mrb[0].mxu0
    %2657 = vmatprep.mubr.f32.mxu0 0.0
    %2658 = vmatmul.mubr.f32.gmra.mrb[0].mxu0 %v852
    %v2659 = vpop.f32.mrb[0].mxu0
    %v2660 = vadd.f32 %v546, %v2659
    %v2661 = vpop.f32.mrb[0].mxu0
    %2662 = vmatprep.mubr.f32.mxu0 0.0
    %2663 = vmatmul.mubr.f32.gmra.mrb[0].mxu0 %v855
    %v2664 = vpop.f32.mrb[0].mxu0
    %v2665 = vadd.f32 %v546, %v2664
    %v2666 = vpop.f32.mrb[0].mxu0
    %2667 = vmatprep.mubr.f32.mxu0 0.0
    %2668 = vmatmul.mubr.f32.gmra.mrb[0].mxu0 %v858
    %v2669 = vpop.f32.mrb[0].mxu0
    %v2670 = vadd.f32 %v546, %v2669
    %v2671 = vpop.f32.mrb[0].mxu0
    %2672 = vmatprep.mubr.f32.mxu0 0.0
    %2673 = vmatmul.mubr.f32.gmra.mrb[0].mxu0 %v861
    %v2674 = vpop.f32.mrb[0].mxu0
    %v2675 = vadd.f32 %v546, %v2674
    %v2676 = vpop.f32.mrb[0].mxu0
    %2677 = vmatprep.mubr.f32.mxu0 0.0
    %2678 = vmatmul.mubr.f32.gmra.mrb[0].mxu0 %v864
    %v2679 = vpop.f32.mrb[0].mxu0
    %v2680 = vadd.f32 %v546, %v2679
    %v2681 = vpop.f32.mrb[0].mxu0
    %2682 = vmatprep.mubr.f32.mxu0 0.0
    %2683 = vmatmul.mubr.f32.gmra.mrb[0].mxu0 %v867
    %v2684 = vpop.f32.mrb[0].mxu0
    %v2685 = vadd.f32 %v546, %v2684
    %v2686 = vpop.f32.mrb[0].mxu0
    %2687 = vmatprep.mubr.f32.mxu0 0.0
    %2688 = vmatmul.mubr.f32.gmra.mrb[0].mxu0 %v870
    %v2689 = vpop.f32.mrb[0].mxu0
    %v2690 = vadd.f32 %v546, %v2689
    %v2691 = vpop.f32.mrb[0].mxu0
    %2692 = vmatprep.mubr.f32.mxu0 0.0
    %2693 = vmatmul.mubr.f32.gmra.mrb[0].mxu0 %v873
    %v2694 = vpop.f32.mrb[0].mxu0
    %v2695 = vadd.f32 %v546, %v2694
    %v2696 = vpop.f32.mrb[0].mxu0
    %2697 = vmatprep.mubr.f32.mxu0 0.0
    %2698 = vmatmul.mubr.f32.gmra.mrb[0].mxu0 %v876
    %v2699 = vpop.f32.mrb[0].mxu0
    %v2700 = vadd.f32 %v546, %v2699
    %v2701 = vpop.f32.mrb[0].mxu0
    %2702 = vmatprep.mubr.f32.mxu0 0.0
    %2703 = vmatmul.mubr.f32.gmra.mrb[0].mxu0 %v879
    %v2704 = vpop.f32.mrb[0].mxu0
    %v2705 = vadd.f32 %v546, %v2704
    %v2706 = vpop.f32.mrb[0].mxu0
    %2707 = vmatprep.mubr.f32.mxu0 0.0
    %2708 = vmatmul.mubr.f32.gmra.mrb[0].mxu0 %v882
    %v2709 = vpop.f32.mrb[0].mxu0
    %v2710 = vadd.f32 %v546, %v2709
    %v2711 = vpop.f32.mrb[0].mxu0
    %2712 = vmatprep.mubr.f32.mxu0 0.0
    %2713 = vmatmul.mubr.f32.gmra.mrb[0].mxu0 %v885
    %v2714 = vpop.f32.mrb[0].mxu0
    %v2715 = vadd.f32 %v546, %v2714
    %v2716 = vpop.f32.mrb[0].mxu0
    %2717 = vmatprep.mubr.f32.mxu0 0.0
    %2718 = vmatmul.mubr.f32.gmra.mrb[0].mxu0 %v888
    %v2719 = vpop.f32.mrb[0].mxu0
    %v2720 = vadd.f32 %v546, %v2719
    %v2721 = vpop.f32.mrb[0].mxu0
    %2722 = vmatprep.mubr.f32.mxu0 0.0
    %2723 = vmatmul.mubr.f32.gmra.mrb[0].mxu0 %v891
    %v2724 = vpop.f32.mrb[0].mxu0
    %v2725 = vadd.f32 %v546, %v2724
    %v2726 = vpop.f32.mrb[0].mxu0
    %2727 = vmatprep.mubr.f32.mxu0 0.0
    %2728 = vmatmul.mubr.f32.gmra.mrb[0].mxu0 %v894
    %v2729 = vpop.f32.mrb[0].mxu0
    %v2730 = vadd.f32 %v546, %v2729
    %v2731 = vpop.f32.mrb[0].mxu0
    %2732 = vmatprep.mubr.f32.mxu0 0.0
    %2733 = vmatmul.mubr.f32.gmra.mrb[0].mxu0 %v897
    %v2734 = vpop.f32.mrb[0].mxu0
    %v2735 = vadd.f32 %v546, %v2734
    %v2736 = vpop.f32.mrb[0].mxu0
    %2737 = vmatprep.mubr.f32.mxu0 0.0
    %2738 = vmatmul.mubr.f32.gmra.mrb[0].mxu0 %v900
    %v2739 = vpop.f32.mrb[0].mxu0
    %v2740 = vadd.f32 %v546, %v2739
    %v2741 = vpop.f32.mrb[0].mxu0
    %2742 = vmatprep.mubr.f32.mxu0 0.0
    %2743 = vmatmul.mubr.f32.gmra.mrb[0].mxu0 %v903
    %v2744 = vpop.f32.mrb[0].mxu0
    %v2745 = vadd.f32 %v546, %v2744
    %v2746 = vpop.f32.mrb[0].mxu0
    %2747 = vmatprep.mubr.f32.mxu0 0.0
    %2748 = vmatmul.mubr.f32.gmra.mrb[0].mxu0 %v906
    %v2749 = vpop.f32.mrb[0].mxu0
    %v2750 = vadd.f32 %v546, %v2749
    %v2751 = vpop.f32.mrb[0].mxu0
    %2752 = vmatprep.mubr.f32.mxu0 0.0
    %2753 = vmatmul.mubr.f32.gmra.mrb[0].mxu0 %v909
    %v2754 = vpop.f32.mrb[0].mxu0
    %v2755 = vadd.f32 %v546, %v2754
    %v2756 = vpop.f32.mrb[0].mxu0
    %2757 = vmatprep.mubr.f32.mxu0 0.0
    %2758 = vmatmul.mubr.f32.gmra.mrb[0].mxu0 %v912
    %v2759 = vpop.f32.mrb[0].mxu0
    %v2760 = vadd.f32 %v546, %v2759
    %v2761 = vpop.f32.mrb[0].mxu0
    %2762 = vmatprep.mubr.f32.mxu0 0.0
    %2763 = vmatmul.mubr.f32.gmra.mrb[0].mxu0 %v915
    %v2764 = vpop.f32.mrb[0].mxu0
    %v2765 = vadd.f32 %v546, %v2764
    %v2766 = vpop.f32.mrb[0].mxu0
    %2767 = vmatprep.mubr.f32.mxu0 0.0
    %2768 = vmatmul.mubr.f32.gmra.mrb[0].mxu0 %v918
    %v2769 = vpop.f32.mrb[0].mxu0
    %v2770 = vadd.f32 %v546, %v2769
    %v2771 = vpop.f32.mrb[0].mxu0
    %2772 = vmatprep.mubr.f32.mxu0 0.0
    %2773 = vmatmul.mubr.f32.gmra.mrb[0].mxu0 %v921
    %v2774 = vpop.f32.mrb[0].mxu0
    %v2775 = vadd.f32 %v546, %v2774
    %v2776 = vpop.f32.mrb[0].mxu0
    %2777 = vmatprep.mubr.f32.mxu0 0.0
    %2778 = vmatmul.mubr.f32.gmra.mrb[0].mxu0 %v924
    %v2779 = vpop.f32.mrb[0].mxu0
    %v2780 = vadd.f32 %v546, %v2779
    %v2781 = vpop.f32.mrb[0].mxu0
    %2782 = vmatprep.mubr.f32.mxu0 0.0
    %2783 = vmatmul.mubr.f32.gmra.mrb[0].mxu0 %v927
    %v2784 = vpop.f32.mrb[0].mxu0
    %v2785 = vadd.f32 %v546, %v2784
    %v2786 = vpop.f32.mrb[0].mxu0
    %2787 = vmatprep.mubr.f32.mxu0 0.0
    %2788 = vmatmul.mubr.f32.gmra.mrb[0].mxu0 %v930
    %v2789 = vpop.f32.mrb[0].mxu0
    %v2790 = vadd.f32 %v546, %v2789
    %v2791 = vpop.f32.mrb[0].mxu0
    %2792 = vmatprep.mubr.f32.mxu0 0.0
    %2793 = vmatmul.mubr.f32.gmra.mrb[0].mxu0 %v933
    %v2794 = vpop.f32.mrb[0].mxu0
    %v2795 = vadd.f32 %v546, %v2794
    %v2796 = vpop.f32.mrb[0].mxu0
    %2797 = vmatprep.mubr.f32.mxu0 0.0
    %2798 = vmatmul.mubr.f32.gmra.mrb[0].mxu0 %v936
    %v2799 = vpop.f32.mrb[0].mxu0
    %v2800 = vadd.f32 %v546, %v2799
    %v2801 = vpop.f32.mrb[0].mxu0
    %2802 = vmatprep.mubr.f32.mxu0 0.0
    %2803 = vmatmul.mubr.f32.gmra.mrb[0].mxu0 %v939
    %v2804 = vpop.f32.mrb[0].mxu0
    %v2805 = vadd.f32 %v546, %v2804
    %v2806 = vpop.f32.mrb[0].mxu0
    %2807 = vmatprep.mubr.f32.mxu0 0.0
    %2808 = vmatmul.mubr.f32.gmra.mrb[0].mxu0 %v942
    %v2809 = vpop.f32.mrb[0].mxu0
    %v2810 = vadd.f32 %v546, %v2809
    %v2811 = vpop.f32.mrb[0].mxu0
    %2812 = vmatprep.mubr.f32.mxu0 0.0
    %2813 = vmatmul.mubr.f32.gmra.mrb[0].mxu0 %v945
    %v2814 = vpop.f32.mrb[0].mxu0
    %v2815 = vadd.f32 %v546, %v2814
    %v2816 = vpop.f32.mrb[0].mxu0
    %2817 = vmatprep.mubr.f32.mxu0 0.0
    %2818 = vmatmul.mubr.f32.gmra.mrb[0].mxu0 %v948
    %v2819 = vpop.f32.mrb[0].mxu0
    %v2820 = vadd.f32 %v546, %v2819
    %v2821 = vpop.f32.mrb[0].mxu0
    %2822 = vmatprep.mubr.f32.mxu0 0.0
    %2823 = vmatmul.mubr.f32.gmra.mrb[0].mxu0 %v951
    %v2824 = vpop.f32.mrb[0].mxu0
    %v2825 = vadd.f32 %v546, %v2824
    %v2826 = vpop.f32.mrb[0].mxu0
    %2827 = vmatprep.mubr.f32.mxu0 0.0
    %2828 = vmatmul.mubr.f32.gmra.mrb[0].mxu0 %v954
    %v2829 = vpop.f32.mrb[0].mxu0
    %v2830 = vadd.f32 %v546, %v2829
    %v2831 = vpop.f32.mrb[0].mxu0
    %2832 = vmatprep.mubr.f32.mxu0 0.0
    %2833 = vmatmul.mubr.f32.gmra.mrb[0].mxu0 %v957
    %v2834 = vpop.f32.mrb[0].mxu0
    %v2835 = vadd.f32 %v546, %v2834
    %v2836 = vpop.f32.mrb[0].mxu0
    %2837 = vmatprep.mubr.f32.mxu0 0.0
    %2838 = vmatmul.mubr.f32.gmra.mrb[0].mxu0 %v960
    %v2839 = vpop.f32.mrb[0].mxu0
    %v2840 = vadd.f32 %v546, %v2839
    %v2841 = vpop.f32.mrb[0].mxu0
    %2842 = vmatprep.mubr.f32.mxu0 0.0
    %2843 = vmatmul.mubr.f32.gmra.mrb[0].mxu0 %v963
    %v2844 = vpop.f32.mrb[0].mxu0
    %v2845 = vadd.f32 %v546, %v2844
    %v2846 = vpop.f32.mrb[0].mxu0
    %2847 = vmatprep.mubr.f32.mxu0 0.0
    %2848 = vmatmul.mubr.f32.gmra.mrb[0].mxu0 %v966
    %v2849 = vpop.f32.mrb[0].mxu0
    %v2850 = vadd.f32 %v546, %v2849
    %v2851 = vpop.f32.mrb[0].mxu0
    %2852 = vmatprep.mubr.f32.mxu0 0.0
    %2853 = vmatmul.mubr.f32.gmra.mrb[0].mxu0 %v969
    %v2854 = vpop.f32.mrb[0].mxu0
    %v2855 = vadd.f32 %v546, %v2854
    %v2856 = vpop.f32.mrb[0].mxu0
    %2857 = vmatprep.mubr.f32.mxu0 0.0
    %2858 = vmatmul.mubr.f32.gmra.mrb[0].mxu0 %v972
    %v2859 = vpop.f32.mrb[0].mxu0
    %v2860 = vadd.f32 %v546, %v2859
    %v2861 = vpop.f32.mrb[0].mxu0
    %2862 = vmatprep.mubr.f32.mxu0 0.0
    %2863 = vmatmul.mubr.f32.gmra.mrb[0].mxu0 %v975
    %v2864 = vpop.f32.mrb[0].mxu0
    %v2865 = vadd.f32 %v546, %v2864
    %v2866 = vpop.f32.mrb[0].mxu0
    %2867 = vmatprep.mubr.f32.mxu0 0.0
    %2868 = vmatmul.mubr.f32.gmra.mrb[0].mxu0 %v978
    %v2869 = vpop.f32.mrb[0].mxu0
    %v2870 = vadd.f32 %v546, %v2869
    %v2871 = vpop.f32.mrb[0].mxu0
    %2872 = vmatprep.mubr.f32.mxu0 0.0
    %2873 = vmatmul.mubr.f32.gmra.mrb[0].mxu0 %v981
    %v2874 = vpop.f32.mrb[0].mxu0
    %v2875 = vadd.f32 %v546, %v2874
    %v2876 = vpop.f32.mrb[0].mxu0
    %2877 = vmatprep.mubr.f32.mxu0 0.0
    %2878 = vmatmul.mubr.f32.gmra.mrb[0].mxu0 %v984
    %v2879 = vpop.f32.mrb[0].mxu0
    %v2880 = vadd.f32 %v546, %v2879
    %v2881 = vpop.f32.mrb[0].mxu0
    %2882 = vmatprep.mubr.f32.mxu0 0.0
    %2883 = vmatmul.mubr.f32.gmra.mrb[0].mxu0 %v987
    %v2884 = vpop.f32.mrb[0].mxu0
    %v2885 = vadd.f32 %v546, %v2884
    %v2886 = vpop.f32.mrb[0].mxu0
    %2887 = vmatprep.mubr.f32.mxu0 0.0
    %2888 = vmatmul.mubr.f32.gmra.mrb[0].mxu0 %v990
    %v2889 = vpop.f32.mrb[0].mxu0
    %v2890 = vadd.f32 %v546, %v2889
    %v2891 = vpop.f32.mrb[0].mxu0
    %2892 = vmatprep.mubr.f32.mxu0 0.0
    %2893 = vmatmul.mubr.f32.gmra.mrb[0].mxu0 %v993
    %v2894 = vpop.f32.mrb[0].mxu0
    %v2895 = vadd.f32 %v546, %v2894
    %v2896 = vpop.f32.mrb[0].mxu0
    %2897 = vmatprep.mubr.f32.mxu0 0.0
    %2898 = vmatmul.mubr.f32.gmra.mrb[0].mxu0 %v996
    %v2899 = vpop.f32.mrb[0].mxu0
    %v2900 = vadd.f32 %v546, %v2899
    %v2901 = vpop.f32.mrb[0].mxu0
    %2902 = vmatprep.mubr.f32.mxu0 0.0
    %2903 = vmatmul.mubr.f32.gmra.mrb[0].mxu0 %v999
    %v2904 = vpop.f32.mrb[0].mxu0
    %v2905 = vadd.f32 %v546, %v2904
    %v2906 = vpop.f32.mrb[0].mxu0
    %2907 = vmatprep.mubr.f32.mxu0 0.0
    %2908 = vmatmul.mubr.f32.gmra.mrb[0].mxu0 %v1002
    %v2909 = vpop.f32.mrb[0].mxu0
    %v2910 = vadd.f32 %v546, %v2909
    %v2911 = vpop.f32.mrb[0].mxu0
    %2912 = vmatprep.mubr.f32.mxu0 0.0
    %2913 = vmatmul.mubr.f32.gmra.mrb[0].mxu0 %v1005
    %v2914 = vpop.f32.mrb[0].mxu0
    %v2915 = vadd.f32 %v546, %v2914
    %v2916 = vpop.f32.mrb[0].mxu0
    %2917 = vmatprep.mubr.f32.mxu0 0.0
    %2918 = vmatmul.mubr.f32.gmra.mrb[0].mxu0 %v1008
    %v2919 = vpop.f32.mrb[0].mxu0
    %v2920 = vadd.f32 %v546, %v2919
    %v2921 = vpop.f32.mrb[0].mxu0
    %2922 = vmatprep.mubr.f32.mxu0 0.0
    %2923 = vmatmul.mubr.f32.gmra.mrb[0].mxu0 %v1011
    %v2924 = vpop.f32.mrb[0].mxu0
    %v2925 = vadd.f32 %v546, %v2924
    %v2926 = vpop.f32.mrb[0].mxu0
    %2927 = vmatprep.mubr.f32.mxu0 0.0
    %2928 = vmatmul.mubr.f32.gmra.mrb[0].mxu0 %v1014
    %v2929 = vpop.f32.mrb[0].mxu0
    %v2930 = vadd.f32 %v546, %v2929
    %v2931 = vpop.f32.mrb[0].mxu0
    %2932 = vmatprep.mubr.f32.mxu0 0.0
    %2933 = vmatmul.mubr.f32.gmra.mrb[0].mxu0 %v1017
    %v2934 = vpop.f32.mrb[0].mxu0
    %v2935 = vadd.f32 %v546, %v2934
    %v2936 = vpop.f32.mrb[0].mxu0
    %2937 = vmatprep.mubr.f32.mxu0 0.0
    %2938 = vmatmul.mubr.f32.gmra.mrb[0].mxu0 %v1020
    %v2939 = vpop.f32.mrb[0].mxu0
    %v2940 = vadd.f32 %v546, %v2939
    %v2941 = vpop.f32.mrb[0].mxu0
    %2942 = vmatprep.mubr.f32.mxu0 0.0
    %2943 = vmatmul.mubr.f32.gmra.mrb[0].mxu0 %v1023
    %v2944 = vpop.f32.mrb[0].mxu0
    %v2945 = vadd.f32 %v546, %v2944
    %v2946 = vpop.f32.mrb[0].mxu0
    %2947 = vmatprep.mubr.f32.mxu0 0.0
    %2948 = vmatmul.mubr.f32.gmra.mrb[0].mxu0 %v1026
    %v2949 = vpop.f32.mrb[0].mxu0
    %v2950 = vadd.f32 %v546, %v2949
    %v2951 = vpop.f32.mrb[0].mxu0
    %2952 = vmatprep.mubr.f32.mxu0 0.0
    %2953 = vmatmul.mubr.f32.gmra.mrb[0].mxu0 %v1029
    %v2954 = vpop.f32.mrb[0].mxu0
    %v2955 = vadd.f32 %v546, %v2954
    %v2956 = vpop.f32.mrb[0].mxu0
    %2957 = vmatprep.mubr.f32.mxu0 0.0
    %2958 = vmatmul.mubr.f32.gmra.mrb[0].mxu0 %v1032
    %v2959 = vpop.f32.mrb[0].mxu0
    %v2960 = vadd.f32 %v546, %v2959
    %v2961 = vpop.f32.mrb[0].mxu0
    %2962 = vmatprep.mubr.f32.mxu0 0.0
    %2963 = vmatmul.mubr.f32.gmra.mrb[0].mxu0 %v1035
    %v2964 = vpop.f32.mrb[0].mxu0
    %v2965 = vadd.f32 %v546, %v2964
    %v2966 = vpop.f32.mrb[0].mxu0
    %2967 = vmatprep.mubr.f32.mxu0 0.0
    %2968 = vmatmul.mubr.f32.gmra.mrb[0].mxu0 %v1038
    %v2969 = vpop.f32.mrb[0].mxu0
    %v2970 = vadd.f32 %v546, %v2969
    %v2971 = vpop.f32.mrb[0].mxu0
    %2972 = vmatprep.mubr.f32.mxu0 0.0
    %2973 = vmatmul.mubr.f32.gmra.mrb[0].mxu0 %v1041
    %v2974 = vpop.f32.mrb[0].mxu0
    %v2975 = vadd.f32 %v546, %v2974
    %v2976 = vpop.f32.mrb[0].mxu0
    %2977 = vmatprep.mubr.f32.mxu0 0.0
    %2978 = vmatmul.mubr.f32.gmra.mrb[0].mxu0 %v1044
    %v2979 = vpop.f32.mrb[0].mxu0
    %v2980 = vadd.f32 %v546, %v2979
    %v2981 = vpop.f32.mrb[0].mxu0
    %2982 = vmatprep.mubr.f32.mxu0 0.0
    %2983 = vmatmul.mubr.f32.gmra.mrb[0].mxu0 %v1047
    %v2984 = vpop.f32.mrb[0].mxu0
    %v2985 = vadd.f32 %v546, %v2984
    %v2986 = vpop.f32.mrb[0].mxu0
    %2987 = vmatprep.mubr.f32.mxu0 0.0
    %2988 = vmatmul.mubr.f32.gmra.mrb[0].mxu0 %v1050
    %v2989 = vpop.f32.mrb[0].mxu0
    %v2990 = vadd.f32 %v546, %v2989
    %v2991 = vpop.f32.mrb[0].mxu0
    %2992 = vmatprep.mubr.f32.mxu0 0.0
    %2993 = vmatmul.mubr.f32.gmra.mrb[0].mxu0 %v1053
    %v2994 = vpop.f32.mrb[0].mxu0
    %v2995 = vadd.f32 %v546, %v2994
    %v2996 = vpop.f32.mrb[0].mxu0
    %2997 = vmatprep.mubr.f32.mxu0 0.0
    %2998 = vmatmul.mubr.f32.gmra.mrb[0].mxu0 %v1056
    %v2999 = vpop.f32.mrb[0].mxu0
    %v3000 = vadd.f32 %v546, %v2999
    %v3001 = vpop.f32.mrb[0].mxu0
    %3002 = vmatprep.mubr.f32.mxu0 0.0
    %3003 = vmatmul.mubr.f32.gmra.mrb[0].mxu0 %v1059
    %v3004 = vpop.f32.mrb[0].mxu0
    %v3005 = vadd.f32 %v546, %v3004
    %v3006 = vpop.f32.mrb[0].mxu0
    %3007 = vmatprep.mubr.f32.mxu0 0.0
    %3008 = vmatmul.mubr.f32.gmra.mrb[0].mxu0 %v1062
    %v3009 = vpop.f32.mrb[0].mxu0
    %v3010 = vadd.f32 %v546, %v3009
    %v3011 = vpop.f32.mrb[0].mxu0
    %3012 = vmatprep.mubr.f32.mxu0 0.0
    %3013 = vmatmul.mubr.f32.gmra.mrb[0].mxu0 %v1065
    %v3014 = vpop.f32.mrb[0].mxu0
    %v3015 = vadd.f32 %v546, %v3014
    %v3016 = vpop.f32.mrb[0].mxu0
    %3017 = vmatprep.mubr.f32.mxu0 0.0
    %3018 = vmatmul.mubr.f32.gmra.mrb[0].mxu0 %v1068
    %v3019 = vpop.f32.mrb[0].mxu0
    %v3020 = vadd.f32 %v546, %v3019
    %v3021 = vpop.f32.mrb[0].mxu0
    %3022 = vmatprep.mubr.f32.mxu0 0.0
    %3023 = vmatmul.mubr.f32.gmra.mrb[0].mxu0 %v1071
    %v3024 = vpop.f32.mrb[0].mxu0
    %v3025 = vadd.f32 %v546, %v3024
    %v3026 = vpop.f32.mrb[0].mxu0
    %3027 = vmatprep.mubr.f32.mxu0 0.0
    %3028 = vmatmul.mubr.f32.gmra.mrb[0].mxu0 %v1074
    %v3029 = vpop.f32.mrb[0].mxu0
    %v3030 = vadd.f32 %v546, %v3029
    %v3031 = vpop.f32.mrb[0].mxu0
    %3032 = vmatprep.mubr.f32.mxu0 0.0
    %3033 = vmatmul.mubr.f32.gmra.mrb[0].mxu0 %v1077
    %v3034 = vpop.f32.mrb[0].mxu0
    %v3035 = vadd.f32 %v546, %v3034
    %v3036 = vpop.f32.mrb[0].mxu0
    %3037 = vmatprep.mubr.f32.mxu0 0.0
    %3038 = vmatmul.mubr.f32.gmra.mrb[0].mxu0 %v1080
    %v3039 = vpop.f32.mrb[0].mxu0
    %v3040 = vadd.f32 %v546, %v3039
    %v3041 = vpop.f32.mrb[0].mxu0
    %3042 = vmatprep.mubr.f32.mxu0 0.0
    %3043 = vmatmul.mubr.f32.gmra.mrb[0].mxu0 %v1083
    %v3044 = vpop.f32.mrb[0].mxu0
    %v3045 = vadd.f32 %v546, %v3044
    %v3046 = vpop.f32.mrb[0].mxu0
    %3047 = vmatprep.mubr.f32.mxu0 0.0
    %3048 = vmatmul.mubr.f32.gmra.mrb[0].mxu0 %v1086
    %v3049 = vpop.f32.mrb[0].mxu0
    %v3050 = vadd.f32 %v546, %v3049
    %v3051 = vpop.f32.mrb[0].mxu0
    %3052 = vmatprep.mubr.f32.mxu0 0.0
    %3053 = vmatmul.mubr.f32.gmra.mrb[0].mxu0 %v1089
    %v3054 = vpop.f32.mrb[0].mxu0
    %v3055 = vadd.f32 %v546, %v3054
    %v3056 = vpop.f32.mrb[0].mxu0
    %3057 = vmatprep.mubr.f32.mxu0 0.0
    %3058 = vmatmul.mubr.f32.gmra.mrb[0].mxu0 %v1092
    %v3059 = vpop.f32.mrb[0].mxu0
    %v3060 = vadd.f32 %v546, %v3059
    %v3061 = vpop.f32.mrb[0].mxu0
    %3062 = vmatprep.mubr.f32.mxu0 0.0
    %3063 = vmatmul.mubr.f32.gmra.mrb[0].mxu0 %v1095
    %v3064 = vpop.f32.mrb[0].mxu0
    %v3065 = vadd.f32 %v546, %v3064
    %v3066 = vpop.f32.mrb[0].mxu0
    %3067 = vmatprep.mubr.f32.mxu0 0.0
    %3068 = vmatmul.mubr.f32.gmra.mrb[0].mxu0 %v1098
    %v3069 = vpop.f32.mrb[0].mxu0
    %v3070 = vadd.f32 %v546, %v3069
    %v3071 = vpop.f32.mrb[0].mxu0
    %3072 = vmatprep.mubr.f32.mxu0 0.0
    %3073 = vmatmul.mubr.f32.gmra.mrb[0].mxu0 %v1101
    %v3074 = vpop.f32.mrb[0].mxu0
    %v3075 = vadd.f32 %v546, %v3074
    %v3076 = vpop.f32.mrb[0].mxu0
    %3077 = vmatprep.mubr.f32.mxu0 0.0
    %3078 = vmatmul.mubr.f32.gmra.mrb[0].mxu0 %v1104
    %v3079 = vpop.f32.mrb[0].mxu0
    %v3080 = vadd.f32 %v546, %v3079
    %v3081 = vpop.f32.mrb[0].mxu0
    %3082 = vmatprep.mubr.f32.mxu0 0.0
    %3083 = vmatmul.mubr.f32.gmra.mrb[0].mxu0 %v1107
    %v3084 = vpop.f32.mrb[0].mxu0
    %v3085 = vadd.f32 %v546, %v3084
    %v3086 = vpop.f32.mrb[0].mxu0
    %3087 = vmatprep.mubr.f32.mxu0 0.0
    %3088 = vmatmul.mubr.f32.gmra.mrb[0].mxu0 %v1110
    %v3089 = vpop.f32.mrb[0].mxu0
    %v3090 = vadd.f32 %v546, %v3089
    %v3091 = vpop.f32.mrb[0].mxu0
    %3092 = vmatprep.mubr.f32.mxu0 0.0
    %3093 = vmatmul.mubr.f32.gmra.mrb[0].mxu0 %v1113
    %v3094 = vpop.f32.mrb[0].mxu0
    %v3095 = vadd.f32 %v546, %v3094
    %v3096 = vpop.f32.mrb[0].mxu0
    %3097 = vmatprep.mubr.f32.mxu0 0.0
    %3098 = vmatmul.mubr.f32.gmra.mrb[0].mxu0 %v1116
    %v3099 = vpop.f32.mrb[0].mxu0
    %v3100 = vadd.f32 %v546, %v3099
    %v3101 = vpop.f32.mrb[0].mxu0
    %3102 = vmatprep.mubr.f32.mxu0 0.0
    %3103 = vmatmul.mubr.f32.gmra.mrb[0].mxu0 %v1119
    %v3104 = vpop.f32.mrb[0].mxu0
    %v3105 = vadd.f32 %v546, %v3104
    %v3106 = vpop.f32.mrb[0].mxu0
    %3107 = vmatprep.mubr.f32.mxu0 0.0
    %3108 = vmatmul.mubr.f32.gmra.mrb[0].mxu0 %v1122
    %v3109 = vpop.f32.mrb[0].mxu0
    %v3110 = vadd.f32 %v546, %v3109
    %v3111 = vpop.f32.mrb[0].mxu0
    %3112 = vmatprep.mubr.f32.mxu0 0.0
    %3113 = vmatmul.mubr.f32.gmra.mrb[0].mxu0 %v1125
    %v3114 = vpop.f32.mrb[0].mxu0
    %v3115 = vadd.f32 %v546, %v3114
    %v3116 = vpop.f32.mrb[0].mxu0
    %3117 = vmatprep.mubr.f32.mxu0 0.0
    %3118 = vmatmul.mubr.f32.gmra.mrb[0].mxu0 %v1128
    %v3119 = vpop.f32.mrb[0].mxu0
    %v3120 = vadd.f32 %v546, %v3119
    %v3121 = vpop.f32.mrb[0].mxu0
    %3122 = vmatprep.mubr.f32.mxu0 0.0
    %3123 = vmatmul.mubr.f32.gmra.mrb[0].mxu0 %v1131
    %v3124 = vpop.f32.mrb[0].mxu0
    %v3125 = vadd.f32 %v546, %v3124
    %v3126 = vpop.f32.mrb[0].mxu0
    %3127 = vmatprep.mubr.f32.mxu0 0.0
    %3128 = vmatmul.mubr.f32.gmra.mrb[0].mxu0 %v1134
    %v3129 = vpop.f32.mrb[0].mxu0
    %v3130 = vadd.f32 %v546, %v3129
    %v3131 = vpop.f32.mrb[0].mxu0
    %3132 = vmatprep.mubr.f32.mxu0 0.0
    %3133 = vmatmul.mubr.f32.gmra.mrb[0].mxu0 %v1137
    %v3134 = vpop.f32.mrb[0].mxu0
    %v3135 = vadd.f32 %v546, %v3134
    %v3136 = vpop.f32.mrb[0].mxu0
    %3137 = vmatprep.mubr.f32.mxu0 0.0
    %3138 = vmatmul.mubr.f32.gmra.mrb[0].mxu0 %v1140
    %v3139 = vpop.f32.mrb[0].mxu0
    %v3140 = vadd.f32 %v546, %v3139
    %v3141 = vpop.f32.mrb[0].mxu0
    %3142 = vmatprep.mubr.f32.mxu0 0.0
    %3143 = vmatmul.mubr.f32.gmra.mrb[0].mxu0 %v1143
    %v3144 = vpop.f32.mrb[0].mxu0
    %v3145 = vadd.f32 %v546, %v3144
    %v3146 = vpop.f32.mrb[0].mxu0
    %3147 = vmatprep.mubr.f32.mxu0 0.0
    %3148 = vmatmul.mubr.f32.gmra.mrb[0].mxu0 %v1146
    %v3149 = vpop.f32.mrb[0].mxu0
    %v3150 = vadd.f32 %v546, %v3149
    %v3151 = vpop.f32.mrb[0].mxu0
    %3152 = vmatprep.mubr.f32.mxu0 0.0
    %3153 = vmatmul.mubr.f32.gmra.mrb[0].mxu0 %v1149
    %v3154 = vpop.f32.mrb[0].mxu0
    %v3155 = vadd.f32 %v546, %v3154
    %v3156 = vpop.f32.mrb[0].mxu0
    %3157 = vmatprep.mubr.f32.mxu0 0.0
    %3158 = vmatmul.mubr.f32.gmra.mrb[0].mxu0 %v1152
    %v3159 = vpop.f32.mrb[0].mxu0
    %v3160 = vadd.f32 %v546, %v3159
    %v3161 = vpop.f32.mrb[0].mxu0
    %3162 = vmatprep.mubr.f32.mxu0 0.0
    %3163 = vmatmul.mubr.f32.gmra.mrb[0].mxu0 %v1155
    %v3164 = vpop.f32.mrb[0].mxu0
    %v3165 = vadd.f32 %v546, %v3164
    %v3166 = vpop.f32.mrb[0].mxu0
    %3167 = vmatprep.mubr.f32.mxu0 0.0
    %3168 = vmatmul.mubr.f32.gmra.mrb[0].mxu0 %v1158
    %v3169 = vpop.f32.mrb[0].mxu0
    %v3170 = vadd.f32 %v546, %v3169
    %v3171 = vpop.f32.mrb[0].mxu0
    %3172 = vmatprep.mubr.f32.mxu0 0.0
    %3173 = vmatmul.mubr.f32.gmra.mrb[0].mxu0 %v1161
    %v3174 = vpop.f32.mrb[0].mxu0
    %v3175 = vadd.f32 %v546, %v3174
    %v3176 = vpop.f32.mrb[0].mxu0
    %3177 = vmatprep.mubr.f32.mxu0 0.0
    %3178 = vmatmul.mubr.f32.gmra.mrb[0].mxu0 %v1164
    %v3179 = vpop.f32.mrb[0].mxu0
    %v3180 = vadd.f32 %v546, %v3179
    %v3181 = vpop.f32.mrb[0].mxu0
    %3182 = vmatprep.mubr.f32.mxu0 0.0
    %3183 = vmatmul.mubr.f32.gmra.mrb[0].mxu0 %v1167
    %v3184 = vpop.f32.mrb[0].mxu0
    %v3185 = vadd.f32 %v546, %v3184
    %v3186 = vpop.f32.mrb[0].mxu0
    %3187 = vmatprep.mubr.f32.mxu0 0.0
    %3188 = vmatmul.mubr.f32.gmra.mrb[0].mxu0 %v1170
    %v3189 = vpop.f32.mrb[0].mxu0
    %v3190 = vadd.f32 %v546, %v3189
    %v3191 = vpop.f32.mrb[0].mxu0
    %3192 = vmatprep.mubr.f32.mxu0 0.0
    %3193 = vmatmul.mubr.f32.gmra.mrb[0].mxu0 %v1173
    %v3194 = vpop.f32.mrb[0].mxu0
    %v3195 = vadd.f32 %v546, %v3194
    %v3196 = vpop.f32.mrb[0].mxu0
    %3197 = vmatprep.mubr.f32.mxu0 0.0
    %3198 = vmatmul.mubr.f32.gmra.mrb[0].mxu0 %v1176
    %v3199 = vpop.f32.mrb[0].mxu0
    %v3200 = vadd.f32 %v546, %v3199
    %v3201 = vpop.f32.mrb[0].mxu0
    %3202 = vmatprep.mubr.f32.mxu0 0.0
    %3203 = vmatmul.mubr.f32.gmra.mrb[0].mxu0 %v1179
    %v3204 = vpop.f32.mrb[0].mxu0
    %v3205 = vadd.f32 %v546, %v3204
    %v3206 = vpop.f32.mrb[0].mxu0
    %3207 = vmatprep.mubr.f32.mxu0 0.0
    %3208 = vmatmul.mubr.f32.gmra.mrb[0].mxu0 %v1182
    %v3209 = vpop.f32.mrb[0].mxu0
    %v3210 = vadd.f32 %v546, %v3209
    %v3211 = vpop.f32.mrb[0].mxu0
    %3212 = vmatprep.mubr.f32.mxu0 0.0
    %3213 = vmatmul.mubr.f32.gmra.mrb[0].mxu0 %v1185
    %v3214 = vpop.f32.mrb[0].mxu0
    %v3215 = vadd.f32 %v546, %v3214
    %v3216 = vpop.f32.mrb[0].mxu0
    %3217 = vmatprep.mubr.f32.mxu0 0.0
    %3218 = vmatmul.mubr.f32.gmra.mrb[0].mxu0 %v1188
    %v3219 = vpop.f32.mrb[0].mxu0
    %v3220 = vadd.f32 %v546, %v3219
    %v3221 = vpop.f32.mrb[0].mxu0
    %3222 = vmatprep.mubr.f32.mxu0 0.0
    %3223 = vmatmul.mubr.f32.gmra.mrb[0].mxu0 %v1191
    %v3224 = vpop.f32.mrb[0].mxu0
    %v3225 = vadd.f32 %v546, %v3224
    %v3226 = vpop.f32.mrb[0].mxu0
    %3227 = vmatprep.mubr.f32.mxu0 0.0
    %3228 = vmatmul.mubr.f32.gmra.mrb[0].mxu0 %v1194
    %v3229 = vpop.f32.mrb[0].mxu0
    %v3230 = vadd.f32 %v546, %v3229
    %v3231 = vpop.f32.mrb[0].mxu0
    %3232 = vmatprep.mubr.f32.mxu0 0.0
    %3233 = vmatmul.mubr.f32.gmra.mrb[0].mxu0 %v1197
    %v3234 = vpop.f32.mrb[0].mxu0
    %v3235 = vadd.f32 %v546, %v3234
    %v3236 = vpop.f32.mrb[0].mxu0
    %3237 = vmatprep.mubr.f32.mxu0 0.0
    %3238 = vmatmul.mubr.f32.gmra.mrb[0].mxu0 %v1200
    %v3239 = vpop.f32.mrb[0].mxu0
    %v3240 = vadd.f32 %v546, %v3239
    %v3241 = vpop.f32.mrb[0].mxu0
    %3242 = vmatprep.mubr.f32.mxu0 0.0
    %3243 = vmatmul.mubr.f32.gmra.mrb[0].mxu0 %v1203
    %v3244 = vpop.f32.mrb[0].mxu0
    %v3245 = vadd.f32 %v546, %v3244
    %v3246 = vpop.f32.mrb[0].mxu0
    %3247 = vmatprep.mubr.f32.mxu0 0.0
    %3248 = vmatmul.mubr.f32.gmra.mrb[0].mxu0 %v1206
    %v3249 = vpop.f32.mrb[0].mxu0
    %v3250 = vadd.f32 %v546, %v3249
    %v3251 = vpop.f32.mrb[0].mxu0
    %3252 = vmatprep.mubr.f32.mxu0 0.0
    %3253 = vmatmul.mubr.f32.gmra.mrb[0].mxu0 %v1209
    %v3254 = vpop.f32.mrb[0].mxu0
    %v3255 = vadd.f32 %v546, %v3254
    %v3256 = vpop.f32.mrb[0].mxu0
    %3257 = vmatprep.mubr.f32.mxu0 0.0
    %3258 = vmatmul.mubr.f32.gmra.mrb[0].mxu0 %v1212
    %v3259 = vpop.f32.mrb[0].mxu0
    %v3260 = vadd.f32 %v546, %v3259
    %v3261 = vpop.f32.mrb[0].mxu0
    %3262 = vmatprep.mubr.f32.mxu0 0.0
    %3263 = vmatmul.mubr.f32.gmra.mrb[0].mxu0 %v1215
    %v3264 = vpop.f32.mrb[0].mxu0
    %v3265 = vadd.f32 %v546, %v3264
    %v3266 = vpop.f32.mrb[0].mxu0
    %3267 = vmatprep.mubr.f32.mxu0 0.0
    %3268 = vmatmul.mubr.f32.gmra.mrb[0].mxu0 %v1218
    %v3269 = vpop.f32.mrb[0].mxu0
    %v3270 = vadd.f32 %v546, %v3269
    %v3271 = vpop.f32.mrb[0].mxu0
    %3272 = vmatprep.mubr.f32.mxu0 0.0
    %3273 = vmatmul.mubr.f32.gmra.mrb[0].mxu0 %v1221
    %v3274 = vpop.f32.mrb[0].mxu0
    %v3275 = vadd.f32 %v546, %v3274
    %v3276 = vpop.f32.mrb[0].mxu0
    %3277 = vmatprep.mubr.f32.mxu0 0.0
    %3278 = vmatmul.mubr.f32.gmra.mrb[0].mxu0 %v1224
    %v3279 = vpop.f32.mrb[0].mxu0
    %v3280 = vadd.f32 %v546, %v3279
    %v3281 = vpop.f32.mrb[0].mxu0
    %3282 = vmatprep.mubr.f32.mxu0 0.0
    %3283 = vmatmul.mubr.f32.gmra.mrb[0].mxu0 %v1227
    %v3284 = vpop.f32.mrb[0].mxu0
    %v3285 = vadd.f32 %v546, %v3284
    %v3286 = vpop.f32.mrb[0].mxu0
    %3287 = vmatprep.mubr.f32.mxu0 0.0
    %3288 = vmatmul.mubr.f32.gmra.mrb[0].mxu0 %v1230
    %v3289 = vpop.f32.mrb[0].mxu0
    %v3290 = vadd.f32 %v546, %v3289
    %v3291 = vpop.f32.mrb[0].mxu0
    %3292 = vmatprep.mubr.f32.mxu0 0.0
    %3293 = vmatmul.mubr.f32.gmra.mrb[0].mxu0 %v1233
    %v3294 = vpop.f32.mrb[0].mxu0
    %v3295 = vadd.f32 %v546, %v3294
    %v3296 = vpop.f32.mrb[0].mxu0
    %3297 = vmatprep.mubr.f32.mxu0 0.0
    %3298 = vmatmul.mubr.f32.gmra.mrb[0].mxu0 %v1236
    %v3299 = vpop.f32.mrb[0].mxu0
    %v3300 = vadd.f32 %v546, %v3299
    %v3301 = vpop.f32.mrb[0].mxu0
    %3302 = vmatprep.mubr.f32.mxu0 0.0
    %3303 = vmatmul.mubr.f32.gmra.mrb[0].mxu0 %v1239
    %v3304 = vpop.f32.mrb[0].mxu0
    %v3305 = vadd.f32 %v546, %v3304
    %v3306 = vpop.f32.mrb[0].mxu0
    %3307 = vmatprep.mubr.f32.mxu0 0.0
    %3308 = vmatmul.mubr.f32.gmra.mrb[0].mxu0 %v1242
    %v3309 = vpop.f32.mrb[0].mxu0
    %v3310 = vadd.f32 %v546, %v3309
    %v3311 = vpop.f32.mrb[0].mxu0
    %3312 = vmatprep.mubr.f32.mxu0 0.0
    %3313 = vmatmul.mubr.f32.gmra.mrb[0].mxu0 %v1245
    %v3314 = vpop.f32.mrb[0].mxu0
    %v3315 = vadd.f32 %v546, %v3314
    %v3316 = vpop.f32.mrb[0].mxu0
    %3317 = vmatprep.mubr.f32.mxu0 0.0
    %3318 = vmatmul.mubr.f32.gmra.mrb[0].mxu0 %v1248
    %v3319 = vpop.f32.mrb[0].mxu0
    %v3320 = vadd.f32 %v546, %v3319
    %v3321 = vpop.f32.mrb[0].mxu0
    %3322 = vmatprep.mubr.f32.mxu0 0.0
    %3323 = vmatmul.mubr.f32.gmra.mrb[0].mxu0 %v1251
    %v3324 = vpop.f32.mrb[0].mxu0
    %v3325 = vadd.f32 %v546, %v3324
    %v3326 = vpop.f32.mrb[0].mxu0
    %3327 = vmatprep.mubr.f32.mxu0 0.0
    %3328 = vmatmul.mubr.f32.gmra.mrb[0].mxu0 %v1254
    %v3329 = vpop.f32.mrb[0].mxu0
    %v3330 = vadd.f32 %v546, %v3329
    %v3331 = vpop.f32.mrb[0].mxu0
    %3332 = vmatprep.mubr.f32.mxu0 0.0
    %3333 = vmatmul.mubr.f32.gmra.mrb[0].mxu0 %v1257
    %v3334 = vpop.f32.mrb[0].mxu0
    %v3335 = vadd.f32 %v546, %v3334
    %v3336 = vpop.f32.mrb[0].mxu0
    %3337 = vmatprep.mubr.f32.mxu0 0.0
    %3338 = vmatmul.mubr.f32.gmra.mrb[0].mxu0 %v1260
    %v3339 = vpop.f32.mrb[0].mxu0
    %v3340 = vadd.f32 %v546, %v3339
    %v3341 = vpop.f32.mrb[0].mxu0
    %3342 = vmatprep.mubr.f32.mxu0 0.0
    %3343 = vmatmul.mubr.f32.gmra.mrb[0].mxu0 %v1263
    %v3344 = vpop.f32.mrb[0].mxu0
    %v3345 = vadd.f32 %v546, %v3344
    %v3346 = vpop.f32.mrb[0].mxu0
    %3347 = vmatprep.mubr.f32.mxu0 0.0
    %3348 = vmatmul.mubr.f32.gmra.mrb[0].mxu0 %v1266
    %v3349 = vpop.f32.mrb[0].mxu0
    %v3350 = vadd.f32 %v546, %v3349
    %v3351 = vpop.f32.mrb[0].mxu0
    %3352 = vmatprep.mubr.f32.mxu0 0.0
    %3353 = vmatmul.mubr.f32.gmra.mrb[0].mxu0 %v1269
    %v3354 = vpop.f32.mrb[0].mxu0
    %v3355 = vadd.f32 %v546, %v3354
    %v3356 = vpop.f32.mrb[0].mxu0
    %3357 = vmatprep.mubr.f32.mxu0 0.0
    %3358 = vmatmul.mubr.f32.gmra.mrb[0].mxu0 %v1272
    %v3359 = vpop.f32.mrb[0].mxu0
    %v3360 = vadd.f32 %v546, %v3359
    %v3361 = vpop.f32.mrb[0].mxu0
    %3362 = vmatprep.mubr.f32.mxu0 0.0
    %3363 = vmatmul.mubr.f32.gmra.mrb[0].mxu0 %v1275
    %v3364 = vpop.f32.mrb[0].mxu0
    %v3365 = vadd.f32 %v546, %v3364
    %v3366 = vpop.f32.mrb[0].mxu0
    %3367 = vmatprep.mubr.f32.mxu0 0.0
    %3368 = vmatmul.mubr.f32.gmra.mrb[0].mxu0 %v1278
    %v3369 = vpop.f32.mrb[0].mxu0
    %v3370 = vadd.f32 %v546, %v3369
    %v3371 = vpop.f32.mrb[0].mxu0
    %3372 = vmatprep.mubr.f32.mxu0 0.0
    %3373 = vmatmul.mubr.f32.gmra.mrb[0].mxu0 %v1281
    %v3374 = vpop.f32.mrb[0].mxu0
    %v3375 = vadd.f32 %v546, %v3374
    %v3376 = vpop.f32.mrb[0].mxu0
    %3377 = vmatprep.mubr.f32.mxu0 0.0
    %3378 = vmatmul.mubr.f32.gmra.mrb[0].mxu0 %v1284
    %v3379 = vpop.f32.mrb[0].mxu0
    %v3380 = vadd.f32 %v546, %v3379
    %v3381 = vpop.f32.mrb[0].mxu0
    %3382 = vmatprep.mubr.f32.mxu0 0.0
    %3383 = vmatmul.mubr.f32.gmra.mrb[0].mxu0 %v1287
    %v3384 = vpop.f32.mrb[0].mxu0
    %v3385 = vadd.f32 %v546, %v3384
    %v3386 = vpop.f32.mrb[0].mxu0
    %3387 = vmatprep.mubr.f32.mxu0 0.0
    %3388 = vmatmul.mubr.f32.gmra.mrb[0].mxu0 %v1290
    %v3389 = vpop.f32.mrb[0].mxu0
    %v3390 = vadd.f32 %v546, %v3389
    %v3391 = vpop.f32.mrb[0].mxu0
    %3392 = vmatprep.mubr.f32.mxu0 0.0
    %3393 = vmatmul.mubr.f32.gmra.mrb[0].mxu0 %v1293
    %v3394 = vpop.f32.mrb[0].mxu0
    %v3395 = vadd.f32 %v546, %v3394
    %v3396 = vpop.f32.mrb[0].mxu0
    %3397 = vmatprep.mubr.f32.mxu0 0.0
    %3398 = vmatmul.mubr.f32.gmra.mrb[0].mxu0 %v1296
    %v3399 = vpop.f32.mrb[0].mxu0
    %v3400 = vadd.f32 %v546, %v3399
    %v3401 = vpop.f32.mrb[0].mxu0
    %3402 = vmatprep.mubr.f32.mxu0 0.0
    %3403 = vmatmul.mubr.f32.gmra.mrb[0].mxu0 %v1299
    %v3404 = vpop.f32.mrb[0].mxu0
    %v3405 = vadd.f32 %v546, %v3404
    %v3406 = vpop.f32.mrb[0].mxu0
    %3407 = vmatprep.mubr.f32.mxu0 0.0
    %3408 = vmatmul.mubr.f32.gmra.mrb[0].mxu0 %v1302
    %v3409 = vpop.f32.mrb[0].mxu0
    %v3410 = vadd.f32 %v546, %v3409
    %v3411 = vpop.f32.mrb[0].mxu0
    %3412 = vmatprep.mubr.f32.mxu0 0.0
    %3413 = vmatmul.mubr.f32.gmra.mrb[0].mxu0 %v1305
    %v3414 = vpop.f32.mrb[0].mxu0
    %v3415 = vadd.f32 %v546, %v3414
    %v3416 = vpop.f32.mrb[0].mxu0
    %3417 = vmatprep.mubr.f32.mxu0 0.0
    %3418 = vmatmul.mubr.f32.gmra.mrb[0].mxu0 %v1308
    %v3419 = vpop.f32.mrb[0].mxu0
    %v3420 = vadd.f32 %v546, %v3419
    %v3421 = vpop.f32.mrb[0].mxu0
    %3422 = vmatprep.mubr.f32.mxu0 0.0
    %3423 = vmatmul.mubr.f32.gmra.mrb[0].mxu0 %v1311
    %v3424 = vpop.f32.mrb[0].mxu0
    %v3425 = vadd.f32 %v546, %v3424
    %v3426 = vpop.f32.mrb[0].mxu0
    %3427 = vmatprep.mubr.f32.mxu0 0.0
    %3428 = vmatmul.mubr.f32.gmra.mrb[0].mxu0 %v1314
    %v3429 = vpop.f32.mrb[0].mxu0
    %v3430 = vadd.f32 %v546, %v3429
    %v3431 = vpop.f32.mrb[0].mxu0
    %3432 = vmatprep.mubr.f32.mxu0 0.0
    %3433 = vmatmul.mubr.f32.gmra.mrb[0].mxu0 %v1317
    %v3434 = vpop.f32.mrb[0].mxu0
    %v3435 = vadd.f32 %v546, %v3434
    %v3436 = vpop.f32.mrb[0].mxu0
    %3437 = vmatprep.mubr.f32.mxu0 0.0
    %3438 = vmatmul.mubr.f32.gmra.mrb[0].mxu0 %v1320
    %v3439 = vpop.f32.mrb[0].mxu0
    %v3440 = vadd.f32 %v546, %v3439
    %v3441 = vpop.f32.mrb[0].mxu0
    %3442 = vmatprep.mubr.f32.mxu0 0.0
    %3443 = vmatmul.mubr.f32.gmra.mrb[0].mxu0 %v1323
    %v3444 = vpop.f32.mrb[0].mxu0
    %v3445 = vadd.f32 %v546, %v3444
    %v3446 = vpop.f32.mrb[0].mxu0
    %3447 = vmatprep.mubr.f32.mxu0 0.0
    %3448 = vmatmul.mubr.f32.gmra.mrb[0].mxu0 %v1326
    %v3449 = vpop.f32.mrb[0].mxu0
    %v3450 = vadd.f32 %v546, %v3449
    %v3451 = vpop.f32.mrb[0].mxu0
    %3452 = vmatprep.mubr.f32.mxu0 0.0
    %3453 = vmatmul.mubr.f32.gmra.mrb[0].mxu0 %v1329
    %v3454 = vpop.f32.mrb[0].mxu0
    %v3455 = vadd.f32 %v546, %v3454
    %v3456 = vpop.f32.mrb[0].mxu0
    %3457 = vmatprep.mubr.f32.mxu0 0.0
    %3458 = vmatmul.mubr.f32.gmra.mrb[0].mxu0 %v1332
    %v3459 = vpop.f32.mrb[0].mxu0
    %v3460 = vadd.f32 %v546, %v3459
    %v3461 = vpop.f32.mrb[0].mxu0
    %3462 = vmatprep.mubr.f32.mxu0 0.0
    %3463 = vmatmul.mubr.f32.gmra.mrb[0].mxu0 %v1335
    %v3464 = vpop.f32.mrb[0].mxu0
    %v3465 = vadd.f32 %v546, %v3464
    %v3466 = vpop.f32.mrb[0].mxu0
    %3467 = vmatprep.mubr.f32.mxu0 0.0
    %3468 = vmatmul.mubr.f32.gmra.mrb[0].mxu0 %v1338
    %v3469 = vpop.f32.mrb[0].mxu0
    %v3470 = vadd.f32 %v546, %v3469
    %v3471 = vpop.f32.mrb[0].mxu0
    %3472 = vmatprep.mubr.f32.mxu0 0.0
    %3473 = vmatmul.mubr.f32.gmra.mrb[0].mxu0 %v1341
    %v3474 = vpop.f32.mrb[0].mxu0
    %v3475 = vadd.f32 %v546, %v3474
    %v3476 = vpop.f32.mrb[0].mxu0
    %3477 = vmatprep.mubr.f32.mxu0 0.0
    %3478 = vmatmul.mubr.f32.gmra.mrb[0].mxu0 %v1344
    %v3479 = vpop.f32.mrb[0].mxu0
    %v3480 = vadd.f32 %v546, %v3479
    %v3481 = vpop.f32.mrb[0].mxu0
    %3482 = vmatprep.mubr.f32.mxu0 0.0
    %3483 = vmatmul.mubr.f32.gmra.mrb[0].mxu0 %v1347
    %v3484 = vpop.f32.mrb[0].mxu0
    %v3485 = vadd.f32 %v546, %v3484
    %v3486 = vpop.f32.mrb[0].mxu0
    %3487 = vmatprep.mubr.f32.mxu0 0.0
    %3488 = vmatmul.mubr.f32.gmra.mrb[0].mxu0 %v1350
    %v3489 = vpop.f32.mrb[0].mxu0
    %v3490 = vadd.f32 %v546, %v3489
    %v3491 = vpop.f32.mrb[0].mxu0
    %3492 = vmatprep.mubr.f32.mxu0 0.0
    %3493 = vmatmul.mubr.f32.gmra.mrb[0].mxu0 %v1353
    %v3494 = vpop.f32.mrb[0].mxu0
    %v3495 = vadd.f32 %v546, %v3494
    %v3496 = vpop.f32.mrb[0].mxu0
    %3497 = vmatprep.mubr.f32.mxu0 0.0
    %3498 = vmatmul.mubr.f32.gmra.mrb[0].mxu0 %v1356
    %v3499 = vpop.f32.mrb[0].mxu0
    %v3500 = vadd.f32 %v546, %v3499
    %v3501 = vpop.f32.mrb[0].mxu0
    %3502 = vmatprep.mubr.f32.mxu0 0.0
    %3503 = vmatmul.mubr.f32.gmra.mrb[0].mxu0 %v1359
    %v3504 = vpop.f32.mrb[0].mxu0
    %v3505 = vadd.f32 %v546, %v3504
    %v3506 = vpop.f32.mrb[0].mxu0
    %3507 = vmatprep.mubr.f32.mxu0 0.0
    %3508 = vmatmul.mubr.f32.gmra.mrb[0].mxu0 %v1362
    %v3509 = vpop.f32.mrb[0].mxu0
    %v3510 = vadd.f32 %v546, %v3509
    %v3511 = vpop.f32.mrb[0].mxu0
    %3512 = vmatprep.mubr.f32.mxu0 0.0
    %3513 = vmatmul.mubr.f32.gmra.mrb[0].mxu0 %v1365
    %v3514 = vpop.f32.mrb[0].mxu0
    %v3515 = vadd.f32 %v546, %v3514
    %v3516 = vpop.f32.mrb[0].mxu0
    %3517 = vmatprep.mubr.f32.mxu0 0.0
    %3518 = vmatmul.mubr.f32.gmra.mrb[0].mxu0 %v1368
    %v3519 = vpop.f32.mrb[0].mxu0
    %v3520 = vadd.f32 %v546, %v3519
    %v3521 = vpop.f32.mrb[0].mxu0
    %3522 = vmatprep.mubr.f32.mxu0 0.0
    %3523 = vmatmul.mubr.f32.gmra.mrb[0].mxu0 %v1371
    %v3524 = vpop.f32.mrb[0].mxu0
    %v3525 = vadd.f32 %v546, %v3524
    %v3526 = vpop.f32.mrb[0].mxu0
    %3527 = vmatprep.mubr.f32.mxu0 0.0
    %3528 = vmatmul.mubr.f32.gmra.mrb[0].mxu0 %v1374
    %v3529 = vpop.f32.mrb[0].mxu0
    %v3530 = vadd.f32 %v546, %v3529
    %v3531 = vpop.f32.mrb[0].mxu0
    %3532 = vmatprep.mubr.f32.mxu0 0.0
    %3533 = vmatmul.mubr.f32.gmra.mrb[0].mxu0 %v1377
    %v3534 = vpop.f32.mrb[0].mxu0
    %v3535 = vadd.f32 %v546, %v3534
    %v3536 = vpop.f32.mrb[0].mxu0
    %3537 = vmatprep.mubr.f32.mxu0 0.0
    %3538 = vmatmul.mubr.f32.gmra.mrb[0].mxu0 %v1380
    %v3539 = vpop.f32.mrb[0].mxu0
    %v3540 = vadd.f32 %v546, %v3539
    %v3541 = vpop.f32.mrb[0].mxu0
    %3542 = vmatprep.mubr.f32.mxu0 0.0
    %3543 = vmatmul.mubr.f32.gmra.mrb[0].mxu0 %v1383
    %v3544 = vpop.f32.mrb[0].mxu0
    %v3545 = vadd.f32 %v546, %v3544
    %v3546 = vpop.f32.mrb[0].mxu0
    %3547 = vmatprep.mubr.f32.mxu0 0.0
    %3548 = vmatmul.mubr.f32.gmra.mrb[0].mxu0 %v1386
    %v3549 = vpop.f32.mrb[0].mxu0
    %v3550 = vadd.f32 %v546, %v3549
    %v3551 = vpop.f32.mrb[0].mxu0
    %3552 = vmatprep.mubr.f32.mxu0 0.0
    %3553 = vmatmul.mubr.f32.gmra.mrb[0].mxu0 %v1389
    %v3554 = vpop.f32.mrb[0].mxu0
    %v3555 = vadd.f32 %v546, %v3554
    %v3556 = vpop.f32.mrb[0].mxu0
    %3557 = vmatprep.mubr.f32.mxu0 0.0
    %3558 = vmatmul.mubr.f32.gmra.mrb[0].mxu0 %v1392
    %v3559 = vpop.f32.mrb[0].mxu0
    %v3560 = vadd.f32 %v546, %v3559
    %v3561 = vpop.f32.mrb[0].mxu0
    %3562 = vmatprep.mubr.f32.mxu0 0.0
    %3563 = vmatmul.mubr.f32.gmra.mrb[0].mxu0 %v1395
    %v3564 = vpop.f32.mrb[0].mxu0
    %v3565 = vadd.f32 %v546, %v3564
    %v3566 = vpop.f32.mrb[0].mxu0
    %3567 = vmatprep.mubr.f32.mxu0 0.0
    %3568 = vmatmul.mubr.f32.gmra.mrb[0].mxu0 %v1398
    %v3569 = vpop.f32.mrb[0].mxu0
    %v3570 = vadd.f32 %v546, %v3569
    %v3571 = vpop.f32.mrb[0].mxu0
    %3572 = vmatprep.mubr.f32.mxu0 0.0
    %3573 = vmatmul.mubr.f32.gmra.mrb[0].mxu0 %v1401
    %v3574 = vpop.f32.mrb[0].mxu0
    %v3575 = vadd.f32 %v546, %v3574
    %v3576 = vpop.f32.mrb[0].mxu0
    %3577 = vmatprep.mubr.f32.mxu0 0.0
    %3578 = vmatmul.mubr.f32.gmra.mrb[0].mxu0 %v1404
    %v3579 = vpop.f32.mrb[0].mxu0
    %v3580 = vadd.f32 %v546, %v3579
    %v3581 = vpop.f32.mrb[0].mxu0
    %3582 = vmatprep.mubr.f32.mxu0 0.0
    %3583 = vmatmul.mubr.f32.gmra.mrb[0].mxu0 %v1407
    %v3584 = vpop.f32.mrb[0].mxu0
    %v3585 = vadd.f32 %v546, %v3584
    %v3586 = vpop.f32.mrb[0].mxu0
    %3587 = vmatprep.mubr.f32.mxu0 0.0
    %3588 = vmatmul.mubr.f32.gmra.mrb[0].mxu0 %v1410
    %v3589 = vpop.f32.mrb[0].mxu0
    %v3590 = vadd.f32 %v546, %v3589
    %v3591 = vpop.f32.mrb[0].mxu0
    %3592 = vmatprep.mubr.f32.mxu0 0.0
    %3593 = vmatmul.mubr.f32.gmra.mrb[0].mxu0 %v1413
    %v3594 = vpop.f32.mrb[0].mxu0
    %v3595 = vadd.f32 %v546, %v3594
    %v3596 = vpop.f32.mrb[0].mxu0
    %3597 = vmatprep.mubr.f32.mxu0 0.0
    %3598 = vmatmul.mubr.f32.gmra.mrb[0].mxu0 %v1416
    %v3599 = vpop.f32.mrb[0].mxu0
    %v3600 = vadd.f32 %v546, %v3599
    %v3601 = vpop.f32.mrb[0].mxu0
    %3602 = vmatprep.mubr.f32.mxu0 0.0
    %3603 = vmatmul.mubr.f32.gmra.mrb[0].mxu0 %v1419
    %v3604 = vpop.f32.mrb[0].mxu0
    %v3605 = vadd.f32 %v546, %v3604
    %v3606 = vpop.f32.mrb[0].mxu0
    %3607 = vmatprep.mubr.f32.mxu0 0.0
    %3608 = vmatmul.mubr.f32.gmra.mrb[0].mxu0 %v1422
    %v3609 = vpop.f32.mrb[0].mxu0
    %v3610 = vadd.f32 %v546, %v3609
    %v3611 = vpop.f32.mrb[0].mxu0
    %3612 = vmatprep.mubr.f32.mxu0 0.0
    %3613 = vmatmul.mubr.f32.gmra.mrb[0].mxu0 %v1425
    %v3614 = vpop.f32.mrb[0].mxu0
    %v3615 = vadd.f32 %v546, %v3614
    %v3616 = vpop.f32.mrb[0].mxu0
    %3617 = vmatprep.mubr.f32.mxu0 0.0
    %3618 = vmatmul.mubr.f32.gmra.mrb[0].mxu0 %v1428
    %v3619 = vpop.f32.mrb[0].mxu0
    %v3620 = vadd.f32 %v546, %v3619
    %v3621 = vpop.f32.mrb[0].mxu0
    %3622 = vmatprep.mubr.f32.mxu0 0.0
    %3623 = vmatmul.mubr.f32.gmra.mrb[0].mxu0 %v1431
    %v3624 = vpop.f32.mrb[0].mxu0
    %v3625 = vadd.f32 %v546, %v3624
    %v3626 = vpop.f32.mrb[0].mxu0
    %3627 = vmatprep.mubr.f32.mxu0 0.0
    %3628 = vmatmul.mubr.f32.gmra.mrb[0].mxu0 %v1434
    %v3629 = vpop.f32.mrb[0].mxu0
    %v3630 = vadd.f32 %v546, %v3629
    %v3631 = vpop.f32.mrb[0].mxu0
    %3632 = vmatprep.mubr.f32.mxu0 0.0
    %3633 = vmatmul.mubr.f32.gmra.mrb[0].mxu0 %v1437
    %v3634 = vpop.f32.mrb[0].mxu0
    %v3635 = vadd.f32 %v546, %v3634
    %v3636 = vpop.f32.mrb[0].mxu0
    %3637 = vmatprep.mubr.f32.mxu0 0.0
    %3638 = vmatmul.mubr.f32.gmra.mrb[0].mxu0 %v1440
    %v3639 = vpop.f32.mrb[0].mxu0
    %v3640 = vadd.f32 %v546, %v3639
    %v3641 = vpop.f32.mrb[0].mxu0
    %3642 = vmatprep.mubr.f32.mxu0 0.0
    %3643 = vmatmul.mubr.f32.gmra.mrb[0].mxu0 %v1443
    %v3644 = vpop.f32.mrb[0].mxu0
    %v3645 = vadd.f32 %v546, %v3644
    %v3646 = vpop.f32.mrb[0].mxu0
    %3647 = vmatprep.mubr.f32.mxu0 0.0
    %3648 = vmatmul.mubr.f32.gmra.mrb[0].mxu0 %v1446
    %v3649 = vpop.f32.mrb[0].mxu0
    %v3650 = vadd.f32 %v546, %v3649
    %v3651 = vpop.f32.mrb[0].mxu0
    %3652 = vmatprep.mubr.f32.mxu0 0.0
    %3653 = vmatmul.mubr.f32.gmra.mrb[0].mxu0 %v1449
    %v3654 = vpop.f32.mrb[0].mxu0
    %v3655 = vadd.f32 %v546, %v3654
    %v3656 = vpop.f32.mrb[0].mxu0
    %3657 = vmatprep.mubr.f32.mxu0 0.0
    %3658 = vmatmul.mubr.f32.gmra.mrb[0].mxu0 %v1452
    %v3659 = vpop.f32.mrb[0].mxu0
    %v3660 = vadd.f32 %v546, %v3659
    %v3661 = vpop.f32.mrb[0].mxu0
    %3662 = vmatprep.mubr.f32.mxu0 0.0
    %3663 = vmatmul.mubr.f32.gmra.mrb[0].mxu0 %v1455
    %v3664 = vpop.f32.mrb[0].mxu0
    %v3665 = vadd.f32 %v546, %v3664
    %v3666 = vpop.f32.mrb[0].mxu0
    %3667 = vmatprep.mubr.f32.mxu0 0.0
    %3668 = vmatmul.mubr.f32.gmra.mrb[0].mxu0 %v1458
    %v3669 = vpop.f32.mrb[0].mxu0
    %v3670 = vadd.f32 %v546, %v3669
    %v3671 = vpop.f32.mrb[0].mxu0
    %3672 = vmatprep.mubr.f32.mxu0 0.0
    %3673 = vmatmul.mubr.f32.gmra.mrb[0].mxu0 %v1461
    %v3674 = vpop.f32.mrb[0].mxu0
    %v3675 = vadd.f32 %v546, %v3674
    %v3676 = vpop.f32.mrb[0].mxu0
    %3677 = vmatprep.mubr.f32.mxu0 0.0
    %3678 = vmatmul.mubr.f32.gmra.mrb[0].mxu0 %v1464
    %v3679 = vpop.f32.mrb[0].mxu0
    %v3680 = vadd.f32 %v546, %v3679
    %v3681 = vpop.f32.mrb[0].mxu0
    %3682 = vmatprep.mubr.f32.mxu0 0.0
    %3683 = vmatmul.mubr.f32.gmra.mrb[0].mxu0 %v1467
    %v3684 = vpop.f32.mrb[0].mxu0
    %v3685 = vadd.f32 %v546, %v3684
    %v3686 = vpop.f32.mrb[0].mxu0
    %3687 = vmatprep.mubr.f32.mxu0 0.0
    %3688 = vmatmul.mubr.f32.gmra.mrb[0].mxu0 %v1470
    %v3689 = vpop.f32.mrb[0].mxu0
    %v3690 = vadd.f32 %v546, %v3689
    %v3691 = vpop.f32.mrb[0].mxu0
    %3692 = vmatprep.mubr.f32.mxu0 0.0
    %3693 = vmatmul.mubr.f32.gmra.mrb[0].mxu0 %v1473
    %v3694 = vpop.f32.mrb[0].mxu0
    %v3695 = vadd.f32 %v546, %v3694
    %v3696 = vpop.f32.mrb[0].mxu0
    %3697 = vmatprep.mubr.f32.mxu0 0.0
    %3698 = vmatmul.mubr.f32.gmra.mrb[0].mxu0 %v1476
    %v3699 = vpop.f32.mrb[0].mxu0
    %v3700 = vadd.f32 %v546, %v3699
    %v3701 = vpop.f32.mrb[0].mxu0
    %3702 = vmatprep.mubr.f32.mxu0 0.0
    %3703 = vmatmul.mubr.f32.gmra.mrb[0].mxu0 %v1479
    %v3704 = vpop.f32.mrb[0].mxu0
    %v3705 = vadd.f32 %v546, %v3704
    %v3706 = vpop.f32.mrb[0].mxu0
    %3707 = vmatprep.mubr.f32.mxu0 0.0
    %3708 = vmatmul.mubr.f32.gmra.mrb[0].mxu0 %v1482
    %v3709 = vpop.f32.mrb[0].mxu0
    %v3710 = vadd.f32 %v546, %v3709
    %v3711 = vpop.f32.mrb[0].mxu0
    %3712 = vmatprep.mubr.f32.mxu0 0.0
    %3713 = vmatmul.mubr.f32.gmra.mrb[0].mxu0 %v1485
    %v3714 = vpop.f32.mrb[0].mxu0
    %v3715 = vadd.f32 %v546, %v3714
    %v3716 = vpop.f32.mrb[0].mxu0
    %3717 = vmatprep.mubr.f32.mxu0 0.0
    %3718 = vmatmul.mubr.f32.gmra.mrb[0].mxu0 %v1488
    %v3719 = vpop.f32.mrb[0].mxu0
    %v3720 = vadd.f32 %v546, %v3719
    %v3721 = vpop.f32.mrb[0].mxu0
    %3722 = vmatprep.mubr.f32.mxu0 0.0
    %3723 = vmatmul.mubr.f32.gmra.mrb[0].mxu0 %v1491
    %v3724 = vpop.f32.mrb[0].mxu0
    %v3725 = vadd.f32 %v546, %v3724
    %v3726 = vpop.f32.mrb[0].mxu0
    %3727 = vmatprep.mubr.f32.mxu0 0.0
    %3728 = vmatmul.mubr.f32.gmra.mrb[0].mxu0 %v1494
    %v3729 = vpop.f32.mrb[0].mxu0
    %v3730 = vadd.f32 %v546, %v3729
    %v3731 = vpop.f32.mrb[0].mxu0
    %3732 = vmatprep.mubr.f32.mxu0 0.0
    %3733 = vmatmul.mubr.f32.gmra.mrb[0].mxu0 %v1497
    %v3734 = vpop.f32.mrb[0].mxu0
    %v3735 = vadd.f32 %v546, %v3734
    %v3736 = vpop.f32.mrb[0].mxu0
    %3737 = vmatprep.mubr.f32.mxu0 0.0
    %3738 = vmatmul.mubr.f32.gmra.mrb[0].mxu0 %v1500
    %v3739 = vpop.f32.mrb[0].mxu0
    %v3740 = vadd.f32 %v546, %v3739
    %v3741 = vpop.f32.mrb[0].mxu0
    %3742 = vmatprep.mubr.f32.mxu0 0.0
    %3743 = vmatmul.mubr.f32.gmra.mrb[0].mxu0 %v1503
    %v3744 = vpop.f32.mrb[0].mxu0
    %v3745 = vadd.f32 %v546, %v3744
    %v3746 = vpop.f32.mrb[0].mxu0
    %3747 = vmatprep.mubr.f32.mxu0 0.0
    %3748 = vmatmul.mubr.f32.gmra.mrb[0].mxu0 %v1506
    %v3749 = vpop.f32.mrb[0].mxu0
    %v3750 = vadd.f32 %v546, %v3749
    %v3751 = vpop.f32.mrb[0].mxu0
    %3752 = vmatprep.mubr.f32.mxu0 0.0
    %3753 = vmatmul.mubr.f32.gmra.mrb[0].mxu0 %v1509
    %v3754 = vpop.f32.mrb[0].mxu0
    %v3755 = vadd.f32 %v546, %v3754
    %v3756 = vpop.f32.mrb[0].mxu0
    %3757 = vmatprep.mubr.f32.mxu0 0.0
    %3758 = vmatmul.mubr.f32.gmra.mrb[0].mxu0 %v1512
    %v3759 = vpop.f32.mrb[0].mxu0
    %v3760 = vadd.f32 %v546, %v3759
    %v3761 = vpop.f32.mrb[0].mxu0
    %3762 = vmatprep.mubr.f32.mxu0 0.0
    %3763 = vmatmul.mubr.f32.gmra.mrb[0].mxu0 %v1515
    %v3764 = vpop.f32.mrb[0].mxu0
    %v3765 = vadd.f32 %v546, %v3764
    %v3766 = vpop.f32.mrb[0].mxu0
    %3767 = vmatprep.mubr.f32.mxu0 0.0
    %3768 = vmatmul.mubr.f32.gmra.mrb[0].mxu0 %v1518
    %v3769 = vpop.f32.mrb[0].mxu0
    %v3770 = vadd.f32 %v546, %v3769
    %v3771 = vpop.f32.mrb[0].mxu0
    %3772 = vmatprep.mubr.f32.mxu0 0.0
    %3773 = vmatmul.mubr.f32.gmra.mrb[0].mxu0 %v1521
    %v3774 = vpop.f32.mrb[0].mxu0
    %v3775 = vadd.f32 %v546, %v3774
    %v3776 = vpop.f32.mrb[0].mxu0
    %3777 = vmatprep.mubr.f32.mxu0 0.0
    %3778 = vmatmul.mubr.f32.gmra.mrb[0].mxu0 %v1524
    %v3779 = vpop.f32.mrb[0].mxu0
    %v3780 = vadd.f32 %v546, %v3779
    %v3781 = vpop.f32.mrb[0].mxu0
    %3782 = vmatprep.mubr.f32.mxu0 0.0
    %3783 = vmatmul.mubr.f32.gmra.mrb[0].mxu0 %v1527
    %v3784 = vpop.f32.mrb[0].mxu0
    %v3785 = vadd.f32 %v546, %v3784
    %v3786 = vpop.f32.mrb[0].mxu0
    %3787 = vmatprep.mubr.f32.mxu0 0.0
    %3788 = vmatmul.mubr.f32.gmra.mrb[0].mxu0 %v1530
    %v3789 = vpop.f32.mrb[0].mxu0
    %v3790 = vadd.f32 %v546, %v3789
    %v3791 = vpop.f32.mrb[0].mxu0
    %3792 = vmatprep.mubr.f32.mxu0 0.0
    %3793 = vmatmul.mubr.f32.gmra.mrb[0].mxu0 %v1533
    %v3794 = vpop.f32.mrb[0].mxu0
    %v3795 = vadd.f32 %v546, %v3794
    %v3796 = vpop.f32.mrb[0].mxu0
    %3797 = vmatprep.mubr.f32.mxu0 0.0
    %3798 = vmatmul.mubr.f32.gmra.mrb[0].mxu0 %v1536
    %v3799 = vpop.f32.mrb[0].mxu0
    %v3800 = vadd.f32 %v546, %v3799
    %v3801 = vpop.f32.mrb[0].mxu0
    %3802 = vmatprep.mubr.f32.mxu0 0.0
    %3803 = vmatmul.mubr.f32.gmra.mrb[0].mxu0 %v1539
    %v3804 = vpop.f32.mrb[0].mxu0
    %v3805 = vadd.f32 %v546, %v3804
    %v3806 = vpop.f32.mrb[0].mxu0
    %3807 = vmatprep.mubr.f32.mxu0 0.0
    %3808 = vmatmul.mubr.f32.gmra.mrb[0].mxu0 %v1542
    %v3809 = vpop.f32.mrb[0].mxu0
    %v3810 = vadd.f32 %v546, %v3809
    %v3811 = vpop.f32.mrb[0].mxu0
    %3812 = vmatprep.mubr.f32.mxu0 0.0
    %3813 = vmatmul.mubr.f32.gmra.mrb[0].mxu0 %v1545
    %v3814 = vpop.f32.mrb[0].mxu0
    %v3815 = vadd.f32 %v546, %v3814
    %v3816 = vpop.f32.mrb[0].mxu0
    %3817 = vmatprep.mubr.f32.mxu0 0.0
    %3818 = vmatmul.mubr.f32.gmra.mrb[0].mxu0 %v1548
    %v3819 = vpop.f32.mrb[0].mxu0
    %v3820 = vadd.f32 %v546, %v3819
    %v3821 = vpop.f32.mrb[0].mxu0
    %3822 = vmatprep.mubr.f32.mxu0 0.0
    %3823 = vmatmul.mubr.f32.gmra.mrb[0].mxu0 %v1551
    %v3824 = vpop.f32.mrb[0].mxu0
    %v3825 = vadd.f32 %v546, %v3824
    %v3826 = vpop.f32.mrb[0].mxu0
    %3827 = vmatprep.mubr.f32.mxu0 0.0
    %3828 = vmatmul.mubr.f32.gmra.mrb[0].mxu0 %v1554
    %v3829 = vpop.f32.mrb[0].mxu0
    %v3830 = vadd.f32 %v546, %v3829
    %v3831 = vpop.f32.mrb[0].mxu0
    %3832 = vmatprep.mubr.f32.mxu0 0.0
    %3833 = vmatmul.mubr.f32.gmra.mrb[0].mxu0 %v1557
    %v3834 = vpop.f32.mrb[0].mxu0
    %v3835 = vadd.f32 %v546, %v3834
    %v3836 = vpop.f32.mrb[0].mxu0
    %3837 = vmatprep.mubr.f32.mxu0 0.0
    %3838 = vmatmul.mubr.f32.gmra.mrb[0].mxu0 %v1560
    %v3839 = vpop.f32.mrb[0].mxu0
    %v3840 = vadd.f32 %v546, %v3839
    %v3841 = vpop.f32.mrb[0].mxu0
    %3842 = vmatprep.mubr.f32.mxu0 0.0
    %3843 = vmatmul.mubr.f32.gmra.mrb[0].mxu0 %v1563
    %v3844 = vpop.f32.mrb[0].mxu0
    %v3845 = vadd.f32 %v546, %v3844
    %v3846 = vpop.f32.mrb[0].mxu0
    %3847 = vmatprep.mubr.f32.mxu0 0.0
    %3848 = vmatmul.mubr.f32.gmra.mrb[0].mxu0 %v1566
    %v3849 = vpop.f32.mrb[0].mxu0
    %v3850 = vadd.f32 %v546, %v3849
    %v3851 = vpop.f32.mrb[0].mxu0
    %3852 = vmatprep.mubr.f32.mxu0 0.0
    %3853 = vmatmul.mubr.f32.gmra.mrb[0].mxu0 %v1569
    %v3854 = vpop.f32.mrb[0].mxu0
    %v3855 = vadd.f32 %v546, %v3854
    %v3856 = vpop.f32.mrb[0].mxu0
    %3857 = vmatprep.mubr.f32.mxu0 0.0
    %3858 = vmatmul.mubr.f32.gmra.mrb[0].mxu0 %v1572
    %v3859 = vpop.f32.mrb[0].mxu0
    %v3860 = vadd.f32 %v546, %v3859
    %v3861 = vpop.f32.mrb[0].mxu0
    %3862 = vmatprep.mubr.f32.mxu0 0.0
    %3863 = vmatmul.mubr.f32.gmra.mrb[0].mxu0 %v1575
    %v3864 = vpop.f32.mrb[0].mxu0
    %v3865 = vadd.f32 %v546, %v3864
    %v3866 = vpop.f32.mrb[0].mxu0
    %3867 = vmatprep.mubr.f32.mxu0 0.0
    %3868 = vmatmul.mubr.f32.gmra.mrb[0].mxu0 %v1578
    %v3869 = vpop.f32.mrb[0].mxu0
    %v3870 = vadd.f32 %v546, %v3869
    %v3871 = vpop.f32.mrb[0].mxu0
    %3872 = vmatprep.mubr.f32.mxu0 0.0
    %3873 = vmatmul.mubr.f32.gmra.mrb[0].mxu0 %v1581
    %v3874 = vpop.f32.mrb[0].mxu0
    %v3875 = vadd.f32 %v546, %v3874
    %v3876 = vpop.f32.mrb[0].mxu0
    %3877 = vmatprep.mubr.f32.mxu0 0.0
    %3878 = vmatmul.mubr.f32.gmra.mrb[0].mxu0 %v1584
    %v3879 = vpop.f32.mrb[0].mxu0
    %v3880 = vadd.f32 %v546, %v3879
    %v3881 = vpop.f32.mrb[0].mxu0
    %3882 = vmatprep.mubr.f32.mxu0 0.0
    %3883 = vmatmul.mubr.f32.gmra.mrb[0].mxu0 %v1587
    %v3884 = vpop.f32.mrb[0].mxu0
    %v3885 = vadd.f32 %v546, %v3884
    %v3886 = vpop.f32.mrb[0].mxu0
    %3887 = vmatprep.mubr.f32.mxu0 0.0
    %3888 = vmatmul.mubr.f32.gmra.mrb[0].mxu0 %v1590
    %v3889 = vpop.f32.mrb[0].mxu0
    %v3890 = vadd.f32 %v546, %v3889
    %v3891 = vpop.f32.mrb[0].mxu0
    %3892 = vmatprep.mubr.f32.mxu0 0.0
    %3893 = vmatmul.mubr.f32.gmra.mrb[0].mxu0 %v1593
    %v3894 = vpop.f32.mrb[0].mxu0
    %v3895 = vadd.f32 %v546, %v3894
    %v3896 = vpop.f32.mrb[0].mxu0
    %3897 = vmatprep.mubr.f32.mxu0 0.0
    %3898 = vmatmul.mubr.f32.gmra.mrb[0].mxu0 %v1596
    %v3899 = vpop.f32.mrb[0].mxu0
    %v3900 = vadd.f32 %v546, %v3899
    %v3901 = vpop.f32.mrb[0].mxu0
    %3902 = vmatprep.mubr.f32.mxu0 0.0
    %3903 = vmatmul.mubr.f32.gmra.mrb[0].mxu0 %v1599
    %v3904 = vpop.f32.mrb[0].mxu0
    %v3905 = vadd.f32 %v546, %v3904
    %v3906 = vpop.f32.mrb[0].mxu0
    %3907 = vmatprep.mubr.f32.mxu0 0.0
    %3908 = vmatmul.mubr.f32.gmra.mrb[0].mxu0 %v1602
    %v3909 = vpop.f32.mrb[0].mxu0
    %v3910 = vadd.f32 %v546, %v3909
    %v3911 = vpop.f32.mrb[0].mxu0
    %3912 = vmatprep.mubr.f32.mxu0 0.0
    %3913 = vmatmul.mubr.f32.gmra.mrb[0].mxu0 %v1605
    %v3914 = vpop.f32.mrb[0].mxu0
    %v3915 = vadd.f32 %v546, %v3914
    %v3916 = vpop.f32.mrb[0].mxu0
    %3917 = vmatprep.mubr.f32.mxu0 0.0
    %3918 = vmatmul.mubr.f32.gmra.mrb[0].mxu0 %v1608
    %v3919 = vpop.f32.mrb[0].mxu0
    %v3920 = vadd.f32 %v546, %v3919
    %v3921 = vpop.f32.mrb[0].mxu0
    %3922 = vmatprep.mubr.f32.mxu0 0.0
    %3923 = vmatmul.mubr.f32.gmra.mrb[0].mxu0 %v1611
    %v3924 = vpop.f32.mrb[0].mxu0
    %v3925 = vadd.f32 %v546, %v3924
    %v3926 = vpop.f32.mrb[0].mxu0
    %3927 = vmatprep.mubr.f32.mxu0 0.0
    %3928 = vmatmul.mubr.f32.gmra.mrb[0].mxu0 %v1614
    %v3929 = vpop.f32.mrb[0].mxu0
    %v3930 = vadd.f32 %v546, %v3929
    %v3931 = vpop.f32.mrb[0].mxu0
    %3932 = vmatprep.mubr.f32.mxu0 0.0
    %3933 = vmatmul.mubr.f32.gmra.mrb[0].mxu0 %v1617
    %v3934 = vpop.f32.mrb[0].mxu0
    %v3935 = vadd.f32 %v546, %v3934
    %v3936 = vpop.f32.mrb[0].mxu0
    %3937 = vmatprep.mubr.f32.mxu0 0.0
    %3938 = vmatmul.mubr.f32.gmra.mrb[0].mxu0 %v1620
    %v3939 = vpop.f32.mrb[0].mxu0
    %v3940 = vadd.f32 %v546, %v3939
    %v3941 = vpop.f32.mrb[0].mxu0
    %3942 = vmatprep.mubr.f32.mxu0 0.0
    %3943 = vmatmul.mubr.f32.gmra.mrb[0].mxu0 %v1623
    %v3944 = vpop.f32.mrb[0].mxu0
    %v3945 = vadd.f32 %v546, %v3944
    %v3946 = vpop.f32.mrb[0].mxu0
    %3947 = vmatprep.mubr.f32.mxu0 0.0
    %3948 = vmatmul.mubr.f32.gmra.mrb[0].mxu0 %v1626
    %v3949 = vpop.f32.mrb[0].mxu0
    %v3950 = vadd.f32 %v546, %v3949
    %v3951 = vpop.f32.mrb[0].mxu0
    %3952 = vmatprep.mubr.f32.mxu0 0.0
    %3953 = vmatmul.mubr.f32.gmra.mrb[0].mxu0 %v1629
    %v3954 = vpop.f32.mrb[0].mxu0
    %v3955 = vadd.f32 %v546, %v3954
    %v3956 = vpop.f32.mrb[0].mxu0
    %3957 = vmatprep.mubr.f32.mxu0 0.0
    %3958 = vmatmul.mubr.f32.gmra.mrb[0].mxu0 %v1632
    %v3959 = vpop.f32.mrb[0].mxu0
    %v3960 = vadd.f32 %v546, %v3959
    %v3961 = vpop.f32.mrb[0].mxu0
    %3962 = vmatprep.mubr.f32.mxu0 0.0
    %3963 = vmatmul.mubr.f32.gmra.mrb[0].mxu0 %v1635
    %v3964 = vpop.f32.mrb[0].mxu0
    %v3965 = vadd.f32 %v546, %v3964
    %v3966 = vpop.f32.mrb[0].mxu0
    %3967 = vmatprep.mubr.f32.mxu0 0.0
    %3968 = vmatmul.mubr.f32.gmra.mrb[0].mxu0 %v1638
    %v3969 = vpop.f32.mrb[0].mxu0
    %v3970 = vadd.f32 %v546, %v3969
    %v3971 = vpop.f32.mrb[0].mxu0
    %3972 = vmatprep.mubr.f32.mxu0 0.0
    %3973 = vmatmul.mubr.f32.gmra.mrb[0].mxu0 %v1641
    %v3974 = vpop.f32.mrb[0].mxu0
    %v3975 = vadd.f32 %v546, %v3974
    %v3976 = vpop.f32.mrb[0].mxu0
    %3977 = vmatprep.mubr.f32.mxu0 0.0
    %3978 = vmatmul.mubr.f32.gmra.mrb[0].mxu0 %v1644
    %v3979 = vpop.f32.mrb[0].mxu0
    %v3980 = vadd.f32 %v546, %v3979
    %v3981 = vpop.f32.mrb[0].mxu0
    %3982 = vmatprep.mubr.f32.mxu0 0.0
    %3983 = vmatmul.mubr.f32.gmra.mrb[0].mxu0 %v1647
    %v3984 = vpop.f32.mrb[0].mxu0
    %v3985 = vadd.f32 %v546, %v3984
    %v3986 = vpop.f32.mrb[0].mxu0
    %3987 = vmatprep.mubr.f32.mxu0 0.0
    %3988 = vmatmul.mubr.f32.gmra.mrb[0].mxu0 %v1650
    %v3989 = vpop.f32.mrb[0].mxu0
    %v3990 = vadd.f32 %v546, %v3989
    %v3991 = vpop.f32.mrb[0].mxu0
    %3992 = vmatprep.mubr.f32.mxu0 0.0
    %3993 = vmatmul.mubr.f32.gmra.mrb[0].mxu0 %v1653
    %v3994 = vpop.f32.mrb[0].mxu0
    %v3995 = vadd.f32 %v546, %v3994
    %v3996 = vpop.f32.mrb[0].mxu0
    %3997 = vmatprep.mubr.f32.mxu0 0.0
    %3998 = vmatmul.mubr.f32.gmra.mrb[0].mxu0 %v1656
    %v3999 = vpop.f32.mrb[0].mxu0
    %v4000 = vadd.f32 %v546, %v3999
    %v4001 = vpop.f32.mrb[0].mxu0
    %4002 = vmatprep.mubr.f32.mxu0 0.0
    %4003 = vmatmul.mubr.f32.gmra.mrb[0].mxu0 %v1659
    %v4004 = vpop.f32.mrb[0].mxu0
    %v4005 = vadd.f32 %v546, %v4004
    %v4006 = vpop.f32.mrb[0].mxu0
    %4007 = vmatprep.mubr.f32.mxu0 0.0
    %4008 = vmatmul.mubr.f32.gmra.mrb[0].mxu0 %v1662
    %v4009 = vpop.f32.mrb[0].mxu0
    %v4010 = vadd.f32 %v546, %v4009
    %v4011 = vpop.f32.mrb[0].mxu0
    %4012 = vmatprep.mubr.f32.mxu0 0.0
    %4013 = vmatmul.mubr.f32.gmra.mrb[0].mxu0 %v1665
    %v4014 = vpop.f32.mrb[0].mxu0
    %v4015 = vadd.f32 %v546, %v4014
    %v4016 = vpop.f32.mrb[0].mxu0
    %4017 = vmatprep.mubr.f32.mxu0 0.0
    %4018 = vmatmul.mubr.f32.gmra.mrb[0].mxu0 %v1668
    %v4019 = vpop.f32.mrb[0].mxu0
    %v4020 = vadd.f32 %v546, %v4019
    %v4021 = vpop.f32.mrb[0].mxu0
    %4022 = vmatprep.mubr.f32.mxu0 0.0
    %4023 = vmatmul.mubr.f32.gmra.mrb[0].mxu0 %v1671
    %v4024 = vpop.f32.mrb[0].mxu0
    %v4025 = vadd.f32 %v546, %v4024
    %v4026 = vpop.f32.mrb[0].mxu0
    %4027 = vmatprep.mubr.f32.mxu0 0.0
    %4028 = vmatmul.mubr.f32.gmra.mrb[0].mxu0 %v1674
    %v4029 = vpop.f32.mrb[0].mxu0
    %v4030 = vadd.f32 %v546, %v4029
    %v4031 = vpop.f32.mrb[0].mxu0
    %4032 = vmatprep.mubr.f32.mxu0 0.0
    %4033 = vmatmul.mubr.f32.gmra.mrb[0].mxu0 %v1677
    %v4034 = vpop.f32.mrb[0].mxu0
    %v4035 = vadd.f32 %v546, %v4034
    %v4036 = vpop.f32.mrb[0].mxu0
    %4037 = vmatprep.mubr.f32.mxu0 0.0
    %4038 = vmatmul.mubr.f32.gmra.mrb[0].mxu0 %v1680
    %v4039 = vpop.f32.mrb[0].mxu0
    %v4040 = vadd.f32 %v546, %v4039
    %v4041 = vpop.f32.mrb[0].mxu0
    %4042 = vmatprep.mubr.f32.mxu0 0.0
    %4043 = vmatmul.mubr.f32.gmra.mrb[0].mxu0 %v1683
    %v4044 = vpop.f32.mrb[0].mxu0
    %v4045 = vadd.f32 %v546, %v4044
    %v4046 = vpop.f32.mrb[0].mxu0
    %4047 = vmatprep.mubr.f32.mxu0 0.0
    %4048 = vmatmul.mubr.f32.gmra.mrb[0].mxu0 %v1686
    %v4049 = vpop.f32.mrb[0].mxu0
    %v4050 = vadd.f32 %v546, %v4049
    %v4051 = vpop.f32.mrb[0].mxu0
    %4052 = vmatprep.mubr.f32.mxu0 0.0
    %4053 = vmatmul.mubr.f32.gmra.mrb[0].mxu0 %v1689
    %v4054 = vpop.f32.mrb[0].mxu0
    %v4055 = vadd.f32 %v546, %v4054
    %v4056 = vpop.f32.mrb[0].mxu0
    %4057 = vmatprep.mubr.f32.mxu0 0.0
    %4058 = vmatmul.mubr.f32.gmra.mrb[0].mxu0 %v1692
    %v4059 = vpop.f32.mrb[0].mxu0
    %v4060 = vadd.f32 %v546, %v4059
    %v4061 = vpop.f32.mrb[0].mxu0
    %4062 = vmatprep.mubr.f32.mxu0 0.0
    %4063 = vmatmul.mubr.f32.gmra.mrb[0].mxu0 %v1695
    %v4064 = vpop.f32.mrb[0].mxu0
    %v4065 = vadd.f32 %v546, %v4064
    %v4066 = vpop.f32.mrb[0].mxu0
    %4067 = vmatprep.mubr.f32.mxu0 0.0
    %4068 = vmatmul.mubr.f32.gmra.mrb[0].mxu0 %v1698
    %v4069 = vpop.f32.mrb[0].mxu0
    %v4070 = vadd.f32 %v546, %v4069
    %v4071 = vpop.f32.mrb[0].mxu0
    %4072 = vmatprep.mubr.f32.mxu0 0.0
    %4073 = vmatmul.mubr.f32.gmra.mrb[0].mxu0 %v1701
    %v4074 = vpop.f32.mrb[0].mxu0
    %v4075 = vadd.f32 %v546, %v4074
    %v4076 = vpop.f32.mrb[0].mxu0
    %4077 = vmatprep.mubr.f32.mxu0 0.0
    %4078 = vmatmul.mubr.f32.gmra.mrb[0].mxu0 %v1704
    %v4079 = vpop.f32.mrb[0].mxu0
    %v4080 = vadd.f32 %v546, %v4079
    %v4081 = vpop.f32.mrb[0].mxu0
    %4082 = vmatprep.mubr.f32.mxu0 0.0
    %4083 = vmatmul.mubr.f32.gmra.mrb[0].mxu0 %v1707
    %v4084 = vpop.f32.mrb[0].mxu0
    %v4085 = vadd.f32 %v546, %v4084
    %v4086 = vpop.f32.mrb[0].mxu0
    %4087 = vmatprep.mubr.f32.mxu0 0.0
    %4088 = vmatmul.mubr.f32.gmra.mrb[0].mxu0 %v1710
    %v4089 = vpop.f32.mrb[0].mxu0
    %v4090 = vadd.f32 %v546, %v4089
    %v4091 = vpop.f32.mrb[0].mxu0
    %4092 = vmatprep.mubr.f32.mxu0 0.0
    %4093 = vmatmul.mubr.f32.gmra.mrb[0].mxu0 %v1713
    %v4094 = vpop.f32.mrb[0].mxu0
    %v4095 = vadd.f32 %v546, %v4094
    %v4096 = vpop.f32.mrb[0].mxu0
    %4097 = vmatprep.mubr.f32.mxu0 0.0
    %4098 = vmatmul.mubr.f32.gmra.mrb[0].mxu0 %v1716
    %v4099 = vpop.f32.mrb[0].mxu0
    %v4100 = vadd.f32 %v546, %v4099
    %v4101 = vpop.f32.mrb[0].mxu0
    %4102 = vmatprep.mubr.f32.mxu0 0.0
    %4103 = vmatmul.mubr.f32.gmra.mrb[0].mxu0 %v1719
    %v4104 = vpop.f32.mrb[0].mxu0
    %v4105 = vadd.f32 %v546, %v4104
    %v4106 = vpop.f32.mrb[0].mxu0
    %4107 = vmatprep.mubr.f32.mxu0 0.0
    %4108 = vmatmul.mubr.f32.gmra.mrb[0].mxu0 %v1722
    %v4109 = vpop.f32.mrb[0].mxu0
    %v4110 = vadd.f32 %v546, %v4109
    %v4111 = vpop.f32.mrb[0].mxu0
    %4112 = vmatprep.mubr.f32.mxu0 0.0
    %4113 = vmatmul.mubr.f32.gmra.mrb[0].mxu0 %v1725
    %v4114 = vpop.f32.mrb[0].mxu0
    %v4115 = vadd.f32 %v546, %v4114
    %v4116 = vpop.f32.mrb[0].mxu0
    %4117 = vmatprep.mubr.f32.mxu0 0.0
    %4118 = vmatmul.mubr.f32.gmra.mrb[0].mxu0 %v1728
    %v4119 = vpop.f32.mrb[0].mxu0
    %v4120 = vadd.f32 %v546, %v4119
    %v4121 = vpop.f32.mrb[0].mxu0
    %4122 = vmatprep.mubr.f32.mxu0 0.0
    %4123 = vmatmul.mubr.f32.gmra.mrb[0].mxu0 %v1731
    %v4124 = vpop.f32.mrb[0].mxu0
    %v4125 = vadd.f32 %v546, %v4124
    %v4126 = vpop.f32.mrb[0].mxu0
    %4127 = vmatprep.mubr.f32.mxu0 0.0
    %4128 = vmatmul.mubr.f32.gmra.mrb[0].mxu0 %v1734
    %v4129 = vpop.f32.mrb[0].mxu0
    %v4130 = vadd.f32 %v546, %v4129
    %v4131 = vpop.f32.mrb[0].mxu0
    %4132 = vmatprep.mubr.f32.mxu0 0.0
    %4133 = vmatmul.mubr.f32.gmra.mrb[0].mxu0 %v1737
    %v4134 = vpop.f32.mrb[0].mxu0
    %v4135 = vadd.f32 %v546, %v4134
    %v4136 = vpop.f32.mrb[0].mxu0
    %4137 = vmatprep.mubr.f32.mxu0 0.0
    %4138 = vmatmul.mubr.f32.gmra.mrb[0].mxu0 %v1740
    %v4139 = vpop.f32.mrb[0].mxu0
    %v4140 = vadd.f32 %v546, %v4139
    %v4141 = vpop.f32.mrb[0].mxu0
    %4142 = vmatprep.mubr.f32.mxu0 0.0
    %4143 = vmatmul.mubr.f32.gmra.mrb[0].mxu0 %v1743
    %v4144 = vpop.f32.mrb[0].mxu0
    %v4145 = vadd.f32 %v546, %v4144
    %v4146 = vpop.f32.mrb[0].mxu0
    %4147 = vmatprep.mubr.f32.mxu0 0.0
    %4148 = vmatmul.mubr.f32.gmra.mrb[0].mxu0 %v1746
    %v4149 = vpop.f32.mrb[0].mxu0
    %v4150 = vadd.f32 %v546, %v4149
    %v4151 = vpop.f32.mrb[0].mxu0
    %4152 = vmatprep.mubr.f32.mxu0 0.0
    %4153 = vmatmul.mubr.f32.gmra.mrb[0].mxu0 %v1749
    %v4154 = vpop.f32.mrb[0].mxu0
    %v4155 = vadd.f32 %v546, %v4154
    %v4156 = vpop.f32.mrb[0].mxu0
    %4157 = vmatprep.mubr.f32.mxu0 0.0
    %4158 = vmatmul.mubr.f32.gmra.mrb[0].mxu0 %v1752
    %v4159 = vpop.f32.mrb[0].mxu0
    %v4160 = vadd.f32 %v546, %v4159
    %v4161 = vpop.f32.mrb[0].mxu0
    %4162 = vmatprep.mubr.f32.mxu0 0.0
    %4163 = vmatmul.mubr.f32.gmra.mrb[0].mxu0 %v1755
    %v4164 = vpop.f32.mrb[0].mxu0
    %v4165 = vadd.f32 %v546, %v4164
    %v4166 = vpop.f32.mrb[0].mxu0
    %4167 = vmatprep.mubr.f32.mxu0 0.0
    %4168 = vmatmul.mubr.f32.gmra.mrb[0].mxu0 %v1758
    %v4169 = vpop.f32.mrb[0].mxu0
    %v4170 = vadd.f32 %v546, %v4169
    %v4171 = vpop.f32.mrb[0].mxu0
    %4172 = vmatprep.mubr.f32.mxu0 0.0
    %4173 = vmatmul.mubr.f32.gmra.mrb[0].mxu0 %v1761
    %v4174 = vpop.f32.mrb[0].mxu0
    %v4175 = vadd.f32 %v546, %v4174
    %v4176 = vpop.f32.mrb[0].mxu0
    %4177 = vmatprep.mubr.f32.mxu0 0.0
    %4178 = vmatmul.mubr.f32.gmra.mrb[0].mxu0 %v1764
    %v4179 = vpop.f32.mrb[0].mxu0
    %v4180 = vadd.f32 %v546, %v4179
    %v4181 = vpop.f32.mrb[0].mxu0
    %4182 = vmatprep.mubr.f32.mxu0 0.0
    %4183 = vmatmul.mubr.f32.gmra.mrb[0].mxu0 %v1767
    %v4184 = vpop.f32.mrb[0].mxu0
    %v4185 = vadd.f32 %v546, %v4184
    %v4186 = vpop.f32.mrb[0].mxu0
    %4187 = vmatprep.mubr.f32.mxu0 0.0
    %4188 = vmatmul.mubr.f32.gmra.mrb[0].mxu0 %v1770
    %v4189 = vpop.f32.mrb[0].mxu0
    %v4190 = vadd.f32 %v546, %v4189
    %v4191 = vpop.f32.mrb[0].mxu0
    %4192 = vmatprep.mubr.f32.mxu0 0.0
    %4193 = vmatmul.mubr.f32.gmra.mrb[0].mxu0 %v1773
    %v4194 = vpop.f32.mrb[0].mxu0
    %v4195 = vadd.f32 %v546, %v4194
    %v4196 = vpop.f32.mrb[0].mxu0
    %4197 = vmatprep.mubr.f32.mxu0 0.0
    %4198 = vmatmul.mubr.f32.gmra.mrb[0].mxu0 %v1776
    %v4199 = vpop.f32.mrb[0].mxu0
    %v4200 = vadd.f32 %v546, %v4199
    %v4201 = vpop.f32.mrb[0].mxu0
    %4202 = vmatprep.mubr.f32.mxu0 0.0
    %4203 = vmatmul.mubr.f32.gmra.mrb[0].mxu0 %v1779
    %v4204 = vpop.f32.mrb[0].mxu0
    %v4205 = vadd.f32 %v546, %v4204
    %v4206 = vpop.f32.mrb[0].mxu0
    %4207 = vmatprep.mubr.f32.mxu0 0.0
    %4208 = vmatmul.mubr.f32.gmra.mrb[0].mxu0 %v1782
    %v4209 = vpop.f32.mrb[0].mxu0
    %v4210 = vadd.f32 %v546, %v4209
    %v4211 = vpop.f32.mrb[0].mxu0
    %4212 = vmatprep.mubr.f32.mxu0 0.0
    %4213 = vmatmul.mubr.f32.gmra.mrb[0].mxu0 %v1785
    %v4214 = vpop.f32.mrb[0].mxu0
    %v4215 = vadd.f32 %v546, %v4214
    %v4216 = vpop.f32.mrb[0].mxu0
    %4217 = vmatprep.mubr.f32.mxu0 0.0
    %4218 = vmatmul.mubr.f32.gmra.mrb[0].mxu0 %v1788
    %v4219 = vpop.f32.mrb[0].mxu0
    %v4220 = vadd.f32 %v546, %v4219
    %v4221 = vpop.f32.mrb[0].mxu0
    %4222 = vmatprep.mubr.f32.mxu0 0.0
    %4223 = vmatmul.mubr.f32.gmra.mrb[0].mxu0 %v1791
    %v4224 = vpop.f32.mrb[0].mxu0
    %v4225 = vadd.f32 %v546, %v4224
    %v4226 = vpop.f32.mrb[0].mxu0
    %4227 = vmatprep.mubr.f32.mxu0 0.0
    %4228 = vmatmul.mubr.f32.gmra.mrb[0].mxu0 %v1794
    %v4229 = vpop.f32.mrb[0].mxu0
    %v4230 = vadd.f32 %v546, %v4229
    %v4231 = vpop.f32.mrb[0].mxu0
    %4232 = vmatprep.mubr.f32.mxu0 0.0
    %4233 = vmatmul.mubr.f32.gmra.mrb[0].mxu0 %v1797
    %v4234 = vpop.f32.mrb[0].mxu0
    %v4235 = vadd.f32 %v546, %v4234
    %v4236 = vpop.f32.mrb[0].mxu0
    %4237 = vmatprep.mubr.f32.mxu0 0.0
    %4238 = vmatmul.mubr.f32.gmra.mrb[0].mxu0 %v1800
    %v4239 = vpop.f32.mrb[0].mxu0
    %v4240 = vadd.f32 %v546, %v4239
    %v4241 = vpop.f32.mrb[0].mxu0
    %4242 = vmatprep.mubr.f32.mxu0 0.0
    %4243 = vmatmul.mubr.f32.gmra.mrb[0].mxu0 %v1803
    %v4244 = vpop.f32.mrb[0].mxu0
    %v4245 = vadd.f32 %v546, %v4244
    %v4246 = vpop.f32.mrb[0].mxu0
    %4247 = vmatprep.mubr.f32.mxu0 0.0
    %4248 = vmatmul.mubr.f32.gmra.mrb[0].mxu0 %v1806
    %v4249 = vpop.f32.mrb[0].mxu0
    %v4250 = vadd.f32 %v546, %v4249
    %v4251 = vpop.f32.mrb[0].mxu0
    %4252 = vmatprep.mubr.f32.mxu0 0.0
    %4253 = vmatmul.mubr.f32.gmra.mrb[0].mxu0 %v1809
    %v4254 = vpop.f32.mrb[0].mxu0
    %v4255 = vadd.f32 %v546, %v4254
    %v4256 = vpop.f32.mrb[0].mxu0
    %4257 = vmatprep.mubr.f32.mxu0 0.0
    %4258 = vmatmul.mubr.f32.gmra.mrb[0].mxu0 %v1812
    %v4259 = vpop.f32.mrb[0].mxu0
    %v4260 = vadd.f32 %v546, %v4259
    %v4261 = vpop.f32.mrb[0].mxu0
    %4262 = vmatprep.mubr.f32.mxu0 0.0
    %4263 = vmatmul.mubr.f32.gmra.mrb[0].mxu0 %v1815
    %v4264 = vpop.f32.mrb[0].mxu0
    %v4265 = vadd.f32 %v546, %v4264
    %v4266 = vpop.f32.mrb[0].mxu0
    %4267 = vmatprep.mubr.f32.mxu0 0.0
    %4268 = vmatmul.mubr.f32.gmra.mrb[0].mxu0 %v1818
    %v4269 = vpop.f32.mrb[0].mxu0
    %v4270 = vadd.f32 %v546, %v4269
    %v4271 = vpop.f32.mrb[0].mxu0
    %4272 = vmatprep.mubr.f32.mxu0 0.0
    %4273 = vmatmul.mubr.f32.gmra.mrb[0].mxu0 %v1821
    %v4274 = vpop.f32.mrb[0].mxu0
    %v4275 = vadd.f32 %v546, %v4274
    %v4276 = vpop.f32.mrb[0].mxu0
    %4277 = vmatprep.mubr.f32.mxu0 0.0
    %4278 = vmatmul.mubr.f32.gmra.mrb[0].mxu0 %v1824
    %v4279 = vpop.f32.mrb[0].mxu0
    %v4280 = vadd.f32 %v546, %v4279
    %v4281 = vpop.f32.mrb[0].mxu0
    %4282 = vmatprep.mubr.f32.mxu0 0.0
    %4283 = vmatmul.mubr.f32.gmra.mrb[0].mxu0 %v1827
    %v4284 = vpop.f32.mrb[0].mxu0
    %v4285 = vadd.f32 %v546, %v4284
    %v4286 = vpop.f32.mrb[0].mxu0
    %4287 = vmatprep.mubr.f32.mxu0 0.0
    %4288 = vmatmul.mubr.f32.gmra.mrb[0].mxu0 %v1830
    %v4289 = vpop.f32.mrb[0].mxu0
    %v4290 = vadd.f32 %v546, %v4289
    %v4291 = vpop.f32.mrb[0].mxu0
    %4292 = vmatprep.mubr.f32.mxu0 0.0
    %4293 = vmatmul.mubr.f32.gmra.mrb[0].mxu0 %v1833
    %v4294 = vpop.f32.mrb[0].mxu0
    %v4295 = vadd.f32 %v546, %v4294
    %v4296 = vpop.f32.mrb[0].mxu0
    %4297 = vmatprep.mubr.f32.mxu0 0.0
    %4298 = vmatmul.mubr.f32.gmra.mrb[0].mxu0 %v1836
    %v4299 = vpop.f32.mrb[0].mxu0
    %v4300 = vadd.f32 %v546, %v4299
    %v4301 = vpop.f32.mrb[0].mxu0
    %4302 = vmatprep.mubr.f32.mxu0 0.0
    %4303 = vmatmul.mubr.f32.gmra.mrb[0].mxu0 %v1839
    %v4304 = vpop.f32.mrb[0].mxu0
    %v4305 = vadd.f32 %v546, %v4304
    %v4306 = vpop.f32.mrb[0].mxu0
    %4307 = vmatprep.mubr.f32.mxu0 0.0
    %4308 = vmatmul.mubr.f32.gmra.mrb[0].mxu0 %v1842
    %v4309 = vpop.f32.mrb[0].mxu0
    %v4310 = vadd.f32 %v546, %v4309
    %v4311 = vpop.f32.mrb[0].mxu0
    %4312 = vmatprep.mubr.f32.mxu0 0.0
    %4313 = vmatmul.mubr.f32.gmra.mrb[0].mxu0 %v1845
    %v4314 = vpop.f32.mrb[0].mxu0
    %v4315 = vadd.f32 %v546, %v4314
    %v4316 = vpop.f32.mrb[0].mxu0
    %4317 = vmatprep.mubr.f32.mxu0 0.0
    %4318 = vmatmul.mubr.f32.gmra.mrb[0].mxu0 %v1848
    %v4319 = vpop.f32.mrb[0].mxu0
    %v4320 = vadd.f32 %v546, %v4319
    %v4321 = vpop.f32.mrb[0].mxu0
    %4322 = vmatprep.mubr.f32.mxu0 0.0
    %4323 = vmatmul.mubr.f32.gmra.mrb[0].mxu0 %v1851
    %v4324 = vpop.f32.mrb[0].mxu0
    %v4325 = vadd.f32 %v546, %v4324
    %v4326 = vpop.f32.mrb[0].mxu0
    %4327 = vmatprep.mubr.f32.mxu0 0.0
    %4328 = vmatmul.mubr.f32.gmra.mrb[0].mxu0 %v1854
    %v4329 = vpop.f32.mrb[0].mxu0
    %v4330 = vadd.f32 %v546, %v4329
    %v4331 = vpop.f32.mrb[0].mxu0
    %4332 = vmatprep.mubr.f32.mxu0 0.0
    %4333 = vmatmul.mubr.f32.gmra.mrb[0].mxu0 %v1857
    %v4334 = vpop.f32.mrb[0].mxu0
    %v4335 = vadd.f32 %v546, %v4334
    %v4336 = vpop.f32.mrb[0].mxu0
    %4337 = vmatprep.mubr.f32.mxu0 0.0
    %4338 = vmatmul.mubr.f32.gmra.mrb[0].mxu0 %v1860
    %v4339 = vpop.f32.mrb[0].mxu0
    %v4340 = vadd.f32 %v546, %v4339
    %v4341 = vpop.f32.mrb[0].mxu0
    %4342 = vmatprep.mubr.f32.mxu0 0.0
    %4343 = vmatmul.mubr.f32.gmra.mrb[0].mxu0 %v1863
    %v4344 = vpop.f32.mrb[0].mxu0
    %v4345 = vadd.f32 %v546, %v4344
    %v4346 = vpop.f32.mrb[0].mxu0
    %4347 = vmatprep.mubr.f32.mxu0 0.0
    %4348 = vmatmul.mubr.f32.gmra.mrb[0].mxu0 %v1866
    %v4349 = vpop.f32.mrb[0].mxu0
    %v4350 = vadd.f32 %v546, %v4349
    %v4351 = vpop.f32.mrb[0].mxu0
    %4352 = vmatprep.mubr.f32.mxu0 0.0
    %4353 = vmatmul.mubr.f32.gmra.mrb[0].mxu0 %v1869
    %v4354 = vpop.f32.mrb[0].mxu0
    %v4355 = vadd.f32 %v546, %v4354
    %v4356 = vpop.f32.mrb[0].mxu0
    %4357 = vmatprep.mubr.f32.mxu0 0.0
    %4358 = vmatmul.mubr.f32.gmra.mrb[0].mxu0 %v1872
    %v4359 = vpop.f32.mrb[0].mxu0
    %v4360 = vadd.f32 %v546, %v4359
    %v4361 = vpop.f32.mrb[0].mxu0
    %4362 = vmatprep.mubr.f32.mxu0 0.0
    %4363 = vmatmul.mubr.f32.gmra.mrb[0].mxu0 %v1875
    %v4364 = vpop.f32.mrb[0].mxu0
    %v4365 = vadd.f32 %v546, %v4364
    %v4366 = vpop.f32.mrb[0].mxu0
    %4367 = vmatprep.mubr.f32.mxu0 0.0
    %4368 = vmatmul.mubr.f32.gmra.mrb[0].mxu0 %v1878
    %v4369 = vpop.f32.mrb[0].mxu0
    %v4370 = vadd.f32 %v546, %v4369
    %v4371 = vpop.f32.mrb[0].mxu0
    %4372 = vmatprep.mubr.f32.mxu0 0.0
    %4373 = vmatmul.mubr.f32.gmra.mrb[0].mxu0 %v1881
    %v4374 = vpop.f32.mrb[0].mxu0
    %v4375 = vadd.f32 %v546, %v4374
    %v4376 = vpop.f32.mrb[0].mxu0
    %4377 = vmatprep.mubr.f32.mxu0 0.0
    %4378 = vmatmul.mubr.f32.gmra.mrb[0].mxu0 %v1884
    %v4379 = vpop.f32.mrb[0].mxu0
    %v4380 = vadd.f32 %v546, %v4379
    %v4381 = vpop.f32.mrb[0].mxu0
    %4382 = vmatprep.mubr.f32.mxu0 0.0
    %4383 = vmatmul.mubr.f32.gmra.mrb[0].mxu0 %v1887
    %v4384 = vpop.f32.mrb[0].mxu0
    %v4385 = vadd.f32 %v546, %v4384
    %v4386 = vpop.f32.mrb[0].mxu0
    %4387 = vmatprep.mubr.f32.mxu0 0.0
    %4388 = vmatmul.mubr.f32.gmra.mrb[0].mxu0 %v1890
    %v4389 = vpop.f32.mrb[0].mxu0
    %v4390 = vadd.f32 %v546, %v4389
    %v4391 = vpop.f32.mrb[0].mxu0
    %4392 = vmatprep.mubr.f32.mxu0 0.0
    %4393 = vmatmul.mubr.f32.gmra.mrb[0].mxu0 %v1893
    %v4394 = vpop.f32.mrb[0].mxu0
    %v4395 = vadd.f32 %v546, %v4394
    %v4396 = vpop.f32.mrb[0].mxu0
    %4397 = vmatprep.mubr.f32.mxu0 0.0
    %4398 = vmatmul.mubr.f32.gmra.mrb[0].mxu0 %v1896
    %v4399 = vpop.f32.mrb[0].mxu0
    %v4400 = vadd.f32 %v546, %v4399
    %v4401 = vpop.f32.mrb[0].mxu0
    %4402 = vmatprep.mubr.f32.mxu0 0.0
    %4403 = vmatmul.mubr.f32.gmra.mrb[0].mxu0 %v1899
    %v4404 = vpop.f32.mrb[0].mxu0
    %v4405 = vadd.f32 %v546, %v4404
    %v4406 = vpop.f32.mrb[0].mxu0
    %4407 = vmatprep.mubr.f32.mxu0 0.0
    %4408 = vmatmul.mubr.f32.gmra.mrb[0].mxu0 %v1902
    %v4409 = vpop.f32.mrb[0].mxu0
    %v4410 = vadd.f32 %v546, %v4409
    %v4411 = vpop.f32.mrb[0].mxu0
    %4412 = vmatprep.mubr.f32.mxu0 0.0
    %4413 = vmatmul.mubr.f32.gmra.mrb[0].mxu0 %v1905
    %v4414 = vpop.f32.mrb[0].mxu0
    %v4415 = vadd.f32 %v546, %v4414
    %v4416 = vpop.f32.mrb[0].mxu0
    %4417 = vmatprep.mubr.f32.mxu0 0.0
    %4418 = vmatmul.mubr.f32.gmra.mrb[0].mxu0 %v1908
    %v4419 = vpop.f32.mrb[0].mxu0
    %v4420 = vadd.f32 %v546, %v4419
    %v4421 = vpop.f32.mrb[0].mxu0
    %4422 = vmatprep.mubr.f32.mxu0 0.0
    %4423 = vmatmul.mubr.f32.gmra.mrb[0].mxu0 %v1911
    %v4424 = vpop.f32.mrb[0].mxu0
    %v4425 = vadd.f32 %v546, %v4424
    %v4426 = vpop.f32.mrb[0].mxu0
    %4427 = vmatprep.mubr.f32.mxu0 0.0
    %4428 = vmatmul.mubr.f32.gmra.mrb[0].mxu0 %v1914
    %v4429 = vpop.f32.mrb[0].mxu0
    %v4430 = vadd.f32 %v546, %v4429
    %v4431 = vpop.f32.mrb[0].mxu0
    %4432 = vmatprep.mubr.f32.mxu0 0.0
    %4433 = vmatmul.mubr.f32.gmra.mrb[0].mxu0 %v1917
    %v4434 = vpop.f32.mrb[0].mxu0
    %v4435 = vadd.f32 %v546, %v4434
    %v4436 = vpop.f32.mrb[0].mxu0
    %4437 = vmatprep.mubr.f32.mxu0 0.0
    %4438 = vmatmul.mubr.f32.gmra.mrb[0].mxu0 %v1920
    %v4439 = vpop.f32.mrb[0].mxu0
    %v4440 = vadd.f32 %v546, %v4439
    %v4441 = vpop.f32.mrb[0].mxu0
    %4442 = vmatprep.mubr.f32.mxu0 0.0
    %4443 = vmatmul.mubr.f32.gmra.mrb[0].mxu0 %v1923
    %v4444 = vpop.f32.mrb[0].mxu0
    %v4445 = vadd.f32 %v546, %v4444
    %v4446 = vpop.f32.mrb[0].mxu0
    %4447 = vmatprep.mubr.f32.mxu0 0.0
    %4448 = vmatmul.mubr.f32.gmra.mrb[0].mxu0 %v1926
    %v4449 = vpop.f32.mrb[0].mxu0
    %v4450 = vadd.f32 %v546, %v4449
    %v4451 = vpop.f32.mrb[0].mxu0
    %4452 = vmatprep.mubr.f32.mxu0 0.0
    %4453 = vmatmul.mubr.f32.gmra.mrb[0].mxu0 %v1929
    %v4454 = vpop.f32.mrb[0].mxu0
    %v4455 = vadd.f32 %v546, %v4454
    %v4456 = vpop.f32.mrb[0].mxu0
    %4457 = vmatprep.mubr.f32.mxu0 0.0
    %4458 = vmatmul.mubr.f32.gmra.mrb[0].mxu0 %v1932
    %v4459 = vpop.f32.mrb[0].mxu0
    %v4460 = vadd.f32 %v546, %v4459
    %v4461 = vpop.f32.mrb[0].mxu0
    %4462 = vmatprep.mubr.f32.mxu0 0.0
    %4463 = vmatmul.mubr.f32.gmra.mrb[0].mxu0 %v1935
    %v4464 = vpop.f32.mrb[0].mxu0
    %v4465 = vadd.f32 %v546, %v4464
    %v4466 = vpop.f32.mrb[0].mxu0
    %4467 = vmatprep.mubr.f32.mxu0 0.0
    %4468 = vmatmul.mubr.f32.gmra.mrb[0].mxu0 %v1938
    %v4469 = vpop.f32.mrb[0].mxu0
    %v4470 = vadd.f32 %v546, %v4469
    %v4471 = vpop.f32.mrb[0].mxu0
    %4472 = vmatprep.mubr.f32.mxu0 0.0
    %4473 = vmatmul.mubr.f32.gmra.mrb[0].mxu0 %v1941
    %v4474 = vpop.f32.mrb[0].mxu0
    %v4475 = vadd.f32 %v546, %v4474
    %v4476 = vpop.f32.mrb[0].mxu0
    %4477 = vmatprep.mubr.f32.mxu0 0.0
    %4478 = vmatmul.mubr.f32.gmra.mrb[0].mxu0 %v1944
    %v4479 = vpop.f32.mrb[0].mxu0
    %v4480 = vadd.f32 %v546, %v4479
    %v4481 = vpop.f32.mrb[0].mxu0
    %4482 = vmatprep.mubr.f32.mxu0 0.0
    %4483 = vmatmul.mubr.f32.gmra.mrb[0].mxu0 %v1947
    %v4484 = vpop.f32.mrb[0].mxu0
    %v4485 = vadd.f32 %v546, %v4484
    %v4486 = vpop.f32.mrb[0].mxu0
    %4487 = vmatprep.mubr.f32.mxu0 0.0
    %4488 = vmatmul.mubr.f32.gmra.mrb[0].mxu0 %v1950
    %v4489 = vpop.f32.mrb[0].mxu0
    %v4490 = vadd.f32 %v546, %v4489
    %v4491 = vpop.f32.mrb[0].mxu0
    %4492 = vmatprep.mubr.f32.mxu0 0.0
    %4493 = vmatmul.mubr.f32.gmra.mrb[0].mxu0 %v1953
    %v4494 = vpop.f32.mrb[0].mxu0
    %v4495 = vadd.f32 %v546, %v4494
    %v4496 = vpop.f32.mrb[0].mxu0
    %4497 = vmatprep.mubr.f32.mxu0 0.0
    %4498 = vmatmul.mubr.f32.gmra.mrb[0].mxu0 %v1956
    %v4499 = vpop.f32.mrb[0].mxu0
    %v4500 = vadd.f32 %v546, %v4499
    %v4501 = vpop.f32.mrb[0].mxu0
    %4502 = vmatprep.mubr.f32.mxu0 0.0
    %4503 = vmatmul.mubr.f32.gmra.mrb[0].mxu0 %v1959
    %v4504 = vpop.f32.mrb[0].mxu0
    %v4505 = vadd.f32 %v546, %v4504
    %v4506 = vpop.f32.mrb[0].mxu0
    %4507 = vmatprep.mubr.f32.mxu0 0.0
    %4508 = vmatmul.mubr.f32.gmra.mrb[0].mxu0 %v1962
    %v4509 = vpop.f32.mrb[0].mxu0
    %v4510 = vadd.f32 %v546, %v4509
    %v4511 = vpop.f32.mrb[0].mxu0
    %4512 = vmatprep.mubr.f32.mxu0 0.0
    %4513 = vmatmul.mubr.f32.gmra.mrb[0].mxu0 %v1965
    %v4514 = vpop.f32.mrb[0].mxu0
    %v4515 = vadd.f32 %v546, %v4514
    %v4516 = vpop.f32.mrb[0].mxu0
    %4517 = vmatprep.mubr.f32.mxu0 0.0
    %4518 = vmatmul.mubr.f32.gmra.mrb[0].mxu0 %v1968
    %v4519 = vpop.f32.mrb[0].mxu0
    %v4520 = vadd.f32 %v546, %v4519
    %v4521 = vpop.f32.mrb[0].mxu0
    %4522 = vmatprep.mubr.f32.mxu0 0.0
    %4523 = vmatmul.mubr.f32.gmra.mrb[0].mxu0 %v1971
    %v4524 = vpop.f32.mrb[0].mxu0
    %v4525 = vadd.f32 %v546, %v4524
    %v4526 = vpop.f32.mrb[0].mxu0
    %4527 = vmatprep.mubr.f32.mxu0 0.0
    %4528 = vmatmul.mubr.f32.gmra.mrb[0].mxu0 %v1974
    %v4529 = vpop.f32.mrb[0].mxu0
    %v4530 = vadd.f32 %v546, %v4529
    %v4531 = vpop.f32.mrb[0].mxu0
    %4532 = vmatprep.mubr.f32.mxu0 0.0
    %4533 = vmatmul.mubr.f32.gmra.mrb[0].mxu0 %v1977
    %v4534 = vpop.f32.mrb[0].mxu0
    %v4535 = vadd.f32 %v546, %v4534
    %v4536 = vpop.f32.mrb[0].mxu0
    %4537 = vmatprep.mubr.f32.mxu0 0.0
    %4538 = vmatmul.mubr.f32.gmra.mrb[0].mxu0 %v1980
    %v4539 = vpop.f32.mrb[0].mxu0
    %v4540 = vadd.f32 %v546, %v4539
    %v4541 = vpop.f32.mrb[0].mxu0
    %4542 = vmatprep.mubr.f32.mxu0 0.0
    %4543 = vmatmul.mubr.f32.gmra.mrb[0].mxu0 %v1983
    %v4544 = vpop.f32.mrb[0].mxu0
    %v4545 = vadd.f32 %v546, %v4544
    %v4546 = vpop.f32.mrb[0].mxu0
    %4547 = vmatprep.mubr.f32.mxu0 0.0
    %4548 = vmatmul.mubr.f32.gmra.mrb[0].mxu0 %v1986
    %v4549 = vpop.f32.mrb[0].mxu0
    %v4550 = vadd.f32 %v546, %v4549
    %v4551 = vpop.f32.mrb[0].mxu0
    %4552 = vmatprep.mubr.f32.mxu0 0.0
    %4553 = vmatmul.mubr.f32.gmra.mrb[0].mxu0 %v1989
    %v4554 = vpop.f32.mrb[0].mxu0
    %v4555 = vadd.f32 %v546, %v4554
    %v4556 = vpop.f32.mrb[0].mxu0
    %4557 = vmatprep.mubr.f32.mxu0 0.0
    %4558 = vmatmul.mubr.f32.gmra.mrb[0].mxu0 %v1992
    %v4559 = vpop.f32.mrb[0].mxu0
    %v4560 = vadd.f32 %v546, %v4559
    %v4561 = vpop.f32.mrb[0].mxu0
    %4562 = vmatprep.mubr.f32.mxu0 0.0
    %4563 = vmatmul.mubr.f32.gmra.mrb[0].mxu0 %v1995
    %v4564 = vpop.f32.mrb[0].mxu0
    %v4565 = vadd.f32 %v546, %v4564
    %v4566 = vpop.f32.mrb[0].mxu0
    %4567 = vmatprep.mubr.f32.mxu0 0.0
    %4568 = vmatmul.mubr.f32.gmra.mrb[0].mxu0 %v1998
    %v4569 = vpop.f32.mrb[0].mxu0
    %v4570 = vadd.f32 %v546, %v4569
    %v4571 = vpop.f32.mrb[0].mxu0
    %4572 = vmatprep.mubr.f32.mxu0 0.0
    %4573 = vmatmul.mubr.f32.gmra.mrb[0].mxu0 %v2001
    %v4574 = vpop.f32.mrb[0].mxu0
    %v4575 = vadd.f32 %v546, %v4574
    %v4576 = vpop.f32.mrb[0].mxu0
    %4577 = vmatprep.mubr.f32.mxu0 0.0
    %4578 = vmatmul.mubr.f32.gmra.mrb[0].mxu0 %v2004
    %v4579 = vpop.f32.mrb[0].mxu0
    %v4580 = vadd.f32 %v546, %v4579
    %v4581 = vpop.f32.mrb[0].mxu0
    %4582 = vmatprep.mubr.f32.mxu0 0.0
    %4583 = vmatmul.mubr.f32.gmra.mrb[0].mxu0 %v2007
    %v4584 = vpop.f32.mrb[0].mxu0
    %v4585 = vadd.f32 %v546, %v4584
    %v4586 = vpop.f32.mrb[0].mxu0
    %4587 = vmatprep.mubr.f32.mxu0 0.0
    %4588 = vmatmul.mubr.f32.gmra.mrb[0].mxu0 %v2010
    %v4589 = vpop.f32.mrb[0].mxu0
    %v4590 = vadd.f32 %v546, %v4589
    %v4591 = vpop.f32.mrb[0].mxu0
    %4592 = vmatprep.mubr.f32.mxu0 0.0
    %4593 = vmatmul.mubr.f32.gmra.mrb[0].mxu0 %v2013
    %v4594 = vpop.f32.mrb[0].mxu0
    %v4595 = vadd.f32 %v546, %v4594
    %v4596 = vpop.f32.mrb[0].mxu0
    %4597 = vmatprep.mubr.f32.mxu0 0.0
    %4598 = vmatmul.mubr.f32.gmra.mrb[0].mxu0 %v2016
    %v4599 = vpop.f32.mrb[0].mxu0
    %v4600 = vadd.f32 %v546, %v4599
    %v4601 = vpop.f32.mrb[0].mxu0
    %4602 = vmatprep.mubr.f32.mxu0 0.0
    %4603 = vmatmul.mubr.f32.gmra.mrb[0].mxu0 %v2019
    %v4604 = vpop.f32.mrb[0].mxu0
    %v4605 = vadd.f32 %v546, %v4604
    %v4606 = vpop.f32.mrb[0].mxu0
    %4607 = vmatprep.mubr.f32.mxu0 0.0
    %4608 = vmatmul.mubr.f32.gmra.mrb[0].mxu0 %v2022
    %v4609 = vpop.f32.mrb[0].mxu0
    %v4610 = vadd.f32 %v546, %v4609
    %v4611 = vpop.f32.mrb[0].mxu0
    %4612 = vmatprep.mubr.f32.mxu0 0.0
    %4613 = vmatmul.mubr.f32.gmra.mrb[0].mxu0 %v2025
    %v4614 = vpop.f32.mrb[0].mxu0
    %v4615 = vadd.f32 %v546, %v4614
    %v4616 = vpop.f32.mrb[0].mxu0
    %4617 = vmatprep.mubr.f32.mxu0 0.0
    %4618 = vmatmul.mubr.f32.gmra.mrb[0].mxu0 %v2028
    %v4619 = vpop.f32.mrb[0].mxu0
    %v4620 = vadd.f32 %v546, %v4619
    %v4621 = vpop.f32.mrb[0].mxu0
    %4622 = vmatprep.mubr.f32.mxu0 0.0
    %4623 = vmatmul.mubr.f32.gmra.mrb[0].mxu0 %v2031
    %v4624 = vpop.f32.mrb[0].mxu0
    %v4625 = vadd.f32 %v546, %v4624
    %v4626 = vpop.f32.mrb[0].mxu0
    %4627 = vmatprep.mubr.f32.mxu0 0.0
    %4628 = vmatmul.mubr.f32.gmra.mrb[0].mxu0 %v2034
    %v4629 = vpop.f32.mrb[0].mxu0
    %v4630 = vadd.f32 %v546, %v4629
    %v4631 = vpop.f32.mrb[0].mxu0
    %4632 = vmatprep.mubr.f32.mxu0 0.0
    %4633 = vmatmul.mubr.f32.gmra.mrb[0].mxu0 %v2037
    %v4634 = vpop.f32.mrb[0].mxu0
    %v4635 = vadd.f32 %v546, %v4634
    %v4636 = vpop.f32.mrb[0].mxu0
    %4637 = vmatprep.mubr.f32.mxu0 0.0
    %4638 = vmatmul.mubr.f32.gmra.mrb[0].mxu0 %v2040
    %v4639 = vpop.f32.mrb[0].mxu0
    %v4640 = vadd.f32 %v546, %v4639
    %v4641 = vpop.f32.mrb[0].mxu0
    %4642 = vmatprep.mubr.f32.mxu0 0.0
    %4643 = vmatmul.mubr.f32.gmra.mrb[0].mxu0 %v2043
    %v4644 = vpop.f32.mrb[0].mxu0
    %v4645 = vadd.f32 %v546, %v4644
    %v4646 = vpop.f32.mrb[0].mxu0
    %4647 = vmatprep.mubr.f32.mxu0 0.0
    %4648 = vmatmul.mubr.f32.gmra.mrb[0].mxu0 %v2046
    %v4649 = vpop.f32.mrb[0].mxu0
    %v4650 = vadd.f32 %v546, %v4649
    %v4651 = vpop.f32.mrb[0].mxu0
    %4652 = vmatprep.mubr.f32.mxu0 0.0
    %4653 = vmatmul.mubr.f32.gmra.mrb[0].mxu0 %v2049
    %v4654 = vpop.f32.mrb[0].mxu0
    %v4655 = vadd.f32 %v546, %v4654
    %v4656 = vpop.f32.mrb[0].mxu0
    %4657 = vmatprep.mubr.f32.mxu0 0.0
    %4658 = vmatmul.mubr.f32.gmra.mrb[0].mxu0 %v2052
    %v4659 = vpop.f32.mrb[0].mxu0
    %v4660 = vadd.f32 %v546, %v4659
    %v4661 = vpop.f32.mrb[0].mxu0
    %4662 = vmatprep.mubr.f32.mxu0 0.0
    %4663 = vmatmul.mubr.f32.gmra.mrb[0].mxu0 %v2055
    %v4664 = vpop.f32.mrb[0].mxu0
    %v4665 = vadd.f32 %v546, %v4664
    %v4666 = vpop.f32.mrb[0].mxu0
    %4667 = vmatprep.mubr.f32.mxu0 0.0
    %4668 = vmatmul.mubr.f32.gmra.mrb[0].mxu0 %v2058
    %v4669 = vpop.f32.mrb[0].mxu0
    %v4670 = vadd.f32 %v546, %v4669
    %v4671 = vpop.f32.mrb[0].mxu0
    %4672 = vmatprep.mubr.f32.mxu0 0.0
    %4673 = vmatmul.mubr.f32.gmra.mrb[0].mxu0 %v2061
    %v4674 = vpop.f32.mrb[0].mxu0
    %v4675 = vadd.f32 %v546, %v4674
    %v4676 = vpop.f32.mrb[0].mxu0
    %4677 = vmatprep.mubr.f32.mxu0 0.0
    %4678 = vmatmul.mubr.f32.gmra.mrb[0].mxu0 %v2064
    %v4679 = vpop.f32.mrb[0].mxu0
    %v4680 = vadd.f32 %v546, %v4679
    %v4681 = vpop.f32.mrb[0].mxu0
    %4682 = vmatprep.mubr.f32.mxu0 0.0
    %4683 = vmatmul.mubr.f32.gmra.mrb[0].mxu0 %v2067
    %v4684 = vpop.f32.mrb[0].mxu0
    %v4685 = vadd.f32 %v546, %v4684
    %v4686 = vpop.f32.mrb[0].mxu0
    %4687 = vmatprep.mubr.f32.mxu0 0.0
    %4688 = vmatmul.mubr.f32.gmra.mrb[0].mxu0 %v2070
    %v4689 = vpop.f32.mrb[0].mxu0
    %v4690 = vadd.f32 %v546, %v4689
    %v4691 = vpop.f32.mrb[0].mxu0
    %4692 = vmatprep.mubr.f32.mxu0 0.0
    %4693 = vmatmul.mubr.f32.gmra.mrb[0].mxu0 %v2073
    %v4694 = vpop.f32.mrb[0].mxu0
    %v4695 = vadd.f32 %v546, %v4694
    %v4696 = vpop.f32.mrb[0].mxu0
    %4697 = vmatprep.mubr.f32.mxu0 0.0
    %4698 = vmatmul.mubr.f32.gmra.mrb[0].mxu0 %v2076
    %v4699 = vpop.f32.mrb[0].mxu0
    %v4700 = vadd.f32 %v546, %v4699
    %v4701 = vpop.f32.mrb[0].mxu0
    %4702 = vmatprep.mubr.f32.mxu0 0.0
    %4703 = vmatmul.mubr.f32.gmra.mrb[0].mxu0 %v2079
    %v4704 = vpop.f32.mrb[0].mxu0
    %v4705 = vadd.f32 %v546, %v4704
    %v4706 = vpop.f32.mrb[0].mxu0
    %4707 = vmatprep.mubr.f32.mxu0 0.0
    %4708 = vmatmul.mubr.f32.gmra.mrb[0].mxu0 %v2082
    %v4709 = vpop.f32.mrb[0].mxu0
    %v4710 = vadd.f32 %v546, %v4709
    %v4711 = vpop.f32.mrb[0].mxu0
    %4712 = vdwg.mxu0
    %v4713 = vmax.f32 %v2155, 0.0
    %v4714 = vmax.f32 %v2160, 0.0
    %v4715 = vmax.f32 %v2165, 0.0
    %v4716 = vmax.f32 %v2170, 0.0
    %v4717 = vmax.f32 %v2175, 0.0
    %v4718 = vmax.f32 %v2180, 0.0
    %v4719 = vmax.f32 %v2185, 0.0
    %v4720 = vmax.f32 %v2190, 0.0
    %v4721 = vmax.f32 %v2195, 0.0
    %v4722 = vmax.f32 %v2200, 0.0
    %v4723 = vmax.f32 %v2205, 0.0
    %v4724 = vmax.f32 %v2210, 0.0
    %v4725 = vmax.f32 %v2215, 0.0
    %v4726 = vmax.f32 %v2220, 0.0
    %v4727 = vmax.f32 %v2225, 0.0
    %v4728 = vmax.f32 %v2230, 0.0
    %v4729 = vmax.f32 %v2235, 0.0
    %v4730 = vmax.f32 %v2240, 0.0
    %v4731 = vmax.f32 %v2245, 0.0
    %v4732 = vmax.f32 %v2250, 0.0
    %v4733 = vmax.f32 %v2255, 0.0
    %v4734 = vmax.f32 %v2260, 0.0
    %v4735 = vmax.f32 %v2265, 0.0
    %v4736 = vmax.f32 %v2270, 0.0
    %v4737 = vmax.f32 %v2275, 0.0
    %v4738 = vmax.f32 %v2280, 0.0
    %v4739 = vmax.f32 %v2285, 0.0
    %v4740 = vmax.f32 %v2290, 0.0
    %v4741 = vmax.f32 %v2295, 0.0
    %v4742 = vmax.f32 %v2300, 0.0
    %v4743 = vmax.f32 %v2305, 0.0
    %v4744 = vmax.f32 %v2310, 0.0
    %v4745 = vmax.f32 %v2315, 0.0
    %v4746 = vmax.f32 %v2320, 0.0
    %v4747 = vmax.f32 %v2325, 0.0
    %v4748 = vmax.f32 %v2330, 0.0
    %v4749 = vmax.f32 %v2335, 0.0
    %v4750 = vmax.f32 %v2340, 0.0
    %v4751 = vmax.f32 %v2345, 0.0
    %v4752 = vmax.f32 %v2350, 0.0
    %v4753 = vmax.f32 %v2355, 0.0
    %v4754 = vmax.f32 %v2360, 0.0
    %v4755 = vmax.f32 %v2365, 0.0
    %v4756 = vmax.f32 %v2370, 0.0
    %v4757 = vmax.f32 %v2375, 0.0
    %v4758 = vmax.f32 %v2380, 0.0
    %v4759 = vmax.f32 %v2385, 0.0
    %v4760 = vmax.f32 %v2390, 0.0
    %v4761 = vmax.f32 %v2395, 0.0
    %v4762 = vmax.f32 %v2400, 0.0
    %v4763 = vmax.f32 %v2405, 0.0
    %v4764 = vmax.f32 %v2410, 0.0
    %v4765 = vmax.f32 %v2415, 0.0
    %v4766 = vmax.f32 %v2420, 0.0
    %v4767 = vmax.f32 %v2425, 0.0
    %v4768 = vmax.f32 %v2430, 0.0
    %v4769 = vmax.f32 %v2435, 0.0
    %v4770 = vmax.f32 %v2440, 0.0
    %v4771 = vmax.f32 %v2445, 0.0
    %v4772 = vmax.f32 %v2450, 0.0
    %v4773 = vmax.f32 %v2455, 0.0
    %v4774 = vmax.f32 %v2460, 0.0
    %v4775 = vmax.f32 %v2465, 0.0
    %v4776 = vmax.f32 %v2470, 0.0
    %v4777 = vmax.f32 %v2475, 0.0
    %v4778 = vmax.f32 %v2480, 0.0
    %v4779 = vmax.f32 %v2485, 0.0
    %v4780 = vmax.f32 %v2490, 0.0
    %v4781 = vmax.f32 %v2495, 0.0
    %v4782 = vmax.f32 %v2500, 0.0
    %v4783 = vmax.f32 %v2505, 0.0
    %v4784 = vmax.f32 %v2510, 0.0
    %v4785 = vmax.f32 %v2515, 0.0
    %v4786 = vmax.f32 %v2520, 0.0
    %v4787 = vmax.f32 %v2525, 0.0
    %v4788 = vmax.f32 %v2530, 0.0
    %v4789 = vmax.f32 %v2535, 0.0
    %v4790 = vmax.f32 %v2540, 0.0
    %v4791 = vmax.f32 %v2545, 0.0
    %v4792 = vmax.f32 %v2550, 0.0
    %v4793 = vmax.f32 %v2555, 0.0
    %v4794 = vmax.f32 %v2560, 0.0
    %v4795 = vmax.f32 %v2565, 0.0
    %v4796 = vmax.f32 %v2570, 0.0
    %v4797 = vmax.f32 %v2575, 0.0
    %v4798 = vmax.f32 %v2580, 0.0
    %v4799 = vmax.f32 %v2585, 0.0
    %v4800 = vmax.f32 %v2590, 0.0
    %v4801 = vmax.f32 %v2595, 0.0
    %v4802 = vmax.f32 %v2600, 0.0
    %v4803 = vmax.f32 %v2605, 0.0
    %v4804 = vmax.f32 %v2610, 0.0
    %v4805 = vmax.f32 %v2615, 0.0
    %v4806 = vmax.f32 %v2620, 0.0
    %v4807 = vmax.f32 %v2625, 0.0
    %v4808 = vmax.f32 %v2630, 0.0
    %v4809 = vmax.f32 %v2635, 0.0
    %v4810 = vmax.f32 %v2640, 0.0
    %v4811 = vmax.f32 %v2645, 0.0
    %v4812 = vmax.f32 %v2650, 0.0
    %v4813 = vmax.f32 %v2655, 0.0
    %v4814 = vmax.f32 %v2660, 0.0
    %v4815 = vmax.f32 %v2665, 0.0
    %v4816 = vmax.f32 %v2670, 0.0
    %v4817 = vmax.f32 %v2675, 0.0
    %v4818 = vmax.f32 %v2680, 0.0
    %v4819 = vmax.f32 %v2685, 0.0
    %v4820 = vmax.f32 %v2690, 0.0
    %v4821 = vmax.f32 %v2695, 0.0
    %v4822 = vmax.f32 %v2700, 0.0
    %v4823 = vmax.f32 %v2705, 0.0
    %v4824 = vmax.f32 %v2710, 0.0
    %v4825 = vmax.f32 %v2715, 0.0
    %v4826 = vmax.f32 %v2720, 0.0
    %v4827 = vmax.f32 %v2725, 0.0
    %v4828 = vmax.f32 %v2730, 0.0
    %v4829 = vmax.f32 %v2735, 0.0
    %v4830 = vmax.f32 %v2740, 0.0
    %v4831 = vmax.f32 %v2745, 0.0
    %v4832 = vmax.f32 %v2750, 0.0
    %v4833 = vmax.f32 %v2755, 0.0
    %v4834 = vmax.f32 %v2760, 0.0
    %v4835 = vmax.f32 %v2765, 0.0
    %v4836 = vmax.f32 %v2770, 0.0
    %v4837 = vmax.f32 %v2775, 0.0
    %v4838 = vmax.f32 %v2780, 0.0
    %v4839 = vmax.f32 %v2785, 0.0
    %v4840 = vmax.f32 %v2790, 0.0
    %v4841 = vmax.f32 %v2795, 0.0
    %v4842 = vmax.f32 %v2800, 0.0
    %v4843 = vmax.f32 %v2805, 0.0
    %v4844 = vmax.f32 %v2810, 0.0
    %v4845 = vmax.f32 %v2815, 0.0
    %v4846 = vmax.f32 %v2820, 0.0
    %v4847 = vmax.f32 %v2825, 0.0
    %v4848 = vmax.f32 %v2830, 0.0
    %v4849 = vmax.f32 %v2835, 0.0
    %v4850 = vmax.f32 %v2840, 0.0
    %v4851 = vmax.f32 %v2845, 0.0
    %v4852 = vmax.f32 %v2850, 0.0
    %v4853 = vmax.f32 %v2855, 0.0
    %v4854 = vmax.f32 %v2860, 0.0
    %v4855 = vmax.f32 %v2865, 0.0
    %v4856 = vmax.f32 %v2870, 0.0
    %v4857 = vmax.f32 %v2875, 0.0
    %v4858 = vmax.f32 %v2880, 0.0
    %v4859 = vmax.f32 %v2885, 0.0
    %v4860 = vmax.f32 %v2890, 0.0
    %v4861 = vmax.f32 %v2895, 0.0
    %v4862 = vmax.f32 %v2900, 0.0
    %v4863 = vmax.f32 %v2905, 0.0
    %v4864 = vmax.f32 %v2910, 0.0
    %v4865 = vmax.f32 %v2915, 0.0
    %v4866 = vmax.f32 %v2920, 0.0
    %v4867 = vmax.f32 %v2925, 0.0
    %v4868 = vmax.f32 %v2930, 0.0
    %v4869 = vmax.f32 %v2935, 0.0
    %v4870 = vmax.f32 %v2940, 0.0
    %v4871 = vmax.f32 %v2945, 0.0
    %v4872 = vmax.f32 %v2950, 0.0
    %v4873 = vmax.f32 %v2955, 0.0
    %v4874 = vmax.f32 %v2960, 0.0
    %v4875 = vmax.f32 %v2965, 0.0
    %v4876 = vmax.f32 %v2970, 0.0
    %v4877 = vmax.f32 %v2975, 0.0
    %v4878 = vmax.f32 %v2980, 0.0
    %v4879 = vmax.f32 %v2985, 0.0
    %v4880 = vmax.f32 %v2990, 0.0
    %v4881 = vmax.f32 %v2995, 0.0
    %v4882 = vmax.f32 %v3000, 0.0
    %v4883 = vmax.f32 %v3005, 0.0
    %v4884 = vmax.f32 %v3010, 0.0
    %v4885 = vmax.f32 %v3015, 0.0
    %v4886 = vmax.f32 %v3020, 0.0
    %v4887 = vmax.f32 %v3025, 0.0
    %v4888 = vmax.f32 %v3030, 0.0
    %v4889 = vmax.f32 %v3035, 0.0
    %v4890 = vmax.f32 %v3040, 0.0
    %v4891 = vmax.f32 %v3045, 0.0
    %v4892 = vmax.f32 %v3050, 0.0
    %v4893 = vmax.f32 %v3055, 0.0
    %v4894 = vmax.f32 %v3060, 0.0
    %v4895 = vmax.f32 %v3065, 0.0
    %v4896 = vmax.f32 %v3070, 0.0
    %v4897 = vmax.f32 %v3075, 0.0
    %v4898 = vmax.f32 %v3080, 0.0
    %v4899 = vmax.f32 %v3085, 0.0
    %v4900 = vmax.f32 %v3090, 0.0
    %v4901 = vmax.f32 %v3095, 0.0
    %v4902 = vmax.f32 %v3100, 0.0
    %v4903 = vmax.f32 %v3105, 0.0
    %v4904 = vmax.f32 %v3110, 0.0
    %v4905 = vmax.f32 %v3115, 0.0
    %v4906 = vmax.f32 %v3120, 0.0
    %v4907 = vmax.f32 %v3125, 0.0
    %v4908 = vmax.f32 %v3130, 0.0
    %v4909 = vmax.f32 %v3135, 0.0
    %v4910 = vmax.f32 %v3140, 0.0
    %v4911 = vmax.f32 %v3145, 0.0
    %v4912 = vmax.f32 %v3150, 0.0
    %v4913 = vmax.f32 %v3155, 0.0
    %v4914 = vmax.f32 %v3160, 0.0
    %v4915 = vmax.f32 %v3165, 0.0
    %v4916 = vmax.f32 %v3170, 0.0
    %v4917 = vmax.f32 %v3175, 0.0
    %v4918 = vmax.f32 %v3180, 0.0
    %v4919 = vmax.f32 %v3185, 0.0
    %v4920 = vmax.f32 %v3190, 0.0
    %v4921 = vmax.f32 %v3195, 0.0
    %v4922 = vmax.f32 %v3200, 0.0
    %v4923 = vmax.f32 %v3205, 0.0
    %v4924 = vmax.f32 %v3210, 0.0
    %v4925 = vmax.f32 %v3215, 0.0
    %v4926 = vmax.f32 %v3220, 0.0
    %v4927 = vmax.f32 %v3225, 0.0
    %v4928 = vmax.f32 %v3230, 0.0
    %v4929 = vmax.f32 %v3235, 0.0
    %v4930 = vmax.f32 %v3240, 0.0
    %v4931 = vmax.f32 %v3245, 0.0
    %v4932 = vmax.f32 %v3250, 0.0
    %v4933 = vmax.f32 %v3255, 0.0
    %v4934 = vmax.f32 %v3260, 0.0
    %v4935 = vmax.f32 %v3265, 0.0
    %v4936 = vmax.f32 %v3270, 0.0
    %v4937 = vmax.f32 %v3275, 0.0
    %v4938 = vmax.f32 %v3280, 0.0
    %v4939 = vmax.f32 %v3285, 0.0
    %v4940 = vmax.f32 %v3290, 0.0
    %v4941 = vmax.f32 %v3295, 0.0
    %v4942 = vmax.f32 %v3300, 0.0
    %v4943 = vmax.f32 %v3305, 0.0
    %v4944 = vmax.f32 %v3310, 0.0
    %v4945 = vmax.f32 %v3315, 0.0
    %v4946 = vmax.f32 %v3320, 0.0
    %v4947 = vmax.f32 %v3325, 0.0
    %v4948 = vmax.f32 %v3330, 0.0
    %v4949 = vmax.f32 %v3335, 0.0
    %v4950 = vmax.f32 %v3340, 0.0
    %v4951 = vmax.f32 %v3345, 0.0
    %v4952 = vmax.f32 %v3350, 0.0
    %v4953 = vmax.f32 %v3355, 0.0
    %v4954 = vmax.f32 %v3360, 0.0
    %v4955 = vmax.f32 %v3365, 0.0
    %v4956 = vmax.f32 %v3370, 0.0
    %v4957 = vmax.f32 %v3375, 0.0
    %v4958 = vmax.f32 %v3380, 0.0
    %v4959 = vmax.f32 %v3385, 0.0
    %v4960 = vmax.f32 %v3390, 0.0
    %v4961 = vmax.f32 %v3395, 0.0
    %v4962 = vmax.f32 %v3400, 0.0
    %v4963 = vmax.f32 %v3405, 0.0
    %v4964 = vmax.f32 %v3410, 0.0
    %v4965 = vmax.f32 %v3415, 0.0
    %v4966 = vmax.f32 %v3420, 0.0
    %v4967 = vmax.f32 %v3425, 0.0
    %v4968 = vmax.f32 %v3430, 0.0
    %v4969 = vmax.f32 %v3435, 0.0
    %v4970 = vmax.f32 %v3440, 0.0
    %v4971 = vmax.f32 %v3445, 0.0
    %v4972 = vmax.f32 %v3450, 0.0
    %v4973 = vmax.f32 %v3455, 0.0
    %v4974 = vmax.f32 %v3460, 0.0
    %v4975 = vmax.f32 %v3465, 0.0
    %v4976 = vmax.f32 %v3470, 0.0
    %v4977 = vmax.f32 %v3475, 0.0
    %v4978 = vmax.f32 %v3480, 0.0
    %v4979 = vmax.f32 %v3485, 0.0
    %v4980 = vmax.f32 %v3490, 0.0
    %v4981 = vmax.f32 %v3495, 0.0
    %v4982 = vmax.f32 %v3500, 0.0
    %v4983 = vmax.f32 %v3505, 0.0
    %v4984 = vmax.f32 %v3510, 0.0
    %v4985 = vmax.f32 %v3515, 0.0
    %v4986 = vmax.f32 %v3520, 0.0
    %v4987 = vmax.f32 %v3525, 0.0
    %v4988 = vmax.f32 %v3530, 0.0
    %v4989 = vmax.f32 %v3535, 0.0
    %v4990 = vmax.f32 %v3540, 0.0
    %v4991 = vmax.f32 %v3545, 0.0
    %v4992 = vmax.f32 %v3550, 0.0
    %v4993 = vmax.f32 %v3555, 0.0
    %v4994 = vmax.f32 %v3560, 0.0
    %v4995 = vmax.f32 %v3565, 0.0
    %v4996 = vmax.f32 %v3570, 0.0
    %v4997 = vmax.f32 %v3575, 0.0
    %v4998 = vmax.f32 %v3580, 0.0
    %v4999 = vmax.f32 %v3585, 0.0
    %v5000 = vmax.f32 %v3590, 0.0
    %v5001 = vmax.f32 %v3595, 0.0
    %v5002 = vmax.f32 %v3600, 0.0
    %v5003 = vmax.f32 %v3605, 0.0
    %v5004 = vmax.f32 %v3610, 0.0
    %v5005 = vmax.f32 %v3615, 0.0
    %v5006 = vmax.f32 %v3620, 0.0
    %v5007 = vmax.f32 %v3625, 0.0
    %v5008 = vmax.f32 %v3630, 0.0
    %v5009 = vmax.f32 %v3635, 0.0
    %v5010 = vmax.f32 %v3640, 0.0
    %v5011 = vmax.f32 %v3645, 0.0
    %v5012 = vmax.f32 %v3650, 0.0
    %v5013 = vmax.f32 %v3655, 0.0
    %v5014 = vmax.f32 %v3660, 0.0
    %v5015 = vmax.f32 %v3665, 0.0
    %v5016 = vmax.f32 %v3670, 0.0
    %v5017 = vmax.f32 %v3675, 0.0
    %v5018 = vmax.f32 %v3680, 0.0
    %v5019 = vmax.f32 %v3685, 0.0
    %v5020 = vmax.f32 %v3690, 0.0
    %v5021 = vmax.f32 %v3695, 0.0
    %v5022 = vmax.f32 %v3700, 0.0
    %v5023 = vmax.f32 %v3705, 0.0
    %v5024 = vmax.f32 %v3710, 0.0
    %v5025 = vmax.f32 %v3715, 0.0
    %v5026 = vmax.f32 %v3720, 0.0
    %v5027 = vmax.f32 %v3725, 0.0
    %v5028 = vmax.f32 %v3730, 0.0
    %v5029 = vmax.f32 %v3735, 0.0
    %v5030 = vmax.f32 %v3740, 0.0
    %v5031 = vmax.f32 %v3745, 0.0
    %v5032 = vmax.f32 %v3750, 0.0
    %v5033 = vmax.f32 %v3755, 0.0
    %v5034 = vmax.f32 %v3760, 0.0
    %v5035 = vmax.f32 %v3765, 0.0
    %v5036 = vmax.f32 %v3770, 0.0
    %v5037 = vmax.f32 %v3775, 0.0
    %v5038 = vmax.f32 %v3780, 0.0
    %v5039 = vmax.f32 %v3785, 0.0
    %v5040 = vmax.f32 %v3790, 0.0
    %v5041 = vmax.f32 %v3795, 0.0
    %v5042 = vmax.f32 %v3800, 0.0
    %v5043 = vmax.f32 %v3805, 0.0
    %v5044 = vmax.f32 %v3810, 0.0
    %v5045 = vmax.f32 %v3815, 0.0
    %v5046 = vmax.f32 %v3820, 0.0
    %v5047 = vmax.f32 %v3825, 0.0
    %v5048 = vmax.f32 %v3830, 0.0
    %v5049 = vmax.f32 %v3835, 0.0
    %v5050 = vmax.f32 %v3840, 0.0
    %v5051 = vmax.f32 %v3845, 0.0
    %v5052 = vmax.f32 %v3850, 0.0
    %v5053 = vmax.f32 %v3855, 0.0
    %v5054 = vmax.f32 %v3860, 0.0
    %v5055 = vmax.f32 %v3865, 0.0
    %v5056 = vmax.f32 %v3870, 0.0
    %v5057 = vmax.f32 %v3875, 0.0
    %v5058 = vmax.f32 %v3880, 0.0
    %v5059 = vmax.f32 %v3885, 0.0
    %v5060 = vmax.f32 %v3890, 0.0
    %v5061 = vmax.f32 %v3895, 0.0
    %v5062 = vmax.f32 %v3900, 0.0
    %v5063 = vmax.f32 %v3905, 0.0
    %v5064 = vmax.f32 %v3910, 0.0
    %v5065 = vmax.f32 %v3915, 0.0
    %v5066 = vmax.f32 %v3920, 0.0
    %v5067 = vmax.f32 %v3925, 0.0
    %v5068 = vmax.f32 %v3930, 0.0
    %v5069 = vmax.f32 %v3935, 0.0
    %v5070 = vmax.f32 %v3940, 0.0
    %v5071 = vmax.f32 %v3945, 0.0
    %v5072 = vmax.f32 %v3950, 0.0
    %v5073 = vmax.f32 %v3955, 0.0
    %v5074 = vmax.f32 %v3960, 0.0
    %v5075 = vmax.f32 %v3965, 0.0
    %v5076 = vmax.f32 %v3970, 0.0
    %v5077 = vmax.f32 %v3975, 0.0
    %v5078 = vmax.f32 %v3980, 0.0
    %v5079 = vmax.f32 %v3985, 0.0
    %v5080 = vmax.f32 %v3990, 0.0
    %v5081 = vmax.f32 %v3995, 0.0
    %v5082 = vmax.f32 %v4000, 0.0
    %v5083 = vmax.f32 %v4005, 0.0
    %v5084 = vmax.f32 %v4010, 0.0
    %v5085 = vmax.f32 %v4015, 0.0
    %v5086 = vmax.f32 %v4020, 0.0
    %v5087 = vmax.f32 %v4025, 0.0
    %v5088 = vmax.f32 %v4030, 0.0
    %v5089 = vmax.f32 %v4035, 0.0
    %v5090 = vmax.f32 %v4040, 0.0
    %v5091 = vmax.f32 %v4045, 0.0
    %v5092 = vmax.f32 %v4050, 0.0
    %v5093 = vmax.f32 %v4055, 0.0
    %v5094 = vmax.f32 %v4060, 0.0
    %v5095 = vmax.f32 %v4065, 0.0
    %v5096 = vmax.f32 %v4070, 0.0
    %v5097 = vmax.f32 %v4075, 0.0
    %v5098 = vmax.f32 %v4080, 0.0
    %v5099 = vmax.f32 %v4085, 0.0
    %v5100 = vmax.f32 %v4090, 0.0
    %v5101 = vmax.f32 %v4095, 0.0
    %v5102 = vmax.f32 %v4100, 0.0
    %v5103 = vmax.f32 %v4105, 0.0
    %v5104 = vmax.f32 %v4110, 0.0
    %v5105 = vmax.f32 %v4115, 0.0
    %v5106 = vmax.f32 %v4120, 0.0
    %v5107 = vmax.f32 %v4125, 0.0
    %v5108 = vmax.f32 %v4130, 0.0
    %v5109 = vmax.f32 %v4135, 0.0
    %v5110 = vmax.f32 %v4140, 0.0
    %v5111 = vmax.f32 %v4145, 0.0
    %v5112 = vmax.f32 %v4150, 0.0
    %v5113 = vmax.f32 %v4155, 0.0
    %v5114 = vmax.f32 %v4160, 0.0
    %v5115 = vmax.f32 %v4165, 0.0
    %v5116 = vmax.f32 %v4170, 0.0
    %v5117 = vmax.f32 %v4175, 0.0
    %v5118 = vmax.f32 %v4180, 0.0
    %v5119 = vmax.f32 %v4185, 0.0
    %v5120 = vmax.f32 %v4190, 0.0
    %v5121 = vmax.f32 %v4195, 0.0
    %v5122 = vmax.f32 %v4200, 0.0
    %v5123 = vmax.f32 %v4205, 0.0
    %v5124 = vmax.f32 %v4210, 0.0
    %v5125 = vmax.f32 %v4215, 0.0
    %v5126 = vmax.f32 %v4220, 0.0
    %v5127 = vmax.f32 %v4225, 0.0
    %v5128 = vmax.f32 %v4230, 0.0
    %v5129 = vmax.f32 %v4235, 0.0
    %v5130 = vmax.f32 %v4240, 0.0
    %v5131 = vmax.f32 %v4245, 0.0
    %v5132 = vmax.f32 %v4250, 0.0
    %v5133 = vmax.f32 %v4255, 0.0
    %v5134 = vmax.f32 %v4260, 0.0
    %v5135 = vmax.f32 %v4265, 0.0
    %v5136 = vmax.f32 %v4270, 0.0
    %v5137 = vmax.f32 %v4275, 0.0
    %v5138 = vmax.f32 %v4280, 0.0
    %v5139 = vmax.f32 %v4285, 0.0
    %v5140 = vmax.f32 %v4290, 0.0
    %v5141 = vmax.f32 %v4295, 0.0
    %v5142 = vmax.f32 %v4300, 0.0
    %v5143 = vmax.f32 %v4305, 0.0
    %v5144 = vmax.f32 %v4310, 0.0
    %v5145 = vmax.f32 %v4315, 0.0
    %v5146 = vmax.f32 %v4320, 0.0
    %v5147 = vmax.f32 %v4325, 0.0
    %v5148 = vmax.f32 %v4330, 0.0
    %v5149 = vmax.f32 %v4335, 0.0
    %v5150 = vmax.f32 %v4340, 0.0
    %v5151 = vmax.f32 %v4345, 0.0
    %v5152 = vmax.f32 %v4350, 0.0
    %v5153 = vmax.f32 %v4355, 0.0
    %v5154 = vmax.f32 %v4360, 0.0
    %v5155 = vmax.f32 %v4365, 0.0
    %v5156 = vmax.f32 %v4370, 0.0
    %v5157 = vmax.f32 %v4375, 0.0
    %v5158 = vmax.f32 %v4380, 0.0
    %v5159 = vmax.f32 %v4385, 0.0
    %v5160 = vmax.f32 %v4390, 0.0
    %v5161 = vmax.f32 %v4395, 0.0
    %v5162 = vmax.f32 %v4400, 0.0
    %v5163 = vmax.f32 %v4405, 0.0
    %v5164 = vmax.f32 %v4410, 0.0
    %v5165 = vmax.f32 %v4415, 0.0
    %v5166 = vmax.f32 %v4420, 0.0
    %v5167 = vmax.f32 %v4425, 0.0
    %v5168 = vmax.f32 %v4430, 0.0
    %v5169 = vmax.f32 %v4435, 0.0
    %v5170 = vmax.f32 %v4440, 0.0
    %v5171 = vmax.f32 %v4445, 0.0
    %v5172 = vmax.f32 %v4450, 0.0
    %v5173 = vmax.f32 %v4455, 0.0
    %v5174 = vmax.f32 %v4460, 0.0
    %v5175 = vmax.f32 %v4465, 0.0
    %v5176 = vmax.f32 %v4470, 0.0
    %v5177 = vmax.f32 %v4475, 0.0
    %v5178 = vmax.f32 %v4480, 0.0
    %v5179 = vmax.f32 %v4485, 0.0
    %v5180 = vmax.f32 %v4490, 0.0
    %v5181 = vmax.f32 %v4495, 0.0
    %v5182 = vmax.f32 %v4500, 0.0
    %v5183 = vmax.f32 %v4505, 0.0
    %v5184 = vmax.f32 %v4510, 0.0
    %v5185 = vmax.f32 %v4515, 0.0
    %v5186 = vmax.f32 %v4520, 0.0
    %v5187 = vmax.f32 %v4525, 0.0
    %v5188 = vmax.f32 %v4530, 0.0
    %v5189 = vmax.f32 %v4535, 0.0
    %v5190 = vmax.f32 %v4540, 0.0
    %v5191 = vmax.f32 %v4545, 0.0
    %v5192 = vmax.f32 %v4550, 0.0
    %v5193 = vmax.f32 %v4555, 0.0
    %v5194 = vmax.f32 %v4560, 0.0
    %v5195 = vmax.f32 %v4565, 0.0
    %v5196 = vmax.f32 %v4570, 0.0
    %v5197 = vmax.f32 %v4575, 0.0
    %v5198 = vmax.f32 %v4580, 0.0
    %v5199 = vmax.f32 %v4585, 0.0
    %v5200 = vmax.f32 %v4590, 0.0
    %v5201 = vmax.f32 %v4595, 0.0
    %v5202 = vmax.f32 %v4600, 0.0
    %v5203 = vmax.f32 %v4605, 0.0
    %v5204 = vmax.f32 %v4610, 0.0
    %v5205 = vmax.f32 %v4615, 0.0
    %v5206 = vmax.f32 %v4620, 0.0
    %v5207 = vmax.f32 %v4625, 0.0
    %v5208 = vmax.f32 %v4630, 0.0
    %v5209 = vmax.f32 %v4635, 0.0
    %v5210 = vmax.f32 %v4640, 0.0
    %v5211 = vmax.f32 %v4645, 0.0
    %v5212 = vmax.f32 %v4650, 0.0
    %v5213 = vmax.f32 %v4655, 0.0
    %v5214 = vmax.f32 %v4660, 0.0
    %v5215 = vmax.f32 %v4665, 0.0
    %v5216 = vmax.f32 %v4670, 0.0
    %v5217 = vmax.f32 %v4675, 0.0
    %v5218 = vmax.f32 %v4680, 0.0
    %v5219 = vmax.f32 %v4685, 0.0
    %v5220 = vmax.f32 %v4690, 0.0
    %v5221 = vmax.f32 %v4695, 0.0
    %v5222 = vmax.f32 %v4700, 0.0
    %v5223 = vmax.f32 %v4705, 0.0
    %v5224 = vmax.f32 %v4710, 0.0
    %v5225 = vlaneseq
    %v5226 = vshrl.u32 %v5225, 7
    %v5227 = vadd.s32 %v5226, 8
    %v5228 = vlaneseq
    %v5229 = vand.u32 %v5228, 127
    %v5230 = vadd.s32 %v5229, 128
    %v5231 = vadd.s32 %v5229, 256
    %v5232 = vadd.s32 %v5229, 384
    %v5233 = vadd.s32 %v5229, 512
    %v5234 = vadd.s32 %v5229, 640
    %v5235 = vadd.s32 %v5229, 768
    %v5236 = vadd.s32 %v5229, 896
    %v5237 = vadd.s32 %v5229, 1024
    %v5238 = vadd.s32 %v5229, 1152
    %v5239 = vadd.s32 %v5229, 1280
    %v5240 = vadd.s32 %v5229, 1408
    %v5241 = vadd.s32 %v5229, 1536
    %v5242 = vadd.s32 %v5229, 1664
    %v5243 = vadd.s32 %v5229, 1792
    %v5244 = vadd.s32 %v5229, 1920
    %v5245 = vadd.s32 %v5229, 2048
    %v5246 = vadd.s32 %v5229, 2176
    %v5247 = vadd.s32 %v5229, 2304
    %v5248 = vadd.s32 %v5229, 2432
    %v5249 = vadd.s32 %v5229, 2560
    %v5250 = vadd.s32 %v5229, 2688
    %v5251 = vadd.s32 %v5229, 2816
    %v5252 = vadd.s32 %v5229, 2944
    %v5253 = vadd.s32 %v5229, 3072
    %v5254 = vadd.s32 %v5229, 3200
    %v5255 = vadd.s32 %v5229, 3328
    %v5256 = vadd.s32 %v5229, 3456
    %v5257 = vadd.s32 %v5229, 3584
    %v5258 = vadd.s32 %v5229, 3712
    %v5259 = vadd.s32 %v5229, 3840
    %v5260 = vadd.s32 %v5229, 3968
    %v5261 = vmul.u32 %v5226, 256
    %v5262 = vmul.u32 %v5227, 256
    %vm5263 = vcmp.ge.s32.totalorder %v5229, %v5261
    %vm5264 = vcmp.ge.s32.totalorder %v5230, %v5261
    %vm5265 = vcmp.ge.s32.totalorder %v5231, %v5261
    %vm5266 = vcmp.ge.s32.totalorder %v5232, %v5261
    %vm5267 = vcmp.ge.s32.totalorder %v5233, %v5261
    %vm5268 = vcmp.ge.s32.totalorder %v5234, %v5261
    %vm5269 = vcmp.ge.s32.totalorder %v5235, %v5261
    %vm5270 = vcmp.ge.s32.totalorder %v5236, %v5261
    %vm5271 = vcmp.ge.s32.totalorder %v5237, %v5261
    %vm5272 = vcmp.ge.s32.totalorder %v5238, %v5261
    %vm5273 = vcmp.ge.s32.totalorder %v5239, %v5261
    %vm5274 = vcmp.ge.s32.totalorder %v5240, %v5261
    %vm5275 = vcmp.ge.s32.totalorder %v5241, %v5261
    %vm5276 = vcmp.ge.s32.totalorder %v5242, %v5261
    %vm5277 = vcmp.ge.s32.totalorder %v5243, %v5261
    %vm5278 = vcmp.ge.s32.totalorder %v5244, %v5261
    %vm5279 = vcmp.ge.s32.totalorder %v5245, %v5261
    %vm5280 = vcmp.ge.s32.totalorder %v5246, %v5261
    %vm5281 = vcmp.ge.s32.totalorder %v5247, %v5261
    %vm5282 = vcmp.ge.s32.totalorder %v5248, %v5261
    %vm5283 = vcmp.ge.s32.totalorder %v5249, %v5261
    %vm5284 = vcmp.ge.s32.totalorder %v5250, %v5261
    %vm5285 = vcmp.ge.s32.totalorder %v5251, %v5261
    %vm5286 = vcmp.ge.s32.totalorder %v5252, %v5261
    %vm5287 = vcmp.ge.s32.totalorder %v5253, %v5261
    %vm5288 = vcmp.ge.s32.totalorder %v5254, %v5261
    %vm5289 = vcmp.ge.s32.totalorder %v5255, %v5261
    %vm5290 = vcmp.ge.s32.totalorder %v5256, %v5261
    %vm5291 = vcmp.ge.s32.totalorder %v5257, %v5261
    %vm5292 = vcmp.ge.s32.totalorder %v5258, %v5261
    %vm5293 = vcmp.ge.s32.totalorder %v5259, %v5261
    %vm5294 = vcmp.ge.s32.totalorder %v5260, %v5261
    %vm5295 = vcmp.ge.s32.totalorder %v5229, %v5262
    %vm5296 = vcmp.ge.s32.totalorder %v5230, %v5262
    %vm5297 = vcmp.ge.s32.totalorder %v5231, %v5262
    %vm5298 = vcmp.ge.s32.totalorder %v5232, %v5262
    %vm5299 = vcmp.ge.s32.totalorder %v5233, %v5262
    %vm5300 = vcmp.ge.s32.totalorder %v5234, %v5262
    %vm5301 = vcmp.ge.s32.totalorder %v5235, %v5262
    %vm5302 = vcmp.ge.s32.totalorder %v5236, %v5262
    %vm5303 = vcmp.ge.s32.totalorder %v5237, %v5262
    %vm5304 = vcmp.ge.s32.totalorder %v5238, %v5262
    %vm5305 = vcmp.ge.s32.totalorder %v5239, %v5262
    %vm5306 = vcmp.ge.s32.totalorder %v5240, %v5262
    %vm5307 = vcmp.ge.s32.totalorder %v5241, %v5262
    %vm5308 = vcmp.ge.s32.totalorder %v5242, %v5262
    %vm5309 = vcmp.ge.s32.totalorder %v5243, %v5262
    %vm5310 = vcmp.ge.s32.totalorder %v5244, %v5262
    %vm5311 = vcmp.ge.s32.totalorder %v5245, %v5262
    %vm5312 = vcmp.ge.s32.totalorder %v5246, %v5262
    %vm5313 = vcmp.ge.s32.totalorder %v5247, %v5262
    %vm5314 = vcmp.ge.s32.totalorder %v5248, %v5262
    %vm5315 = vcmp.ge.s32.totalorder %v5249, %v5262
    %vm5316 = vcmp.ge.s32.totalorder %v5250, %v5262
    %vm5317 = vcmp.ge.s32.totalorder %v5251, %v5262
    %vm5318 = vcmp.ge.s32.totalorder %v5252, %v5262
    %vm5319 = vcmp.ge.s32.totalorder %v5253, %v5262
    %vm5320 = vcmp.ge.s32.totalorder %v5254, %v5262
    %vm5321 = vcmp.ge.s32.totalorder %v5255, %v5262
    %vm5322 = vcmp.ge.s32.totalorder %v5256, %v5262
    %vm5323 = vcmp.ge.s32.totalorder %v5257, %v5262
    %vm5324 = vcmp.ge.s32.totalorder %v5258, %v5262
    %vm5325 = vcmp.ge.s32.totalorder %v5259, %v5262
    %vm5326 = vcmp.ge.s32.totalorder %v5260, %v5262
    %v5327 = vadd.s32 %v5261, 256
    %v5328 = vadd.s32 %v5262, 256
    %vm5329 = vcmp.lt.s32.totalorder %v5229, %v5327
    %vm5330 = vcmp.lt.s32.totalorder %v5230, %v5327
    %vm5331 = vcmp.lt.s32.totalorder %v5231, %v5327
    %vm5332 = vcmp.lt.s32.totalorder %v5232, %v5327
    %vm5333 = vcmp.lt.s32.totalorder %v5233, %v5327
    %vm5334 = vcmp.lt.s32.totalorder %v5234, %v5327
    %vm5335 = vcmp.lt.s32.totalorder %v5235, %v5327
    %vm5336 = vcmp.lt.s32.totalorder %v5236, %v5327
    %vm5337 = vcmp.lt.s32.totalorder %v5237, %v5327
    %vm5338 = vcmp.lt.s32.totalorder %v5238, %v5327
    %vm5339 = vcmp.lt.s32.totalorder %v5239, %v5327
    %vm5340 = vcmp.lt.s32.totalorder %v5240, %v5327
    %vm5341 = vcmp.lt.s32.totalorder %v5241, %v5327
    %vm5342 = vcmp.lt.s32.totalorder %v5242, %v5327
    %vm5343 = vcmp.lt.s32.totalorder %v5243, %v5327
    %vm5344 = vcmp.lt.s32.totalorder %v5244, %v5327
    %vm5345 = vcmp.lt.s32.totalorder %v5245, %v5327
    %vm5346 = vcmp.lt.s32.totalorder %v5246, %v5327
    %vm5347 = vcmp.lt.s32.totalorder %v5247, %v5327
    %vm5348 = vcmp.lt.s32.totalorder %v5248, %v5327
    %vm5349 = vcmp.lt.s32.totalorder %v5249, %v5327
    %vm5350 = vcmp.lt.s32.totalorder %v5250, %v5327
    %vm5351 = vcmp.lt.s32.totalorder %v5251, %v5327
    %vm5352 = vcmp.lt.s32.totalorder %v5252, %v5327
    %vm5353 = vcmp.lt.s32.totalorder %v5253, %v5327
    %vm5354 = vcmp.lt.s32.totalorder %v5254, %v5327
    %vm5355 = vcmp.lt.s32.totalorder %v5255, %v5327
    %vm5356 = vcmp.lt.s32.totalorder %v5256, %v5327
    %vm5357 = vcmp.lt.s32.totalorder %v5257, %v5327
    %vm5358 = vcmp.lt.s32.totalorder %v5258, %v5327
    %vm5359 = vcmp.lt.s32.totalorder %v5259, %v5327
    %vm5360 = vcmp.lt.s32.totalorder %v5260, %v5327
    %vm5361 = vcmp.lt.s32.totalorder %v5229, %v5328
    %vm5362 = vcmp.lt.s32.totalorder %v5230, %v5328
    %vm5363 = vcmp.lt.s32.totalorder %v5231, %v5328
    %vm5364 = vcmp.lt.s32.totalorder %v5232, %v5328
    %vm5365 = vcmp.lt.s32.totalorder %v5233, %v5328
    %vm5366 = vcmp.lt.s32.totalorder %v5234, %v5328
    %vm5367 = vcmp.lt.s32.totalorder %v5235, %v5328
    %vm5368 = vcmp.lt.s32.totalorder %v5236, %v5328
    %vm5369 = vcmp.lt.s32.totalorder %v5237, %v5328
    %vm5370 = vcmp.lt.s32.totalorder %v5238, %v5328
    %vm5371 = vcmp.lt.s32.totalorder %v5239, %v5328
    %vm5372 = vcmp.lt.s32.totalorder %v5240, %v5328
    %vm5373 = vcmp.lt.s32.totalorder %v5241, %v5328
    %vm5374 = vcmp.lt.s32.totalorder %v5242, %v5328
    %vm5375 = vcmp.lt.s32.totalorder %v5243, %v5328
    %vm5376 = vcmp.lt.s32.totalorder %v5244, %v5328
    %vm5377 = vcmp.lt.s32.totalorder %v5245, %v5328
    %vm5378 = vcmp.lt.s32.totalorder %v5246, %v5328
    %vm5379 = vcmp.lt.s32.totalorder %v5247, %v5328
    %vm5380 = vcmp.lt.s32.totalorder %v5248, %v5328
    %vm5381 = vcmp.lt.s32.totalorder %v5249, %v5328
    %vm5382 = vcmp.lt.s32.totalorder %v5250, %v5328
    %vm5383 = vcmp.lt.s32.totalorder %v5251, %v5328
    %vm5384 = vcmp.lt.s32.totalorder %v5252, %v5328
    %vm5385 = vcmp.lt.s32.totalorder %v5253, %v5328
    %vm5386 = vcmp.lt.s32.totalorder %v5254, %v5328
    %vm5387 = vcmp.lt.s32.totalorder %v5255, %v5328
    %vm5388 = vcmp.lt.s32.totalorder %v5256, %v5328
    %vm5389 = vcmp.lt.s32.totalorder %v5257, %v5328
    %vm5390 = vcmp.lt.s32.totalorder %v5258, %v5328
    %vm5391 = vcmp.lt.s32.totalorder %v5259, %v5328
    %vm5392 = vcmp.lt.s32.totalorder %v5260, %v5328
    %vm5393 = vmand %vm5263, %vm5329
    %vm5394 = vmand %vm5264, %vm5330
    %vm5395 = vmand %vm5265, %vm5331
    %vm5396 = vmand %vm5266, %vm5332
    %vm5397 = vmand %vm5267, %vm5333
    %vm5398 = vmand %vm5268, %vm5334
    %vm5399 = vmand %vm5269, %vm5335
    %vm5400 = vmand %vm5270, %vm5336
    %vm5401 = vmand %vm5271, %vm5337
    %vm5402 = vmand %vm5272, %vm5338
    %vm5403 = vmand %vm5273, %vm5339
    %vm5404 = vmand %vm5274, %vm5340
    %vm5405 = vmand %vm5275, %vm5341
    %vm5406 = vmand %vm5276, %vm5342
    %vm5407 = vmand %vm5277, %vm5343
    %vm5408 = vmand %vm5278, %vm5344
    %vm5409 = vmand %vm5279, %vm5345
    %vm5410 = vmand %vm5280, %vm5346
    %vm5411 = vmand %vm5281, %vm5347
    %vm5412 = vmand %vm5282, %vm5348
    %vm5413 = vmand %vm5283, %vm5349
    %vm5414 = vmand %vm5284, %vm5350
    %vm5415 = vmand %vm5285, %vm5351
    %vm5416 = vmand %vm5286, %vm5352
    %vm5417 = vmand %vm5287, %vm5353
    %vm5418 = vmand %vm5288, %vm5354
    %vm5419 = vmand %vm5289, %vm5355
    %vm5420 = vmand %vm5290, %vm5356
    %vm5421 = vmand %vm5291, %vm5357
    %vm5422 = vmand %vm5292, %vm5358
    %vm5423 = vmand %vm5293, %vm5359
    %vm5424 = vmand %vm5294, %vm5360
    %vm5425 = vmand %vm5295, %vm5361
    %vm5426 = vmand %vm5296, %vm5362
    %vm5427 = vmand %vm5297, %vm5363
    %vm5428 = vmand %vm5298, %vm5364
    %vm5429 = vmand %vm5299, %vm5365
    %vm5430 = vmand %vm5300, %vm5366
    %vm5431 = vmand %vm5301, %vm5367
    %vm5432 = vmand %vm5302, %vm5368
    %vm5433 = vmand %vm5303, %vm5369
    %vm5434 = vmand %vm5304, %vm5370
    %vm5435 = vmand %vm5305, %vm5371
    %vm5436 = vmand %vm5306, %vm5372
    %vm5437 = vmand %vm5307, %vm5373
    %vm5438 = vmand %vm5308, %vm5374
    %vm5439 = vmand %vm5309, %vm5375
    %vm5440 = vmand %vm5310, %vm5376
    %vm5441 = vmand %vm5311, %vm5377
    %vm5442 = vmand %vm5312, %vm5378
    %vm5443 = vmand %vm5313, %vm5379
    %vm5444 = vmand %vm5314, %vm5380
    %vm5445 = vmand %vm5315, %vm5381
    %vm5446 = vmand %vm5316, %vm5382
    %vm5447 = vmand %vm5317, %vm5383
    %vm5448 = vmand %vm5318, %vm5384
    %vm5449 = vmand %vm5319, %vm5385
    %vm5450 = vmand %vm5320, %vm5386
    %vm5451 = vmand %vm5321, %vm5387
    %vm5452 = vmand %vm5322, %vm5388
    %vm5453 = vmand %vm5323, %vm5389
    %vm5454 = vmand %vm5324, %vm5390
    %vm5455 = vmand %vm5325, %vm5391
    %vm5456 = vmand %vm5326, %vm5392
    %v5457 = vsel %vm5393, 0.00390625, 0.0
    %v5458 = vsel %vm5394, 0.00390625, 0.0
    %v5459 = vsel %vm5395, 0.00390625, 0.0
    %v5460 = vsel %vm5396, 0.00390625, 0.0
    %v5461 = vsel %vm5397, 0.00390625, 0.0
    %v5462 = vsel %vm5398, 0.00390625, 0.0
    %v5463 = vsel %vm5399, 0.00390625, 0.0
    %v5464 = vsel %vm5400, 0.00390625, 0.0
    %v5465 = vsel %vm5401, 0.00390625, 0.0
    %v5466 = vsel %vm5402, 0.00390625, 0.0
    %v5467 = vsel %vm5403, 0.00390625, 0.0
    %v5468 = vsel %vm5404, 0.00390625, 0.0
    %v5469 = vsel %vm5405, 0.00390625, 0.0
    %v5470 = vsel %vm5406, 0.00390625, 0.0
    %v5471 = vsel %vm5407, 0.00390625, 0.0
    %v5472 = vsel %vm5408, 0.00390625, 0.0
    %v5473 = vsel %vm5409, 0.00390625, 0.0
    %v5474 = vsel %vm5410, 0.00390625, 0.0
    %v5475 = vsel %vm5411, 0.00390625, 0.0
    %v5476 = vsel %vm5412, 0.00390625, 0.0
    %v5477 = vsel %vm5413, 0.00390625, 0.0
    %v5478 = vsel %vm5414, 0.00390625, 0.0
    %v5479 = vsel %vm5415, 0.00390625, 0.0
    %v5480 = vsel %vm5416, 0.00390625, 0.0
    %v5481 = vsel %vm5417, 0.00390625, 0.0
    %v5482 = vsel %vm5418, 0.00390625, 0.0
    %v5483 = vsel %vm5419, 0.00390625, 0.0
    %v5484 = vsel %vm5420, 0.00390625, 0.0
    %v5485 = vsel %vm5421, 0.00390625, 0.0
    %v5486 = vsel %vm5422, 0.00390625, 0.0
    %v5487 = vsel %vm5423, 0.00390625, 0.0
    %v5488 = vsel %vm5424, 0.00390625, 0.0
    %v5489 = vsel %vm5425, 0.00390625, 0.0
    %v5490 = vsel %vm5426, 0.00390625, 0.0
    %v5491 = vsel %vm5427, 0.00390625, 0.0
    %v5492 = vsel %vm5428, 0.00390625, 0.0
    %v5493 = vsel %vm5429, 0.00390625, 0.0
    %v5494 = vsel %vm5430, 0.00390625, 0.0
    %v5495 = vsel %vm5431, 0.00390625, 0.0
    %v5496 = vsel %vm5432, 0.00390625, 0.0
    %v5497 = vsel %vm5433, 0.00390625, 0.0
    %v5498 = vsel %vm5434, 0.00390625, 0.0
    %v5499 = vsel %vm5435, 0.00390625, 0.0
    %v5500 = vsel %vm5436, 0.00390625, 0.0
    %v5501 = vsel %vm5437, 0.00390625, 0.0
    %v5502 = vsel %vm5438, 0.00390625, 0.0
    %v5503 = vsel %vm5439, 0.00390625, 0.0
    %v5504 = vsel %vm5440, 0.00390625, 0.0
    %v5505 = vsel %vm5441, 0.00390625, 0.0
    %v5506 = vsel %vm5442, 0.00390625, 0.0
    %v5507 = vsel %vm5443, 0.00390625, 0.0
    %v5508 = vsel %vm5444, 0.00390625, 0.0
    %v5509 = vsel %vm5445, 0.00390625, 0.0
    %v5510 = vsel %vm5446, 0.00390625, 0.0
    %v5511 = vsel %vm5447, 0.00390625, 0.0
    %v5512 = vsel %vm5448, 0.00390625, 0.0
    %v5513 = vsel %vm5449, 0.00390625, 0.0
    %v5514 = vsel %vm5450, 0.00390625, 0.0
    %v5515 = vsel %vm5451, 0.00390625, 0.0
    %v5516 = vsel %vm5452, 0.00390625, 0.0
    %v5517 = vsel %vm5453, 0.00390625, 0.0
    %v5518 = vsel %vm5454, 0.00390625, 0.0
    %v5519 = vsel %vm5455, 0.00390625, 0.0
    %v5520 = vsel %vm5456, 0.00390625, 0.0
    %5521 = vmatprep.subr.mxu0 0.0
    %5522 = vmatpush1.msra.mxu0 %v4713
    %5523 = vmatprep.subr.mxu0 0.0
    %5524 = vmatpush1.msra.mxu0 %v4714
    %5525 = vmatprep.subr.mxu0 0.0
    %5526 = vmatpush1.msra.mxu0 %v4715
    %5527 = vmatprep.subr.mxu0 0.0
    %5528 = vmatpush1.msra.mxu0 %v4716
    %5529 = vmatprep.subr.mxu0 0.0
    %5530 = vmatpush1.msra.mxu0 %v4717
    %5531 = vmatprep.subr.mxu0 0.0
    %5532 = vmatpush1.msra.mxu0 %v4718
    %5533 = vmatprep.subr.mxu0 0.0
    %5534 = vmatpush1.msra.mxu0 %v4719
    %5535 = vmatprep.subr.mxu0 0.0
    %5536 = vmatpush1.msra.mxu0 %v4720
    %5537 = vmatprep.subr.mxu0 0.0
    %5538 = vmatpush1.msra.mxu0 %v4721
    %5539 = vmatprep.subr.mxu0 0.0
    %5540 = vmatpush1.msra.mxu0 %v4722
    %5541 = vmatprep.subr.mxu0 0.0
    %5542 = vmatpush1.msra.mxu0 %v4723
    %5543 = vmatprep.subr.mxu0 0.0
    %5544 = vmatpush1.msra.mxu0 %v4724
    %5545 = vmatprep.subr.mxu0 0.0
    %5546 = vmatpush1.msra.mxu0 %v4725
    %5547 = vmatprep.subr.mxu0 0.0
    %5548 = vmatpush1.msra.mxu0 %v4726
    %5549 = vmatprep.subr.mxu0 0.0
    %5550 = vmatpush1.msra.mxu0 %v4727
    %5551 = vmatprep.subr.mxu0 0.0
    %5552 = vmatpush1.msra.mxu0 %v4728
    %5553 = vmatprep.subr.mxu0 0.0
    %5554 = vmatpush1.msra.mxu0 %v4729
    %5555 = vmatprep.subr.mxu0 0.0
    %5556 = vmatpush1.msra.mxu0 %v4730
    %5557 = vmatprep.subr.mxu0 0.0
    %5558 = vmatpush1.msra.mxu0 %v4731
    %5559 = vmatprep.subr.mxu0 0.0
    %5560 = vmatpush1.msra.mxu0 %v4732
    %5561 = vmatprep.subr.mxu0 0.0
    %5562 = vmatpush1.msra.mxu0 %v4733
    %5563 = vmatprep.subr.mxu0 0.0
    %5564 = vmatpush1.msra.mxu0 %v4734
    %5565 = vmatprep.subr.mxu0 0.0
    %5566 = vmatpush1.msra.mxu0 %v4735
    %5567 = vmatprep.subr.mxu0 0.0
    %5568 = vmatpush1.msra.mxu0 %v4736
    %5569 = vmatprep.subr.mxu0 0.0
    %5570 = vmatpush1.msra.mxu0 %v4737
    %5571 = vmatprep.subr.mxu0 0.0
    %5572 = vmatpush1.msra.mxu0 %v4738
    %5573 = vmatprep.subr.mxu0 0.0
    %5574 = vmatpush1.msra.mxu0 %v4739
    %5575 = vmatprep.subr.mxu0 0.0
    %5576 = vmatpush1.msra.mxu0 %v4740
    %5577 = vmatprep.subr.mxu0 0.0
    %5578 = vmatpush1.msra.mxu0 %v4741
    %5579 = vmatprep.subr.mxu0 0.0
    %5580 = vmatpush1.msra.mxu0 %v4742
    %5581 = vmatprep.subr.mxu0 0.0
    %5582 = vmatpush1.msra.mxu0 %v4743
    %5583 = vmatprep.subr.mxu0 0.0
    %5584 = vmatpush1.msra.mxu0 %v4744
    %5585 = vmatprep.mubr.f32.mxu0 %v5458
    %5586 = vmatmul.mubr.f32.gmra.mrb[0].mxu0 %v5457
    %v5587 = vpop.f32.mrb[0].mxu0
    %v5588 = vadd.f32 0.0, %v5587
    %v5589 = vpop.f32.mrb[0].mxu0
    %5590 = vmatprep.mubr.f32.mxu0 %v5490
    %5591 = vmatmul.mubr.f32.gmra.mrb[0].mxu0 %v5489
    %v5592 = vpop.f32.mrb[0].mxu0
    %v5593 = vadd.f32 0.0, %v5592
    %v5594 = vpop.f32.mrb[0].mxu0
    %5595 = vdwg.mxu0
    %5596 = vmatprep.subr.mxu0 0.0
    %5597 = vmatpush1.msra.mxu0 %v4745
    %5598 = vmatprep.subr.mxu0 0.0
    %5599 = vmatpush1.msra.mxu0 %v4746
    %5600 = vmatprep.subr.mxu0 0.0
    %5601 = vmatpush1.msra.mxu0 %v4747
    %5602 = vmatprep.subr.mxu0 0.0
    %5603 = vmatpush1.msra.mxu0 %v4748
    %5604 = vmatprep.subr.mxu0 0.0
    %5605 = vmatpush1.msra.mxu0 %v4749
    %5606 = vmatprep.subr.mxu0 0.0
    %5607 = vmatpush1.msra.mxu0 %v4750
    %5608 = vmatprep.subr.mxu0 0.0
    %5609 = vmatpush1.msra.mxu0 %v4751
    %5610 = vmatprep.subr.mxu0 0.0
    %5611 = vmatpush1.msra.mxu0 %v4752
    %5612 = vmatprep.subr.mxu0 0.0
    %5613 = vmatpush1.msra.mxu0 %v4753
    %5614 = vmatprep.subr.mxu0 0.0
    %5615 = vmatpush1.msra.mxu0 %v4754
    %5616 = vmatprep.subr.mxu0 0.0
    %5617 = vmatpush1.msra.mxu0 %v4755
    %5618 = vmatprep.subr.mxu0 0.0
    %5619 = vmatpush1.msra.mxu0 %v4756
    %5620 = vmatprep.subr.mxu0 0.0
    %5621 = vmatpush1.msra.mxu0 %v4757
    %5622 = vmatprep.subr.mxu0 0.0
    %5623 = vmatpush1.msra.mxu0 %v4758
    %5624 = vmatprep.subr.mxu0 0.0
    %5625 = vmatpush1.msra.mxu0 %v4759
    %5626 = vmatprep.subr.mxu0 0.0
    %5627 = vmatpush1.msra.mxu0 %v4760
    %5628 = vmatprep.subr.mxu0 0.0
    %5629 = vmatpush1.msra.mxu0 %v4761
    %5630 = vmatprep.subr.mxu0 0.0
    %5631 = vmatpush1.msra.mxu0 %v4762
    %5632 = vmatprep.subr.mxu0 0.0
    %5633 = vmatpush1.msra.mxu0 %v4763
    %5634 = vmatprep.subr.mxu0 0.0
    %5635 = vmatpush1.msra.mxu0 %v4764
    %5636 = vmatprep.subr.mxu0 0.0
    %5637 = vmatpush1.msra.mxu0 %v4765
    %5638 = vmatprep.subr.mxu0 0.0
    %5639 = vmatpush1.msra.mxu0 %v4766
    %5640 = vmatprep.subr.mxu0 0.0
    %5641 = vmatpush1.msra.mxu0 %v4767
    %5642 = vmatprep.subr.mxu0 0.0
    %5643 = vmatpush1.msra.mxu0 %v4768
    %5644 = vmatprep.subr.mxu0 0.0
    %5645 = vmatpush1.msra.mxu0 %v4769
    %5646 = vmatprep.subr.mxu0 0.0
    %5647 = vmatpush1.msra.mxu0 %v4770
    %5648 = vmatprep.subr.mxu0 0.0
    %5649 = vmatpush1.msra.mxu0 %v4771
    %5650 = vmatprep.subr.mxu0 0.0
    %5651 = vmatpush1.msra.mxu0 %v4772
    %5652 = vmatprep.subr.mxu0 0.0
    %5653 = vmatpush1.msra.mxu0 %v4773
    %5654 = vmatprep.subr.mxu0 0.0
    %5655 = vmatpush1.msra.mxu0 %v4774
    %5656 = vmatprep.subr.mxu0 0.0
    %5657 = vmatpush1.msra.mxu0 %v4775
    %5658 = vmatprep.subr.mxu0 0.0
    %5659 = vmatpush1.msra.mxu0 %v4776
    %5660 = vmatprep.mubr.f32.mxu0 %v5460
    %5661 = vmatmul.mubr.f32.gmra.mrb[0].mxu0 %v5459
    %v5662 = vpop.f32.mrb[0].mxu0
    %v5663 = vadd.f32 %v5588, %v5662
    %v5664 = vpop.f32.mrb[0].mxu0
    %5665 = vmatprep.mubr.f32.mxu0 %v5492
    %5666 = vmatmul.mubr.f32.gmra.mrb[0].mxu0 %v5491
    %v5667 = vpop.f32.mrb[0].mxu0
    %v5668 = vadd.f32 %v5593, %v5667
    %v5669 = vpop.f32.mrb[0].mxu0
    %5670 = vdwg.mxu0
    %5671 = vmatprep.subr.mxu0 0.0
    %5672 = vmatpush1.msra.mxu0 %v4777
    %5673 = vmatprep.subr.mxu0 0.0
    %5674 = vmatpush1.msra.mxu0 %v4778
    %5675 = vmatprep.subr.mxu0 0.0
    %5676 = vmatpush1.msra.mxu0 %v4779
    %5677 = vmatprep.subr.mxu0 0.0
    %5678 = vmatpush1.msra.mxu0 %v4780
    %5679 = vmatprep.subr.mxu0 0.0
    %5680 = vmatpush1.msra.mxu0 %v4781
    %5681 = vmatprep.subr.mxu0 0.0
    %5682 = vmatpush1.msra.mxu0 %v4782
    %5683 = vmatprep.subr.mxu0 0.0
    %5684 = vmatpush1.msra.mxu0 %v4783
    %5685 = vmatprep.subr.mxu0 0.0
    %5686 = vmatpush1.msra.mxu0 %v4784
    %5687 = vmatprep.subr.mxu0 0.0
    %5688 = vmatpush1.msra.mxu0 %v4785
    %5689 = vmatprep.subr.mxu0 0.0
    %5690 = vmatpush1.msra.mxu0 %v4786
    %5691 = vmatprep.subr.mxu0 0.0
    %5692 = vmatpush1.msra.mxu0 %v4787
    %5693 = vmatprep.subr.mxu0 0.0
    %5694 = vmatpush1.msra.mxu0 %v4788
    %5695 = vmatprep.subr.mxu0 0.0
    %5696 = vmatpush1.msra.mxu0 %v4789
    %5697 = vmatprep.subr.mxu0 0.0
    %5698 = vmatpush1.msra.mxu0 %v4790
    %5699 = vmatprep.subr.mxu0 0.0
    %5700 = vmatpush1.msra.mxu0 %v4791
    %5701 = vmatprep.subr.mxu0 0.0
    %5702 = vmatpush1.msra.mxu0 %v4792
    %5703 = vmatprep.subr.mxu0 0.0
    %5704 = vmatpush1.msra.mxu0 %v4793
    %5705 = vmatprep.subr.mxu0 0.0
    %5706 = vmatpush1.msra.mxu0 %v4794
    %5707 = vmatprep.subr.mxu0 0.0
    %5708 = vmatpush1.msra.mxu0 %v4795
    %5709 = vmatprep.subr.mxu0 0.0
    %5710 = vmatpush1.msra.mxu0 %v4796
    %5711 = vmatprep.subr.mxu0 0.0
    %5712 = vmatpush1.msra.mxu0 %v4797
    %5713 = vmatprep.subr.mxu0 0.0
    %5714 = vmatpush1.msra.mxu0 %v4798
    %5715 = vmatprep.subr.mxu0 0.0
    %5716 = vmatpush1.msra.mxu0 %v4799
    %5717 = vmatprep.subr.mxu0 0.0
    %5718 = vmatpush1.msra.mxu0 %v4800
    %5719 = vmatprep.subr.mxu0 0.0
    %5720 = vmatpush1.msra.mxu0 %v4801
    %5721 = vmatprep.subr.mxu0 0.0
    %5722 = vmatpush1.msra.mxu0 %v4802
    %5723 = vmatprep.subr.mxu0 0.0
    %5724 = vmatpush1.msra.mxu0 %v4803
    %5725 = vmatprep.subr.mxu0 0.0
    %5726 = vmatpush1.msra.mxu0 %v4804
    %5727 = vmatprep.subr.mxu0 0.0
    %5728 = vmatpush1.msra.mxu0 %v4805
    %5729 = vmatprep.subr.mxu0 0.0
    %5730 = vmatpush1.msra.mxu0 %v4806
    %5731 = vmatprep.subr.mxu0 0.0
    %5732 = vmatpush1.msra.mxu0 %v4807
    %5733 = vmatprep.subr.mxu0 0.0
    %5734 = vmatpush1.msra.mxu0 %v4808
    %5735 = vmatprep.mubr.f32.mxu0 %v5462
    %5736 = vmatmul.mubr.f32.gmra.mrb[0].mxu0 %v5461
    %v5737 = vpop.f32.mrb[0].mxu0
    %v5738 = vadd.f32 %v5663, %v5737
    %v5739 = vpop.f32.mrb[0].mxu0
    %5740 = vmatprep.mubr.f32.mxu0 %v5494
    %5741 = vmatmul.mubr.f32.gmra.mrb[0].mxu0 %v5493
    %v5742 = vpop.f32.mrb[0].mxu0
    %v5743 = vadd.f32 %v5668, %v5742
    %v5744 = vpop.f32.mrb[0].mxu0
    %5745 = vdwg.mxu0
    %5746 = vmatprep.subr.mxu0 0.0
    %5747 = vmatpush1.msra.mxu0 %v4809
    %5748 = vmatprep.subr.mxu0 0.0
    %5749 = vmatpush1.msra.mxu0 %v4810
    %5750 = vmatprep.subr.mxu0 0.0
    %5751 = vmatpush1.msra.mxu0 %v4811
    %5752 = vmatprep.subr.mxu0 0.0
    %5753 = vmatpush1.msra.mxu0 %v4812
    %5754 = vmatprep.subr.mxu0 0.0
    %5755 = vmatpush1.msra.mxu0 %v4813
    %5756 = vmatprep.subr.mxu0 0.0
    %5757 = vmatpush1.msra.mxu0 %v4814
    %5758 = vmatprep.subr.mxu0 0.0
    %5759 = vmatpush1.msra.mxu0 %v4815
    %5760 = vmatprep.subr.mxu0 0.0
    %5761 = vmatpush1.msra.mxu0 %v4816
    %5762 = vmatprep.subr.mxu0 0.0
    %5763 = vmatpush1.msra.mxu0 %v4817
    %5764 = vmatprep.subr.mxu0 0.0
    %5765 = vmatpush1.msra.mxu0 %v4818
    %5766 = vmatprep.subr.mxu0 0.0
    %5767 = vmatpush1.msra.mxu0 %v4819
    %5768 = vmatprep.subr.mxu0 0.0
    %5769 = vmatpush1.msra.mxu0 %v4820
    %5770 = vmatprep.subr.mxu0 0.0
    %5771 = vmatpush1.msra.mxu0 %v4821
    %5772 = vmatprep.subr.mxu0 0.0
    %5773 = vmatpush1.msra.mxu0 %v4822
    %5774 = vmatprep.subr.mxu0 0.0
    %5775 = vmatpush1.msra.mxu0 %v4823
    %5776 = vmatprep.subr.mxu0 0.0
    %5777 = vmatpush1.msra.mxu0 %v4824
    %5778 = vmatprep.subr.mxu0 0.0
    %5779 = vmatpush1.msra.mxu0 %v4825
    %5780 = vmatprep.subr.mxu0 0.0
    %5781 = vmatpush1.msra.mxu0 %v4826
    %5782 = vmatprep.subr.mxu0 0.0
    %5783 = vmatpush1.msra.mxu0 %v4827
    %5784 = vmatprep.subr.mxu0 0.0
    %5785 = vmatpush1.msra.mxu0 %v4828
    %5786 = vmatprep.subr.mxu0 0.0
    %5787 = vmatpush1.msra.mxu0 %v4829
    %5788 = vmatprep.subr.mxu0 0.0
    %5789 = vmatpush1.msra.mxu0 %v4830
    %5790 = vmatprep.subr.mxu0 0.0
    %5791 = vmatpush1.msra.mxu0 %v4831
    %5792 = vmatprep.subr.mxu0 0.0
    %5793 = vmatpush1.msra.mxu0 %v4832
    %5794 = vmatprep.subr.mxu0 0.0
    %5795 = vmatpush1.msra.mxu0 %v4833
    %5796 = vmatprep.subr.mxu0 0.0
    %5797 = vmatpush1.msra.mxu0 %v4834
    %5798 = vmatprep.subr.mxu0 0.0
    %5799 = vmatpush1.msra.mxu0 %v4835
    %5800 = vmatprep.subr.mxu0 0.0
    %5801 = vmatpush1.msra.mxu0 %v4836
    %5802 = vmatprep.subr.mxu0 0.0
    %5803 = vmatpush1.msra.mxu0 %v4837
    %5804 = vmatprep.subr.mxu0 0.0
    %5805 = vmatpush1.msra.mxu0 %v4838
    %5806 = vmatprep.subr.mxu0 0.0
    %5807 = vmatpush1.msra.mxu0 %v4839
    %5808 = vmatprep.subr.mxu0 0.0
    %5809 = vmatpush1.msra.mxu0 %v4840
    %5810 = vmatprep.mubr.f32.mxu0 %v5464
    %5811 = vmatmul.mubr.f32.gmra.mrb[0].mxu0 %v5463
    %v5812 = vpop.f32.mrb[0].mxu0
    %v5813 = vadd.f32 %v5738, %v5812
    %v5814 = vpop.f32.mrb[0].mxu0
    %5815 = vmatprep.mubr.f32.mxu0 %v5496
    %5816 = vmatmul.mubr.f32.gmra.mrb[0].mxu0 %v5495
    %v5817 = vpop.f32.mrb[0].mxu0
    %v5818 = vadd.f32 %v5743, %v5817
    %v5819 = vpop.f32.mrb[0].mxu0
    %5820 = vdwg.mxu0
    %5821 = vmatprep.subr.mxu0 0.0
    %5822 = vmatpush1.msra.mxu0 %v4841
    %5823 = vmatprep.subr.mxu0 0.0
    %5824 = vmatpush1.msra.mxu0 %v4842
    %5825 = vmatprep.subr.mxu0 0.0
    %5826 = vmatpush1.msra.mxu0 %v4843
    %5827 = vmatprep.subr.mxu0 0.0
    %5828 = vmatpush1.msra.mxu0 %v4844
    %5829 = vmatprep.subr.mxu0 0.0
    %5830 = vmatpush1.msra.mxu0 %v4845
    %5831 = vmatprep.subr.mxu0 0.0
    %5832 = vmatpush1.msra.mxu0 %v4846
    %5833 = vmatprep.subr.mxu0 0.0
    %5834 = vmatpush1.msra.mxu0 %v4847
    %5835 = vmatprep.subr.mxu0 0.0
    %5836 = vmatpush1.msra.mxu0 %v4848
    %5837 = vmatprep.subr.mxu0 0.0
    %5838 = vmatpush1.msra.mxu0 %v4849
    %5839 = vmatprep.subr.mxu0 0.0
    %5840 = vmatpush1.msra.mxu0 %v4850
    %5841 = vmatprep.subr.mxu0 0.0
    %5842 = vmatpush1.msra.mxu0 %v4851
    %5843 = vmatprep.subr.mxu0 0.0
    %5844 = vmatpush1.msra.mxu0 %v4852
    %5845 = vmatprep.subr.mxu0 0.0
    %5846 = vmatpush1.msra.mxu0 %v4853
    %5847 = vmatprep.subr.mxu0 0.0
    %5848 = vmatpush1.msra.mxu0 %v4854
    %5849 = vmatprep.subr.mxu0 0.0
    %5850 = vmatpush1.msra.mxu0 %v4855
    %5851 = vmatprep.subr.mxu0 0.0
    %5852 = vmatpush1.msra.mxu0 %v4856
    %5853 = vmatprep.subr.mxu0 0.0
    %5854 = vmatpush1.msra.mxu0 %v4857
    %5855 = vmatprep.subr.mxu0 0.0
    %5856 = vmatpush1.msra.mxu0 %v4858
    %5857 = vmatprep.subr.mxu0 0.0
    %5858 = vmatpush1.msra.mxu0 %v4859
    %5859 = vmatprep.subr.mxu0 0.0
    %5860 = vmatpush1.msra.mxu0 %v4860
    %5861 = vmatprep.subr.mxu0 0.0
    %5862 = vmatpush1.msra.mxu0 %v4861
    %5863 = vmatprep.subr.mxu0 0.0
    %5864 = vmatpush1.msra.mxu0 %v4862
    %5865 = vmatprep.subr.mxu0 0.0
    %5866 = vmatpush1.msra.mxu0 %v4863
    %5867 = vmatprep.subr.mxu0 0.0
    %5868 = vmatpush1.msra.mxu0 %v4864
    %5869 = vmatprep.subr.mxu0 0.0
    %5870 = vmatpush1.msra.mxu0 %v4865
    %5871 = vmatprep.subr.mxu0 0.0
    %5872 = vmatpush1.msra.mxu0 %v4866
    %5873 = vmatprep.subr.mxu0 0.0
    %5874 = vmatpush1.msra.mxu0 %v4867
    %5875 = vmatprep.subr.mxu0 0.0
    %5876 = vmatpush1.msra.mxu0 %v4868
    %5877 = vmatprep.subr.mxu0 0.0
    %5878 = vmatpush1.msra.mxu0 %v4869
    %5879 = vmatprep.subr.mxu0 0.0
    %5880 = vmatpush1.msra.mxu0 %v4870
    %5881 = vmatprep.subr.mxu0 0.0
    %5882 = vmatpush1.msra.mxu0 %v4871
    %5883 = vmatprep.subr.mxu0 0.0
    %5884 = vmatpush1.msra.mxu0 %v4872
    %5885 = vmatprep.mubr.f32.mxu0 %v5466
    %5886 = vmatmul.mubr.f32.gmra.mrb[0].mxu0 %v5465
    %v5887 = vpop.f32.mrb[0].mxu0
    %v5888 = vadd.f32 %v5813, %v5887
    %v5889 = vpop.f32.mrb[0].mxu0
    %5890 = vmatprep.mubr.f32.mxu0 %v5498
    %5891 = vmatmul.mubr.f32.gmra.mrb[0].mxu0 %v5497
    %v5892 = vpop.f32.mrb[0].mxu0
    %v5893 = vadd.f32 %v5818, %v5892
    %v5894 = vpop.f32.mrb[0].mxu0
    %5895 = vdwg.mxu0
    %5896 = vmatprep.subr.mxu0 0.0
    %5897 = vmatpush1.msra.mxu0 %v4873
    %5898 = vmatprep.subr.mxu0 0.0
    %5899 = vmatpush1.msra.mxu0 %v4874
    %5900 = vmatprep.subr.mxu0 0.0
    %5901 = vmatpush1.msra.mxu0 %v4875
    %5902 = vmatprep.subr.mxu0 0.0
    %5903 = vmatpush1.msra.mxu0 %v4876
    %5904 = vmatprep.subr.mxu0 0.0
    %5905 = vmatpush1.msra.mxu0 %v4877
    %5906 = vmatprep.subr.mxu0 0.0
    %5907 = vmatpush1.msra.mxu0 %v4878
    %5908 = vmatprep.subr.mxu0 0.0
    %5909 = vmatpush1.msra.mxu0 %v4879
    %5910 = vmatprep.subr.mxu0 0.0
    %5911 = vmatpush1.msra.mxu0 %v4880
    %5912 = vmatprep.subr.mxu0 0.0
    %5913 = vmatpush1.msra.mxu0 %v4881
    %5914 = vmatprep.subr.mxu0 0.0
    %5915 = vmatpush1.msra.mxu0 %v4882
    %5916 = vmatprep.subr.mxu0 0.0
    %5917 = vmatpush1.msra.mxu0 %v4883
    %5918 = vmatprep.subr.mxu0 0.0
    %5919 = vmatpush1.msra.mxu0 %v4884
    %5920 = vmatprep.subr.mxu0 0.0
    %5921 = vmatpush1.msra.mxu0 %v4885
    %5922 = vmatprep.subr.mxu0 0.0
    %5923 = vmatpush1.msra.mxu0 %v4886
    %5924 = vmatprep.subr.mxu0 0.0
    %5925 = vmatpush1.msra.mxu0 %v4887
    %5926 = vmatprep.subr.mxu0 0.0
    %5927 = vmatpush1.msra.mxu0 %v4888
    %5928 = vmatprep.subr.mxu0 0.0
    %5929 = vmatpush1.msra.mxu0 %v4889
    %5930 = vmatprep.subr.mxu0 0.0
    %5931 = vmatpush1.msra.mxu0 %v4890
    %5932 = vmatprep.subr.mxu0 0.0
    %5933 = vmatpush1.msra.mxu0 %v4891
    %5934 = vmatprep.subr.mxu0 0.0
    %5935 = vmatpush1.msra.mxu0 %v4892
    %5936 = vmatprep.subr.mxu0 0.0
    %5937 = vmatpush1.msra.mxu0 %v4893
    %5938 = vmatprep.subr.mxu0 0.0
    %5939 = vmatpush1.msra.mxu0 %v4894
    %5940 = vmatprep.subr.mxu0 0.0
    %5941 = vmatpush1.msra.mxu0 %v4895
    %5942 = vmatprep.subr.mxu0 0.0
    %5943 = vmatpush1.msra.mxu0 %v4896
    %5944 = vmatprep.subr.mxu0 0.0
    %5945 = vmatpush1.msra.mxu0 %v4897
    %5946 = vmatprep.subr.mxu0 0.0
    %5947 = vmatpush1.msra.mxu0 %v4898
    %5948 = vmatprep.subr.mxu0 0.0
    %5949 = vmatpush1.msra.mxu0 %v4899
    %5950 = vmatprep.subr.mxu0 0.0
    %5951 = vmatpush1.msra.mxu0 %v4900
    %5952 = vmatprep.subr.mxu0 0.0
    %5953 = vmatpush1.msra.mxu0 %v4901
    %5954 = vmatprep.subr.mxu0 0.0
    %5955 = vmatpush1.msra.mxu0 %v4902
    %5956 = vmatprep.subr.mxu0 0.0
    %5957 = vmatpush1.msra.mxu0 %v4903
    %5958 = vmatprep.subr.mxu0 0.0
    %5959 = vmatpush1.msra.mxu0 %v4904
    %5960 = vmatprep.mubr.f32.mxu0 %v5468
    %5961 = vmatmul.mubr.f32.gmra.mrb[0].mxu0 %v5467
    %v5962 = vpop.f32.mrb[0].mxu0
    %v5963 = vadd.f32 %v5888, %v5962
    %v5964 = vpop.f32.mrb[0].mxu0
    %5965 = vmatprep.mubr.f32.mxu0 %v5500
    %5966 = vmatmul.mubr.f32.gmra.mrb[0].mxu0 %v5499
    %v5967 = vpop.f32.mrb[0].mxu0
    %v5968 = vadd.f32 %v5893, %v5967
    %v5969 = vpop.f32.mrb[0].mxu0
    %5970 = vdwg.mxu0
    %5971 = vmatprep.subr.mxu0 0.0
    %5972 = vmatpush1.msra.mxu0 %v4905
    %5973 = vmatprep.subr.mxu0 0.0
    %5974 = vmatpush1.msra.mxu0 %v4906
    %5975 = vmatprep.subr.mxu0 0.0
    %5976 = vmatpush1.msra.mxu0 %v4907
    %5977 = vmatprep.subr.mxu0 0.0
    %5978 = vmatpush1.msra.mxu0 %v4908
    %5979 = vmatprep.subr.mxu0 0.0
    %5980 = vmatpush1.msra.mxu0 %v4909
    %5981 = vmatprep.subr.mxu0 0.0
    %5982 = vmatpush1.msra.mxu0 %v4910
    %5983 = vmatprep.subr.mxu0 0.0
    %5984 = vmatpush1.msra.mxu0 %v4911
    %5985 = vmatprep.subr.mxu0 0.0
    %5986 = vmatpush1.msra.mxu0 %v4912
    %5987 = vmatprep.subr.mxu0 0.0
    %5988 = vmatpush1.msra.mxu0 %v4913
    %5989 = vmatprep.subr.mxu0 0.0
    %5990 = vmatpush1.msra.mxu0 %v4914
    %5991 = vmatprep.subr.mxu0 0.0
    %5992 = vmatpush1.msra.mxu0 %v4915
    %5993 = vmatprep.subr.mxu0 0.0
    %5994 = vmatpush1.msra.mxu0 %v4916
    %5995 = vmatprep.subr.mxu0 0.0
    %5996 = vmatpush1.msra.mxu0 %v4917
    %5997 = vmatprep.subr.mxu0 0.0
    %5998 = vmatpush1.msra.mxu0 %v4918
    %5999 = vmatprep.subr.mxu0 0.0
    %6000 = vmatpush1.msra.mxu0 %v4919
    %6001 = vmatprep.subr.mxu0 0.0
    %6002 = vmatpush1.msra.mxu0 %v4920
    %6003 = vmatprep.subr.mxu0 0.0
    %6004 = vmatpush1.msra.mxu0 %v4921
    %6005 = vmatprep.subr.mxu0 0.0
    %6006 = vmatpush1.msra.mxu0 %v4922
    %6007 = vmatprep.subr.mxu0 0.0
    %6008 = vmatpush1.msra.mxu0 %v4923
    %6009 = vmatprep.subr.mxu0 0.0
    %6010 = vmatpush1.msra.mxu0 %v4924
    %6011 = vmatprep.subr.mxu0 0.0
    %6012 = vmatpush1.msra.mxu0 %v4925
    %6013 = vmatprep.subr.mxu0 0.0
    %6014 = vmatpush1.msra.mxu0 %v4926
    %6015 = vmatprep.subr.mxu0 0.0
    %6016 = vmatpush1.msra.mxu0 %v4927
    %6017 = vmatprep.subr.mxu0 0.0
    %6018 = vmatpush1.msra.mxu0 %v4928
    %6019 = vmatprep.subr.mxu0 0.0
    %6020 = vmatpush1.msra.mxu0 %v4929
    %6021 = vmatprep.subr.mxu0 0.0
    %6022 = vmatpush1.msra.mxu0 %v4930
    %6023 = vmatprep.subr.mxu0 0.0
    %6024 = vmatpush1.msra.mxu0 %v4931
    %6025 = vmatprep.subr.mxu0 0.0
    %6026 = vmatpush1.msra.mxu0 %v4932
    %6027 = vmatprep.subr.mxu0 0.0
    %6028 = vmatpush1.msra.mxu0 %v4933
    %6029 = vmatprep.subr.mxu0 0.0
    %6030 = vmatpush1.msra.mxu0 %v4934
    %6031 = vmatprep.subr.mxu0 0.0
    %6032 = vmatpush1.msra.mxu0 %v4935
    %6033 = vmatprep.subr.mxu0 0.0
    %6034 = vmatpush1.msra.mxu0 %v4936
    %6035 = vmatprep.mubr.f32.mxu0 %v5470
    %6036 = vmatmul.mubr.f32.gmra.mrb[0].mxu0 %v5469
    %v6037 = vpop.f32.mrb[0].mxu0
    %v6038 = vadd.f32 %v5963, %v6037
    %v6039 = vpop.f32.mrb[0].mxu0
    %6040 = vmatprep.mubr.f32.mxu0 %v5502
    %6041 = vmatmul.mubr.f32.gmra.mrb[0].mxu0 %v5501
    %v6042 = vpop.f32.mrb[0].mxu0
    %v6043 = vadd.f32 %v5968, %v6042
    %v6044 = vpop.f32.mrb[0].mxu0
    %6045 = vdwg.mxu0
    %6046 = vmatprep.subr.mxu0 0.0
    %6047 = vmatpush1.msra.mxu0 %v4937
    %6048 = vmatprep.subr.mxu0 0.0
    %6049 = vmatpush1.msra.mxu0 %v4938
    %6050 = vmatprep.subr.mxu0 0.0
    %6051 = vmatpush1.msra.mxu0 %v4939
    %6052 = vmatprep.subr.mxu0 0.0
    %6053 = vmatpush1.msra.mxu0 %v4940
    %6054 = vmatprep.subr.mxu0 0.0
    %6055 = vmatpush1.msra.mxu0 %v4941
    %6056 = vmatprep.subr.mxu0 0.0
    %6057 = vmatpush1.msra.mxu0 %v4942
    %6058 = vmatprep.subr.mxu0 0.0
    %6059 = vmatpush1.msra.mxu0 %v4943
    %6060 = vmatprep.subr.mxu0 0.0
    %6061 = vmatpush1.msra.mxu0 %v4944
    %6062 = vmatprep.subr.mxu0 0.0
    %6063 = vmatpush1.msra.mxu0 %v4945
    %6064 = vmatprep.subr.mxu0 0.0
    %6065 = vmatpush1.msra.mxu0 %v4946
    %6066 = vmatprep.subr.mxu0 0.0
    %6067 = vmatpush1.msra.mxu0 %v4947
    %6068 = vmatprep.subr.mxu0 0.0
    %6069 = vmatpush1.msra.mxu0 %v4948
    %6070 = vmatprep.subr.mxu0 0.0
    %6071 = vmatpush1.msra.mxu0 %v4949
    %6072 = vmatprep.subr.mxu0 0.0
    %6073 = vmatpush1.msra.mxu0 %v4950
    %6074 = vmatprep.subr.mxu0 0.0
    %6075 = vmatpush1.msra.mxu0 %v4951
    %6076 = vmatprep.subr.mxu0 0.0
    %6077 = vmatpush1.msra.mxu0 %v4952
    %6078 = vmatprep.subr.mxu0 0.0
    %6079 = vmatpush1.msra.mxu0 %v4953
    %6080 = vmatprep.subr.mxu0 0.0
    %6081 = vmatpush1.msra.mxu0 %v4954
    %6082 = vmatprep.subr.mxu0 0.0
    %6083 = vmatpush1.msra.mxu0 %v4955
    %6084 = vmatprep.subr.mxu0 0.0
    %6085 = vmatpush1.msra.mxu0 %v4956
    %6086 = vmatprep.subr.mxu0 0.0
    %6087 = vmatpush1.msra.mxu0 %v4957
    %6088 = vmatprep.subr.mxu0 0.0
    %6089 = vmatpush1.msra.mxu0 %v4958
    %6090 = vmatprep.subr.mxu0 0.0
    %6091 = vmatpush1.msra.mxu0 %v4959
    %6092 = vmatprep.subr.mxu0 0.0
    %6093 = vmatpush1.msra.mxu0 %v4960
    %6094 = vmatprep.subr.mxu0 0.0
    %6095 = vmatpush1.msra.mxu0 %v4961
    %6096 = vmatprep.subr.mxu0 0.0
    %6097 = vmatpush1.msra.mxu0 %v4962
    %6098 = vmatprep.subr.mxu0 0.0
    %6099 = vmatpush1.msra.mxu0 %v4963
    %6100 = vmatprep.subr.mxu0 0.0
    %6101 = vmatpush1.msra.mxu0 %v4964
    %6102 = vmatprep.subr.mxu0 0.0
    %6103 = vmatpush1.msra.mxu0 %v4965
    %6104 = vmatprep.subr.mxu0 0.0
    %6105 = vmatpush1.msra.mxu0 %v4966
    %6106 = vmatprep.subr.mxu0 0.0
    %6107 = vmatpush1.msra.mxu0 %v4967
    %6108 = vmatprep.subr.mxu0 0.0
    %6109 = vmatpush1.msra.mxu0 %v4968
    %6110 = vmatprep.mubr.f32.mxu0 %v5472
    %6111 = vmatmul.mubr.f32.gmra.mrb[0].mxu0 %v5471
    %v6112 = vpop.f32.mrb[0].mxu0
    %v6113 = vadd.f32 %v6038, %v6112
    %v6114 = vpop.f32.mrb[0].mxu0
    %6115 = vmatprep.mubr.f32.mxu0 %v5504
    %6116 = vmatmul.mubr.f32.gmra.mrb[0].mxu0 %v5503
    %v6117 = vpop.f32.mrb[0].mxu0
    %v6118 = vadd.f32 %v6043, %v6117
    %v6119 = vpop.f32.mrb[0].mxu0
    %6120 = vdwg.mxu0
    %6121 = vmatprep.subr.mxu0 0.0
    %6122 = vmatpush1.msra.mxu0 %v4969
    %6123 = vmatprep.subr.mxu0 0.0
    %6124 = vmatpush1.msra.mxu0 %v4970
    %6125 = vmatprep.subr.mxu0 0.0
    %6126 = vmatpush1.msra.mxu0 %v4971
    %6127 = vmatprep.subr.mxu0 0.0
    %6128 = vmatpush1.msra.mxu0 %v4972
    %6129 = vmatprep.subr.mxu0 0.0
    %6130 = vmatpush1.msra.mxu0 %v4973
    %6131 = vmatprep.subr.mxu0 0.0
    %6132 = vmatpush1.msra.mxu0 %v4974
    %6133 = vmatprep.subr.mxu0 0.0
    %6134 = vmatpush1.msra.mxu0 %v4975
    %6135 = vmatprep.subr.mxu0 0.0
    %6136 = vmatpush1.msra.mxu0 %v4976
    %6137 = vmatprep.subr.mxu0 0.0
    %6138 = vmatpush1.msra.mxu0 %v4977
    %6139 = vmatprep.subr.mxu0 0.0
    %6140 = vmatpush1.msra.mxu0 %v4978
    %6141 = vmatprep.subr.mxu0 0.0
    %6142 = vmatpush1.msra.mxu0 %v4979
    %6143 = vmatprep.subr.mxu0 0.0
    %6144 = vmatpush1.msra.mxu0 %v4980
    %6145 = vmatprep.subr.mxu0 0.0
    %6146 = vmatpush1.msra.mxu0 %v4981
    %6147 = vmatprep.subr.mxu0 0.0
    %6148 = vmatpush1.msra.mxu0 %v4982
    %6149 = vmatprep.subr.mxu0 0.0
    %6150 = vmatpush1.msra.mxu0 %v4983
    %6151 = vmatprep.subr.mxu0 0.0
    %6152 = vmatpush1.msra.mxu0 %v4984
    %6153 = vmatprep.subr.mxu0 0.0
    %6154 = vmatpush1.msra.mxu0 %v4985
    %6155 = vmatprep.subr.mxu0 0.0
    %6156 = vmatpush1.msra.mxu0 %v4986
    %6157 = vmatprep.subr.mxu0 0.0
    %6158 = vmatpush1.msra.mxu0 %v4987
    %6159 = vmatprep.subr.mxu0 0.0
    %6160 = vmatpush1.msra.mxu0 %v4988
    %6161 = vmatprep.subr.mxu0 0.0
    %6162 = vmatpush1.msra.mxu0 %v4989
    %6163 = vmatprep.subr.mxu0 0.0
    %6164 = vmatpush1.msra.mxu0 %v4990
    %6165 = vmatprep.subr.mxu0 0.0
    %6166 = vmatpush1.msra.mxu0 %v4991
    %6167 = vmatprep.subr.mxu0 0.0
    %6168 = vmatpush1.msra.mxu0 %v4992
    %6169 = vmatprep.subr.mxu0 0.0
    %6170 = vmatpush1.msra.mxu0 %v4993
    %6171 = vmatprep.subr.mxu0 0.0
    %6172 = vmatpush1.msra.mxu0 %v4994
    %6173 = vmatprep.subr.mxu0 0.0
    %6174 = vmatpush1.msra.mxu0 %v4995
    %6175 = vmatprep.subr.mxu0 0.0
    %6176 = vmatpush1.msra.mxu0 %v4996
    %6177 = vmatprep.subr.mxu0 0.0
    %6178 = vmatpush1.msra.mxu0 %v4997
    %6179 = vmatprep.subr.mxu0 0.0
    %6180 = vmatpush1.msra.mxu0 %v4998
    %6181 = vmatprep.subr.mxu0 0.0
    %6182 = vmatpush1.msra.mxu0 %v4999
    %6183 = vmatprep.subr.mxu0 0.0
    %6184 = vmatpush1.msra.mxu0 %v5000
    %6185 = vmatprep.mubr.f32.mxu0 %v5474
    %6186 = vmatmul.mubr.f32.gmra.mrb[0].mxu0 %v5473
    %v6187 = vpop.f32.mrb[0].mxu0
    %v6188 = vadd.f32 %v6113, %v6187
    %v6189 = vpop.f32.mrb[0].mxu0
    %6190 = vmatprep.mubr.f32.mxu0 %v5506
    %6191 = vmatmul.mubr.f32.gmra.mrb[0].mxu0 %v5505
    %v6192 = vpop.f32.mrb[0].mxu0
    %v6193 = vadd.f32 %v6118, %v6192
    %v6194 = vpop.f32.mrb[0].mxu0
    %6195 = vdwg.mxu0
    %6196 = vmatprep.subr.mxu0 0.0
    %6197 = vmatpush1.msra.mxu0 %v5001
    %6198 = vmatprep.subr.mxu0 0.0
    %6199 = vmatpush1.msra.mxu0 %v5002
    %6200 = vmatprep.subr.mxu0 0.0
    %6201 = vmatpush1.msra.mxu0 %v5003
    %6202 = vmatprep.subr.mxu0 0.0
    %6203 = vmatpush1.msra.mxu0 %v5004
    %6204 = vmatprep.subr.mxu0 0.0
    %6205 = vmatpush1.msra.mxu0 %v5005
    %6206 = vmatprep.subr.mxu0 0.0
    %6207 = vmatpush1.msra.mxu0 %v5006
    %6208 = vmatprep.subr.mxu0 0.0
    %6209 = vmatpush1.msra.mxu0 %v5007
    %6210 = vmatprep.subr.mxu0 0.0
    %6211 = vmatpush1.msra.mxu0 %v5008
    %6212 = vmatprep.subr.mxu0 0.0
    %6213 = vmatpush1.msra.mxu0 %v5009
    %6214 = vmatprep.subr.mxu0 0.0
    %6215 = vmatpush1.msra.mxu0 %v5010
    %6216 = vmatprep.subr.mxu0 0.0
    %6217 = vmatpush1.msra.mxu0 %v5011
    %6218 = vmatprep.subr.mxu0 0.0
    %6219 = vmatpush1.msra.mxu0 %v5012
    %6220 = vmatprep.subr.mxu0 0.0
    %6221 = vmatpush1.msra.mxu0 %v5013
    %6222 = vmatprep.subr.mxu0 0.0
    %6223 = vmatpush1.msra.mxu0 %v5014
    %6224 = vmatprep.subr.mxu0 0.0
    %6225 = vmatpush1.msra.mxu0 %v5015
    %6226 = vmatprep.subr.mxu0 0.0
    %6227 = vmatpush1.msra.mxu0 %v5016
    %6228 = vmatprep.subr.mxu0 0.0
    %6229 = vmatpush1.msra.mxu0 %v5017
    %6230 = vmatprep.subr.mxu0 0.0
    %6231 = vmatpush1.msra.mxu0 %v5018
    %6232 = vmatprep.subr.mxu0 0.0
    %6233 = vmatpush1.msra.mxu0 %v5019
    %6234 = vmatprep.subr.mxu0 0.0
    %6235 = vmatpush1.msra.mxu0 %v5020
    %6236 = vmatprep.subr.mxu0 0.0
    %6237 = vmatpush1.msra.mxu0 %v5021
    %6238 = vmatprep.subr.mxu0 0.0
    %6239 = vmatpush1.msra.mxu0 %v5022
    %6240 = vmatprep.subr.mxu0 0.0
    %6241 = vmatpush1.msra.mxu0 %v5023
    %6242 = vmatprep.subr.mxu0 0.0
    %6243 = vmatpush1.msra.mxu0 %v5024
    %6244 = vmatprep.subr.mxu0 0.0
    %6245 = vmatpush1.msra.mxu0 %v5025
    %6246 = vmatprep.subr.mxu0 0.0
    %6247 = vmatpush1.msra.mxu0 %v5026
    %6248 = vmatprep.subr.mxu0 0.0
    %6249 = vmatpush1.msra.mxu0 %v5027
    %6250 = vmatprep.subr.mxu0 0.0
    %6251 = vmatpush1.msra.mxu0 %v5028
    %6252 = vmatprep.subr.mxu0 0.0
    %6253 = vmatpush1.msra.mxu0 %v5029
    %6254 = vmatprep.subr.mxu0 0.0
    %6255 = vmatpush1.msra.mxu0 %v5030
    %6256 = vmatprep.subr.mxu0 0.0
    %6257 = vmatpush1.msra.mxu0 %v5031
    %6258 = vmatprep.subr.mxu0 0.0
    %6259 = vmatpush1.msra.mxu0 %v5032
    %6260 = vmatprep.mubr.f32.mxu0 %v5476
    %6261 = vmatmul.mubr.f32.gmra.mrb[0].mxu0 %v5475
    %v6262 = vpop.f32.mrb[0].mxu0
    %v6263 = vadd.f32 %v6188, %v6262
    %v6264 = vpop.f32.mrb[0].mxu0
    %6265 = vmatprep.mubr.f32.mxu0 %v5508
    %6266 = vmatmul.mubr.f32.gmra.mrb[0].mxu0 %v5507
    %v6267 = vpop.f32.mrb[0].mxu0
    %v6268 = vadd.f32 %v6193, %v6267
    %v6269 = vpop.f32.mrb[0].mxu0
    %6270 = vdwg.mxu0
    %6271 = vmatprep.subr.mxu0 0.0
    %6272 = vmatpush1.msra.mxu0 %v5033
    %6273 = vmatprep.subr.mxu0 0.0
    %6274 = vmatpush1.msra.mxu0 %v5034
    %6275 = vmatprep.subr.mxu0 0.0
    %6276 = vmatpush1.msra.mxu0 %v5035
    %6277 = vmatprep.subr.mxu0 0.0
    %6278 = vmatpush1.msra.mxu0 %v5036
    %6279 = vmatprep.subr.mxu0 0.0
    %6280 = vmatpush1.msra.mxu0 %v5037
    %6281 = vmatprep.subr.mxu0 0.0
    %6282 = vmatpush1.msra.mxu0 %v5038
    %6283 = vmatprep.subr.mxu0 0.0
    %6284 = vmatpush1.msra.mxu0 %v5039
    %6285 = vmatprep.subr.mxu0 0.0
    %6286 = vmatpush1.msra.mxu0 %v5040
    %6287 = vmatprep.subr.mxu0 0.0
    %6288 = vmatpush1.msra.mxu0 %v5041
    %6289 = vmatprep.subr.mxu0 0.0
    %6290 = vmatpush1.msra.mxu0 %v5042
    %6291 = vmatprep.subr.mxu0 0.0
    %6292 = vmatpush1.msra.mxu0 %v5043
    %6293 = vmatprep.subr.mxu0 0.0
    %6294 = vmatpush1.msra.mxu0 %v5044
    %6295 = vmatprep.subr.mxu0 0.0
    %6296 = vmatpush1.msra.mxu0 %v5045
    %6297 = vmatprep.subr.mxu0 0.0
    %6298 = vmatpush1.msra.mxu0 %v5046
    %6299 = vmatprep.subr.mxu0 0.0
    %6300 = vmatpush1.msra.mxu0 %v5047
    %6301 = vmatprep.subr.mxu0 0.0
    %6302 = vmatpush1.msra.mxu0 %v5048
    %6303 = vmatprep.subr.mxu0 0.0
    %6304 = vmatpush1.msra.mxu0 %v5049
    %6305 = vmatprep.subr.mxu0 0.0
    %6306 = vmatpush1.msra.mxu0 %v5050
    %6307 = vmatprep.subr.mxu0 0.0
    %6308 = vmatpush1.msra.mxu0 %v5051
    %6309 = vmatprep.subr.mxu0 0.0
    %6310 = vmatpush1.msra.mxu0 %v5052
    %6311 = vmatprep.subr.mxu0 0.0
    %6312 = vmatpush1.msra.mxu0 %v5053
    %6313 = vmatprep.subr.mxu0 0.0
    %6314 = vmatpush1.msra.mxu0 %v5054
    %6315 = vmatprep.subr.mxu0 0.0
    %6316 = vmatpush1.msra.mxu0 %v5055
    %6317 = vmatprep.subr.mxu0 0.0
    %6318 = vmatpush1.msra.mxu0 %v5056
    %6319 = vmatprep.subr.mxu0 0.0
    %6320 = vmatpush1.msra.mxu0 %v5057
    %6321 = vmatprep.subr.mxu0 0.0
    %6322 = vmatpush1.msra.mxu0 %v5058
    %6323 = vmatprep.subr.mxu0 0.0
    %6324 = vmatpush1.msra.mxu0 %v5059
    %6325 = vmatprep.subr.mxu0 0.0
    %6326 = vmatpush1.msra.mxu0 %v5060
    %6327 = vmatprep.subr.mxu0 0.0
    %6328 = vmatpush1.msra.mxu0 %v5061
    %6329 = vmatprep.subr.mxu0 0.0
    %6330 = vmatpush1.msra.mxu0 %v5062
    %6331 = vmatprep.subr.mxu0 0.0
    %6332 = vmatpush1.msra.mxu0 %v5063
    %6333 = vmatprep.subr.mxu0 0.0
    %6334 = vmatpush1.msra.mxu0 %v5064
    %6335 = vmatprep.mubr.f32.mxu0 %v5478
    %6336 = vmatmul.mubr.f32.gmra.mrb[0].mxu0 %v5477
    %v6337 = vpop.f32.mrb[0].mxu0
    %v6338 = vadd.f32 %v6263, %v6337
    %v6339 = vpop.f32.mrb[0].mxu0
    %6340 = vmatprep.mubr.f32.mxu0 %v5510
    %6341 = vmatmul.mubr.f32.gmra.mrb[0].mxu0 %v5509
    %v6342 = vpop.f32.mrb[0].mxu0
    %v6343 = vadd.f32 %v6268, %v6342
    %v6344 = vpop.f32.mrb[0].mxu0
    %6345 = vdwg.mxu0
    %6346 = vmatprep.subr.mxu0 0.0
    %6347 = vmatpush1.msra.mxu0 %v5065
    %6348 = vmatprep.subr.mxu0 0.0
    %6349 = vmatpush1.msra.mxu0 %v5066
    %6350 = vmatprep.subr.mxu0 0.0
    %6351 = vmatpush1.msra.mxu0 %v5067
    %6352 = vmatprep.subr.mxu0 0.0
    %6353 = vmatpush1.msra.mxu0 %v5068
    %6354 = vmatprep.subr.mxu0 0.0
    %6355 = vmatpush1.msra.mxu0 %v5069
    %6356 = vmatprep.subr.mxu0 0.0
    %6357 = vmatpush1.msra.mxu0 %v5070
    %6358 = vmatprep.subr.mxu0 0.0
    %6359 = vmatpush1.msra.mxu0 %v5071
    %6360 = vmatprep.subr.mxu0 0.0
    %6361 = vmatpush1.msra.mxu0 %v5072
    %6362 = vmatprep.subr.mxu0 0.0
    %6363 = vmatpush1.msra.mxu0 %v5073
    %6364 = vmatprep.subr.mxu0 0.0
    %6365 = vmatpush1.msra.mxu0 %v5074
    %6366 = vmatprep.subr.mxu0 0.0
    %6367 = vmatpush1.msra.mxu0 %v5075
    %6368 = vmatprep.subr.mxu0 0.0
    %6369 = vmatpush1.msra.mxu0 %v5076
    %6370 = vmatprep.subr.mxu0 0.0
    %6371 = vmatpush1.msra.mxu0 %v5077
    %6372 = vmatprep.subr.mxu0 0.0
    %6373 = vmatpush1.msra.mxu0 %v5078
    %6374 = vmatprep.subr.mxu0 0.0
    %6375 = vmatpush1.msra.mxu0 %v5079
    %6376 = vmatprep.subr.mxu0 0.0
    %6377 = vmatpush1.msra.mxu0 %v5080
    %6378 = vmatprep.subr.mxu0 0.0
    %6379 = vmatpush1.msra.mxu0 %v5081
    %6380 = vmatprep.subr.mxu0 0.0
    %6381 = vmatpush1.msra.mxu0 %v5082
    %6382 = vmatprep.subr.mxu0 0.0
    %6383 = vmatpush1.msra.mxu0 %v5083
    %6384 = vmatprep.subr.mxu0 0.0
    %6385 = vmatpush1.msra.mxu0 %v5084
    %6386 = vmatprep.subr.mxu0 0.0
    %6387 = vmatpush1.msra.mxu0 %v5085
    %6388 = vmatprep.subr.mxu0 0.0
    %6389 = vmatpush1.msra.mxu0 %v5086
    %6390 = vmatprep.subr.mxu0 0.0
    %6391 = vmatpush1.msra.mxu0 %v5087
    %6392 = vmatprep.subr.mxu0 0.0
    %6393 = vmatpush1.msra.mxu0 %v5088
    %6394 = vmatprep.subr.mxu0 0.0
    %6395 = vmatpush1.msra.mxu0 %v5089
    %6396 = vmatprep.subr.mxu0 0.0
    %6397 = vmatpush1.msra.mxu0 %v5090
    %6398 = vmatprep.subr.mxu0 0.0
    %6399 = vmatpush1.msra.mxu0 %v5091
    %6400 = vmatprep.subr.mxu0 0.0
    %6401 = vmatpush1.msra.mxu0 %v5092
    %6402 = vmatprep.subr.mxu0 0.0
    %6403 = vmatpush1.msra.mxu0 %v5093
    %6404 = vmatprep.subr.mxu0 0.0
    %6405 = vmatpush1.msra.mxu0 %v5094
    %6406 = vmatprep.subr.mxu0 0.0
    %6407 = vmatpush1.msra.mxu0 %v5095
    %6408 = vmatprep.subr.mxu0 0.0
    %6409 = vmatpush1.msra.mxu0 %v5096
    %6410 = vmatprep.mubr.f32.mxu0 %v5480
    %6411 = vmatmul.mubr.f32.gmra.mrb[0].mxu0 %v5479
    %v6412 = vpop.f32.mrb[0].mxu0
    %v6413 = vadd.f32 %v6338, %v6412
    %v6414 = vpop.f32.mrb[0].mxu0
    %6415 = vmatprep.mubr.f32.mxu0 %v5512
    %6416 = vmatmul.mubr.f32.gmra.mrb[0].mxu0 %v5511
    %v6417 = vpop.f32.mrb[0].mxu0
    %v6418 = vadd.f32 %v6343, %v6417
    %v6419 = vpop.f32.mrb[0].mxu0
    %6420 = vdwg.mxu0
    %6421 = vmatprep.subr.mxu0 0.0
    %6422 = vmatpush1.msra.mxu0 %v5097
    %6423 = vmatprep.subr.mxu0 0.0
    %6424 = vmatpush1.msra.mxu0 %v5098
    %6425 = vmatprep.subr.mxu0 0.0
    %6426 = vmatpush1.msra.mxu0 %v5099
    %6427 = vmatprep.subr.mxu0 0.0
    %6428 = vmatpush1.msra.mxu0 %v5100
    %6429 = vmatprep.subr.mxu0 0.0
    %6430 = vmatpush1.msra.mxu0 %v5101
    %6431 = vmatprep.subr.mxu0 0.0
    %6432 = vmatpush1.msra.mxu0 %v5102
    %6433 = vmatprep.subr.mxu0 0.0
    %6434 = vmatpush1.msra.mxu0 %v5103
    %6435 = vmatprep.subr.mxu0 0.0
    %6436 = vmatpush1.msra.mxu0 %v5104
    %6437 = vmatprep.subr.mxu0 0.0
    %6438 = vmatpush1.msra.mxu0 %v5105
    %6439 = vmatprep.subr.mxu0 0.0
    %6440 = vmatpush1.msra.mxu0 %v5106
    %6441 = vmatprep.subr.mxu0 0.0
    %6442 = vmatpush1.msra.mxu0 %v5107
    %6443 = vmatprep.subr.mxu0 0.0
    %6444 = vmatpush1.msra.mxu0 %v5108
    %6445 = vmatprep.subr.mxu0 0.0
    %6446 = vmatpush1.msra.mxu0 %v5109
    %6447 = vmatprep.subr.mxu0 0.0
    %6448 = vmatpush1.msra.mxu0 %v5110
    %6449 = vmatprep.subr.mxu0 0.0
    %6450 = vmatpush1.msra.mxu0 %v5111
    %6451 = vmatprep.subr.mxu0 0.0
    %6452 = vmatpush1.msra.mxu0 %v5112
    %6453 = vmatprep.subr.mxu0 0.0
    %6454 = vmatpush1.msra.mxu0 %v5113
    %6455 = vmatprep.subr.mxu0 0.0
    %6456 = vmatpush1.msra.mxu0 %v5114
    %6457 = vmatprep.subr.mxu0 0.0
    %6458 = vmatpush1.msra.mxu0 %v5115
    %6459 = vmatprep.subr.mxu0 0.0
    %6460 = vmatpush1.msra.mxu0 %v5116
    %6461 = vmatprep.subr.mxu0 0.0
    %6462 = vmatpush1.msra.mxu0 %v5117
    %6463 = vmatprep.subr.mxu0 0.0
    %6464 = vmatpush1.msra.mxu0 %v5118
    %6465 = vmatprep.subr.mxu0 0.0
    %6466 = vmatpush1.msra.mxu0 %v5119
    %6467 = vmatprep.subr.mxu0 0.0
    %6468 = vmatpush1.msra.mxu0 %v5120
    %6469 = vmatprep.subr.mxu0 0.0
    %6470 = vmatpush1.msra.mxu0 %v5121
    %6471 = vmatprep.subr.mxu0 0.0
    %6472 = vmatpush1.msra.mxu0 %v5122
    %6473 = vmatprep.subr.mxu0 0.0
    %6474 = vmatpush1.msra.mxu0 %v5123
    %6475 = vmatprep.subr.mxu0 0.0
    %6476 = vmatpush1.msra.mxu0 %v5124
    %6477 = vmatprep.subr.mxu0 0.0
    %6478 = vmatpush1.msra.mxu0 %v5125
    %6479 = vmatprep.subr.mxu0 0.0
    %6480 = vmatpush1.msra.mxu0 %v5126
    %6481 = vmatprep.subr.mxu0 0.0
    %6482 = vmatpush1.msra.mxu0 %v5127
    %6483 = vmatprep.subr.mxu0 0.0
    %6484 = vmatpush1.msra.mxu0 %v5128
    %6485 = vmatprep.mubr.f32.mxu0 %v5482
    %6486 = vmatmul.mubr.f32.gmra.mrb[0].mxu0 %v5481
    %v6487 = vpop.f32.mrb[0].mxu0
    %v6488 = vadd.f32 %v6413, %v6487
    %v6489 = vpop.f32.mrb[0].mxu0
    %6490 = vmatprep.mubr.f32.mxu0 %v5514
    %6491 = vmatmul.mubr.f32.gmra.mrb[0].mxu0 %v5513
    %v6492 = vpop.f32.mrb[0].mxu0
    %v6493 = vadd.f32 %v6418, %v6492
    %v6494 = vpop.f32.mrb[0].mxu0
    %6495 = vdwg.mxu0
    %6496 = vmatprep.subr.mxu0 0.0
    %6497 = vmatpush1.msra.mxu0 %v5129
    %6498 = vmatprep.subr.mxu0 0.0
    %6499 = vmatpush1.msra.mxu0 %v5130
    %6500 = vmatprep.subr.mxu0 0.0
    %6501 = vmatpush1.msra.mxu0 %v5131
    %6502 = vmatprep.subr.mxu0 0.0
    %6503 = vmatpush1.msra.mxu0 %v5132
    %6504 = vmatprep.subr.mxu0 0.0
    %6505 = vmatpush1.msra.mxu0 %v5133
    %6506 = vmatprep.subr.mxu0 0.0
    %6507 = vmatpush1.msra.mxu0 %v5134
    %6508 = vmatprep.subr.mxu0 0.0
    %6509 = vmatpush1.msra.mxu0 %v5135
    %6510 = vmatprep.subr.mxu0 0.0
    %6511 = vmatpush1.msra.mxu0 %v5136
    %6512 = vmatprep.subr.mxu0 0.0
    %6513 = vmatpush1.msra.mxu0 %v5137
    %6514 = vmatprep.subr.mxu0 0.0
    %6515 = vmatpush1.msra.mxu0 %v5138
    %6516 = vmatprep.subr.mxu0 0.0
    %6517 = vmatpush1.msra.mxu0 %v5139
    %6518 = vmatprep.subr.mxu0 0.0
    %6519 = vmatpush1.msra.mxu0 %v5140
    %6520 = vmatprep.subr.mxu0 0.0
    %6521 = vmatpush1.msra.mxu0 %v5141
    %6522 = vmatprep.subr.mxu0 0.0
    %6523 = vmatpush1.msra.mxu0 %v5142
    %6524 = vmatprep.subr.mxu0 0.0
    %6525 = vmatpush1.msra.mxu0 %v5143
    %6526 = vmatprep.subr.mxu0 0.0
    %6527 = vmatpush1.msra.mxu0 %v5144
    %6528 = vmatprep.subr.mxu0 0.0
    %6529 = vmatpush1.msra.mxu0 %v5145
    %6530 = vmatprep.subr.mxu0 0.0
    %6531 = vmatpush1.msra.mxu0 %v5146
    %6532 = vmatprep.subr.mxu0 0.0
    %6533 = vmatpush1.msra.mxu0 %v5147
    %6534 = vmatprep.subr.mxu0 0.0
    %6535 = vmatpush1.msra.mxu0 %v5148
    %6536 = vmatprep.subr.mxu0 0.0
    %6537 = vmatpush1.msra.mxu0 %v5149
    %6538 = vmatprep.subr.mxu0 0.0
    %6539 = vmatpush1.msra.mxu0 %v5150
    %6540 = vmatprep.subr.mxu0 0.0
    %6541 = vmatpush1.msra.mxu0 %v5151
    %6542 = vmatprep.subr.mxu0 0.0
    %6543 = vmatpush1.msra.mxu0 %v5152
    %6544 = vmatprep.subr.mxu0 0.0
    %6545 = vmatpush1.msra.mxu0 %v5153
    %6546 = vmatprep.subr.mxu0 0.0
    %6547 = vmatpush1.msra.mxu0 %v5154
    %6548 = vmatprep.subr.mxu0 0.0
    %6549 = vmatpush1.msra.mxu0 %v5155
    %6550 = vmatprep.subr.mxu0 0.0
    %6551 = vmatpush1.msra.mxu0 %v5156
    %6552 = vmatprep.subr.mxu0 0.0
    %6553 = vmatpush1.msra.mxu0 %v5157
    %6554 = vmatprep.subr.mxu0 0.0
    %6555 = vmatpush1.msra.mxu0 %v5158
    %6556 = vmatprep.subr.mxu0 0.0
    %6557 = vmatpush1.msra.mxu0 %v5159
    %6558 = vmatprep.subr.mxu0 0.0
    %6559 = vmatpush1.msra.mxu0 %v5160
    %6560 = vmatprep.mubr.f32.mxu0 %v5484
    %6561 = vmatmul.mubr.f32.gmra.mrb[0].mxu0 %v5483
    %v6562 = vpop.f32.mrb[0].mxu0
    %v6563 = vadd.f32 %v6488, %v6562
    %v6564 = vpop.f32.mrb[0].mxu0
    %6565 = vmatprep.mubr.f32.mxu0 %v5516
    %6566 = vmatmul.mubr.f32.gmra.mrb[0].mxu0 %v5515
    %v6567 = vpop.f32.mrb[0].mxu0
    %v6568 = vadd.f32 %v6493, %v6567
    %v6569 = vpop.f32.mrb[0].mxu0
    %6570 = vdwg.mxu0
    %6571 = vmatprep.subr.mxu0 0.0
    %6572 = vmatpush1.msra.mxu0 %v5161
    %6573 = vmatprep.subr.mxu0 0.0
    %6574 = vmatpush1.msra.mxu0 %v5162
    %6575 = vmatprep.subr.mxu0 0.0
    %6576 = vmatpush1.msra.mxu0 %v5163
    %6577 = vmatprep.subr.mxu0 0.0
    %6578 = vmatpush1.msra.mxu0 %v5164
    %6579 = vmatprep.subr.mxu0 0.0
    %6580 = vmatpush1.msra.mxu0 %v5165
    %6581 = vmatprep.subr.mxu0 0.0
    %6582 = vmatpush1.msra.mxu0 %v5166
    %6583 = vmatprep.subr.mxu0 0.0
    %6584 = vmatpush1.msra.mxu0 %v5167
    %6585 = vmatprep.subr.mxu0 0.0
    %6586 = vmatpush1.msra.mxu0 %v5168
    %6587 = vmatprep.subr.mxu0 0.0
    %6588 = vmatpush1.msra.mxu0 %v5169
    %6589 = vmatprep.subr.mxu0 0.0
    %6590 = vmatpush1.msra.mxu0 %v5170
    %6591 = vmatprep.subr.mxu0 0.0
    %6592 = vmatpush1.msra.mxu0 %v5171
    %6593 = vmatprep.subr.mxu0 0.0
    %6594 = vmatpush1.msra.mxu0 %v5172
    %6595 = vmatprep.subr.mxu0 0.0
    %6596 = vmatpush1.msra.mxu0 %v5173
    %6597 = vmatprep.subr.mxu0 0.0
    %6598 = vmatpush1.msra.mxu0 %v5174
    %6599 = vmatprep.subr.mxu0 0.0
    %6600 = vmatpush1.msra.mxu0 %v5175
    %6601 = vmatprep.subr.mxu0 0.0
    %6602 = vmatpush1.msra.mxu0 %v5176
    %6603 = vmatprep.subr.mxu0 0.0
    %6604 = vmatpush1.msra.mxu0 %v5177
    %6605 = vmatprep.subr.mxu0 0.0
    %6606 = vmatpush1.msra.mxu0 %v5178
    %6607 = vmatprep.subr.mxu0 0.0
    %6608 = vmatpush1.msra.mxu0 %v5179
    %6609 = vmatprep.subr.mxu0 0.0
    %6610 = vmatpush1.msra.mxu0 %v5180
    %6611 = vmatprep.subr.mxu0 0.0
    %6612 = vmatpush1.msra.mxu0 %v5181
    %6613 = vmatprep.subr.mxu0 0.0
    %6614 = vmatpush1.msra.mxu0 %v5182
    %6615 = vmatprep.subr.mxu0 0.0
    %6616 = vmatpush1.msra.mxu0 %v5183
    %6617 = vmatprep.subr.mxu0 0.0
    %6618 = vmatpush1.msra.mxu0 %v5184
    %6619 = vmatprep.subr.mxu0 0.0
    %6620 = vmatpush1.msra.mxu0 %v5185
    %6621 = vmatprep.subr.mxu0 0.0
    %6622 = vmatpush1.msra.mxu0 %v5186
    %6623 = vmatprep.subr.mxu0 0.0
    %6624 = vmatpush1.msra.mxu0 %v5187
    %6625 = vmatprep.subr.mxu0 0.0
    %6626 = vmatpush1.msra.mxu0 %v5188
    %6627 = vmatprep.subr.mxu0 0.0
    %6628 = vmatpush1.msra.mxu0 %v5189
    %6629 = vmatprep.subr.mxu0 0.0
    %6630 = vmatpush1.msra.mxu0 %v5190
    %6631 = vmatprep.subr.mxu0 0.0
    %6632 = vmatpush1.msra.mxu0 %v5191
    %6633 = vmatprep.subr.mxu0 0.0
    %6634 = vmatpush1.msra.mxu0 %v5192
    %6635 = vmatprep.mubr.f32.mxu0 %v5486
    %6636 = vmatmul.mubr.f32.gmra.mrb[0].mxu0 %v5485
    %v6637 = vpop.f32.mrb[0].mxu0
    %v6638 = vadd.f32 %v6563, %v6637
    %v6639 = vpop.f32.mrb[0].mxu0
    %6640 = vmatprep.mubr.f32.mxu0 %v5518
    %6641 = vmatmul.mubr.f32.gmra.mrb[0].mxu0 %v5517
    %v6642 = vpop.f32.mrb[0].mxu0
    %v6643 = vadd.f32 %v6568, %v6642
    %v6644 = vpop.f32.mrb[0].mxu0
    %6645 = vdwg.mxu0
    %6646 = vmatprep.subr.mxu0 0.0
    %6647 = vmatpush1.msra.mxu0 %v5193
    %6648 = vmatprep.subr.mxu0 0.0
    %6649 = vmatpush1.msra.mxu0 %v5194
    %6650 = vmatprep.subr.mxu0 0.0
    %6651 = vmatpush1.msra.mxu0 %v5195
    %6652 = vmatprep.subr.mxu0 0.0
    %6653 = vmatpush1.msra.mxu0 %v5196
    %6654 = vmatprep.subr.mxu0 0.0
    %6655 = vmatpush1.msra.mxu0 %v5197
    %6656 = vmatprep.subr.mxu0 0.0
    %6657 = vmatpush1.msra.mxu0 %v5198
    %6658 = vmatprep.subr.mxu0 0.0
    %6659 = vmatpush1.msra.mxu0 %v5199
    %6660 = vmatprep.subr.mxu0 0.0
    %6661 = vmatpush1.msra.mxu0 %v5200
    %6662 = vmatprep.subr.mxu0 0.0
    %6663 = vmatpush1.msra.mxu0 %v5201
    %6664 = vmatprep.subr.mxu0 0.0
    %6665 = vmatpush1.msra.mxu0 %v5202
    %6666 = vmatprep.subr.mxu0 0.0
    %6667 = vmatpush1.msra.mxu0 %v5203
    %6668 = vmatprep.subr.mxu0 0.0
    %6669 = vmatpush1.msra.mxu0 %v5204
    %6670 = vmatprep.subr.mxu0 0.0
    %6671 = vmatpush1.msra.mxu0 %v5205
    %6672 = vmatprep.subr.mxu0 0.0
    %6673 = vmatpush1.msra.mxu0 %v5206
    %6674 = vmatprep.subr.mxu0 0.0
    %6675 = vmatpush1.msra.mxu0 %v5207
    %6676 = vmatprep.subr.mxu0 0.0
    %6677 = vmatpush1.msra.mxu0 %v5208
    %6678 = vmatprep.subr.mxu0 0.0
    %6679 = vmatpush1.msra.mxu0 %v5209
    %6680 = vmatprep.subr.mxu0 0.0
    %6681 = vmatpush1.msra.mxu0 %v5210
    %6682 = vmatprep.subr.mxu0 0.0
    %6683 = vmatpush1.msra.mxu0 %v5211
    %6684 = vmatprep.subr.mxu0 0.0
    %6685 = vmatpush1.msra.mxu0 %v5212
    %6686 = vmatprep.subr.mxu0 0.0
    %6687 = vmatpush1.msra.mxu0 %v5213
    %6688 = vmatprep.subr.mxu0 0.0
    %6689 = vmatpush1.msra.mxu0 %v5214
    %6690 = vmatprep.subr.mxu0 0.0
    %6691 = vmatpush1.msra.mxu0 %v5215
    %6692 = vmatprep.subr.mxu0 0.0
    %6693 = vmatpush1.msra.mxu0 %v5216
    %6694 = vmatprep.subr.mxu0 0.0
    %6695 = vmatpush1.msra.mxu0 %v5217
    %6696 = vmatprep.subr.mxu0 0.0
    %6697 = vmatpush1.msra.mxu0 %v5218
    %6698 = vmatprep.subr.mxu0 0.0
    %6699 = vmatpush1.msra.mxu0 %v5219
    %6700 = vmatprep.subr.mxu0 0.0
    %6701 = vmatpush1.msra.mxu0 %v5220
    %6702 = vmatprep.subr.mxu0 0.0
    %6703 = vmatpush1.msra.mxu0 %v5221
    %6704 = vmatprep.subr.mxu0 0.0
    %6705 = vmatpush1.msra.mxu0 %v5222
    %6706 = vmatprep.subr.mxu0 0.0
    %6707 = vmatpush1.msra.mxu0 %v5223
    %6708 = vmatprep.subr.mxu0 0.0
    %6709 = vmatpush1.msra.mxu0 %v5224
    %6710 = vmatprep.mubr.f32.mxu0 %v5488
    %6711 = vmatmul.mubr.f32.gmra.mrb[0].mxu0 %v5487
    %v6712 = vpop.f32.mrb[0].mxu0
    %v6713 = vadd.f32 %v6638, %v6712
    %v6714 = vpop.f32.mrb[0].mxu0
    %6715 = vmatprep.mubr.f32.mxu0 %v5520
    %6716 = vmatmul.mubr.f32.gmra.mrb[0].mxu0 %v5519
    %v6717 = vpop.f32.mrb[0].mxu0
    %v6718 = vadd.f32 %v6643, %v6717
    %v6719 = vpop.f32.mrb[0].mxu0
    %6720 = vdwg.mxu0
    %6721 = vst [vmem:[#allocation4] sm:$0xff] %v6713
    %6722 = vst [vmem:[#allocation4 + $0x8] sm:$0xff] %v6718
    %v6723 = vpack.c.bf16 %v6718, %v6713
    %v6724 = vld [vmem:[%s2] sm:$0xff]
    %v6725 = vld [vmem:[%s2 + $0x8] sm:$0xff]
    %v6726 = vld [vmem:[%s2 + $0x10] sm:$0xff]
    %v6727 = vld [vmem:[%s2 + $0x18] sm:$0xff]
    %v6728 = vld [vmem:[%s2 + $0x20] sm:$0xff]
    %v6729 = vld [vmem:[%s2 + $0x28] sm:$0xff]
    %v6730 = vld [vmem:[%s2 + $0x30] sm:$0xff]
    %v6731 = vld [vmem:[%s2 + $0x38] sm:$0xff]
    %v6732 = vld [vmem:[%s2 + $0x40] sm:$0xff]
    %v6733 = vld [vmem:[%s2 + $0x48] sm:$0xff]
    %v6734 = vld [vmem:[%s2 + $0x50] sm:$0xff]
    %v6735 = vld [vmem:[%s2 + $0x58] sm:$0xff]
    %v6736 = vld [vmem:[%s2 + $0x60] sm:$0xff]
    %v6737 = vld [vmem:[%s2 + $0x68] sm:$0xff]
    %v6738 = vld [vmem:[%s2 + $0x70] sm:$0xff]
    %v6739 = vld [vmem:[%s2 + $0x78] sm:$0xff]
    %v6756 = vunpack.c.l.b16 %v6724
    %v6757 = vunpack.c.h.b16 %v6724
    %v6758 = vunpack.c.l.b16 %v6725
    %v6759 = vunpack.c.h.b16 %v6725
    %v6760 = vunpack.c.l.b16 %v6726
    %v6761 = vunpack.c.h.b16 %v6726
    %v6762 = vunpack.c.l.b16 %v6727
    %v6763 = vunpack.c.h.b16 %v6727
    %v6764 = vunpack.c.l.b16 %v6728
    %v6765 = vunpack.c.h.b16 %v6728
    %v6766 = vunpack.c.l.b16 %v6729
    %v6767 = vunpack.c.h.b16 %v6729
    %v6768 = vunpack.c.l.b16 %v6730
    %v6769 = vunpack.c.h.b16 %v6730
    %v6770 = vunpack.c.l.b16 %v6731
    %v6771 = vunpack.c.h.b16 %v6731
    %v6772 = vunpack.c.l.b16 %v6732
    %v6773 = vunpack.c.h.b16 %v6732
    %v6774 = vunpack.c.l.b16 %v6733
    %v6775 = vunpack.c.h.b16 %v6733
    %v6776 = vunpack.c.l.b16 %v6734
    %v6777 = vunpack.c.h.b16 %v6734
    %v6778 = vunpack.c.l.b16 %v6735
    %v6779 = vunpack.c.h.b16 %v6735
    %v6780 = vunpack.c.l.b16 %v6736
    %v6781 = vunpack.c.h.b16 %v6736
    %v6782 = vunpack.c.l.b16 %v6737
    %v6783 = vunpack.c.h.b16 %v6737
    %v6784 = vunpack.c.l.b16 %v6738
    %v6785 = vunpack.c.h.b16 %v6738
    %v6786 = vunpack.c.l.b16 %v6739
    %v6787 = vunpack.c.h.b16 %v6739
    %v6788 = vpack.c.b16 %v6758, %v6756
    %v6789 = vpack.c.b16 %v6759, %v6757
    %v6790 = vpack.c.b16 %v6762, %v6760
    %v6791 = vpack.c.b16 %v6763, %v6761
    %v6792 = vpack.c.b16 %v6766, %v6764
    %v6793 = vpack.c.b16 %v6767, %v6765
    %v6794 = vpack.c.b16 %v6770, %v6768
    %v6795 = vpack.c.b16 %v6771, %v6769
    %v6796 = vpack.c.b16 %v6774, %v6772
    %v6797 = vpack.c.b16 %v6775, %v6773
    %v6798 = vpack.c.b16 %v6778, %v6776
    %v6799 = vpack.c.b16 %v6779, %v6777
    %v6800 = vpack.c.b16 %v6782, %v6780
    %v6801 = vpack.c.b16 %v6783, %v6781
    %v6802 = vpack.c.b16 %v6786, %v6784
    %v6803 = vpack.c.b16 %v6787, %v6785
    %6820 = vmatprep.subr.bf16.mxu0 %v6789
    %6821 = vmatpush1.bf16.msra.mxu0 %v6788
    %6822 = vmatprep.subr.bf16.mxu0 %v6791
    %6823 = vmatpush1.bf16.msra.mxu0 %v6790
    %6824 = vmatprep.subr.bf16.mxu0 %v6793
    %6825 = vmatpush1.bf16.msra.mxu0 %v6792
    %6826 = vmatprep.subr.bf16.mxu0 %v6795
    %6827 = vmatpush1.bf16.msra.mxu0 %v6794
    %6828 = vmatprep.subr.bf16.mxu0 %v6797
    %6829 = vmatpush1.bf16.msra.mxu0 %v6796
    %6830 = vmatprep.subr.bf16.mxu0 %v6799
    %6831 = vmatpush1.bf16.msra.mxu0 %v6798
    %6832 = vmatprep.subr.bf16.mxu0 %v6801
    %6833 = vmatpush1.bf16.msra.mxu0 %v6800
    %6834 = vmatprep.subr.bf16.mxu0 %v6803
    %6835 = vmatpush1.bf16.msra.mxu0 %v6802
    %6836 = vmatprep.subr.bf16.mxu0 0
    %6837 = vmatpush1.bf16.msra.mxu0 0
    %6838 = vmatprep.subr.bf16.mxu0 0
    %6839 = vmatpush1.bf16.msra.mxu0 0
    %6840 = vmatprep.subr.bf16.mxu0 0
    %6841 = vmatpush1.bf16.msra.mxu0 0
    %6842 = vmatprep.subr.bf16.mxu0 0
    %6843 = vmatpush1.bf16.msra.mxu0 0
    %6844 = vmatprep.subr.bf16.mxu0 0
    %6845 = vmatpush1.bf16.msra.mxu0 0
    %6846 = vmatprep.subr.bf16.mxu0 0
    %6847 = vmatpush1.bf16.msra.mxu0 0
    %6848 = vmatprep.subr.bf16.mxu0 0
    %6849 = vmatpush1.bf16.msra.mxu0 0
    %6850 = vmatprep.subr.bf16.mxu0 0
    %6851 = vmatpush1.bf16.msra.mxu0 0
    %6852 = vmatprep.mubr.bf16.mxu0 0
    %6853 = vmatmul.mubr.bf16.gmra.mrb[0].mxu0 %v6723
    %v6854 = vpop.f32.mrb[0].mxu0
    %v6855 = vadd.f32 0.0, %v6854
    %v6856 = vpop.f32.mrb[0].mxu0
    %v6857 = vadd.f32 0.0, %v6856
    %v6858 = vpop.f32.mrb[0].mxu0
    %v6859 = vadd.f32 0.0, %v6858
    %v6860 = vpop.f32.mrb[0].mxu0
    %v6861 = vadd.f32 0.0, %v6860
    %6862 = vdwg.mxu0
    %v6863 = vrot.slane %v6855, 4
    %v6864 = vadd.f32 %v6855, %v6863
    %v6865 = vrot.slane %v6864, 2
    %v6866 = vadd.f32 %v6864, %v6865
    %v6867 = vrot.slane %v6866, 1
    %v6868 = vadd.f32 %v6866, %v6867
    %v6869 = vrot.slane %v6857, 4
    %v6870 = vadd.f32 %v6857, %v6869
    %v6871 = vrot.slane %v6870, 2
    %v6872 = vadd.f32 %v6870, %v6871
    %v6873 = vrot.slane %v6872, 1
    %v6874 = vadd.f32 %v6872, %v6873
    %v6875 = vrcp.pop 8.0
    %v6876 = vmul.f32 %v6868, %v6875
    %v6877 = vmul.f32 %v6874, %v6875
    %v6878 = vsub.f32 %v6855, %v6876
    %v6879 = vsub.f32 %v6857, %v6877
    %v6880 = vmul.f32 %v6878, %v6878
    %v6881 = vmul.f32 %v6879, %v6879
    %v6882 = vrot.slane %v6880, 4
    %v6883 = vadd.f32 %v6880, %v6882
    %v6884 = vrot.slane %v6883, 2
    %v6885 = vadd.f32 %v6883, %v6884
    %v6886 = vrot.slane %v6885, 1
    %v6887 = vadd.f32 %v6885, %v6886
    %v6888 = vrot.slane %v6881, 4
    %v6889 = vadd.f32 %v6881, %v6888
    %v6890 = vrot.slane %v6889, 2
    %v6891 = vadd.f32 %v6889, %v6890
    %v6892 = vrot.slane %v6891, 1
    %v6893 = vadd.f32 %v6891, %v6892
    %v6894 = vmul.f32 %v6887, %v6875
    %v6895 = vmul.f32 %v6893, %v6875
    %v6896 = vadd.f32 %v6894, 1e-05
    %v6897 = vadd.f32 %v6895, 1e-05
    %v6898 = vrsqrt.pop %v6896
    %v6899 = vrsqrt.pop %v6897
    %v6900 = vmul.f32 %v6878, %v6898
    %v6901 = vmul.f32 %v6879, %v6899
    %v6902 = vrot.slane %v6859, 4
    %v6903 = vadd.f32 %v6859, %v6902
    %v6904 = vrot.slane %v6903, 2
    %v6905 = vadd.f32 %v6903, %v6904
    %v6906 = vrot.slane %v6905, 1
    %v6907 = vadd.f32 %v6905, %v6906
    %v6908 = vrot.slane %v6861, 4
    %v6909 = vadd.f32 %v6861, %v6908
    %v6910 = vrot.slane %v6909, 2
    %v6911 = vadd.f32 %v6909, %v6910
    %v6912 = vrot.slane %v6911, 1
    %v6913 = vadd.f32 %v6911, %v6912
    %v6914 = vmul.f32 %v6907, %v6875
    %v6915 = vmul.f32 %v6913, %v6875
    %v6916 = vsub.f32 %v6859, %v6914
    %v6917 = vsub.f32 %v6861, %v6915
    %v6918 = vmul.f32 %v6916, %v6916
    %v6919 = vmul.f32 %v6917, %v6917
    %v6920 = vrot.slane %v6918, 4
    %v6921 = vadd.f32 %v6918, %v6920
    %v6922 = vrot.slane %v6921, 2
    %v6923 = vadd.f32 %v6921, %v6922
    %v6924 = vrot.slane %v6923, 1
    %v6925 = vadd.f32 %v6923, %v6924
    %v6926 = vrot.slane %v6919, 4
    %v6927 = vadd.f32 %v6919, %v6926
    %v6928 = vrot.slane %v6927, 2
    %v6929 = vadd.f32 %v6927, %v6928
    %v6930 = vrot.slane %v6929, 1
    %v6931 = vadd.f32 %v6929, %v6930
    %v6932 = vmul.f32 %v6925, %v6875
    %v6933 = vmul.f32 %v6931, %v6875
    %v6934 = vadd.f32 %v6932, 1e-05
    %v6935 = vadd.f32 %v6933, 1e-05
    %v6936 = vrsqrt.pop %v6934
    %v6937 = vrsqrt.pop %v6935
    %v6938 = vmul.f32 %v6916, %v6936
    %v6939 = vmul.f32 %v6917, %v6937
    %v6940 = vlaneseq
    %v6941 = vshrl.u32 %v6940, 7
    %v6942 = vsub.s32 1, %v6941
    %v6943 = vrot.slane %v28, %v6942
    %v6944 = vlaneseq
    %v6945 = vshrl.u32 %v6944, 7
    %v6946 = vsub.s32 1, %v6945
    %v6947 = vrot.slane %v29, %v6946
    %v6948 = vmul.f32 %v6900, %v6943
    %v6949 = vmul.f32 %v6901, %v6947
    %v6950 = vmul.f32 %v6938, %v6943
    %v6951 = vmul.f32 %v6939, %v6947
    %v6952 = vlaneseq
    %v6953 = vshrl.u32 %v6952, 7
    %v6954 = vsub.s32 2, %v6953
    %v6955 = vrot.slane %v28, %v6954
    %v6956 = vlaneseq
    %v6957 = vshrl.u32 %v6956, 7
    %v6958 = vsub.s32 2, %v6957
    %v6959 = vrot.slane %v29, %v6958
    %v6960 = vadd.f32 %v6948, %v6955
    %v6961 = vadd.f32 %v6949, %v6959
    %v6962 = vadd.f32 %v6950, %v6955
    %v6963 = vadd.f32 %v6951, %v6959
    %v6964 = vmax.f32 %v6960, 0.0
    %v6965 = vmax.f32 %v6961, 0.0
    %v6966 = vmax.f32 %v6962, 0.0
    %v6967 = vmax.f32 %v6963, 0.0
    %v6968 = vpack.c.bf16 %v6966, %v6964
    %v6969 = vpack.c.bf16 %v6967, %v6965
    %v6970 = vld [vmem:[%s3] sm:$0xff]
    %v6971 = vld [vmem:[%s3 + $0x8] sm:$0xff]
    %v6972 = vld [vmem:[%s3 + $0x10] sm:$0xff]
    %v6973 = vld [vmem:[%s3 + $0x18] sm:$0xff]
    %v6974 = vld [vmem:[%s3 + $0x20] sm:$0xff]
    %v6975 = vld [vmem:[%s3 + $0x28] sm:$0xff]
    %v6976 = vld [vmem:[%s3 + $0x30] sm:$0xff]
    %v6977 = vld [vmem:[%s3 + $0x38] sm:$0xff]
    %v6978 = vld [vmem:[%s3 + $0x40] sm:$0xff]
    %v6979 = vld [vmem:[%s3 + $0x48] sm:$0xff]
    %v6980 = vld [vmem:[%s3 + $0x50] sm:$0xff]
    %v6981 = vld [vmem:[%s3 + $0x58] sm:$0xff]
    %v6982 = vld [vmem:[%s3 + $0x60] sm:$0xff]
    %v6983 = vld [vmem:[%s3 + $0x68] sm:$0xff]
    %v6984 = vld [vmem:[%s3 + $0x70] sm:$0xff]
    %v6985 = vld [vmem:[%s3 + $0x78] sm:$0xff]
    %v6986 = vld [vmem:[%s3 + $0x80] sm:$0xff]
    %v6987 = vld [vmem:[%s3 + $0x88] sm:$0xff]
    %v6988 = vld [vmem:[%s3 + $0x90] sm:$0xff]
    %v6989 = vld [vmem:[%s3 + $0x98] sm:$0xff]
    %v6990 = vld [vmem:[%s3 + $0xa0] sm:$0xff]
    %v6991 = vld [vmem:[%s3 + $0xa8] sm:$0xff]
    %v6992 = vld [vmem:[%s3 + $0xb0] sm:$0xff]
    %v6993 = vld [vmem:[%s3 + $0xb8] sm:$0xff]
    %v6994 = vld [vmem:[%s3 + $0xc0] sm:$0xff]
    %v6995 = vld [vmem:[%s3 + $0xc8] sm:$0xff]
    %v6996 = vld [vmem:[%s3 + $0xd0] sm:$0xff]
    %v6997 = vld [vmem:[%s3 + $0xd8] sm:$0xff]
    %v6998 = vld [vmem:[%s3 + $0xe0] sm:$0xff]
    %v6999 = vld [vmem:[%s3 + $0xe8] sm:$0xff]
    %v7000 = vld [vmem:[%s3 + $0xf0] sm:$0xff]
    %v7001 = vld [vmem:[%s3 + $0xf8] sm:$0xff]
    %v7034 = vunpack.c.l.b16 %v6970
    %v7035 = vunpack.c.h.b16 %v6970
    %v7036 = vunpack.c.l.b16 %v6971
    %v7037 = vunpack.c.h.b16 %v6971
    %v7038 = vunpack.c.l.b16 %v6972
    %v7039 = vunpack.c.h.b16 %v6972
    %v7040 = vunpack.c.l.b16 %v6973
    %v7041 = vunpack.c.h.b16 %v6973
    %v7042 = vunpack.c.l.b16 %v6974
    %v7043 = vunpack.c.h.b16 %v6974
    %v7044 = vunpack.c.l.b16 %v6975
    %v7045 = vunpack.c.h.b16 %v6975
    %v7046 = vunpack.c.l.b16 %v6976
    %v7047 = vunpack.c.h.b16 %v6976
    %v7048 = vunpack.c.l.b16 %v6977
    %v7049 = vunpack.c.h.b16 %v6977
    %v7050 = vunpack.c.l.b16 %v6978
    %v7051 = vunpack.c.h.b16 %v6978
    %v7052 = vunpack.c.l.b16 %v6979
    %v7053 = vunpack.c.h.b16 %v6979
    %v7054 = vunpack.c.l.b16 %v6980
    %v7055 = vunpack.c.h.b16 %v6980
    %v7056 = vunpack.c.l.b16 %v6981
    %v7057 = vunpack.c.h.b16 %v6981
    %v7058 = vunpack.c.l.b16 %v6982
    %v7059 = vunpack.c.h.b16 %v6982
    %v7060 = vunpack.c.l.b16 %v6983
    %v7061 = vunpack.c.h.b16 %v6983
    %v7062 = vunpack.c.l.b16 %v6984
    %v7063 = vunpack.c.h.b16 %v6984
    %v7064 = vunpack.c.l.b16 %v6985
    %v7065 = vunpack.c.h.b16 %v6985
    %v7066 = vunpack.c.l.b16 %v6986
    %v7067 = vunpack.c.h.b16 %v6986
    %v7068 = vunpack.c.l.b16 %v6987
    %v7069 = vunpack.c.h.b16 %v6987
    %v7070 = vunpack.c.l.b16 %v6988
    %v7071 = vunpack.c.h.b16 %v6988
    %v7072 = vunpack.c.l.b16 %v6989
    %v7073 = vunpack.c.h.b16 %v6989
    %v7074 = vunpack.c.l.b16 %v6990
    %v7075 = vunpack.c.h.b16 %v6990
    %v7076 = vunpack.c.l.b16 %v6991
    %v7077 = vunpack.c.h.b16 %v6991
    %v7078 = vunpack.c.l.b16 %v6992
    %v7079 = vunpack.c.h.b16 %v6992
    %v7080 = vunpack.c.l.b16 %v6993
    %v7081 = vunpack.c.h.b16 %v6993
    %v7082 = vunpack.c.l.b16 %v6994
    %v7083 = vunpack.c.h.b16 %v6994
    %v7084 = vunpack.c.l.b16 %v6995
    %v7085 = vunpack.c.h.b16 %v6995
    %v7086 = vunpack.c.l.b16 %v6996
    %v7087 = vunpack.c.h.b16 %v6996
    %v7088 = vunpack.c.l.b16 %v6997
    %v7089 = vunpack.c.h.b16 %v6997
    %v7090 = vunpack.c.l.b16 %v6998
    %v7091 = vunpack.c.h.b16 %v6998
    %v7092 = vunpack.c.l.b16 %v6999
    %v7093 = vunpack.c.h.b16 %v6999
    %v7094 = vunpack.c.l.b16 %v7000
    %v7095 = vunpack.c.h.b16 %v7000
    %v7096 = vunpack.c.l.b16 %v7001
    %v7097 = vunpack.c.h.b16 %v7001
    %v7098 = vpack.c.b16 %v7036, %v7034
    %v7099 = vpack.c.b16 %v7037, %v7035
    %v7100 = vpack.c.b16 %v7040, %v7038
    %v7101 = vpack.c.b16 %v7041, %v7039
    %v7102 = vpack.c.b16 %v7044, %v7042
    %v7103 = vpack.c.b16 %v7045, %v7043
    %v7104 = vpack.c.b16 %v7048, %v7046
    %v7105 = vpack.c.b16 %v7049, %v7047
    %v7106 = vpack.c.b16 %v7052, %v7050
    %v7107 = vpack.c.b16 %v7053, %v7051
    %v7108 = vpack.c.b16 %v7056, %v7054
    %v7109 = vpack.c.b16 %v7057, %v7055
    %v7110 = vpack.c.b16 %v7060, %v7058
    %v7111 = vpack.c.b16 %v7061, %v7059
    %v7112 = vpack.c.b16 %v7064, %v7062
    %v7113 = vpack.c.b16 %v7065, %v7063
    %v7114 = vpack.c.b16 %v7068, %v7066
    %v7115 = vpack.c.b16 %v7069, %v7067
    %v7116 = vpack.c.b16 %v7072, %v7070
    %v7117 = vpack.c.b16 %v7073, %v7071
    %v7118 = vpack.c.b16 %v7076, %v7074
    %v7119 = vpack.c.b16 %v7077, %v7075
    %v7120 = vpack.c.b16 %v7080, %v7078
    %v7121 = vpack.c.b16 %v7081, %v7079
    %v7122 = vpack.c.b16 %v7084, %v7082
    %v7123 = vpack.c.b16 %v7085, %v7083
    %v7124 = vpack.c.b16 %v7088, %v7086
    %v7125 = vpack.c.b16 %v7089, %v7087
    %v7126 = vpack.c.b16 %v7092, %v7090
    %v7127 = vpack.c.b16 %v7093, %v7091
    %v7128 = vpack.c.b16 %v7096, %v7094
    %v7129 = vpack.c.b16 %v7097, %v7095
    %7162 = vmatprep.subr.bf16.mxu0 %v7099
    %7163 = vmatpush1.bf16.msra.mxu0 %v7098
    %7164 = vmatprep.subr.bf16.mxu0 %v7101
    %7165 = vmatpush1.bf16.msra.mxu0 %v7100
    %7166 = vmatprep.subr.bf16.mxu0 %v7103
    %7167 = vmatpush1.bf16.msra.mxu0 %v7102
    %7168 = vmatprep.subr.bf16.mxu0 %v7105
    %7169 = vmatpush1.bf16.msra.mxu0 %v7104
    %7170 = vmatprep.subr.bf16.mxu0 %v7107
    %7171 = vmatpush1.bf16.msra.mxu0 %v7106
    %7172 = vmatprep.subr.bf16.mxu0 %v7109
    %7173 = vmatpush1.bf16.msra.mxu0 %v7108
    %7174 = vmatprep.subr.bf16.mxu0 %v7111
    %7175 = vmatpush1.bf16.msra.mxu0 %v7110
    %7176 = vmatprep.subr.bf16.mxu0 %v7113
    %7177 = vmatpush1.bf16.msra.mxu0 %v7112
    %7178 = vmatprep.subr.bf16.mxu0 %v7115
    %7179 = vmatpush1.bf16.msra.mxu0 %v7114
    %7180 = vmatprep.subr.bf16.mxu0 %v7117
    %7181 = vmatpush1.bf16.msra.mxu0 %v7116
    %7182 = vmatprep.subr.bf16.mxu0 %v7119
    %7183 = vmatpush1.bf16.msra.mxu0 %v7118
    %7184 = vmatprep.subr.bf16.mxu0 %v7121
    %7185 = vmatpush1.bf16.msra.mxu0 %v7120
    %7186 = vmatprep.subr.bf16.mxu0 %v7123
    %7187 = vmatpush1.bf16.msra.mxu0 %v7122
    %7188 = vmatprep.subr.bf16.mxu0 %v7125
    %7189 = vmatpush1.bf16.msra.mxu0 %v7124
    %7190 = vmatprep.subr.bf16.mxu0 %v7127
    %7191 = vmatpush1.bf16.msra.mxu0 %v7126
    %7192 = vmatprep.subr.bf16.mxu0 %v7129
    %7193 = vmatpush1.bf16.msra.mxu0 %v7128
    %7194 = vmatprep.mubr.bf16.mxu0 %v6969
    %7195 = vmatmul.mubr.bf16.gmra.mrb[0].mxu0 %v6968
    %v7196 = vpop.f32.mrb[0].mxu0
    %v7197 = vadd.f32 0.0, %v7196
    %v7198 = vpop.f32.mrb[0].mxu0
    %v7199 = vadd.f32 0.0, %v7198
    %v7200 = vpop.f32.mrb[0].mxu0
    %v7201 = vadd.f32 0.0, %v7200
    %v7202 = vpop.f32.mrb[0].mxu0
    %v7203 = vadd.f32 0.0, %v7202
    %7204 = vdwg.mxu0
    %v7205 = vrot.slane %v7197, 4
    %v7206 = vadd.f32 %v7197, %v7205
    %v7207 = vrot.slane %v7206, 2
    %v7208 = vadd.f32 %v7206, %v7207
    %v7209 = vrot.slane %v7208, 1
    %v7210 = vadd.f32 %v7208, %v7209
    %v7211 = vrot.slane %v7199, 4
    %v7212 = vadd.f32 %v7199, %v7211
    %v7213 = vrot.slane %v7212, 2
    %v7214 = vadd.f32 %v7212, %v7213
    %v7215 = vrot.slane %v7214, 1
    %v7216 = vadd.f32 %v7214, %v7215
    %v7217 = vmul.f32 %v7210, %v6875
    %v7218 = vmul.f32 %v7216, %v6875
    %v7219 = vsub.f32 %v7197, %v7217
    %v7220 = vsub.f32 %v7199, %v7218
    %v7221 = vmul.f32 %v7219, %v7219
    %v7222 = vmul.f32 %v7220, %v7220
    %v7223 = vrot.slane %v7221, 4
    %v7224 = vadd.f32 %v7221, %v7223
    %v7225 = vrot.slane %v7224, 2
    %v7226 = vadd.f32 %v7224, %v7225
    %v7227 = vrot.slane %v7226, 1
    %v7228 = vadd.f32 %v7226, %v7227
    %v7229 = vrot.slane %v7222, 4
    %v7230 = vadd.f32 %v7222, %v7229
    %v7231 = vrot.slane %v7230, 2
    %v7232 = vadd.f32 %v7230, %v7231
    %v7233 = vrot.slane %v7232, 1
    %v7234 = vadd.f32 %v7232, %v7233
    %v7235 = vmul.f32 %v7228, %v6875
    %v7236 = vmul.f32 %v7234, %v6875
    %v7237 = vadd.f32 %v7235, 1e-05
    %v7238 = vadd.f32 %v7236, 1e-05
    %v7239 = vrsqrt.pop %v7237
    %v7240 = vrsqrt.pop %v7238
    %v7241 = vmul.f32 %v7219, %v7239
    %v7242 = vmul.f32 %v7220, %v7240
    %v7243 = vrot.slane %v7201, 4
    %v7244 = vadd.f32 %v7201, %v7243
    %v7245 = vrot.slane %v7244, 2
    %v7246 = vadd.f32 %v7244, %v7245
    %v7247 = vrot.slane %v7246, 1
    %v7248 = vadd.f32 %v7246, %v7247
    %v7249 = vrot.slane %v7203, 4
    %v7250 = vadd.f32 %v7203, %v7249
    %v7251 = vrot.slane %v7250, 2
    %v7252 = vadd.f32 %v7250, %v7251
    %v7253 = vrot.slane %v7252, 1
    %v7254 = vadd.f32 %v7252, %v7253
    %v7255 = vmul.f32 %v7248, %v6875
    %v7256 = vmul.f32 %v7254, %v6875
    %v7257 = vsub.f32 %v7201, %v7255
    %v7258 = vsub.f32 %v7203, %v7256
    %v7259 = vmul.f32 %v7257, %v7257
    %v7260 = vmul.f32 %v7258, %v7258
    %v7261 = vrot.slane %v7259, 4
    %v7262 = vadd.f32 %v7259, %v7261
    %v7263 = vrot.slane %v7262, 2
    %v7264 = vadd.f32 %v7262, %v7263
    %v7265 = vrot.slane %v7264, 1
    %v7266 = vadd.f32 %v7264, %v7265
    %v7267 = vrot.slane %v7260, 4
    %v7268 = vadd.f32 %v7260, %v7267
    %v7269 = vrot.slane %v7268, 2
    %v7270 = vadd.f32 %v7268, %v7269
    %v7271 = vrot.slane %v7270, 1
    %v7272 = vadd.f32 %v7270, %v7271
    %v7273 = vmul.f32 %v7266, %v6875
    %v7274 = vmul.f32 %v7272, %v6875
    %v7275 = vadd.f32 %v7273, 1e-05
    %v7276 = vadd.f32 %v7274, 1e-05
    %v7277 = vrsqrt.pop %v7275
    %v7278 = vrsqrt.pop %v7276
    %v7279 = vmul.f32 %v7257, %v7277
    %v7280 = vmul.f32 %v7258, %v7278
    %v7281 = vlaneseq
    %v7282 = vshrl.u32 %v7281, 7
    %v7283 = vsub.s32 3, %v7282
    %v7284 = vrot.slane %v28, %v7283
    %v7285 = vlaneseq
    %v7286 = vshrl.u32 %v7285, 7
    %v7287 = vsub.s32 3, %v7286
    %v7288 = vrot.slane %v29, %v7287
    %v7289 = vmul.f32 %v7241, %v7284
    %v7290 = vmul.f32 %v7242, %v7288
    %v7291 = vmul.f32 %v7279, %v7284
    %v7292 = vmul.f32 %v7280, %v7288
    %v7293 = vlaneseq
    %v7294 = vshrl.u32 %v7293, 7
    %v7295 = vsub.s32 4, %v7294
    %v7296 = vrot.slane %v28, %v7295
    %v7297 = vlaneseq
    %v7298 = vshrl.u32 %v7297, 7
    %v7299 = vsub.s32 4, %v7298
    %v7300 = vrot.slane %v29, %v7299
    %v7301 = vadd.f32 %v7289, %v7296
    %v7302 = vadd.f32 %v7290, %v7300
    %v7303 = vadd.f32 %v7291, %v7296
    %v7304 = vadd.f32 %v7292, %v7300
    %v7305 = vmax.f32 %v7301, 0.0
    %v7306 = vmax.f32 %v7302, 0.0
    %v7307 = vmax.f32 %v7303, 0.0
    %v7308 = vmax.f32 %v7304, 0.0
    %v7309 = vpack.c.bf16 %v7307, %v7305
    %v7310 = vpack.c.bf16 %v7308, %v7306
    %v7311 = vld [vmem:[%s4] sm:$0xff]
    %v7312 = vld [vmem:[%s4 + $0x8] sm:$0xff]
    %v7313 = vld [vmem:[%s4 + $0x10] sm:$0xff]
    %v7314 = vld [vmem:[%s4 + $0x18] sm:$0xff]
    %v7315 = vld [vmem:[%s4 + $0x20] sm:$0xff]
    %v7316 = vld [vmem:[%s4 + $0x28] sm:$0xff]
    %v7317 = vld [vmem:[%s4 + $0x30] sm:$0xff]
    %v7318 = vld [vmem:[%s4 + $0x38] sm:$0xff]
    %v7319 = vld [vmem:[%s4 + $0x40] sm:$0xff]
    %v7320 = vld [vmem:[%s4 + $0x48] sm:$0xff]
    %v7321 = vld [vmem:[%s4 + $0x50] sm:$0xff]
    %v7322 = vld [vmem:[%s4 + $0x58] sm:$0xff]
    %v7323 = vld [vmem:[%s4 + $0x60] sm:$0xff]
    %v7324 = vld [vmem:[%s4 + $0x68] sm:$0xff]
    %v7325 = vld [vmem:[%s4 + $0x70] sm:$0xff]
    %v7326 = vld [vmem:[%s4 + $0x78] sm:$0xff]
    %v7327 = vld [vmem:[%s4 + $0x80] sm:$0xff]
    %v7328 = vld [vmem:[%s4 + $0x88] sm:$0xff]
    %v7329 = vld [vmem:[%s4 + $0x90] sm:$0xff]
    %v7330 = vld [vmem:[%s4 + $0x98] sm:$0xff]
    %v7331 = vld [vmem:[%s4 + $0xa0] sm:$0xff]
    %v7332 = vld [vmem:[%s4 + $0xa8] sm:$0xff]
    %v7333 = vld [vmem:[%s4 + $0xb0] sm:$0xff]
    %v7334 = vld [vmem:[%s4 + $0xb8] sm:$0xff]
    %v7335 = vld [vmem:[%s4 + $0xc0] sm:$0xff]
    %v7336 = vld [vmem:[%s4 + $0xc8] sm:$0xff]
    %v7337 = vld [vmem:[%s4 + $0xd0] sm:$0xff]
    %v7338 = vld [vmem:[%s4 + $0xd8] sm:$0xff]
    %v7339 = vld [vmem:[%s4 + $0xe0] sm:$0xff]
    %v7340 = vld [vmem:[%s4 + $0xe8] sm:$0xff]
    %v7341 = vld [vmem:[%s4 + $0xf0] sm:$0xff]
    %v7342 = vld [vmem:[%s4 + $0xf8] sm:$0xff]
    %v7343 = vlaneseq
    %v7344 = vshrl.u32 %v7343, 7
    %v7345 = vsub.s32 5, %v7344
    %v7346 = vrot.slane %v28, %v7345
    %v7347 = vlaneseq
    %v7348 = vshrl.u32 %v7347, 7
    %v7349 = vsub.s32 5, %v7348
    %v7350 = vrot.slane %v29, %v7349
    %v7383 = vunpack.c.l.b16 %v7311
    %v7384 = vunpack.c.h.b16 %v7311
    %v7385 = vunpack.c.l.b16 %v7312
    %v7386 = vunpack.c.h.b16 %v7312
    %v7387 = vunpack.c.l.b16 %v7313
    %v7388 = vunpack.c.h.b16 %v7313
    %v7389 = vunpack.c.l.b16 %v7314
    %v7390 = vunpack.c.h.b16 %v7314
    %v7391 = vunpack.c.l.b16 %v7315
    %v7392 = vunpack.c.h.b16 %v7315
    %v7393 = vunpack.c.l.b16 %v7316
    %v7394 = vunpack.c.h.b16 %v7316
    %v7395 = vunpack.c.l.b16 %v7317
    %v7396 = vunpack.c.h.b16 %v7317
    %v7397 = vunpack.c.l.b16 %v7318
    %v7398 = vunpack.c.h.b16 %v7318
    %v7399 = vunpack.c.l.b16 %v7319
    %v7400 = vunpack.c.h.b16 %v7319
    %v7401 = vunpack.c.l.b16 %v7320
    %v7402 = vunpack.c.h.b16 %v7320
    %v7403 = vunpack.c.l.b16 %v7321
    %v7404 = vunpack.c.h.b16 %v7321
    %v7405 = vunpack.c.l.b16 %v7322
    %v7406 = vunpack.c.h.b16 %v7322
    %v7407 = vunpack.c.l.b16 %v7323
    %v7408 = vunpack.c.h.b16 %v7323
    %v7409 = vunpack.c.l.b16 %v7324
    %v7410 = vunpack.c.h.b16 %v7324
    %v7411 = vunpack.c.l.b16 %v7325
    %v7412 = vunpack.c.h.b16 %v7325
    %v7413 = vunpack.c.l.b16 %v7326
    %v7414 = vunpack.c.h.b16 %v7326
    %v7415 = vunpack.c.l.b16 %v7327
    %v7416 = vunpack.c.h.b16 %v7327
    %v7417 = vunpack.c.l.b16 %v7328
    %v7418 = vunpack.c.h.b16 %v7328
    %v7419 = vunpack.c.l.b16 %v7329
    %v7420 = vunpack.c.h.b16 %v7329
    %v7421 = vunpack.c.l.b16 %v7330
    %v7422 = vunpack.c.h.b16 %v7330
    %v7423 = vunpack.c.l.b16 %v7331
    %v7424 = vunpack.c.h.b16 %v7331
    %v7425 = vunpack.c.l.b16 %v7332
    %v7426 = vunpack.c.h.b16 %v7332
    %v7427 = vunpack.c.l.b16 %v7333
    %v7428 = vunpack.c.h.b16 %v7333
    %v7429 = vunpack.c.l.b16 %v7334
    %v7430 = vunpack.c.h.b16 %v7334
    %v7431 = vunpack.c.l.b16 %v7335
    %v7432 = vunpack.c.h.b16 %v7335
    %v7433 = vunpack.c.l.b16 %v7336
    %v7434 = vunpack.c.h.b16 %v7336
    %v7435 = vunpack.c.l.b16 %v7337
    %v7436 = vunpack.c.h.b16 %v7337
    %v7437 = vunpack.c.l.b16 %v7338
    %v7438 = vunpack.c.h.b16 %v7338
    %v7439 = vunpack.c.l.b16 %v7339
    %v7440 = vunpack.c.h.b16 %v7339
    %v7441 = vunpack.c.l.b16 %v7340
    %v7442 = vunpack.c.h.b16 %v7340
    %v7443 = vunpack.c.l.b16 %v7341
    %v7444 = vunpack.c.h.b16 %v7341
    %v7445 = vunpack.c.l.b16 %v7342
    %v7446 = vunpack.c.h.b16 %v7342
    %v7447 = vpack.c.b16 %v7385, %v7383
    %v7448 = vpack.c.b16 %v7386, %v7384
    %v7449 = vpack.c.b16 %v7389, %v7387
    %v7450 = vpack.c.b16 %v7390, %v7388
    %v7451 = vpack.c.b16 %v7393, %v7391
    %v7452 = vpack.c.b16 %v7394, %v7392
    %v7453 = vpack.c.b16 %v7397, %v7395
    %v7454 = vpack.c.b16 %v7398, %v7396
    %v7455 = vpack.c.b16 %v7401, %v7399
    %v7456 = vpack.c.b16 %v7402, %v7400
    %v7457 = vpack.c.b16 %v7405, %v7403
    %v7458 = vpack.c.b16 %v7406, %v7404
    %v7459 = vpack.c.b16 %v7409, %v7407
    %v7460 = vpack.c.b16 %v7410, %v7408
    %v7461 = vpack.c.b16 %v7413, %v7411
    %v7462 = vpack.c.b16 %v7414, %v7412
    %v7463 = vpack.c.b16 %v7417, %v7415
    %v7464 = vpack.c.b16 %v7418, %v7416
    %v7465 = vpack.c.b16 %v7421, %v7419
    %v7466 = vpack.c.b16 %v7422, %v7420
    %v7467 = vpack.c.b16 %v7425, %v7423
    %v7468 = vpack.c.b16 %v7426, %v7424
    %v7469 = vpack.c.b16 %v7429, %v7427
    %v7470 = vpack.c.b16 %v7430, %v7428
    %v7471 = vpack.c.b16 %v7433, %v7431
    %v7472 = vpack.c.b16 %v7434, %v7432
    %v7473 = vpack.c.b16 %v7437, %v7435
    %v7474 = vpack.c.b16 %v7438, %v7436
    %v7475 = vpack.c.b16 %v7441, %v7439
    %v7476 = vpack.c.b16 %v7442, %v7440
    %v7477 = vpack.c.b16 %v7445, %v7443
    %v7478 = vpack.c.b16 %v7446, %v7444
    %7511 = vmatprep.subr.bf16.mxu0 %v7448
    %7512 = vmatpush1.bf16.msra.mxu0 %v7447
    %7513 = vmatprep.subr.bf16.mxu0 %v7450
    %7514 = vmatpush1.bf16.msra.mxu0 %v7449
    %7515 = vmatprep.subr.bf16.mxu0 %v7452
    %7516 = vmatpush1.bf16.msra.mxu0 %v7451
    %7517 = vmatprep.subr.bf16.mxu0 %v7454
    %7518 = vmatpush1.bf16.msra.mxu0 %v7453
    %7519 = vmatprep.subr.bf16.mxu0 %v7456
    %7520 = vmatpush1.bf16.msra.mxu0 %v7455
    %7521 = vmatprep.subr.bf16.mxu0 %v7458
    %7522 = vmatpush1.bf16.msra.mxu0 %v7457
    %7523 = vmatprep.subr.bf16.mxu0 %v7460
    %7524 = vmatpush1.bf16.msra.mxu0 %v7459
    %7525 = vmatprep.subr.bf16.mxu0 %v7462
    %7526 = vmatpush1.bf16.msra.mxu0 %v7461
    %7527 = vmatprep.subr.bf16.mxu0 %v7464
    %7528 = vmatpush1.bf16.msra.mxu0 %v7463
    %7529 = vmatprep.subr.bf16.mxu0 %v7466
    %7530 = vmatpush1.bf16.msra.mxu0 %v7465
    %7531 = vmatprep.subr.bf16.mxu0 %v7468
    %7532 = vmatpush1.bf16.msra.mxu0 %v7467
    %7533 = vmatprep.subr.bf16.mxu0 %v7470
    %7534 = vmatpush1.bf16.msra.mxu0 %v7469
    %7535 = vmatprep.subr.bf16.mxu0 %v7472
    %7536 = vmatpush1.bf16.msra.mxu0 %v7471
    %7537 = vmatprep.subr.bf16.mxu0 %v7474
    %7538 = vmatpush1.bf16.msra.mxu0 %v7473
    %7539 = vmatprep.subr.bf16.mxu0 %v7476
    %7540 = vmatpush1.bf16.msra.mxu0 %v7475
    %7541 = vmatprep.subr.bf16.mxu0 %v7478
    %7542 = vmatpush1.bf16.msra.mxu0 %v7477
    %7543 = vmatprep.mubr.bf16.mxu0 %v7310
    %7544 = vmatmul.mubr.bf16.gmra.mrb[0].mxu0 %v7309
    %v7545 = vpop.f32.mrb[0].mxu0
    %v7546 = vadd.f32 %v7346, %v7545
    %v7547 = vpop.f32.mrb[0].mxu0
    %v7548 = vadd.f32 %v7350, %v7547
    %v7549 = vpop.f32.mrb[0].mxu0
    %v7550 = vadd.f32 %v7346, %v7549
    %v7551 = vpop.f32.mrb[0].mxu0
    %v7552 = vadd.f32 %v7350, %v7551
    %7553 = vdwg.mxu0
    %7554 = vst [vmem:[#allocation2] sm:$0xff] %v7546
    %7555 = vst [vmem:[#allocation2 + $0x8] sm:$0xff] %v7548
    %7556 = vst [vmem:[#allocation2 + $0x10] sm:$0xff] %v7550
    %7557 = vst [vmem:[#allocation2 + $0x18] sm:$0xff] %v7552
    // Predicated region
    $region26: #{_forward_impl.1} parent=1 // pred_check
      _
    $region27: #{_forward_impl.1} parent=1 // pred_check_branch
      %7559 = sbr.rel (0) target = $region29
    $region28: #{_forward_impl.1} parent=1 // pred_region
      %s7561 = ssub.s32 512, 512
      %7562 = vsyncadd [#allocation3], %s7561
      %s7563 = sshll.u32 [#allocation2], 4
      %s7564 = int_to_ptr.vmem [resolvable:$true] %s7563
      %7569 = dma.vmem_to_hbm [thread:$0]  %s7564, 512, %s6, [#allocation3], 256, 256, 16
    $region29: #{_forward_impl.1} parent=1 // pred_fallthru
      _
    // Predicated region
    $region30: #{_forward_impl.1} parent=1 // pred_check
      _
    $region31: #{_forward_impl.1} parent=1 // pred_check_branch
      %7571 = sbr.rel (0) target = $region33
    $region32: #{_forward_impl.1} parent=1 // pred_region
      %s7573 = ssub.s32 256, 256
      %7574 = vsyncadd [#allocation5], %s7573
      %s7575 = sshll.u32 [#allocation4], 4
      %s7576 = int_to_ptr.vmem [resolvable:$true] %s7575
      %7581 = dma.vmem_to_hbm [thread:$0]  %s7576, 256, %s7, [#allocation5], 128, 128, 8
    $region33: #{_forward_impl.1} parent=1 // pred_fallthru
      _
    // Predicated region
    $region34: #{_forward_impl.1} parent=1 // pred_check
      _
    $region35: #{_forward_impl.1} parent=1 // pred_check_branch
      %7583 = sbr.rel (0) target = $region37
    $region36: #{_forward_impl.1} parent=1 // pred_region
      %7584 = dma.done [#allocation3], 512
    $region37: #{_forward_impl.1} parent=1 // pred_fallthru
      _
    // Predicated region
    $region38: #{_forward_impl.1} parent=1 // pred_check
      _
    $region39: #{_forward_impl.1} parent=1 // pred_check_branch
      %7586 = sbr.rel (0) target = $region41
    $region40: #{_forward_impl.1} parent=1 // pred_region
      %7587 = dma.done [#allocation5], 256
    $region41: #{_forward_impl.1} parent=1 // pred_fallthru
      _
    %7588 = vsyncpa [#allocation3], 1
    %7589 = vsyncpa [#allocation5], 1

</llo_original>
